<compile_context>
chip_gen: v5e
topology: v5e:2x2
jax: 0.10.0
libtpu: 0.0.40
codegen_flags: <defaults>
</compile_context>

<pallas_src>
import math
from functools import partial

import jax
import jax.numpy as jnp
from jax.experimental import pallas as pl
from jax.experimental.pallas import tpu as pltpu


# ----------------------------- small math helpers -----------------------------

def _gelu(x):
    # TODO(synk): tanh-approx GELU; torch.nn.GELU default is the exact erf form (tiny diff).
    c = 0.7978845608028654  # sqrt(2/pi)
    return 0.5 * x * (1.0 + jnp.tanh(c * (x + 0.044715 * x * x * x)))


def _sigmoid(x):
    # exp + approximate reciprocal -> both on the EUP path.
    return pl.reciprocal(1.0 + jnp.exp(-x), approx=True)


def _split_sizes(c, split=2):
    sizes = []
    for i in range(split):
        sizes.append(round(c / split) if i < split - 1 else c - sum(sizes))
    return sizes


# ----------------------------- the fused forward kernel -----------------------------

def _mardan_kernel(x_ref, wpos_ref, *refs, cfg):
    H, W = cfg["H"], cfg["W"]
    G0, G, D, C = cfg["G0"], cfg["G"], cfg["D"], cfg["C"]
    kR, kB = cfg["kRDN"], cfg["kRDB"]
    M = H * W

    out_ref = refs[-1]
    w_it = iter(refs[:-1])
    nxt = lambda: next(w_it)

    wpos = wpos_ref[...]            # (1, M) f32: column index w of every flattened pixel
    hmasks = {}                     # per-dw horizontal boundary masks, built lazily, reused

    def _hmask(dw):
        # valid iff 0 <= w + dw < W  (horizontal taps must not wrap across image rows)
        return (jnp.logical_and(wpos >= float(-dw), wpos <= float(W - 1 - dw))
                .astype(jnp.float32))

    def conv_same(x, w_ref, b_ref, k):
        # x: (Cin, M) f32 ; w_ref: (Cout, k*k*Cin) tap-major columns ; b_ref: (Cout, 1)
        if k == 1:
            return jnp.dot(w_ref[...], x, preferred_element_type=jnp.float32) + b_ref[...]
        cin = x.shape[0]
        p = k // 2
        pad = p * W + p
        z = jnp.zeros((cin, pad), jnp.float32)
        xp = jnp.concatenate([z, x, z], axis=-1)              # (Cin, M + 2*pad), VMEM only
        cols = []
        for kh in range(k):
            for kw in range(k):
                dh, dw = kh - p, kw - p
                s = dh * W + dw
                col = xp[:, pad + s: pad + s + M]              # static lane slice
                if dw != 0:
                    if dw not in hmasks:
                        hmasks[dw] = _hmask(dw)
                    col = col * hmasks[dw]
                cols.append(col)
        a = jnp.concatenate(cols, axis=0)                      # (k*k*Cin, M), VMEM only
        return jnp.dot(w_ref[...], a, preferred_element_type=jnp.float32) + b_ref[...]

    def pixel_attn(x, w_ref, b_ref):
        z = jnp.dot(w_ref[...], x, preferred_element_type=jnp.float32) + b_ref[...]
        return x * _sigmoid(z)

    x = x_ref[0].astype(jnp.float32)                           # (n_colors, M)

    # --- shallow feature extraction ---
    f1 = conv_same(x, nxt(), nxt(), kR)                        # SFENet1
    sfe2 = conv_same(f1, nxt(), nxt(), kR)                     # SFENet2
    sfe_pa = pixel_attn(f1, nxt(), nxt())                      # SFE_attn(f1)
    res_pa = pixel_attn(f1, nxt(), nxt())                      # SFE_res_attn(f1)
    wb = nxt()[0]                                              # SFE_balance
    feat = wb * sfe2 + (1.0 - wb) * sfe_pa

    # --- residual dense attention blocks ---
    block_outs = []
    for _d in range(D):
        res = feat
        cur = feat
        for c in range(C):
            cin = G0 + c * G
            s0, s1 = _split_sizes(cin, 2)
            x_lo, x_hi = cur[:s0], cur[s0:]
            # MAConv fc path (mutually-affine modulation, split = 2)
            w00, b00, w01, b01 = nxt(), nxt(), nxt(), nxt()
            w10, b10, w11, b11 = nxt(), nxt(), nxt(), nxt()
            h0 = jnp.maximum(
                jnp.dot(w00[...], x_hi, preferred_element_type=jnp.float32) + b00[...], 0.0)
            st0 = jnp.dot(w01[...], h0, preferred_element_type=jnp.float32) + b01[...]
            mod0 = x_lo * _sigmoid(st0[:s0]) + st0[s0:]
            h1 = jnp.maximum(
                jnp.dot(w10[...], x_lo, preferred_element_type=jnp.float32) + b10[...], 0.0)
            st1 = jnp.dot(w11[...], h1, preferred_element_type=jnp.float32) + b11[...]
            mod1 = x_hi * _sigmoid(st1[:s1]) + st1[s1:]
            # per-split kxk conv -> GELU -> layer PixelAttention
            y0 = conv_same(mod0, nxt(), nxt(), kB)
            y1 = conv_same(mod1, nxt(), nxt(), kB)
            y = _gelu(jnp.concatenate([y0, y1], axis=0))       # (G, M)
            new = pixel_attn(y, nxt(), nxt())
            cur = jnp.concatenate([cur, new], axis=0)          # dense concat, VMEM only
        # local feature fusion (1x1) + residual Balance
        lff_w, lff_b = nxt(), nxt()
        lff = jnp.dot(lff_w[...], cur, preferred_element_type=jnp.float32) + lff_b[...]
        wb = nxt()[0]
        feat = wb * lff + (1.0 - wb) * res
        block_outs.append(feat)

    # --- global feature fusion + final Balance ---
    gcat = jnp.concatenate(block_outs, axis=0)                 # (D*G0, M), VMEM only
    g1w, g1b = nxt(), nxt()
    g = jnp.dot(g1w[...], gcat, preferred_element_type=jnp.float32) + g1b[...]
    g = conv_same(g, nxt(), nxt(), kR)                         # GFF kxk conv
    wb = nxt()[0]                                              # GFF_balance
    out = wb * g + (1.0 - wb) * res_pa
    out_ref[0] = out.astype(out_ref.dtype)


# ----------------------------- wrapper -----------------------------

def _conv_mat(w):
    # HWIO (KH, KW, Cin, Cout) -> (Cout, KH*KW*Cin), tap-major columns (kh, kw, cin)
    KH, KW, Cin, Cout = w.shape
    return jnp.asarray(w, jnp.float32).reshape(KH * KW * Cin, Cout).T


def _col(b):
    return jnp.asarray(b, jnp.float32).reshape(-1, 1)


def _flatten_params(params):
    """Flatten weights in the exact order the kernel consumes them."""
    ws = []
    add_conv = lambda p: ws.extend([_conv_mat(p[0]), _col(p[1])])
    add_mat = lambda p: ws.extend([jnp.asarray(p[0], jnp.float32), _col(p[1])])
    add_bal = lambda b: ws.append(jnp.asarray(b, jnp.float32).reshape(1))

    add_conv(params["sfe1"])
    add_conv(params["sfe2"])
    add_mat(params["sfe_attn"])
    add_mat(params["sfe_res_attn"])
    add_bal(params["sfe_balance"])
    for bp in params["blocks"]:
        for lp in bp["layers"]:
            mp = lp["maconv"]
            for (w0, b0, w1, b1) in mp["fc"]:
                add_mat((w0, b0))
                add_mat((w1, b1))
            for cp in mp["conv"]:
                add_conv(cp)
            add_mat(lp["attn"])
        add_mat(bp["lff"])
        add_bal(bp["balance"])
    add_mat(params["gff1"])
    add_conv(params["gff2"])
    add_bal(params["gff_balance"])
    return ws


def mardan_forward(params, x_nchw, cfg):
    N, Cc, H, W = x_nchw.shape
    M = H * W
    G0 = cfg["G0"]
    x = jnp.asarray(x_nchw, jnp.float32).reshape(N, Cc, M)     # lane-dense (C, H*W)
    wpos = jnp.tile(jnp.arange(W, dtype=jnp.float32), H).reshape(1, M)
    weights = _flatten_params(params)

    def _const_spec(a):
        if a.ndim == 1:                        # Balance scalars -> SMEM
            return pl.BlockSpec(memory_space=pltpu.MemorySpace.SMEM)
        nd = a.ndim
        return pl.BlockSpec(a.shape, lambda n, _nd=nd: (0,) * _nd)

    in_specs = [pl.BlockSpec((1, Cc, M), lambda n: (n, 0, 0)),
                pl.BlockSpec((1, M), lambda n: (0, 0))]
    in_specs += [_const_spec(a) for a in weights]

    kcfg = dict(H=H, W=W, G0=G0, G=cfg["G"], D=cfg["D"], C=cfg["C"],
                kRDN=cfg["RDNkSize"], kRDB=cfg["RDBkSize"])

    out = pl.pallas_call(
        partial(_mardan_kernel, cfg=kcfg),
        out_shape=jax.ShapeDtypeStruct((N, G0, M), jnp.float32),
        grid=(N,),
        in_specs=in_specs,
        out_specs=pl.BlockSpec((1, G0, M), lambda n: (n, 0, 0)),
        compiler_params=pltpu.CompilerParams(
            dimension_semantics=("parallel",),
            vmem_limit_bytes=32 * 1024 * 1024),
    )(x, wpos, *weights)
    return out.reshape(N, G0, H, W)


# ----------------------------- deterministic parameter init -----------------------------

def _conv_init(key, kh, kw, cin, cout):
    kw_, kb_ = jax.random.split(key)
    fan_in = kh * kw * cin
    w = jax.random.normal(kw_, (kh, kw, cin, cout), jnp.float32) / math.sqrt(fan_in)
    b = 0.01 * jax.random.normal(kb_, (cout,), jnp.float32)
    return w, b


def _mat_init(key, cin, cout):
    kw_, kb_ = jax.random.split(key)
    w = jax.random.normal(kw_, (cout, cin), jnp.float32) / math.sqrt(cin)
    b = 0.01 * jax.random.normal(kb_, (cout,), jnp.float32)
    return w, b


def _init_maconv(key, cin, cout, k, split=2, reduction=2):
    in_split = _split_sizes(cin, split)
    out_split = _split_sizes(cout, split)
    fcs, convs = [], []
    for i in range(split):
        rest = cin - in_split[i]
        hidden = max(1, rest // reduction)
        key, k1, k2, k3 = jax.random.split(key, 4)
        w0, b0 = _mat_init(k1, rest, hidden)
        w1, b1 = _mat_init(k2, hidden, 2 * in_split[i])
        fcs.append((w0, b0, w1, b1))
        convs.append(_conv_init(k3, k, k, in_split[i], out_split[i]))
    return {"fc": fcs, "conv": convs}


def init_params(key, args):
    G0, G, D, C = args["G0"], args["G"], args["D"], args["C"]
    k_rdn, k_rdb = args["RDNkSize"], args["RDBkSize"]
    n_colors = args["n_colors"]
    params = {}
    key, *ks = jax.random.split(key, 8)
    params["sfe1"] = _conv_init(ks[0], k_rdn, k_rdn, n_colors, G0)
    params["sfe2"] = _conv_init(ks[1], k_rdn, k_rdn, G0, G0)
    params["sfe_attn"] = _mat_init(ks[2], G0, G0)
    params["sfe_res_attn"] = _mat_init(ks[3], G0, G0)
    params["sfe_balance"] = jnp.array([0.5], jnp.float32)

    blocks = []
    for _ in range(D):
        layers = []
        for c in range(C):
            key, k1, k2 = jax.random.split(key, 3)
            layers.append({
                "maconv": _init_maconv(k1, G0 + c * G, G, k_rdb),
                "attn": _mat_init(k2, G, G),
            })
        key, k1 = jax.random.split(key)
        blocks.append({
            "layers": layers,
            "lff": _mat_init(k1, G0 + C * G, G0),
            "balance": jnp.array([0.5], jnp.float32),
        })
    params["blocks"] = blocks

    key, k1, k2 = jax.random.split(key, 3)
    params["gff1"] = _mat_init(k1, D * G0, G0)
    params["gff2"] = _conv_init(k2, k_rdn, k_rdn, G0, G0)
    params["gff_balance"] = jnp.array([0.5], jnp.float32)
    return params


# ----------------------------- main -----------------------------

if __name__ == "__main__":
    args = dict(scale=[2], n_colors=3, G0=8, RDNkSize=3, RDBkSize=3,
                act="gelu", D=2, C=2, G=8, no_upsampling=True)

    key = jax.random.PRNGKey(0)
    kp, kx = jax.random.split(key)
    params = init_params(kp, args)
    x = jax.random.normal(kx, (2, args["n_colors"], 16, 16), jnp.float32)  # NCHW input

    fwd = jax.jit(partial(mardan_forward, cfg=args))
    y = jax.block_until_ready(fwd(params, x))

    assert y.shape == (2, args["G0"], 16, 16), y.shape
    assert bool(jnp.all(jnp.isfinite(y)))
    print("KERNEL_OK")
</pallas_src>

<mosaic_0001>
module attributes {stable_mosaic.version = 11 : i64} {
  func.func @_mardan_kernel(%arg0: i32, %arg1: memref<1x3x256xf32, #tpu.memory_space<vmem>>, %arg2: memref<1x256xf32, #tpu.memory_space<vmem>>, %arg3: memref<8x27xf32, #tpu.memory_space<vmem>>, %arg4: memref<8x1xf32, #tpu.memory_space<vmem>>, %arg5: memref<8x72xf32, #tpu.memory_space<vmem>>, %arg6: memref<8x1xf32, #tpu.memory_space<vmem>>, %arg7: memref<8x8xf32, #tpu.memory_space<vmem>>, %arg8: memref<8x1xf32, #tpu.memory_space<vmem>>, %arg9: memref<8x8xf32, #tpu.memory_space<vmem>>, %arg10: memref<8x1xf32, #tpu.memory_space<vmem>>, %arg11: memref<1xf32, #tpu.memory_space<smem>>, %arg12: memref<2x4xf32, #tpu.memory_space<vmem>>, %arg13: memref<2x1xf32, #tpu.memory_space<vmem>>, %arg14: memref<8x2xf32, #tpu.memory_space<vmem>>, %arg15: memref<8x1xf32, #tpu.memory_space<vmem>>, %arg16: memref<2x4xf32, #tpu.memory_space<vmem>>, %arg17: memref<2x1xf32, #tpu.memory_space<vmem>>, %arg18: memref<8x2xf32, #tpu.memory_space<vmem>>, %arg19: memref<8x1xf32, #tpu.memory_space<vmem>>, %arg20: memref<4x36xf32, #tpu.memory_space<vmem>>, %arg21: memref<4x1xf32, #tpu.memory_space<vmem>>, %arg22: memref<4x36xf32, #tpu.memory_space<vmem>>, %arg23: memref<4x1xf32, #tpu.memory_space<vmem>>, %arg24: memref<8x8xf32, #tpu.memory_space<vmem>>, %arg25: memref<8x1xf32, #tpu.memory_space<vmem>>, %arg26: memref<4x8xf32, #tpu.memory_space<vmem>>, %arg27: memref<4x1xf32, #tpu.memory_space<vmem>>, %arg28: memref<16x4xf32, #tpu.memory_space<vmem>>, %arg29: memref<16x1xf32, #tpu.memory_space<vmem>>, %arg30: memref<4x8xf32, #tpu.memory_space<vmem>>, %arg31: memref<4x1xf32, #tpu.memory_space<vmem>>, %arg32: memref<16x4xf32, #tpu.memory_space<vmem>>, %arg33: memref<16x1xf32, #tpu.memory_space<vmem>>, %arg34: memref<4x72xf32, #tpu.memory_space<vmem>>, %arg35: memref<4x1xf32, #tpu.memory_space<vmem>>, %arg36: memref<4x72xf32, #tpu.memory_space<vmem>>, %arg37: memref<4x1xf32, #tpu.memory_space<vmem>>, %arg38: memref<8x8xf32, #tpu.memory_space<vmem>>, %arg39: memref<8x1xf32, #tpu.memory_space<vmem>>, %arg40: memref<8x24xf32, #tpu.memory_space<vmem>>, %arg41: memref<8x1xf32, #tpu.memory_space<vmem>>, %arg42: memref<1xf32, #tpu.memory_space<smem>>, %arg43: memref<2x4xf32, #tpu.memory_space<vmem>>, %arg44: memref<2x1xf32, #tpu.memory_space<vmem>>, %arg45: memref<8x2xf32, #tpu.memory_space<vmem>>, %arg46: memref<8x1xf32, #tpu.memory_space<vmem>>, %arg47: memref<2x4xf32, #tpu.memory_space<vmem>>, %arg48: memref<2x1xf32, #tpu.memory_space<vmem>>, %arg49: memref<8x2xf32, #tpu.memory_space<vmem>>, %arg50: memref<8x1xf32, #tpu.memory_space<vmem>>, %arg51: memref<4x36xf32, #tpu.memory_space<vmem>>, %arg52: memref<4x1xf32, #tpu.memory_space<vmem>>, %arg53: memref<4x36xf32, #tpu.memory_space<vmem>>, %arg54: memref<4x1xf32, #tpu.memory_space<vmem>>, %arg55: memref<8x8xf32, #tpu.memory_space<vmem>>, %arg56: memref<8x1xf32, #tpu.memory_space<vmem>>, %arg57: memref<4x8xf32, #tpu.memory_space<vmem>>, %arg58: memref<4x1xf32, #tpu.memory_space<vmem>>, %arg59: memref<16x4xf32, #tpu.memory_space<vmem>>, %arg60: memref<16x1xf32, #tpu.memory_space<vmem>>, %arg61: memref<4x8xf32, #tpu.memory_space<vmem>>, %arg62: memref<4x1xf32, #tpu.memory_space<vmem>>, %arg63: memref<16x4xf32, #tpu.memory_space<vmem>>, %arg64: memref<16x1xf32, #tpu.memory_space<vmem>>, %arg65: memref<4x72xf32, #tpu.memory_space<vmem>>, %arg66: memref<4x1xf32, #tpu.memory_space<vmem>>, %arg67: memref<4x72xf32, #tpu.memory_space<vmem>>, %arg68: memref<4x1xf32, #tpu.memory_space<vmem>>, %arg69: memref<8x8xf32, #tpu.memory_space<vmem>>, %arg70: memref<8x1xf32, #tpu.memory_space<vmem>>, %arg71: memref<8x24xf32, #tpu.memory_space<vmem>>, %arg72: memref<8x1xf32, #tpu.memory_space<vmem>>, %arg73: memref<1xf32, #tpu.memory_space<smem>>, %arg74: memref<8x16xf32, #tpu.memory_space<vmem>>, %arg75: memref<8x1xf32, #tpu.memory_space<vmem>>, %arg76: memref<8x72xf32, #tpu.memory_space<vmem>>, %arg77: memref<8x1xf32, #tpu.memory_space<vmem>>, %arg78: memref<1xf32, #tpu.memory_space<smem>>, %arg79: memref<1x8x256xf32, #tpu.memory_space<vmem>>) attributes {dimension_semantics = [#tpu.dimension_semantics<parallel>], iteration_bounds = array<i64: 2>, scalar_prefetch = 0 : i64, scratch_operands = 0 : i64, tpu.core_type = #tpu.core_type<tc>, window_params = [{transform_indices = @transform_0, window_bounds = array<i64: 1, 3, 256>}, {pipeline_mode = #tpu.pipeline_mode<synchronous>, transform_indices = @transform_1, window_bounds = array<i64: 1, 256>}, {pipeline_mode = #tpu.pipeline_mode<synchronous>, transform_indices = @transform_2, window_bounds = array<i64: 8, 27>}, {pipeline_mode = #tpu.pipeline_mode<synchronous>, transform_indices = @transform_3, window_bounds = array<i64: 8, 1>}, {pipeline_mode = #tpu.pipeline_mode<synchronous>, transform_indices = @transform_4, window_bounds = array<i64: 8, 72>}, {pipeline_mode = #tpu.pipeline_mode<synchronous>, transform_indices = @transform_5, window_bounds = array<i64: 8, 1>}, {pipeline_mode = #tpu.pipeline_mode<synchronous>, transform_indices = @transform_6, window_bounds = array<i64: 8, 8>}, {pipeline_mode = #tpu.pipeline_mode<synchronous>, transform_indices = @transform_7, window_bounds = array<i64: 8, 1>}, {pipeline_mode = #tpu.pipeline_mode<synchronous>, transform_indices = @transform_8, window_bounds = array<i64: 8, 8>}, {pipeline_mode = #tpu.pipeline_mode<synchronous>, transform_indices = @transform_9, window_bounds = array<i64: 8, 1>}, {transform_indices = @transform_10, window_bounds = array<i64: 1>}, {pipeline_mode = #tpu.pipeline_mode<synchronous>, transform_indices = @transform_11, window_bounds = array<i64: 2, 4>}, {pipeline_mode = #tpu.pipeline_mode<synchronous>, transform_indices = @transform_12, window_bounds = array<i64: 2, 1>}, {pipeline_mode = #tpu.pipeline_mode<synchronous>, transform_indices = @transform_13, window_bounds = array<i64: 8, 2>}, {pipeline_mode = #tpu.pipeline_mode<synchronous>, transform_indices = @transform_14, window_bounds = array<i64: 8, 1>}, {pipeline_mode = #tpu.pipeline_mode<synchronous>, transform_indices = @transform_15, window_bounds = array<i64: 2, 4>}, {pipeline_mode = #tpu.pipeline_mode<synchronous>, transform_indices = @transform_16, window_bounds = array<i64: 2, 1>}, {pipeline_mode = #tpu.pipeline_mode<synchronous>, transform_indices = @transform_17, window_bounds = array<i64: 8, 2>}, {pipeline_mode = #tpu.pipeline_mode<synchronous>, transform_indices = @transform_18, window_bounds = array<i64: 8, 1>}, {pipeline_mode = #tpu.pipeline_mode<synchronous>, transform_indices = @transform_19, window_bounds = array<i64: 4, 36>}, {pipeline_mode = #tpu.pipeline_mode<synchronous>, transform_indices = @transform_20, window_bounds = array<i64: 4, 1>}, {pipeline_mode = #tpu.pipeline_mode<synchronous>, transform_indices = @transform_21, window_bounds = array<i64: 4, 36>}, {pipeline_mode = #tpu.pipeline_mode<synchronous>, transform_indices = @transform_22, window_bounds = array<i64: 4, 1>}, {pipeline_mode = #tpu.pipeline_mode<synchronous>, transform_indices = @transform_23, window_bounds = array<i64: 8, 8>}, {pipeline_mode = #tpu.pipeline_mode<synchronous>, transform_indices = @transform_24, window_bounds = array<i64: 8, 1>}, {pipeline_mode = #tpu.pipeline_mode<synchronous>, transform_indices = @transform_25, window_bounds = array<i64: 4, 8>}, {pipeline_mode = #tpu.pipeline_mode<synchronous>, transform_indices = @transform_26, window_bounds = array<i64: 4, 1>}, {pipeline_mode = #tpu.pipeline_mode<synchronous>, transform_indices = @transform_27, window_bounds = array<i64: 16, 4>}, {pipeline_mode = #tpu.pipeline_mode<synchronous>, transform_indices = @transform_28, window_bounds = array<i64: 16, 1>}, {pipeline_mode = #tpu.pipeline_mode<synchronous>, transform_indices = @transform_29, window_bounds = array<i64: 4, 8>}, {pipeline_mode = #tpu.pipeline_mode<synchronous>, transform_indices = @transform_30, window_bounds = array<i64: 4, 1>}, {pipeline_mode = #tpu.pipeline_mode<synchronous>, transform_indices = @transform_31, window_bounds = array<i64: 16, 4>}, {pipeline_mode = #tpu.pipeline_mode<synchronous>, transform_indices = @transform_32, window_bounds = array<i64: 16, 1>}, {pipeline_mode = #tpu.pipeline_mode<synchronous>, transform_indices = @transform_33, window_bounds = array<i64: 4, 72>}, {pipeline_mode = #tpu.pipeline_mode<synchronous>, transform_indices = @transform_34, window_bounds = array<i64: 4, 1>}, {pipeline_mode = #tpu.pipeline_mode<synchronous>, transform_indices = @transform_35, window_bounds = array<i64: 4, 72>}, {pipeline_mode = #tpu.pipeline_mode<synchronous>, transform_indices = @transform_36, window_bounds = array<i64: 4, 1>}, {pipeline_mode = #tpu.pipeline_mode<synchronous>, transform_indices = @transform_37, window_bounds = array<i64: 8, 8>}, {pipeline_mode = #tpu.pipeline_mode<synchronous>, transform_indices = @transform_38, window_bounds = array<i64: 8, 1>}, {pipeline_mode = #tpu.pipeline_mode<synchronous>, transform_indices = @transform_39, window_bounds = array<i64: 8, 24>}, {pipeline_mode = #tpu.pipeline_mode<synchronous>, transform_indices = @transform_40, window_bounds = array<i64: 8, 1>}, {transform_indices = @transform_41, window_bounds = array<i64: 1>}, {pipeline_mode = #tpu.pipeline_mode<synchronous>, transform_indices = @transform_42, window_bounds = array<i64: 2, 4>}, {pipeline_mode = #tpu.pipeline_mode<synchronous>, transform_indices = @transform_43, window_bounds = array<i64: 2, 1>}, {pipeline_mode = #tpu.pipeline_mode<synchronous>, transform_indices = @transform_44, window_bounds = array<i64: 8, 2>}, {pipeline_mode = #tpu.pipeline_mode<synchronous>, transform_indices = @transform_45, window_bounds = array<i64: 8, 1>}, {pipeline_mode = #tpu.pipeline_mode<synchronous>, transform_indices = @transform_46, window_bounds = array<i64: 2, 4>}, {pipeline_mode = #tpu.pipeline_mode<synchronous>, transform_indices = @transform_47, window_bounds = array<i64: 2, 1>}, {pipeline_mode = #tpu.pipeline_mode<synchronous>, transform_indices = @transform_48, window_bounds = array<i64: 8, 2>}, {pipeline_mode = #tpu.pipeline_mode<synchronous>, transform_indices = @transform_49, window_bounds = array<i64: 8, 1>}, {pipeline_mode = #tpu.pipeline_mode<synchronous>, transform_indices = @transform_50, window_bounds = array<i64: 4, 36>}, {pipeline_mode = #tpu.pipeline_mode<synchronous>, transform_indices = @transform_51, window_bounds = array<i64: 4, 1>}, {pipeline_mode = #tpu.pipeline_mode<synchronous>, transform_indices = @transform_52, window_bounds = array<i64: 4, 36>}, {pipeline_mode = #tpu.pipeline_mode<synchronous>, transform_indices = @transform_53, window_bounds = array<i64: 4, 1>}, {pipeline_mode = #tpu.pipeline_mode<synchronous>, transform_indices = @transform_54, window_bounds = array<i64: 8, 8>}, {pipeline_mode = #tpu.pipeline_mode<synchronous>, transform_indices = @transform_55, window_bounds = array<i64: 8, 1>}, {pipeline_mode = #tpu.pipeline_mode<synchronous>, transform_indices = @transform_56, window_bounds = array<i64: 4, 8>}, {pipeline_mode = #tpu.pipeline_mode<synchronous>, transform_indices = @transform_57, window_bounds = array<i64: 4, 1>}, {pipeline_mode = #tpu.pipeline_mode<synchronous>, transform_indices = @transform_58, window_bounds = array<i64: 16, 4>}, {pipeline_mode = #tpu.pipeline_mode<synchronous>, transform_indices = @transform_59, window_bounds = array<i64: 16, 1>}, {pipeline_mode = #tpu.pipeline_mode<synchronous>, transform_indices = @transform_60, window_bounds = array<i64: 4, 8>}, {pipeline_mode = #tpu.pipeline_mode<synchronous>, transform_indices = @transform_61, window_bounds = array<i64: 4, 1>}, {pipeline_mode = #tpu.pipeline_mode<synchronous>, transform_indices = @transform_62, window_bounds = array<i64: 16, 4>}, {pipeline_mode = #tpu.pipeline_mode<synchronous>, transform_indices = @transform_63, window_bounds = array<i64: 16, 1>}, {pipeline_mode = #tpu.pipeline_mode<synchronous>, transform_indices = @transform_64, window_bounds = array<i64: 4, 72>}, {pipeline_mode = #tpu.pipeline_mode<synchronous>, transform_indices = @transform_65, window_bounds = array<i64: 4, 1>}, {pipeline_mode = #tpu.pipeline_mode<synchronous>, transform_indices = @transform_66, window_bounds = array<i64: 4, 72>}, {pipeline_mode = #tpu.pipeline_mode<synchronous>, transform_indices = @transform_67, window_bounds = array<i64: 4, 1>}, {pipeline_mode = #tpu.pipeline_mode<synchronous>, transform_indices = @transform_68, window_bounds = array<i64: 8, 8>}, {pipeline_mode = #tpu.pipeline_mode<synchronous>, transform_indices = @transform_69, window_bounds = array<i64: 8, 1>}, {pipeline_mode = #tpu.pipeline_mode<synchronous>, transform_indices = @transform_70, window_bounds = array<i64: 8, 24>}, {pipeline_mode = #tpu.pipeline_mode<synchronous>, transform_indices = @transform_71, window_bounds = array<i64: 8, 1>}, {transform_indices = @transform_72, window_bounds = array<i64: 1>}, {pipeline_mode = #tpu.pipeline_mode<synchronous>, transform_indices = @transform_73, window_bounds = array<i64: 8, 16>}, {pipeline_mode = #tpu.pipeline_mode<synchronous>, transform_indices = @transform_74, window_bounds = array<i64: 8, 1>}, {pipeline_mode = #tpu.pipeline_mode<synchronous>, transform_indices = @transform_75, window_bounds = array<i64: 8, 72>}, {pipeline_mode = #tpu.pipeline_mode<synchronous>, transform_indices = @transform_76, window_bounds = array<i64: 8, 1>}, {transform_indices = @transform_77, window_bounds = array<i64: 1>}, {transform_indices = @transform_78, window_bounds = array<i64: 1, 8, 256>}]} {
    %c0 = arith.constant 0 : index
    %c0_0 = arith.constant 0 : index
    %0 = vector.load %arg2[%c0, %c0_0] : memref<1x256xf32, #tpu.memory_space<vmem>>, vector<1x256xf32>
    %c0_1 = arith.constant 0 : index
    %c0_2 = arith.constant 0 : index
    %c0_3 = arith.constant 0 : index
    %1 = vector.load %arg1[%c0_1, %c0_2, %c0_3] : memref<1x3x256xf32, #tpu.memory_space<vmem>>, vector<1x3x256xf32>
    %2 = vector.shape_cast %1 : vector<1x3x256xf32> to vector<3x256xf32>
    %cst = arith.constant 0.000000e+00 : f32
    %3 = vector.broadcast %cst : f32 to vector<3x17xf32>
    %4 = tpu.concatenate %3, %2, %3 in 1 : vector<3x17xf32>, vector<3x256xf32>, vector<3x17xf32> -> vector<3x290xf32>
    %5 = vector.extract_strided_slice %4 {offsets = [0, 0], sizes = [3, 256], strides = [1, 1]} : vector<3x290xf32> to vector<3x256xf32>
    %cst_4 = arith.constant 1.000000e+00 : f32
    %6 = vector.broadcast %cst_4 : f32 to vector<1x256xf32>
    %7 = arith.cmpf oge, %0, %6 : vector<1x256xf32>
    %cst_5 = arith.constant 1.600000e+01 : f32
    %8 = vector.broadcast %cst_5 : f32 to vector<1x256xf32>
    %9 = arith.cmpf ole, %0, %8 : vector<1x256xf32>
    %10 = arith.andi %7, %9 : vector<1x256xi1>
    %11 = arith.extui %10 : vector<1x256xi1> to vector<1x256xi32>
    %12 = arith.sitofp %11 : vector<1x256xi32> to vector<1x256xf32>
    %13 = vector.broadcast %12 : vector<1x256xf32> to vector<3x256xf32>
    %14 = arith.mulf %5, %13 : vector<3x256xf32>
    %15 = vector.extract_strided_slice %4 {offsets = [0, 1], sizes = [3, 256], strides = [1, 1]} : vector<3x290xf32> to vector<3x256xf32>
    %16 = vector.extract_strided_slice %4 {offsets = [0, 2], sizes = [3, 256], strides = [1, 1]} : vector<3x290xf32> to vector<3x256xf32>
    %cst_6 = arith.constant -1.000000e+00 : f32
    %17 = vector.broadcast %cst_6 : f32 to vector<1x256xf32>
    %18 = arith.cmpf oge, %0, %17 : vector<1x256xf32>
    %cst_7 = arith.constant 1.400000e+01 : f32
    %19 = vector.broadcast %cst_7 : f32 to vector<1x256xf32>
    %20 = arith.cmpf ole, %0, %19 : vector<1x256xf32>
    %21 = arith.andi %18, %20 : vector<1x256xi1>
    %22 = arith.extui %21 : vector<1x256xi1> to vector<1x256xi32>
    %23 = arith.sitofp %22 : vector<1x256xi32> to vector<1x256xf32>
    %24 = vector.broadcast %23 : vector<1x256xf32> to vector<3x256xf32>
    %25 = arith.mulf %16, %24 : vector<3x256xf32>
    %26 = vector.extract_strided_slice %4 {offsets = [0, 16], sizes = [3, 256], strides = [1, 1]} : vector<3x290xf32> to vector<3x256xf32>
    %27 = vector.broadcast %12 : vector<1x256xf32> to vector<3x256xf32>
    %28 = arith.mulf %26, %27 : vector<3x256xf32>
    %29 = vector.extract_strided_slice %4 {offsets = [0, 17], sizes = [3, 256], strides = [1, 1]} : vector<3x290xf32> to vector<3x256xf32>
    %30 = vector.extract_strided_slice %4 {offsets = [0, 18], sizes = [3, 256], strides = [1, 1]} : vector<3x290xf32> to vector<3x256xf32>
    %31 = vector.broadcast %23 : vector<1x256xf32> to vector<3x256xf32>
    %32 = arith.mulf %30, %31 : vector<3x256xf32>
    %33 = vector.extract_strided_slice %4 {offsets = [0, 32], sizes = [3, 256], strides = [1, 1]} : vector<3x290xf32> to vector<3x256xf32>
    %34 = vector.broadcast %12 : vector<1x256xf32> to vector<3x256xf32>
    %35 = arith.mulf %33, %34 : vector<3x256xf32>
    %36 = vector.extract_strided_slice %4 {offsets = [0, 33], sizes = [3, 256], strides = [1, 1]} : vector<3x290xf32> to vector<3x256xf32>
    %37 = vector.extract_strided_slice %4 {offsets = [0, 34], sizes = [3, 256], strides = [1, 1]} : vector<3x290xf32> to vector<3x256xf32>
    %38 = vector.broadcast %23 : vector<1x256xf32> to vector<3x256xf32>
    %39 = arith.mulf %37, %38 : vector<3x256xf32>
    %40 = tpu.concatenate %14, %15, %25, %28, %29, %32, %35, %36, %39 in 0 : vector<3x256xf32>, vector<3x256xf32>, vector<3x256xf32>, vector<3x256xf32>, vector<3x256xf32>, vector<3x256xf32>, vector<3x256xf32>, vector<3x256xf32>, vector<3x256xf32> -> vector<27x256xf32>
    %c0_8 = arith.constant 0 : index
    %c0_9 = arith.constant 0 : index
    %41 = vector.load %arg3[%c0_8, %c0_9] : memref<8x27xf32, #tpu.memory_space<vmem>>, vector<8x27xf32>
    %cst_10 = arith.constant dense<0.000000e+00> : vector<8x256xf32>
    %42 = tpu.matmul %41, %40, %cst_10 {dimension_numbers = #tpu.dot_dimension_numbers<[1], [0], [0], [1], [0, 0, 1, 1], [], []>} : vector<8x27xf32>, vector<27x256xf32>, vector<8x256xf32> -> vector<8x256xf32>
    %c0_11 = arith.constant 0 : index
    %c0_12 = arith.constant 0 : index
    %43 = vector.load %arg4[%c0_11, %c0_12] : memref<8x1xf32, #tpu.memory_space<vmem>>, vector<8x1xf32>
    %44 = vector.broadcast %43 : vector<8x1xf32> to vector<8x256xf32>
    %45 = arith.addf %42, %44 : vector<8x256xf32>
    %cst_13 = arith.constant 0.000000e+00 : f32
    %46 = vector.broadcast %cst_13 : f32 to vector<8x17xf32>
    %47 = tpu.concatenate %46, %45, %46 in 1 : vector<8x17xf32>, vector<8x256xf32>, vector<8x17xf32> -> vector<8x290xf32>
    %48 = vector.extract_strided_slice %47 {offsets = [0, 0], sizes = [8, 256], strides = [1, 1]} : vector<8x290xf32> to vector<8x256xf32>
    %49 = vector.broadcast %12 : vector<1x256xf32> to vector<8x256xf32>
    %50 = arith.mulf %48, %49 : vector<8x256xf32>
    %51 = vector.extract_strided_slice %47 {offsets = [0, 1], sizes = [8, 256], strides = [1, 1]} : vector<8x290xf32> to vector<8x256xf32>
    %52 = vector.extract_strided_slice %47 {offsets = [0, 2], sizes = [8, 256], strides = [1, 1]} : vector<8x290xf32> to vector<8x256xf32>
    %53 = vector.broadcast %23 : vector<1x256xf32> to vector<8x256xf32>
    %54 = arith.mulf %52, %53 : vector<8x256xf32>
    %55 = vector.extract_strided_slice %47 {offsets = [0, 16], sizes = [8, 256], strides = [1, 1]} : vector<8x290xf32> to vector<8x256xf32>
    %56 = vector.broadcast %12 : vector<1x256xf32> to vector<8x256xf32>
    %57 = arith.mulf %55, %56 : vector<8x256xf32>
    %58 = vector.extract_strided_slice %47 {offsets = [0, 17], sizes = [8, 256], strides = [1, 1]} : vector<8x290xf32> to vector<8x256xf32>
    %59 = vector.extract_strided_slice %47 {offsets = [0, 18], sizes = [8, 256], strides = [1, 1]} : vector<8x290xf32> to vector<8x256xf32>
    %60 = vector.broadcast %23 : vector<1x256xf32> to vector<8x256xf32>
    %61 = arith.mulf %59, %60 : vector<8x256xf32>
    %62 = vector.extract_strided_slice %47 {offsets = [0, 32], sizes = [8, 256], strides = [1, 1]} : vector<8x290xf32> to vector<8x256xf32>
    %63 = vector.broadcast %12 : vector<1x256xf32> to vector<8x256xf32>
    %64 = arith.mulf %62, %63 : vector<8x256xf32>
    %65 = vector.extract_strided_slice %47 {offsets = [0, 33], sizes = [8, 256], strides = [1, 1]} : vector<8x290xf32> to vector<8x256xf32>
    %66 = vector.extract_strided_slice %47 {offsets = [0, 34], sizes = [8, 256], strides = [1, 1]} : vector<8x290xf32> to vector<8x256xf32>
    %67 = vector.broadcast %23 : vector<1x256xf32> to vector<8x256xf32>
    %68 = arith.mulf %66, %67 : vector<8x256xf32>
    %69 = tpu.concatenate %50, %51, %54, %57, %58, %61, %64, %65, %68 in 0 : vector<8x256xf32>, vector<8x256xf32>, vector<8x256xf32>, vector<8x256xf32>, vector<8x256xf32>, vector<8x256xf32>, vector<8x256xf32>, vector<8x256xf32>, vector<8x256xf32> -> vector<72x256xf32>
    %c0_14 = arith.constant 0 : index
    %c0_15 = arith.constant 0 : index
    %70 = vector.load %arg5[%c0_14, %c0_15] : memref<8x72xf32, #tpu.memory_space<vmem>>, vector<8x72xf32>
    %cst_16 = arith.constant dense<0.000000e+00> : vector<8x256xf32>
    %71 = tpu.matmul %70, %69, %cst_16 {dimension_numbers = #tpu.dot_dimension_numbers<[1], [0], [0], [1], [0, 0, 1, 1], [], []>} : vector<8x72xf32>, vector<72x256xf32>, vector<8x256xf32> -> vector<8x256xf32>
    %c0_17 = arith.constant 0 : index
    %c0_18 = arith.constant 0 : index
    %72 = vector.load %arg6[%c0_17, %c0_18] : memref<8x1xf32, #tpu.memory_space<vmem>>, vector<8x1xf32>
    %73 = vector.broadcast %72 : vector<8x1xf32> to vector<8x256xf32>
    %74 = arith.addf %71, %73 : vector<8x256xf32>
    %c0_19 = arith.constant 0 : index
    %c0_20 = arith.constant 0 : index
    %75 = vector.load %arg7[%c0_19, %c0_20] : memref<8x8xf32, #tpu.memory_space<vmem>>, vector<8x8xf32>
    %cst_21 = arith.constant dense<0.000000e+00> : vector<8x256xf32>
    %76 = tpu.matmul %75, %45, %cst_21 {dimension_numbers = #tpu.dot_dimension_numbers<[1], [0], [0], [1], [0, 0, 1, 1], [], []>} : vector<8x8xf32>, vector<8x256xf32>, vector<8x256xf32> -> vector<8x256xf32>
    %c0_22 = arith.constant 0 : index
    %c0_23 = arith.constant 0 : index
    %77 = vector.load %arg8[%c0_22, %c0_23] : memref<8x1xf32, #tpu.memory_space<vmem>>, vector<8x1xf32>
    %78 = vector.broadcast %77 : vector<8x1xf32> to vector<8x256xf32>
    %79 = arith.addf %76, %78 : vector<8x256xf32>
    %cst_24 = arith.constant 0.000000e+00 : f32
    %80 = vector.broadcast %cst_24 : f32 to vector<8x256xf32>
    %81 = arith.subf %80, %79 : vector<8x256xf32>
    %82 = math.exp %81 : vector<8x256xf32>
    %cst_25 = arith.constant 1.000000e+00 : f32
    %83 = vector.broadcast %cst_25 : f32 to vector<8x256xf32>
    %84 = arith.addf %83, %82 : vector<8x256xf32>
    %85 = tpu.reciprocal %84 {approx = true} : vector<8x256xf32> -> vector<8x256xf32>
    %86 = arith.mulf %45, %85 : vector<8x256xf32>
    %c0_26 = arith.constant 0 : index
    %c0_27 = arith.constant 0 : index
    %87 = vector.load %arg9[%c0_26, %c0_27] : memref<8x8xf32, #tpu.memory_space<vmem>>, vector<8x8xf32>
    %cst_28 = arith.constant dense<0.000000e+00> : vector<8x256xf32>
    %88 = tpu.matmul %87, %45, %cst_28 {dimension_numbers = #tpu.dot_dimension_numbers<[1], [0], [0], [1], [0, 0, 1, 1], [], []>} : vector<8x8xf32>, vector<8x256xf32>, vector<8x256xf32> -> vector<8x256xf32>
    %c0_29 = arith.constant 0 : index
    %c0_30 = arith.constant 0 : index
    %89 = vector.load %arg10[%c0_29, %c0_30] : memref<8x1xf32, #tpu.memory_space<vmem>>, vector<8x1xf32>
    %90 = vector.broadcast %89 : vector<8x1xf32> to vector<8x256xf32>
    %91 = arith.addf %88, %90 : vector<8x256xf32>
    %cst_31 = arith.constant 0.000000e+00 : f32
    %92 = vector.broadcast %cst_31 : f32 to vector<8x256xf32>
    %93 = arith.subf %92, %91 : vector<8x256xf32>
    %94 = math.exp %93 : vector<8x256xf32>
    %cst_32 = arith.constant 1.000000e+00 : f32
    %95 = vector.broadcast %cst_32 : f32 to vector<8x256xf32>
    %96 = arith.addf %95, %94 : vector<8x256xf32>
    %97 = tpu.reciprocal %96 {approx = true} : vector<8x256xf32> -> vector<8x256xf32>
    %98 = arith.mulf %45, %97 : vector<8x256xf32>
    %c0_33 = arith.constant 0 : index
    %99 = memref.load %arg11[%c0_33] : memref<1xf32, #tpu.memory_space<smem>>
    %100 = vector.broadcast %99 : f32 to vector<8x256xf32>
    %101 = arith.mulf %100, %74 : vector<8x256xf32>
    %cst_34 = arith.constant 1.000000e+00 : f32
    %102 = arith.subf %cst_34, %99 : f32
    %103 = vector.broadcast %102 : f32 to vector<8x256xf32>
    %104 = arith.mulf %103, %86 : vector<8x256xf32>
    %105 = arith.addf %101, %104 : vector<8x256xf32>
    %106 = vector.extract_strided_slice %105 {offsets = [0, 0], sizes = [4, 256], strides = [1, 1]} : vector<8x256xf32> to vector<4x256xf32>
    %107 = vector.extract_strided_slice %105 {offsets = [4, 0], sizes = [4, 256], strides = [1, 1]} : vector<8x256xf32> to vector<4x256xf32>
    %c0_35 = arith.constant 0 : index
    %c0_36 = arith.constant 0 : index
    %108 = vector.load %arg12[%c0_35, %c0_36] : memref<2x4xf32, #tpu.memory_space<vmem>>, vector<2x4xf32>
    %cst_37 = arith.constant dense<0.000000e+00> : vector<2x256xf32>
    %109 = tpu.matmul %108, %107, %cst_37 {dimension_numbers = #tpu.dot_dimension_numbers<[1], [0], [0], [1], [0, 0, 1, 1], [], []>} : vector<2x4xf32>, vector<4x256xf32>, vector<2x256xf32> -> vector<2x256xf32>
    %c0_38 = arith.constant 0 : index
    %c0_39 = arith.constant 0 : index
    %110 = vector.load %arg13[%c0_38, %c0_39] : memref<2x1xf32, #tpu.memory_space<vmem>>, vector<2x1xf32>
    %111 = vector.broadcast %110 : vector<2x1xf32> to vector<2x256xf32>
    %112 = arith.addf %109, %111 : vector<2x256xf32>
    %cst_40 = arith.constant 0.000000e+00 : f32
    %113 = vector.broadcast %cst_40 : f32 to vector<2x256xf32>
    %114 = arith.maximumf %112, %113 : vector<2x256xf32>
    %c0_41 = arith.constant 0 : index
    %c0_42 = arith.constant 0 : index
    %115 = vector.load %arg14[%c0_41, %c0_42] : memref<8x2xf32, #tpu.memory_space<vmem>>, vector<8x2xf32>
    %cst_43 = arith.constant dense<0.000000e+00> : vector<8x256xf32>
    %116 = tpu.matmul %115, %114, %cst_43 {dimension_numbers = #tpu.dot_dimension_numbers<[1], [0], [0], [1], [0, 0, 1, 1], [], []>} : vector<8x2xf32>, vector<2x256xf32>, vector<8x256xf32> -> vector<8x256xf32>
    %c0_44 = arith.constant 0 : index
    %c0_45 = arith.constant 0 : index
    %117 = vector.load %arg15[%c0_44, %c0_45] : memref<8x1xf32, #tpu.memory_space<vmem>>, vector<8x1xf32>
    %118 = vector.broadcast %117 : vector<8x1xf32> to vector<8x256xf32>
    %119 = arith.addf %116, %118 : vector<8x256xf32>
    %120 = vector.extract_strided_slice %119 {offsets = [0, 0], sizes = [4, 256], strides = [1, 1]} : vector<8x256xf32> to vector<4x256xf32>
    %cst_46 = arith.constant 0.000000e+00 : f32
    %121 = vector.broadcast %cst_46 : f32 to vector<4x256xf32>
    %122 = arith.subf %121, %120 : vector<4x256xf32>
    %123 = math.exp %122 : vector<4x256xf32>
    %cst_47 = arith.constant 1.000000e+00 : f32
    %124 = vector.broadcast %cst_47 : f32 to vector<4x256xf32>
    %125 = arith.addf %124, %123 : vector<4x256xf32>
    %126 = tpu.reciprocal %125 {approx = true} : vector<4x256xf32> -> vector<4x256xf32>
    %127 = arith.mulf %106, %126 : vector<4x256xf32>
    %128 = vector.extract_strided_slice %119 {offsets = [4, 0], sizes = [4, 256], strides = [1, 1]} : vector<8x256xf32> to vector<4x256xf32>
    %129 = arith.addf %127, %128 : vector<4x256xf32>
    %c0_48 = arith.constant 0 : index
    %c0_49 = arith.constant 0 : index
    %130 = vector.load %arg16[%c0_48, %c0_49] : memref<2x4xf32, #tpu.memory_space<vmem>>, vector<2x4xf32>
    %cst_50 = arith.constant dense<0.000000e+00> : vector<2x256xf32>
    %131 = tpu.matmul %130, %106, %cst_50 {dimension_numbers = #tpu.dot_dimension_numbers<[1], [0], [0], [1], [0, 0, 1, 1], [], []>} : vector<2x4xf32>, vector<4x256xf32>, vector<2x256xf32> -> vector<2x256xf32>
    %c0_51 = arith.constant 0 : index
    %c0_52 = arith.constant 0 : index
    %132 = vector.load %arg17[%c0_51, %c0_52] : memref<2x1xf32, #tpu.memory_space<vmem>>, vector<2x1xf32>
    %133 = vector.broadcast %132 : vector<2x1xf32> to vector<2x256xf32>
    %134 = arith.addf %131, %133 : vector<2x256xf32>
    %cst_53 = arith.constant 0.000000e+00 : f32
    %135 = vector.broadcast %cst_53 : f32 to vector<2x256xf32>
    %136 = arith.maximumf %134, %135 : vector<2x256xf32>
    %c0_54 = arith.constant 0 : index
    %c0_55 = arith.constant 0 : index
    %137 = vector.load %arg18[%c0_54, %c0_55] : memref<8x2xf32, #tpu.memory_space<vmem>>, vector<8x2xf32>
    %cst_56 = arith.constant dense<0.000000e+00> : vector<8x256xf32>
    %138 = tpu.matmul %137, %136, %cst_56 {dimension_numbers = #tpu.dot_dimension_numbers<[1], [0], [0], [1], [0, 0, 1, 1], [], []>} : vector<8x2xf32>, vector<2x256xf32>, vector<8x256xf32> -> vector<8x256xf32>
    %c0_57 = arith.constant 0 : index
    %c0_58 = arith.constant 0 : index
    %139 = vector.load %arg19[%c0_57, %c0_58] : memref<8x1xf32, #tpu.memory_space<vmem>>, vector<8x1xf32>
    %140 = vector.broadcast %139 : vector<8x1xf32> to vector<8x256xf32>
    %141 = arith.addf %138, %140 : vector<8x256xf32>
    %142 = vector.extract_strided_slice %141 {offsets = [0, 0], sizes = [4, 256], strides = [1, 1]} : vector<8x256xf32> to vector<4x256xf32>
    %cst_59 = arith.constant 0.000000e+00 : f32
    %143 = vector.broadcast %cst_59 : f32 to vector<4x256xf32>
    %144 = arith.subf %143, %142 : vector<4x256xf32>
    %145 = math.exp %144 : vector<4x256xf32>
    %cst_60 = arith.constant 1.000000e+00 : f32
    %146 = vector.broadcast %cst_60 : f32 to vector<4x256xf32>
    %147 = arith.addf %146, %145 : vector<4x256xf32>
    %148 = tpu.reciprocal %147 {approx = true} : vector<4x256xf32> -> vector<4x256xf32>
    %149 = arith.mulf %107, %148 : vector<4x256xf32>
    %150 = vector.extract_strided_slice %141 {offsets = [4, 0], sizes = [4, 256], strides = [1, 1]} : vector<8x256xf32> to vector<4x256xf32>
    %151 = arith.addf %149, %150 : vector<4x256xf32>
    %cst_61 = arith.constant 0.000000e+00 : f32
    %152 = vector.broadcast %cst_61 : f32 to vector<4x17xf32>
    %153 = tpu.concatenate %152, %129, %152 in 1 : vector<4x17xf32>, vector<4x256xf32>, vector<4x17xf32> -> vector<4x290xf32>
    %154 = vector.extract_strided_slice %153 {offsets = [0, 0], sizes = [4, 256], strides = [1, 1]} : vector<4x290xf32> to vector<4x256xf32>
    %155 = vector.broadcast %12 : vector<1x256xf32> to vector<4x256xf32>
    %156 = arith.mulf %154, %155 : vector<4x256xf32>
    %157 = vector.extract_strided_slice %153 {offsets = [0, 1], sizes = [4, 256], strides = [1, 1]} : vector<4x290xf32> to vector<4x256xf32>
    %158 = vector.extract_strided_slice %153 {offsets = [0, 2], sizes = [4, 256], strides = [1, 1]} : vector<4x290xf32> to vector<4x256xf32>
    %159 = vector.broadcast %23 : vector<1x256xf32> to vector<4x256xf32>
    %160 = arith.mulf %158, %159 : vector<4x256xf32>
    %161 = vector.extract_strided_slice %153 {offsets = [0, 16], sizes = [4, 256], strides = [1, 1]} : vector<4x290xf32> to vector<4x256xf32>
    %162 = vector.broadcast %12 : vector<1x256xf32> to vector<4x256xf32>
    %163 = arith.mulf %161, %162 : vector<4x256xf32>
    %164 = vector.extract_strided_slice %153 {offsets = [0, 17], sizes = [4, 256], strides = [1, 1]} : vector<4x290xf32> to vector<4x256xf32>
    %165 = vector.extract_strided_slice %153 {offsets = [0, 18], sizes = [4, 256], strides = [1, 1]} : vector<4x290xf32> to vector<4x256xf32>
    %166 = vector.broadcast %23 : vector<1x256xf32> to vector<4x256xf32>
    %167 = arith.mulf %165, %166 : vector<4x256xf32>
    %168 = vector.extract_strided_slice %153 {offsets = [0, 32], sizes = [4, 256], strides = [1, 1]} : vector<4x290xf32> to vector<4x256xf32>
    %169 = vector.broadcast %12 : vector<1x256xf32> to vector<4x256xf32>
    %170 = arith.mulf %168, %169 : vector<4x256xf32>
    %171 = vector.extract_strided_slice %153 {offsets = [0, 33], sizes = [4, 256], strides = [1, 1]} : vector<4x290xf32> to vector<4x256xf32>
    %172 = vector.extract_strided_slice %153 {offsets = [0, 34], sizes = [4, 256], strides = [1, 1]} : vector<4x290xf32> to vector<4x256xf32>
    %173 = vector.broadcast %23 : vector<1x256xf32> to vector<4x256xf32>
    %174 = arith.mulf %172, %173 : vector<4x256xf32>
    %175 = tpu.concatenate %156, %157, %160, %163, %164, %167, %170, %171, %174 in 0 : vector<4x256xf32>, vector<4x256xf32>, vector<4x256xf32>, vector<4x256xf32>, vector<4x256xf32>, vector<4x256xf32>, vector<4x256xf32>, vector<4x256xf32>, vector<4x256xf32> -> vector<36x256xf32>
    %c0_62 = arith.constant 0 : index
    %c0_63 = arith.constant 0 : index
    %176 = vector.load %arg20[%c0_62, %c0_63] : memref<4x36xf32, #tpu.memory_space<vmem>>, vector<4x36xf32>
    %cst_64 = arith.constant dense<0.000000e+00> : vector<4x256xf32>
    %177 = tpu.matmul %176, %175, %cst_64 {dimension_numbers = #tpu.dot_dimension_numbers<[1], [0], [0], [1], [0, 0, 1, 1], [], []>} : vector<4x36xf32>, vector<36x256xf32>, vector<4x256xf32> -> vector<4x256xf32>
    %c0_65 = arith.constant 0 : index
    %c0_66 = arith.constant 0 : index
    %178 = vector.load %arg21[%c0_65, %c0_66] : memref<4x1xf32, #tpu.memory_space<vmem>>, vector<4x1xf32>
    %179 = vector.broadcast %178 : vector<4x1xf32> to vector<4x256xf32>
    %180 = arith.addf %177, %179 : vector<4x256xf32>
    %cst_67 = arith.constant 0.000000e+00 : f32
    %181 = vector.broadcast %cst_67 : f32 to vector<4x17xf32>
    %182 = tpu.concatenate %181, %151, %181 in 1 : vector<4x17xf32>, vector<4x256xf32>, vector<4x17xf32> -> vector<4x290xf32>
    %183 = vector.extract_strided_slice %182 {offsets = [0, 0], sizes = [4, 256], strides = [1, 1]} : vector<4x290xf32> to vector<4x256xf32>
    %184 = vector.broadcast %12 : vector<1x256xf32> to vector<4x256xf32>
    %185 = arith.mulf %183, %184 : vector<4x256xf32>
    %186 = vector.extract_strided_slice %182 {offsets = [0, 1], sizes = [4, 256], strides = [1, 1]} : vector<4x290xf32> to vector<4x256xf32>
    %187 = vector.extract_strided_slice %182 {offsets = [0, 2], sizes = [4, 256], strides = [1, 1]} : vector<4x290xf32> to vector<4x256xf32>
    %188 = vector.broadcast %23 : vector<1x256xf32> to vector<4x256xf32>
    %189 = arith.mulf %187, %188 : vector<4x256xf32>
    %190 = vector.extract_strided_slice %182 {offsets = [0, 16], sizes = [4, 256], strides = [1, 1]} : vector<4x290xf32> to vector<4x256xf32>
    %191 = vector.broadcast %12 : vector<1x256xf32> to vector<4x256xf32>
    %192 = arith.mulf %190, %191 : vector<4x256xf32>
    %193 = vector.extract_strided_slice %182 {offsets = [0, 17], sizes = [4, 256], strides = [1, 1]} : vector<4x290xf32> to vector<4x256xf32>
    %194 = vector.extract_strided_slice %182 {offsets = [0, 18], sizes = [4, 256], strides = [1, 1]} : vector<4x290xf32> to vector<4x256xf32>
    %195 = vector.broadcast %23 : vector<1x256xf32> to vector<4x256xf32>
    %196 = arith.mulf %194, %195 : vector<4x256xf32>
    %197 = vector.extract_strided_slice %182 {offsets = [0, 32], sizes = [4, 256], strides = [1, 1]} : vector<4x290xf32> to vector<4x256xf32>
    %198 = vector.broadcast %12 : vector<1x256xf32> to vector<4x256xf32>
    %199 = arith.mulf %197, %198 : vector<4x256xf32>
    %200 = vector.extract_strided_slice %182 {offsets = [0, 33], sizes = [4, 256], strides = [1, 1]} : vector<4x290xf32> to vector<4x256xf32>
    %201 = vector.extract_strided_slice %182 {offsets = [0, 34], sizes = [4, 256], strides = [1, 1]} : vector<4x290xf32> to vector<4x256xf32>
    %202 = vector.broadcast %23 : vector<1x256xf32> to vector<4x256xf32>
    %203 = arith.mulf %201, %202 : vector<4x256xf32>
    %204 = tpu.concatenate %185, %186, %189, %192, %193, %196, %199, %200, %203 in 0 : vector<4x256xf32>, vector<4x256xf32>, vector<4x256xf32>, vector<4x256xf32>, vector<4x256xf32>, vector<4x256xf32>, vector<4x256xf32>, vector<4x256xf32>, vector<4x256xf32> -> vector<36x256xf32>
    %c0_68 = arith.constant 0 : index
    %c0_69 = arith.constant 0 : index
    %205 = vector.load %arg22[%c0_68, %c0_69] : memref<4x36xf32, #tpu.memory_space<vmem>>, vector<4x36xf32>
    %cst_70 = arith.constant dense<0.000000e+00> : vector<4x256xf32>
    %206 = tpu.matmul %205, %204, %cst_70 {dimension_numbers = #tpu.dot_dimension_numbers<[1], [0], [0], [1], [0, 0, 1, 1], [], []>} : vector<4x36xf32>, vector<36x256xf32>, vector<4x256xf32> -> vector<4x256xf32>
    %c0_71 = arith.constant 0 : index
    %c0_72 = arith.constant 0 : index
    %207 = vector.load %arg23[%c0_71, %c0_72] : memref<4x1xf32, #tpu.memory_space<vmem>>, vector<4x1xf32>
    %208 = vector.broadcast %207 : vector<4x1xf32> to vector<4x256xf32>
    %209 = arith.addf %206, %208 : vector<4x256xf32>
    %210 = tpu.concatenate %180, %209 in 0 : vector<4x256xf32>, vector<4x256xf32> -> vector<8x256xf32>
    %cst_73 = arith.constant 5.000000e-01 : f32
    %211 = vector.broadcast %cst_73 : f32 to vector<8x256xf32>
    %212 = arith.mulf %211, %210 : vector<8x256xf32>
    %cst_74 = arith.constant 4.471500e-02 : f32
    %213 = vector.broadcast %cst_74 : f32 to vector<8x256xf32>
    %214 = arith.mulf %213, %210 : vector<8x256xf32>
    %215 = arith.mulf %214, %210 : vector<8x256xf32>
    %216 = arith.mulf %215, %210 : vector<8x256xf32>
    %217 = arith.addf %210, %216 : vector<8x256xf32>
    %cst_75 = arith.constant 0.797884583 : f32
    %218 = vector.broadcast %cst_75 : f32 to vector<8x256xf32>
    %219 = arith.mulf %218, %217 : vector<8x256xf32>
    %220 = math.tanh %219 : vector<8x256xf32>
    %cst_76 = arith.constant 1.000000e+00 : f32
    %221 = vector.broadcast %cst_76 : f32 to vector<8x256xf32>
    %222 = arith.addf %221, %220 : vector<8x256xf32>
    %223 = arith.mulf %212, %222 : vector<8x256xf32>
    %c0_77 = arith.constant 0 : index
    %c0_78 = arith.constant 0 : index
    %224 = vector.load %arg24[%c0_77, %c0_78] : memref<8x8xf32, #tpu.memory_space<vmem>>, vector<8x8xf32>
    %cst_79 = arith.constant dense<0.000000e+00> : vector<8x256xf32>
    %225 = tpu.matmul %224, %223, %cst_79 {dimension_numbers = #tpu.dot_dimension_numbers<[1], [0], [0], [1], [0, 0, 1, 1], [], []>} : vector<8x8xf32>, vector<8x256xf32>, vector<8x256xf32> -> vector<8x256xf32>
    %c0_80 = arith.constant 0 : index
    %c0_81 = arith.constant 0 : index
    %226 = vector.load %arg25[%c0_80, %c0_81] : memref<8x1xf32, #tpu.memory_space<vmem>>, vector<8x1xf32>
    %227 = vector.broadcast %226 : vector<8x1xf32> to vector<8x256xf32>
    %228 = arith.addf %225, %227 : vector<8x256xf32>
    %cst_82 = arith.constant 0.000000e+00 : f32
    %229 = vector.broadcast %cst_82 : f32 to vector<8x256xf32>
    %230 = arith.subf %229, %228 : vector<8x256xf32>
    %231 = math.exp %230 : vector<8x256xf32>
    %cst_83 = arith.constant 1.000000e+00 : f32
    %232 = vector.broadcast %cst_83 : f32 to vector<8x256xf32>
    %233 = arith.addf %232, %231 : vector<8x256xf32>
    %234 = tpu.reciprocal %233 {approx = true} : vector<8x256xf32> -> vector<8x256xf32>
    %235 = arith.mulf %223, %234 : vector<8x256xf32>
    %236 = tpu.concatenate %105, %235 in 0 : vector<8x256xf32>, vector<8x256xf32> -> vector<16x256xf32>
    %237 = vector.extract_strided_slice %236 {offsets = [0, 0], sizes = [8, 256], strides = [1, 1]} : vector<16x256xf32> to vector<8x256xf32>
    %238 = vector.extract_strided_slice %236 {offsets = [8, 0], sizes = [8, 256], strides = [1, 1]} : vector<16x256xf32> to vector<8x256xf32>
    %c0_84 = arith.constant 0 : index
    %c0_85 = arith.constant 0 : index
    %239 = vector.load %arg26[%c0_84, %c0_85] : memref<4x8xf32, #tpu.memory_space<vmem>>, vector<4x8xf32>
    %cst_86 = arith.constant dense<0.000000e+00> : vector<4x256xf32>
    %240 = tpu.matmul %239, %238, %cst_86 {dimension_numbers = #tpu.dot_dimension_numbers<[1], [0], [0], [1], [0, 0, 1, 1], [], []>} : vector<4x8xf32>, vector<8x256xf32>, vector<4x256xf32> -> vector<4x256xf32>
    %c0_87 = arith.constant 0 : index
    %c0_88 = arith.constant 0 : index
    %241 = vector.load %arg27[%c0_87, %c0_88] : memref<4x1xf32, #tpu.memory_space<vmem>>, vector<4x1xf32>
    %242 = vector.broadcast %241 : vector<4x1xf32> to vector<4x256xf32>
    %243 = arith.addf %240, %242 : vector<4x256xf32>
    %cst_89 = arith.constant 0.000000e+00 : f32
    %244 = vector.broadcast %cst_89 : f32 to vector<4x256xf32>
    %245 = arith.maximumf %243, %244 : vector<4x256xf32>
    %c0_90 = arith.constant 0 : index
    %c0_91 = arith.constant 0 : index
    %246 = vector.load %arg28[%c0_90, %c0_91] : memref<16x4xf32, #tpu.memory_space<vmem>>, vector<16x4xf32>
    %cst_92 = arith.constant dense<0.000000e+00> : vector<16x256xf32>
    %247 = tpu.matmul %246, %245, %cst_92 {dimension_numbers = #tpu.dot_dimension_numbers<[1], [0], [0], [1], [0, 0, 1, 1], [], []>} : vector<16x4xf32>, vector<4x256xf32>, vector<16x256xf32> -> vector<16x256xf32>
    %c0_93 = arith.constant 0 : index
    %c0_94 = arith.constant 0 : index
    %248 = vector.load %arg29[%c0_93, %c0_94] : memref<16x1xf32, #tpu.memory_space<vmem>>, vector<16x1xf32>
    %249 = vector.broadcast %248 : vector<16x1xf32> to vector<16x256xf32>
    %250 = arith.addf %247, %249 : vector<16x256xf32>
    %251 = vector.extract_strided_slice %250 {offsets = [0, 0], sizes = [8, 256], strides = [1, 1]} : vector<16x256xf32> to vector<8x256xf32>
    %cst_95 = arith.constant 0.000000e+00 : f32
    %252 = vector.broadcast %cst_95 : f32 to vector<8x256xf32>
    %253 = arith.subf %252, %251 : vector<8x256xf32>
    %254 = math.exp %253 : vector<8x256xf32>
    %cst_96 = arith.constant 1.000000e+00 : f32
    %255 = vector.broadcast %cst_96 : f32 to vector<8x256xf32>
    %256 = arith.addf %255, %254 : vector<8x256xf32>
    %257 = tpu.reciprocal %256 {approx = true} : vector<8x256xf32> -> vector<8x256xf32>
    %258 = arith.mulf %237, %257 : vector<8x256xf32>
    %259 = vector.extract_strided_slice %250 {offsets = [8, 0], sizes = [8, 256], strides = [1, 1]} : vector<16x256xf32> to vector<8x256xf32>
    %260 = arith.addf %258, %259 : vector<8x256xf32>
    %c0_97 = arith.constant 0 : index
    %c0_98 = arith.constant 0 : index
    %261 = vector.load %arg30[%c0_97, %c0_98] : memref<4x8xf32, #tpu.memory_space<vmem>>, vector<4x8xf32>
    %cst_99 = arith.constant dense<0.000000e+00> : vector<4x256xf32>
    %262 = tpu.matmul %261, %237, %cst_99 {dimension_numbers = #tpu.dot_dimension_numbers<[1], [0], [0], [1], [0, 0, 1, 1], [], []>} : vector<4x8xf32>, vector<8x256xf32>, vector<4x256xf32> -> vector<4x256xf32>
    %c0_100 = arith.constant 0 : index
    %c0_101 = arith.constant 0 : index
    %263 = vector.load %arg31[%c0_100, %c0_101] : memref<4x1xf32, #tpu.memory_space<vmem>>, vector<4x1xf32>
    %264 = vector.broadcast %263 : vector<4x1xf32> to vector<4x256xf32>
    %265 = arith.addf %262, %264 : vector<4x256xf32>
    %cst_102 = arith.constant 0.000000e+00 : f32
    %266 = vector.broadcast %cst_102 : f32 to vector<4x256xf32>
    %267 = arith.maximumf %265, %266 : vector<4x256xf32>
    %c0_103 = arith.constant 0 : index
    %c0_104 = arith.constant 0 : index
    %268 = vector.load %arg32[%c0_103, %c0_104] : memref<16x4xf32, #tpu.memory_space<vmem>>, vector<16x4xf32>
    %cst_105 = arith.constant dense<0.000000e+00> : vector<16x256xf32>
    %269 = tpu.matmul %268, %267, %cst_105 {dimension_numbers = #tpu.dot_dimension_numbers<[1], [0], [0], [1], [0, 0, 1, 1], [], []>} : vector<16x4xf32>, vector<4x256xf32>, vector<16x256xf32> -> vector<16x256xf32>
    %c0_106 = arith.constant 0 : index
    %c0_107 = arith.constant 0 : index
    %270 = vector.load %arg33[%c0_106, %c0_107] : memref<16x1xf32, #tpu.memory_space<vmem>>, vector<16x1xf32>
    %271 = vector.broadcast %270 : vector<16x1xf32> to vector<16x256xf32>
    %272 = arith.addf %269, %271 : vector<16x256xf32>
    %273 = vector.extract_strided_slice %272 {offsets = [0, 0], sizes = [8, 256], strides = [1, 1]} : vector<16x256xf32> to vector<8x256xf32>
    %cst_108 = arith.constant 0.000000e+00 : f32
    %274 = vector.broadcast %cst_108 : f32 to vector<8x256xf32>
    %275 = arith.subf %274, %273 : vector<8x256xf32>
    %276 = math.exp %275 : vector<8x256xf32>
    %cst_109 = arith.constant 1.000000e+00 : f32
    %277 = vector.broadcast %cst_109 : f32 to vector<8x256xf32>
    %278 = arith.addf %277, %276 : vector<8x256xf32>
    %279 = tpu.reciprocal %278 {approx = true} : vector<8x256xf32> -> vector<8x256xf32>
    %280 = arith.mulf %238, %279 : vector<8x256xf32>
    %281 = vector.extract_strided_slice %272 {offsets = [8, 0], sizes = [8, 256], strides = [1, 1]} : vector<16x256xf32> to vector<8x256xf32>
    %282 = arith.addf %280, %281 : vector<8x256xf32>
    %cst_110 = arith.constant 0.000000e+00 : f32
    %283 = vector.broadcast %cst_110 : f32 to vector<8x17xf32>
    %284 = tpu.concatenate %283, %260, %283 in 1 : vector<8x17xf32>, vector<8x256xf32>, vector<8x17xf32> -> vector<8x290xf32>
    %285 = vector.extract_strided_slice %284 {offsets = [0, 0], sizes = [8, 256], strides = [1, 1]} : vector<8x290xf32> to vector<8x256xf32>
    %286 = vector.broadcast %12 : vector<1x256xf32> to vector<8x256xf32>
    %287 = arith.mulf %285, %286 : vector<8x256xf32>
    %288 = vector.extract_strided_slice %284 {offsets = [0, 1], sizes = [8, 256], strides = [1, 1]} : vector<8x290xf32> to vector<8x256xf32>
    %289 = vector.extract_strided_slice %284 {offsets = [0, 2], sizes = [8, 256], strides = [1, 1]} : vector<8x290xf32> to vector<8x256xf32>
    %290 = vector.broadcast %23 : vector<1x256xf32> to vector<8x256xf32>
    %291 = arith.mulf %289, %290 : vector<8x256xf32>
    %292 = vector.extract_strided_slice %284 {offsets = [0, 16], sizes = [8, 256], strides = [1, 1]} : vector<8x290xf32> to vector<8x256xf32>
    %293 = vector.broadcast %12 : vector<1x256xf32> to vector<8x256xf32>
    %294 = arith.mulf %292, %293 : vector<8x256xf32>
    %295 = vector.extract_strided_slice %284 {offsets = [0, 17], sizes = [8, 256], strides = [1, 1]} : vector<8x290xf32> to vector<8x256xf32>
    %296 = vector.extract_strided_slice %284 {offsets = [0, 18], sizes = [8, 256], strides = [1, 1]} : vector<8x290xf32> to vector<8x256xf32>
    %297 = vector.broadcast %23 : vector<1x256xf32> to vector<8x256xf32>
    %298 = arith.mulf %296, %297 : vector<8x256xf32>
    %299 = vector.extract_strided_slice %284 {offsets = [0, 32], sizes = [8, 256], strides = [1, 1]} : vector<8x290xf32> to vector<8x256xf32>
    %300 = vector.broadcast %12 : vector<1x256xf32> to vector<8x256xf32>
    %301 = arith.mulf %299, %300 : vector<8x256xf32>
    %302 = vector.extract_strided_slice %284 {offsets = [0, 33], sizes = [8, 256], strides = [1, 1]} : vector<8x290xf32> to vector<8x256xf32>
    %303 = vector.extract_strided_slice %284 {offsets = [0, 34], sizes = [8, 256], strides = [1, 1]} : vector<8x290xf32> to vector<8x256xf32>
    %304 = vector.broadcast %23 : vector<1x256xf32> to vector<8x256xf32>
    %305 = arith.mulf %303, %304 : vector<8x256xf32>
    %306 = tpu.concatenate %287, %288, %291, %294, %295, %298, %301, %302, %305 in 0 : vector<8x256xf32>, vector<8x256xf32>, vector<8x256xf32>, vector<8x256xf32>, vector<8x256xf32>, vector<8x256xf32>, vector<8x256xf32>, vector<8x256xf32>, vector<8x256xf32> -> vector<72x256xf32>
    %c0_111 = arith.constant 0 : index
    %c0_112 = arith.constant 0 : index
    %307 = vector.load %arg34[%c0_111, %c0_112] : memref<4x72xf32, #tpu.memory_space<vmem>>, vector<4x72xf32>
    %cst_113 = arith.constant dense<0.000000e+00> : vector<4x256xf32>
    %308 = tpu.matmul %307, %306, %cst_113 {dimension_numbers = #tpu.dot_dimension_numbers<[1], [0], [0], [1], [0, 0, 1, 1], [], []>} : vector<4x72xf32>, vector<72x256xf32>, vector<4x256xf32> -> vector<4x256xf32>
    %c0_114 = arith.constant 0 : index
    %c0_115 = arith.constant 0 : index
    %309 = vector.load %arg35[%c0_114, %c0_115] : memref<4x1xf32, #tpu.memory_space<vmem>>, vector<4x1xf32>
    %310 = vector.broadcast %309 : vector<4x1xf32> to vector<4x256xf32>
    %311 = arith.addf %308, %310 : vector<4x256xf32>
    %cst_116 = arith.constant 0.000000e+00 : f32
    %312 = vector.broadcast %cst_116 : f32 to vector<8x17xf32>
    %313 = tpu.concatenate %312, %282, %312 in 1 : vector<8x17xf32>, vector<8x256xf32>, vector<8x17xf32> -> vector<8x290xf32>
    %314 = vector.extract_strided_slice %313 {offsets = [0, 0], sizes = [8, 256], strides = [1, 1]} : vector<8x290xf32> to vector<8x256xf32>
    %315 = vector.broadcast %12 : vector<1x256xf32> to vector<8x256xf32>
    %316 = arith.mulf %314, %315 : vector<8x256xf32>
    %317 = vector.extract_strided_slice %313 {offsets = [0, 1], sizes = [8, 256], strides = [1, 1]} : vector<8x290xf32> to vector<8x256xf32>
    %318 = vector.extract_strided_slice %313 {offsets = [0, 2], sizes = [8, 256], strides = [1, 1]} : vector<8x290xf32> to vector<8x256xf32>
    %319 = vector.broadcast %23 : vector<1x256xf32> to vector<8x256xf32>
    %320 = arith.mulf %318, %319 : vector<8x256xf32>
    %321 = vector.extract_strided_slice %313 {offsets = [0, 16], sizes = [8, 256], strides = [1, 1]} : vector<8x290xf32> to vector<8x256xf32>
    %322 = vector.broadcast %12 : vector<1x256xf32> to vector<8x256xf32>
    %323 = arith.mulf %321, %322 : vector<8x256xf32>
    %324 = vector.extract_strided_slice %313 {offsets = [0, 17], sizes = [8, 256], strides = [1, 1]} : vector<8x290xf32> to vector<8x256xf32>
    %325 = vector.extract_strided_slice %313 {offsets = [0, 18], sizes = [8, 256], strides = [1, 1]} : vector<8x290xf32> to vector<8x256xf32>
    %326 = vector.broadcast %23 : vector<1x256xf32> to vector<8x256xf32>
    %327 = arith.mulf %325, %326 : vector<8x256xf32>
    %328 = vector.extract_strided_slice %313 {offsets = [0, 32], sizes = [8, 256], strides = [1, 1]} : vector<8x290xf32> to vector<8x256xf32>
    %329 = vector.broadcast %12 : vector<1x256xf32> to vector<8x256xf32>
    %330 = arith.mulf %328, %329 : vector<8x256xf32>
    %331 = vector.extract_strided_slice %313 {offsets = [0, 33], sizes = [8, 256], strides = [1, 1]} : vector<8x290xf32> to vector<8x256xf32>
    %332 = vector.extract_strided_slice %313 {offsets = [0, 34], sizes = [8, 256], strides = [1, 1]} : vector<8x290xf32> to vector<8x256xf32>
    %333 = vector.broadcast %23 : vector<1x256xf32> to vector<8x256xf32>
    %334 = arith.mulf %332, %333 : vector<8x256xf32>
    %335 = tpu.concatenate %316, %317, %320, %323, %324, %327, %330, %331, %334 in 0 : vector<8x256xf32>, vector<8x256xf32>, vector<8x256xf32>, vector<8x256xf32>, vector<8x256xf32>, vector<8x256xf32>, vector<8x256xf32>, vector<8x256xf32>, vector<8x256xf32> -> vector<72x256xf32>
    %c0_117 = arith.constant 0 : index
    %c0_118 = arith.constant 0 : index
    %336 = vector.load %arg36[%c0_117, %c0_118] : memref<4x72xf32, #tpu.memory_space<vmem>>, vector<4x72xf32>
    %cst_119 = arith.constant dense<0.000000e+00> : vector<4x256xf32>
    %337 = tpu.matmul %336, %335, %cst_119 {dimension_numbers = #tpu.dot_dimension_numbers<[1], [0], [0], [1], [0, 0, 1, 1], [], []>} : vector<4x72xf32>, vector<72x256xf32>, vector<4x256xf32> -> vector<4x256xf32>
    %c0_120 = arith.constant 0 : index
    %c0_121 = arith.constant 0 : index
    %338 = vector.load %arg37[%c0_120, %c0_121] : memref<4x1xf32, #tpu.memory_space<vmem>>, vector<4x1xf32>
    %339 = vector.broadcast %338 : vector<4x1xf32> to vector<4x256xf32>
    %340 = arith.addf %337, %339 : vector<4x256xf32>
    %341 = tpu.concatenate %311, %340 in 0 : vector<4x256xf32>, vector<4x256xf32> -> vector<8x256xf32>
    %cst_122 = arith.constant 5.000000e-01 : f32
    %342 = vector.broadcast %cst_122 : f32 to vector<8x256xf32>
    %343 = arith.mulf %342, %341 : vector<8x256xf32>
    %cst_123 = arith.constant 4.471500e-02 : f32
    %344 = vector.broadcast %cst_123 : f32 to vector<8x256xf32>
    %345 = arith.mulf %344, %341 : vector<8x256xf32>
    %346 = arith.mulf %345, %341 : vector<8x256xf32>
    %347 = arith.mulf %346, %341 : vector<8x256xf32>
    %348 = arith.addf %341, %347 : vector<8x256xf32>
    %cst_124 = arith.constant 0.797884583 : f32
    %349 = vector.broadcast %cst_124 : f32 to vector<8x256xf32>
    %350 = arith.mulf %349, %348 : vector<8x256xf32>
    %351 = math.tanh %350 : vector<8x256xf32>
    %cst_125 = arith.constant 1.000000e+00 : f32
    %352 = vector.broadcast %cst_125 : f32 to vector<8x256xf32>
    %353 = arith.addf %352, %351 : vector<8x256xf32>
    %354 = arith.mulf %343, %353 : vector<8x256xf32>
    %c0_126 = arith.constant 0 : index
    %c0_127 = arith.constant 0 : index
    %355 = vector.load %arg38[%c0_126, %c0_127] : memref<8x8xf32, #tpu.memory_space<vmem>>, vector<8x8xf32>
    %cst_128 = arith.constant dense<0.000000e+00> : vector<8x256xf32>
    %356 = tpu.matmul %355, %354, %cst_128 {dimension_numbers = #tpu.dot_dimension_numbers<[1], [0], [0], [1], [0, 0, 1, 1], [], []>} : vector<8x8xf32>, vector<8x256xf32>, vector<8x256xf32> -> vector<8x256xf32>
    %c0_129 = arith.constant 0 : index
    %c0_130 = arith.constant 0 : index
    %357 = vector.load %arg39[%c0_129, %c0_130] : memref<8x1xf32, #tpu.memory_space<vmem>>, vector<8x1xf32>
    %358 = vector.broadcast %357 : vector<8x1xf32> to vector<8x256xf32>
    %359 = arith.addf %356, %358 : vector<8x256xf32>
    %cst_131 = arith.constant 0.000000e+00 : f32
    %360 = vector.broadcast %cst_131 : f32 to vector<8x256xf32>
    %361 = arith.subf %360, %359 : vector<8x256xf32>
    %362 = math.exp %361 : vector<8x256xf32>
    %cst_132 = arith.constant 1.000000e+00 : f32
    %363 = vector.broadcast %cst_132 : f32 to vector<8x256xf32>
    %364 = arith.addf %363, %362 : vector<8x256xf32>
    %365 = tpu.reciprocal %364 {approx = true} : vector<8x256xf32> -> vector<8x256xf32>
    %366 = arith.mulf %354, %365 : vector<8x256xf32>
    %367 = tpu.concatenate %236, %366 in 0 : vector<16x256xf32>, vector<8x256xf32> -> vector<24x256xf32>
    %c0_133 = arith.constant 0 : index
    %c0_134 = arith.constant 0 : index
    %368 = vector.load %arg40[%c0_133, %c0_134] : memref<8x24xf32, #tpu.memory_space<vmem>>, vector<8x24xf32>
    %cst_135 = arith.constant dense<0.000000e+00> : vector<8x256xf32>
    %369 = tpu.matmul %368, %367, %cst_135 {dimension_numbers = #tpu.dot_dimension_numbers<[1], [0], [0], [1], [0, 0, 1, 1], [], []>} : vector<8x24xf32>, vector<24x256xf32>, vector<8x256xf32> -> vector<8x256xf32>
    %c0_136 = arith.constant 0 : index
    %c0_137 = arith.constant 0 : index
    %370 = vector.load %arg41[%c0_136, %c0_137] : memref<8x1xf32, #tpu.memory_space<vmem>>, vector<8x1xf32>
    %371 = vector.broadcast %370 : vector<8x1xf32> to vector<8x256xf32>
    %372 = arith.addf %369, %371 : vector<8x256xf32>
    %c0_138 = arith.constant 0 : index
    %373 = memref.load %arg42[%c0_138] : memref<1xf32, #tpu.memory_space<smem>>
    %374 = vector.broadcast %373 : f32 to vector<8x256xf32>
    %375 = arith.mulf %374, %372 : vector<8x256xf32>
    %cst_139 = arith.constant 1.000000e+00 : f32
    %376 = arith.subf %cst_139, %373 : f32
    %377 = vector.broadcast %376 : f32 to vector<8x256xf32>
    %378 = arith.mulf %377, %105 : vector<8x256xf32>
    %379 = arith.addf %375, %378 : vector<8x256xf32>
    %380 = vector.extract_strided_slice %379 {offsets = [0, 0], sizes = [4, 256], strides = [1, 1]} : vector<8x256xf32> to vector<4x256xf32>
    %381 = vector.extract_strided_slice %379 {offsets = [4, 0], sizes = [4, 256], strides = [1, 1]} : vector<8x256xf32> to vector<4x256xf32>
    %c0_140 = arith.constant 0 : index
    %c0_141 = arith.constant 0 : index
    %382 = vector.load %arg43[%c0_140, %c0_141] : memref<2x4xf32, #tpu.memory_space<vmem>>, vector<2x4xf32>
    %cst_142 = arith.constant dense<0.000000e+00> : vector<2x256xf32>
    %383 = tpu.matmul %382, %381, %cst_142 {dimension_numbers = #tpu.dot_dimension_numbers<[1], [0], [0], [1], [0, 0, 1, 1], [], []>} : vector<2x4xf32>, vector<4x256xf32>, vector<2x256xf32> -> vector<2x256xf32>
    %c0_143 = arith.constant 0 : index
    %c0_144 = arith.constant 0 : index
    %384 = vector.load %arg44[%c0_143, %c0_144] : memref<2x1xf32, #tpu.memory_space<vmem>>, vector<2x1xf32>
    %385 = vector.broadcast %384 : vector<2x1xf32> to vector<2x256xf32>
    %386 = arith.addf %383, %385 : vector<2x256xf32>
    %cst_145 = arith.constant 0.000000e+00 : f32
    %387 = vector.broadcast %cst_145 : f32 to vector<2x256xf32>
    %388 = arith.maximumf %386, %387 : vector<2x256xf32>
    %c0_146 = arith.constant 0 : index
    %c0_147 = arith.constant 0 : index
    %389 = vector.load %arg45[%c0_146, %c0_147] : memref<8x2xf32, #tpu.memory_space<vmem>>, vector<8x2xf32>
    %cst_148 = arith.constant dense<0.000000e+00> : vector<8x256xf32>
    %390 = tpu.matmul %389, %388, %cst_148 {dimension_numbers = #tpu.dot_dimension_numbers<[1], [0], [0], [1], [0, 0, 1, 1], [], []>} : vector<8x2xf32>, vector<2x256xf32>, vector<8x256xf32> -> vector<8x256xf32>
    %c0_149 = arith.constant 0 : index
    %c0_150 = arith.constant 0 : index
    %391 = vector.load %arg46[%c0_149, %c0_150] : memref<8x1xf32, #tpu.memory_space<vmem>>, vector<8x1xf32>
    %392 = vector.broadcast %391 : vector<8x1xf32> to vector<8x256xf32>
    %393 = arith.addf %390, %392 : vector<8x256xf32>
    %394 = vector.extract_strided_slice %393 {offsets = [0, 0], sizes = [4, 256], strides = [1, 1]} : vector<8x256xf32> to vector<4x256xf32>
    %cst_151 = arith.constant 0.000000e+00 : f32
    %395 = vector.broadcast %cst_151 : f32 to vector<4x256xf32>
    %396 = arith.subf %395, %394 : vector<4x256xf32>
    %397 = math.exp %396 : vector<4x256xf32>
    %cst_152 = arith.constant 1.000000e+00 : f32
    %398 = vector.broadcast %cst_152 : f32 to vector<4x256xf32>
    %399 = arith.addf %398, %397 : vector<4x256xf32>
    %400 = tpu.reciprocal %399 {approx = true} : vector<4x256xf32> -> vector<4x256xf32>
    %401 = arith.mulf %380, %400 : vector<4x256xf32>
    %402 = vector.extract_strided_slice %393 {offsets = [4, 0], sizes = [4, 256], strides = [1, 1]} : vector<8x256xf32> to vector<4x256xf32>
    %403 = arith.addf %401, %402 : vector<4x256xf32>
    %c0_153 = arith.constant 0 : index
    %c0_154 = arith.constant 0 : index
    %404 = vector.load %arg47[%c0_153, %c0_154] : memref<2x4xf32, #tpu.memory_space<vmem>>, vector<2x4xf32>
    %cst_155 = arith.constant dense<0.000000e+00> : vector<2x256xf32>
    %405 = tpu.matmul %404, %380, %cst_155 {dimension_numbers = #tpu.dot_dimension_numbers<[1], [0], [0], [1], [0, 0, 1, 1], [], []>} : vector<2x4xf32>, vector<4x256xf32>, vector<2x256xf32> -> vector<2x256xf32>
    %c0_156 = arith.constant 0 : index
    %c0_157 = arith.constant 0 : index
    %406 = vector.load %arg48[%c0_156, %c0_157] : memref<2x1xf32, #tpu.memory_space<vmem>>, vector<2x1xf32>
    %407 = vector.broadcast %406 : vector<2x1xf32> to vector<2x256xf32>
    %408 = arith.addf %405, %407 : vector<2x256xf32>
    %cst_158 = arith.constant 0.000000e+00 : f32
    %409 = vector.broadcast %cst_158 : f32 to vector<2x256xf32>
    %410 = arith.maximumf %408, %409 : vector<2x256xf32>
    %c0_159 = arith.constant 0 : index
    %c0_160 = arith.constant 0 : index
    %411 = vector.load %arg49[%c0_159, %c0_160] : memref<8x2xf32, #tpu.memory_space<vmem>>, vector<8x2xf32>
    %cst_161 = arith.constant dense<0.000000e+00> : vector<8x256xf32>
    %412 = tpu.matmul %411, %410, %cst_161 {dimension_numbers = #tpu.dot_dimension_numbers<[1], [0], [0], [1], [0, 0, 1, 1], [], []>} : vector<8x2xf32>, vector<2x256xf32>, vector<8x256xf32> -> vector<8x256xf32>
    %c0_162 = arith.constant 0 : index
    %c0_163 = arith.constant 0 : index
    %413 = vector.load %arg50[%c0_162, %c0_163] : memref<8x1xf32, #tpu.memory_space<vmem>>, vector<8x1xf32>
    %414 = vector.broadcast %413 : vector<8x1xf32> to vector<8x256xf32>
    %415 = arith.addf %412, %414 : vector<8x256xf32>
    %416 = vector.extract_strided_slice %415 {offsets = [0, 0], sizes = [4, 256], strides = [1, 1]} : vector<8x256xf32> to vector<4x256xf32>
    %cst_164 = arith.constant 0.000000e+00 : f32
    %417 = vector.broadcast %cst_164 : f32 to vector<4x256xf32>
    %418 = arith.subf %417, %416 : vector<4x256xf32>
    %419 = math.exp %418 : vector<4x256xf32>
    %cst_165 = arith.constant 1.000000e+00 : f32
    %420 = vector.broadcast %cst_165 : f32 to vector<4x256xf32>
    %421 = arith.addf %420, %419 : vector<4x256xf32>
    %422 = tpu.reciprocal %421 {approx = true} : vector<4x256xf32> -> vector<4x256xf32>
    %423 = arith.mulf %381, %422 : vector<4x256xf32>
    %424 = vector.extract_strided_slice %415 {offsets = [4, 0], sizes = [4, 256], strides = [1, 1]} : vector<8x256xf32> to vector<4x256xf32>
    %425 = arith.addf %423, %424 : vector<4x256xf32>
    %cst_166 = arith.constant 0.000000e+00 : f32
    %426 = vector.broadcast %cst_166 : f32 to vector<4x17xf32>
    %427 = tpu.concatenate %426, %403, %426 in 1 : vector<4x17xf32>, vector<4x256xf32>, vector<4x17xf32> -> vector<4x290xf32>
    %428 = vector.extract_strided_slice %427 {offsets = [0, 0], sizes = [4, 256], strides = [1, 1]} : vector<4x290xf32> to vector<4x256xf32>
    %429 = vector.broadcast %12 : vector<1x256xf32> to vector<4x256xf32>
    %430 = arith.mulf %428, %429 : vector<4x256xf32>
    %431 = vector.extract_strided_slice %427 {offsets = [0, 1], sizes = [4, 256], strides = [1, 1]} : vector<4x290xf32> to vector<4x256xf32>
    %432 = vector.extract_strided_slice %427 {offsets = [0, 2], sizes = [4, 256], strides = [1, 1]} : vector<4x290xf32> to vector<4x256xf32>
    %433 = vector.broadcast %23 : vector<1x256xf32> to vector<4x256xf32>
    %434 = arith.mulf %432, %433 : vector<4x256xf32>
    %435 = vector.extract_strided_slice %427 {offsets = [0, 16], sizes = [4, 256], strides = [1, 1]} : vector<4x290xf32> to vector<4x256xf32>
    %436 = vector.broadcast %12 : vector<1x256xf32> to vector<4x256xf32>
    %437 = arith.mulf %435, %436 : vector<4x256xf32>
    %438 = vector.extract_strided_slice %427 {offsets = [0, 17], sizes = [4, 256], strides = [1, 1]} : vector<4x290xf32> to vector<4x256xf32>
    %439 = vector.extract_strided_slice %427 {offsets = [0, 18], sizes = [4, 256], strides = [1, 1]} : vector<4x290xf32> to vector<4x256xf32>
    %440 = vector.broadcast %23 : vector<1x256xf32> to vector<4x256xf32>
    %441 = arith.mulf %439, %440 : vector<4x256xf32>
    %442 = vector.extract_strided_slice %427 {offsets = [0, 32], sizes = [4, 256], strides = [1, 1]} : vector<4x290xf32> to vector<4x256xf32>
    %443 = vector.broadcast %12 : vector<1x256xf32> to vector<4x256xf32>
    %444 = arith.mulf %442, %443 : vector<4x256xf32>
    %445 = vector.extract_strided_slice %427 {offsets = [0, 33], sizes = [4, 256], strides = [1, 1]} : vector<4x290xf32> to vector<4x256xf32>
    %446 = vector.extract_strided_slice %427 {offsets = [0, 34], sizes = [4, 256], strides = [1, 1]} : vector<4x290xf32> to vector<4x256xf32>
    %447 = vector.broadcast %23 : vector<1x256xf32> to vector<4x256xf32>
    %448 = arith.mulf %446, %447 : vector<4x256xf32>
    %449 = tpu.concatenate %430, %431, %434, %437, %438, %441, %444, %445, %448 in 0 : vector<4x256xf32>, vector<4x256xf32>, vector<4x256xf32>, vector<4x256xf32>, vector<4x256xf32>, vector<4x256xf32>, vector<4x256xf32>, vector<4x256xf32>, vector<4x256xf32> -> vector<36x256xf32>
    %c0_167 = arith.constant 0 : index
    %c0_168 = arith.constant 0 : index
    %450 = vector.load %arg51[%c0_167, %c0_168] : memref<4x36xf32, #tpu.memory_space<vmem>>, vector<4x36xf32>
    %cst_169 = arith.constant dense<0.000000e+00> : vector<4x256xf32>
    %451 = tpu.matmul %450, %449, %cst_169 {dimension_numbers = #tpu.dot_dimension_numbers<[1], [0], [0], [1], [0, 0, 1, 1], [], []>} : vector<4x36xf32>, vector<36x256xf32>, vector<4x256xf32> -> vector<4x256xf32>
    %c0_170 = arith.constant 0 : index
    %c0_171 = arith.constant 0 : index
    %452 = vector.load %arg52[%c0_170, %c0_171] : memref<4x1xf32, #tpu.memory_space<vmem>>, vector<4x1xf32>
    %453 = vector.broadcast %452 : vector<4x1xf32> to vector<4x256xf32>
    %454 = arith.addf %451, %453 : vector<4x256xf32>
    %cst_172 = arith.constant 0.000000e+00 : f32
    %455 = vector.broadcast %cst_172 : f32 to vector<4x17xf32>
    %456 = tpu.concatenate %455, %425, %455 in 1 : vector<4x17xf32>, vector<4x256xf32>, vector<4x17xf32> -> vector<4x290xf32>
    %457 = vector.extract_strided_slice %456 {offsets = [0, 0], sizes = [4, 256], strides = [1, 1]} : vector<4x290xf32> to vector<4x256xf32>
    %458 = vector.broadcast %12 : vector<1x256xf32> to vector<4x256xf32>
    %459 = arith.mulf %457, %458 : vector<4x256xf32>
    %460 = vector.extract_strided_slice %456 {offsets = [0, 1], sizes = [4, 256], strides = [1, 1]} : vector<4x290xf32> to vector<4x256xf32>
    %461 = vector.extract_strided_slice %456 {offsets = [0, 2], sizes = [4, 256], strides = [1, 1]} : vector<4x290xf32> to vector<4x256xf32>
    %462 = vector.broadcast %23 : vector<1x256xf32> to vector<4x256xf32>
    %463 = arith.mulf %461, %462 : vector<4x256xf32>
    %464 = vector.extract_strided_slice %456 {offsets = [0, 16], sizes = [4, 256], strides = [1, 1]} : vector<4x290xf32> to vector<4x256xf32>
    %465 = vector.broadcast %12 : vector<1x256xf32> to vector<4x256xf32>
    %466 = arith.mulf %464, %465 : vector<4x256xf32>
    %467 = vector.extract_strided_slice %456 {offsets = [0, 17], sizes = [4, 256], strides = [1, 1]} : vector<4x290xf32> to vector<4x256xf32>
    %468 = vector.extract_strided_slice %456 {offsets = [0, 18], sizes = [4, 256], strides = [1, 1]} : vector<4x290xf32> to vector<4x256xf32>
    %469 = vector.broadcast %23 : vector<1x256xf32> to vector<4x256xf32>
    %470 = arith.mulf %468, %469 : vector<4x256xf32>
    %471 = vector.extract_strided_slice %456 {offsets = [0, 32], sizes = [4, 256], strides = [1, 1]} : vector<4x290xf32> to vector<4x256xf32>
    %472 = vector.broadcast %12 : vector<1x256xf32> to vector<4x256xf32>
    %473 = arith.mulf %471, %472 : vector<4x256xf32>
    %474 = vector.extract_strided_slice %456 {offsets = [0, 33], sizes = [4, 256], strides = [1, 1]} : vector<4x290xf32> to vector<4x256xf32>
    %475 = vector.extract_strided_slice %456 {offsets = [0, 34], sizes = [4, 256], strides = [1, 1]} : vector<4x290xf32> to vector<4x256xf32>
    %476 = vector.broadcast %23 : vector<1x256xf32> to vector<4x256xf32>
    %477 = arith.mulf %475, %476 : vector<4x256xf32>
    %478 = tpu.concatenate %459, %460, %463, %466, %467, %470, %473, %474, %477 in 0 : vector<4x256xf32>, vector<4x256xf32>, vector<4x256xf32>, vector<4x256xf32>, vector<4x256xf32>, vector<4x256xf32>, vector<4x256xf32>, vector<4x256xf32>, vector<4x256xf32> -> vector<36x256xf32>
    %c0_173 = arith.constant 0 : index
    %c0_174 = arith.constant 0 : index
    %479 = vector.load %arg53[%c0_173, %c0_174] : memref<4x36xf32, #tpu.memory_space<vmem>>, vector<4x36xf32>
    %cst_175 = arith.constant dense<0.000000e+00> : vector<4x256xf32>
    %480 = tpu.matmul %479, %478, %cst_175 {dimension_numbers = #tpu.dot_dimension_numbers<[1], [0], [0], [1], [0, 0, 1, 1], [], []>} : vector<4x36xf32>, vector<36x256xf32>, vector<4x256xf32> -> vector<4x256xf32>
    %c0_176 = arith.constant 0 : index
    %c0_177 = arith.constant 0 : index
    %481 = vector.load %arg54[%c0_176, %c0_177] : memref<4x1xf32, #tpu.memory_space<vmem>>, vector<4x1xf32>
    %482 = vector.broadcast %481 : vector<4x1xf32> to vector<4x256xf32>
    %483 = arith.addf %480, %482 : vector<4x256xf32>
    %484 = tpu.concatenate %454, %483 in 0 : vector<4x256xf32>, vector<4x256xf32> -> vector<8x256xf32>
    %cst_178 = arith.constant 5.000000e-01 : f32
    %485 = vector.broadcast %cst_178 : f32 to vector<8x256xf32>
    %486 = arith.mulf %485, %484 : vector<8x256xf32>
    %cst_179 = arith.constant 4.471500e-02 : f32
    %487 = vector.broadcast %cst_179 : f32 to vector<8x256xf32>
    %488 = arith.mulf %487, %484 : vector<8x256xf32>
    %489 = arith.mulf %488, %484 : vector<8x256xf32>
    %490 = arith.mulf %489, %484 : vector<8x256xf32>
    %491 = arith.addf %484, %490 : vector<8x256xf32>
    %cst_180 = arith.constant 0.797884583 : f32
    %492 = vector.broadcast %cst_180 : f32 to vector<8x256xf32>
    %493 = arith.mulf %492, %491 : vector<8x256xf32>
    %494 = math.tanh %493 : vector<8x256xf32>
    %cst_181 = arith.constant 1.000000e+00 : f32
    %495 = vector.broadcast %cst_181 : f32 to vector<8x256xf32>
    %496 = arith.addf %495, %494 : vector<8x256xf32>
    %497 = arith.mulf %486, %496 : vector<8x256xf32>
    %c0_182 = arith.constant 0 : index
    %c0_183 = arith.constant 0 : index
    %498 = vector.load %arg55[%c0_182, %c0_183] : memref<8x8xf32, #tpu.memory_space<vmem>>, vector<8x8xf32>
    %cst_184 = arith.constant dense<0.000000e+00> : vector<8x256xf32>
    %499 = tpu.matmul %498, %497, %cst_184 {dimension_numbers = #tpu.dot_dimension_numbers<[1], [0], [0], [1], [0, 0, 1, 1], [], []>} : vector<8x8xf32>, vector<8x256xf32>, vector<8x256xf32> -> vector<8x256xf32>
    %c0_185 = arith.constant 0 : index
    %c0_186 = arith.constant 0 : index
    %500 = vector.load %arg56[%c0_185, %c0_186] : memref<8x1xf32, #tpu.memory_space<vmem>>, vector<8x1xf32>
    %501 = vector.broadcast %500 : vector<8x1xf32> to vector<8x256xf32>
    %502 = arith.addf %499, %501 : vector<8x256xf32>
    %cst_187 = arith.constant 0.000000e+00 : f32
    %503 = vector.broadcast %cst_187 : f32 to vector<8x256xf32>
    %504 = arith.subf %503, %502 : vector<8x256xf32>
    %505 = math.exp %504 : vector<8x256xf32>
    %cst_188 = arith.constant 1.000000e+00 : f32
    %506 = vector.broadcast %cst_188 : f32 to vector<8x256xf32>
    %507 = arith.addf %506, %505 : vector<8x256xf32>
    %508 = tpu.reciprocal %507 {approx = true} : vector<8x256xf32> -> vector<8x256xf32>
    %509 = arith.mulf %497, %508 : vector<8x256xf32>
    %510 = tpu.concatenate %379, %509 in 0 : vector<8x256xf32>, vector<8x256xf32> -> vector<16x256xf32>
    %511 = vector.extract_strided_slice %510 {offsets = [0, 0], sizes = [8, 256], strides = [1, 1]} : vector<16x256xf32> to vector<8x256xf32>
    %512 = vector.extract_strided_slice %510 {offsets = [8, 0], sizes = [8, 256], strides = [1, 1]} : vector<16x256xf32> to vector<8x256xf32>
    %c0_189 = arith.constant 0 : index
    %c0_190 = arith.constant 0 : index
    %513 = vector.load %arg57[%c0_189, %c0_190] : memref<4x8xf32, #tpu.memory_space<vmem>>, vector<4x8xf32>
    %cst_191 = arith.constant dense<0.000000e+00> : vector<4x256xf32>
    %514 = tpu.matmul %513, %512, %cst_191 {dimension_numbers = #tpu.dot_dimension_numbers<[1], [0], [0], [1], [0, 0, 1, 1], [], []>} : vector<4x8xf32>, vector<8x256xf32>, vector<4x256xf32> -> vector<4x256xf32>
    %c0_192 = arith.constant 0 : index
    %c0_193 = arith.constant 0 : index
    %515 = vector.load %arg58[%c0_192, %c0_193] : memref<4x1xf32, #tpu.memory_space<vmem>>, vector<4x1xf32>
    %516 = vector.broadcast %515 : vector<4x1xf32> to vector<4x256xf32>
    %517 = arith.addf %514, %516 : vector<4x256xf32>
    %cst_194 = arith.constant 0.000000e+00 : f32
    %518 = vector.broadcast %cst_194 : f32 to vector<4x256xf32>
    %519 = arith.maximumf %517, %518 : vector<4x256xf32>
    %c0_195 = arith.constant 0 : index
    %c0_196 = arith.constant 0 : index
    %520 = vector.load %arg59[%c0_195, %c0_196] : memref<16x4xf32, #tpu.memory_space<vmem>>, vector<16x4xf32>
    %cst_197 = arith.constant dense<0.000000e+00> : vector<16x256xf32>
    %521 = tpu.matmul %520, %519, %cst_197 {dimension_numbers = #tpu.dot_dimension_numbers<[1], [0], [0], [1], [0, 0, 1, 1], [], []>} : vector<16x4xf32>, vector<4x256xf32>, vector<16x256xf32> -> vector<16x256xf32>
    %c0_198 = arith.constant 0 : index
    %c0_199 = arith.constant 0 : index
    %522 = vector.load %arg60[%c0_198, %c0_199] : memref<16x1xf32, #tpu.memory_space<vmem>>, vector<16x1xf32>
    %523 = vector.broadcast %522 : vector<16x1xf32> to vector<16x256xf32>
    %524 = arith.addf %521, %523 : vector<16x256xf32>
    %525 = vector.extract_strided_slice %524 {offsets = [0, 0], sizes = [8, 256], strides = [1, 1]} : vector<16x256xf32> to vector<8x256xf32>
    %cst_200 = arith.constant 0.000000e+00 : f32
    %526 = vector.broadcast %cst_200 : f32 to vector<8x256xf32>
    %527 = arith.subf %526, %525 : vector<8x256xf32>
    %528 = math.exp %527 : vector<8x256xf32>
    %cst_201 = arith.constant 1.000000e+00 : f32
    %529 = vector.broadcast %cst_201 : f32 to vector<8x256xf32>
    %530 = arith.addf %529, %528 : vector<8x256xf32>
    %531 = tpu.reciprocal %530 {approx = true} : vector<8x256xf32> -> vector<8x256xf32>
    %532 = arith.mulf %511, %531 : vector<8x256xf32>
    %533 = vector.extract_strided_slice %524 {offsets = [8, 0], sizes = [8, 256], strides = [1, 1]} : vector<16x256xf32> to vector<8x256xf32>
    %534 = arith.addf %532, %533 : vector<8x256xf32>
    %c0_202 = arith.constant 0 : index
    %c0_203 = arith.constant 0 : index
    %535 = vector.load %arg61[%c0_202, %c0_203] : memref<4x8xf32, #tpu.memory_space<vmem>>, vector<4x8xf32>
    %cst_204 = arith.constant dense<0.000000e+00> : vector<4x256xf32>
    %536 = tpu.matmul %535, %511, %cst_204 {dimension_numbers = #tpu.dot_dimension_numbers<[1], [0], [0], [1], [0, 0, 1, 1], [], []>} : vector<4x8xf32>, vector<8x256xf32>, vector<4x256xf32> -> vector<4x256xf32>
    %c0_205 = arith.constant 0 : index
    %c0_206 = arith.constant 0 : index
    %537 = vector.load %arg62[%c0_205, %c0_206] : memref<4x1xf32, #tpu.memory_space<vmem>>, vector<4x1xf32>
    %538 = vector.broadcast %537 : vector<4x1xf32> to vector<4x256xf32>
    %539 = arith.addf %536, %538 : vector<4x256xf32>
    %cst_207 = arith.constant 0.000000e+00 : f32
    %540 = vector.broadcast %cst_207 : f32 to vector<4x256xf32>
    %541 = arith.maximumf %539, %540 : vector<4x256xf32>
    %c0_208 = arith.constant 0 : index
    %c0_209 = arith.constant 0 : index
    %542 = vector.load %arg63[%c0_208, %c0_209] : memref<16x4xf32, #tpu.memory_space<vmem>>, vector<16x4xf32>
    %cst_210 = arith.constant dense<0.000000e+00> : vector<16x256xf32>
    %543 = tpu.matmul %542, %541, %cst_210 {dimension_numbers = #tpu.dot_dimension_numbers<[1], [0], [0], [1], [0, 0, 1, 1], [], []>} : vector<16x4xf32>, vector<4x256xf32>, vector<16x256xf32> -> vector<16x256xf32>
    %c0_211 = arith.constant 0 : index
    %c0_212 = arith.constant 0 : index
    %544 = vector.load %arg64[%c0_211, %c0_212] : memref<16x1xf32, #tpu.memory_space<vmem>>, vector<16x1xf32>
    %545 = vector.broadcast %544 : vector<16x1xf32> to vector<16x256xf32>
    %546 = arith.addf %543, %545 : vector<16x256xf32>
    %547 = vector.extract_strided_slice %546 {offsets = [0, 0], sizes = [8, 256], strides = [1, 1]} : vector<16x256xf32> to vector<8x256xf32>
    %cst_213 = arith.constant 0.000000e+00 : f32
    %548 = vector.broadcast %cst_213 : f32 to vector<8x256xf32>
    %549 = arith.subf %548, %547 : vector<8x256xf32>
    %550 = math.exp %549 : vector<8x256xf32>
    %cst_214 = arith.constant 1.000000e+00 : f32
    %551 = vector.broadcast %cst_214 : f32 to vector<8x256xf32>
    %552 = arith.addf %551, %550 : vector<8x256xf32>
    %553 = tpu.reciprocal %552 {approx = true} : vector<8x256xf32> -> vector<8x256xf32>
    %554 = arith.mulf %512, %553 : vector<8x256xf32>
    %555 = vector.extract_strided_slice %546 {offsets = [8, 0], sizes = [8, 256], strides = [1, 1]} : vector<16x256xf32> to vector<8x256xf32>
    %556 = arith.addf %554, %555 : vector<8x256xf32>
    %cst_215 = arith.constant 0.000000e+00 : f32
    %557 = vector.broadcast %cst_215 : f32 to vector<8x17xf32>
    %558 = tpu.concatenate %557, %534, %557 in 1 : vector<8x17xf32>, vector<8x256xf32>, vector<8x17xf32> -> vector<8x290xf32>
    %559 = vector.extract_strided_slice %558 {offsets = [0, 0], sizes = [8, 256], strides = [1, 1]} : vector<8x290xf32> to vector<8x256xf32>
    %560 = vector.broadcast %12 : vector<1x256xf32> to vector<8x256xf32>
    %561 = arith.mulf %559, %560 : vector<8x256xf32>
    %562 = vector.extract_strided_slice %558 {offsets = [0, 1], sizes = [8, 256], strides = [1, 1]} : vector<8x290xf32> to vector<8x256xf32>
    %563 = vector.extract_strided_slice %558 {offsets = [0, 2], sizes = [8, 256], strides = [1, 1]} : vector<8x290xf32> to vector<8x256xf32>
    %564 = vector.broadcast %23 : vector<1x256xf32> to vector<8x256xf32>
    %565 = arith.mulf %563, %564 : vector<8x256xf32>
    %566 = vector.extract_strided_slice %558 {offsets = [0, 16], sizes = [8, 256], strides = [1, 1]} : vector<8x290xf32> to vector<8x256xf32>
    %567 = vector.broadcast %12 : vector<1x256xf32> to vector<8x256xf32>
    %568 = arith.mulf %566, %567 : vector<8x256xf32>
    %569 = vector.extract_strided_slice %558 {offsets = [0, 17], sizes = [8, 256], strides = [1, 1]} : vector<8x290xf32> to vector<8x256xf32>
    %570 = vector.extract_strided_slice %558 {offsets = [0, 18], sizes = [8, 256], strides = [1, 1]} : vector<8x290xf32> to vector<8x256xf32>
    %571 = vector.broadcast %23 : vector<1x256xf32> to vector<8x256xf32>
    %572 = arith.mulf %570, %571 : vector<8x256xf32>
    %573 = vector.extract_strided_slice %558 {offsets = [0, 32], sizes = [8, 256], strides = [1, 1]} : vector<8x290xf32> to vector<8x256xf32>
    %574 = vector.broadcast %12 : vector<1x256xf32> to vector<8x256xf32>
    %575 = arith.mulf %573, %574 : vector<8x256xf32>
    %576 = vector.extract_strided_slice %558 {offsets = [0, 33], sizes = [8, 256], strides = [1, 1]} : vector<8x290xf32> to vector<8x256xf32>
    %577 = vector.extract_strided_slice %558 {offsets = [0, 34], sizes = [8, 256], strides = [1, 1]} : vector<8x290xf32> to vector<8x256xf32>
    %578 = vector.broadcast %23 : vector<1x256xf32> to vector<8x256xf32>
    %579 = arith.mulf %577, %578 : vector<8x256xf32>
    %580 = tpu.concatenate %561, %562, %565, %568, %569, %572, %575, %576, %579 in 0 : vector<8x256xf32>, vector<8x256xf32>, vector<8x256xf32>, vector<8x256xf32>, vector<8x256xf32>, vector<8x256xf32>, vector<8x256xf32>, vector<8x256xf32>, vector<8x256xf32> -> vector<72x256xf32>
    %c0_216 = arith.constant 0 : index
    %c0_217 = arith.constant 0 : index
    %581 = vector.load %arg65[%c0_216, %c0_217] : memref<4x72xf32, #tpu.memory_space<vmem>>, vector<4x72xf32>
    %cst_218 = arith.constant dense<0.000000e+00> : vector<4x256xf32>
    %582 = tpu.matmul %581, %580, %cst_218 {dimension_numbers = #tpu.dot_dimension_numbers<[1], [0], [0], [1], [0, 0, 1, 1], [], []>} : vector<4x72xf32>, vector<72x256xf32>, vector<4x256xf32> -> vector<4x256xf32>
    %c0_219 = arith.constant 0 : index
    %c0_220 = arith.constant 0 : index
    %583 = vector.load %arg66[%c0_219, %c0_220] : memref<4x1xf32, #tpu.memory_space<vmem>>, vector<4x1xf32>
    %584 = vector.broadcast %583 : vector<4x1xf32> to vector<4x256xf32>
    %585 = arith.addf %582, %584 : vector<4x256xf32>
    %cst_221 = arith.constant 0.000000e+00 : f32
    %586 = vector.broadcast %cst_221 : f32 to vector<8x17xf32>
    %587 = tpu.concatenate %586, %556, %586 in 1 : vector<8x17xf32>, vector<8x256xf32>, vector<8x17xf32> -> vector<8x290xf32>
    %588 = vector.extract_strided_slice %587 {offsets = [0, 0], sizes = [8, 256], strides = [1, 1]} : vector<8x290xf32> to vector<8x256xf32>
    %589 = vector.broadcast %12 : vector<1x256xf32> to vector<8x256xf32>
    %590 = arith.mulf %588, %589 : vector<8x256xf32>
    %591 = vector.extract_strided_slice %587 {offsets = [0, 1], sizes = [8, 256], strides = [1, 1]} : vector<8x290xf32> to vector<8x256xf32>
    %592 = vector.extract_strided_slice %587 {offsets = [0, 2], sizes = [8, 256], strides = [1, 1]} : vector<8x290xf32> to vector<8x256xf32>
    %593 = vector.broadcast %23 : vector<1x256xf32> to vector<8x256xf32>
    %594 = arith.mulf %592, %593 : vector<8x256xf32>
    %595 = vector.extract_strided_slice %587 {offsets = [0, 16], sizes = [8, 256], strides = [1, 1]} : vector<8x290xf32> to vector<8x256xf32>
    %596 = vector.broadcast %12 : vector<1x256xf32> to vector<8x256xf32>
    %597 = arith.mulf %595, %596 : vector<8x256xf32>
    %598 = vector.extract_strided_slice %587 {offsets = [0, 17], sizes = [8, 256], strides = [1, 1]} : vector<8x290xf32> to vector<8x256xf32>
    %599 = vector.extract_strided_slice %587 {offsets = [0, 18], sizes = [8, 256], strides = [1, 1]} : vector<8x290xf32> to vector<8x256xf32>
    %600 = vector.broadcast %23 : vector<1x256xf32> to vector<8x256xf32>
    %601 = arith.mulf %599, %600 : vector<8x256xf32>
    %602 = vector.extract_strided_slice %587 {offsets = [0, 32], sizes = [8, 256], strides = [1, 1]} : vector<8x290xf32> to vector<8x256xf32>
    %603 = vector.broadcast %12 : vector<1x256xf32> to vector<8x256xf32>
    %604 = arith.mulf %602, %603 : vector<8x256xf32>
    %605 = vector.extract_strided_slice %587 {offsets = [0, 33], sizes = [8, 256], strides = [1, 1]} : vector<8x290xf32> to vector<8x256xf32>
    %606 = vector.extract_strided_slice %587 {offsets = [0, 34], sizes = [8, 256], strides = [1, 1]} : vector<8x290xf32> to vector<8x256xf32>
    %607 = vector.broadcast %23 : vector<1x256xf32> to vector<8x256xf32>
    %608 = arith.mulf %606, %607 : vector<8x256xf32>
    %609 = tpu.concatenate %590, %591, %594, %597, %598, %601, %604, %605, %608 in 0 : vector<8x256xf32>, vector<8x256xf32>, vector<8x256xf32>, vector<8x256xf32>, vector<8x256xf32>, vector<8x256xf32>, vector<8x256xf32>, vector<8x256xf32>, vector<8x256xf32> -> vector<72x256xf32>
    %c0_222 = arith.constant 0 : index
    %c0_223 = arith.constant 0 : index
    %610 = vector.load %arg67[%c0_222, %c0_223] : memref<4x72xf32, #tpu.memory_space<vmem>>, vector<4x72xf32>
    %cst_224 = arith.constant dense<0.000000e+00> : vector<4x256xf32>
    %611 = tpu.matmul %610, %609, %cst_224 {dimension_numbers = #tpu.dot_dimension_numbers<[1], [0], [0], [1], [0, 0, 1, 1], [], []>} : vector<4x72xf32>, vector<72x256xf32>, vector<4x256xf32> -> vector<4x256xf32>
    %c0_225 = arith.constant 0 : index
    %c0_226 = arith.constant 0 : index
    %612 = vector.load %arg68[%c0_225, %c0_226] : memref<4x1xf32, #tpu.memory_space<vmem>>, vector<4x1xf32>
    %613 = vector.broadcast %612 : vector<4x1xf32> to vector<4x256xf32>
    %614 = arith.addf %611, %613 : vector<4x256xf32>
    %615 = tpu.concatenate %585, %614 in 0 : vector<4x256xf32>, vector<4x256xf32> -> vector<8x256xf32>
    %cst_227 = arith.constant 5.000000e-01 : f32
    %616 = vector.broadcast %cst_227 : f32 to vector<8x256xf32>
    %617 = arith.mulf %616, %615 : vector<8x256xf32>
    %cst_228 = arith.constant 4.471500e-02 : f32
    %618 = vector.broadcast %cst_228 : f32 to vector<8x256xf32>
    %619 = arith.mulf %618, %615 : vector<8x256xf32>
    %620 = arith.mulf %619, %615 : vector<8x256xf32>
    %621 = arith.mulf %620, %615 : vector<8x256xf32>
    %622 = arith.addf %615, %621 : vector<8x256xf32>
    %cst_229 = arith.constant 0.797884583 : f32
    %623 = vector.broadcast %cst_229 : f32 to vector<8x256xf32>
    %624 = arith.mulf %623, %622 : vector<8x256xf32>
    %625 = math.tanh %624 : vector<8x256xf32>
    %cst_230 = arith.constant 1.000000e+00 : f32
    %626 = vector.broadcast %cst_230 : f32 to vector<8x256xf32>
    %627 = arith.addf %626, %625 : vector<8x256xf32>
    %628 = arith.mulf %617, %627 : vector<8x256xf32>
    %c0_231 = arith.constant 0 : index
    %c0_232 = arith.constant 0 : index
    %629 = vector.load %arg69[%c0_231, %c0_232] : memref<8x8xf32, #tpu.memory_space<vmem>>, vector<8x8xf32>
    %cst_233 = arith.constant dense<0.000000e+00> : vector<8x256xf32>
    %630 = tpu.matmul %629, %628, %cst_233 {dimension_numbers = #tpu.dot_dimension_numbers<[1], [0], [0], [1], [0, 0, 1, 1], [], []>} : vector<8x8xf32>, vector<8x256xf32>, vector<8x256xf32> -> vector<8x256xf32>
    %c0_234 = arith.constant 0 : index
    %c0_235 = arith.constant 0 : index
    %631 = vector.load %arg70[%c0_234, %c0_235] : memref<8x1xf32, #tpu.memory_space<vmem>>, vector<8x1xf32>
    %632 = vector.broadcast %631 : vector<8x1xf32> to vector<8x256xf32>
    %633 = arith.addf %630, %632 : vector<8x256xf32>
    %cst_236 = arith.constant 0.000000e+00 : f32
    %634 = vector.broadcast %cst_236 : f32 to vector<8x256xf32>
    %635 = arith.subf %634, %633 : vector<8x256xf32>
    %636 = math.exp %635 : vector<8x256xf32>
    %cst_237 = arith.constant 1.000000e+00 : f32
    %637 = vector.broadcast %cst_237 : f32 to vector<8x256xf32>
    %638 = arith.addf %637, %636 : vector<8x256xf32>
    %639 = tpu.reciprocal %638 {approx = true} : vector<8x256xf32> -> vector<8x256xf32>
    %640 = arith.mulf %628, %639 : vector<8x256xf32>
    %641 = tpu.concatenate %510, %640 in 0 : vector<16x256xf32>, vector<8x256xf32> -> vector<24x256xf32>
    %c0_238 = arith.constant 0 : index
    %c0_239 = arith.constant 0 : index
    %642 = vector.load %arg71[%c0_238, %c0_239] : memref<8x24xf32, #tpu.memory_space<vmem>>, vector<8x24xf32>
    %cst_240 = arith.constant dense<0.000000e+00> : vector<8x256xf32>
    %643 = tpu.matmul %642, %641, %cst_240 {dimension_numbers = #tpu.dot_dimension_numbers<[1], [0], [0], [1], [0, 0, 1, 1], [], []>} : vector<8x24xf32>, vector<24x256xf32>, vector<8x256xf32> -> vector<8x256xf32>
    %c0_241 = arith.constant 0 : index
    %c0_242 = arith.constant 0 : index
    %644 = vector.load %arg72[%c0_241, %c0_242] : memref<8x1xf32, #tpu.memory_space<vmem>>, vector<8x1xf32>
    %645 = vector.broadcast %644 : vector<8x1xf32> to vector<8x256xf32>
    %646 = arith.addf %643, %645 : vector<8x256xf32>
    %c0_243 = arith.constant 0 : index
    %647 = memref.load %arg73[%c0_243] : memref<1xf32, #tpu.memory_space<smem>>
    %648 = vector.broadcast %647 : f32 to vector<8x256xf32>
    %649 = arith.mulf %648, %646 : vector<8x256xf32>
    %cst_244 = arith.constant 1.000000e+00 : f32
    %650 = arith.subf %cst_244, %647 : f32
    %651 = vector.broadcast %650 : f32 to vector<8x256xf32>
    %652 = arith.mulf %651, %379 : vector<8x256xf32>
    %653 = arith.addf %649, %652 : vector<8x256xf32>
    %654 = tpu.concatenate %379, %653 in 0 : vector<8x256xf32>, vector<8x256xf32> -> vector<16x256xf32>
    %c0_245 = arith.constant 0 : index
    %c0_246 = arith.constant 0 : index
    %655 = vector.load %arg74[%c0_245, %c0_246] : memref<8x16xf32, #tpu.memory_space<vmem>>, vector<8x16xf32>
    %cst_247 = arith.constant dense<0.000000e+00> : vector<8x256xf32>
    %656 = tpu.matmul %655, %654, %cst_247 {dimension_numbers = #tpu.dot_dimension_numbers<[1], [0], [0], [1], [0, 0, 1, 1], [], []>} : vector<8x16xf32>, vector<16x256xf32>, vector<8x256xf32> -> vector<8x256xf32>
    %c0_248 = arith.constant 0 : index
    %c0_249 = arith.constant 0 : index
    %657 = vector.load %arg75[%c0_248, %c0_249] : memref<8x1xf32, #tpu.memory_space<vmem>>, vector<8x1xf32>
    %658 = vector.broadcast %657 : vector<8x1xf32> to vector<8x256xf32>
    %659 = arith.addf %656, %658 : vector<8x256xf32>
    %cst_250 = arith.constant 0.000000e+00 : f32
    %660 = vector.broadcast %cst_250 : f32 to vector<8x17xf32>
    %661 = tpu.concatenate %660, %659, %660 in 1 : vector<8x17xf32>, vector<8x256xf32>, vector<8x17xf32> -> vector<8x290xf32>
    %662 = vector.extract_strided_slice %661 {offsets = [0, 0], sizes = [8, 256], strides = [1, 1]} : vector<8x290xf32> to vector<8x256xf32>
    %663 = vector.broadcast %12 : vector<1x256xf32> to vector<8x256xf32>
    %664 = arith.mulf %662, %663 : vector<8x256xf32>
    %665 = vector.extract_strided_slice %661 {offsets = [0, 1], sizes = [8, 256], strides = [1, 1]} : vector<8x290xf32> to vector<8x256xf32>
    %666 = vector.extract_strided_slice %661 {offsets = [0, 2], sizes = [8, 256], strides = [1, 1]} : vector<8x290xf32> to vector<8x256xf32>
    %667 = vector.broadcast %23 : vector<1x256xf32> to vector<8x256xf32>
    %668 = arith.mulf %666, %667 : vector<8x256xf32>
    %669 = vector.extract_strided_slice %661 {offsets = [0, 16], sizes = [8, 256], strides = [1, 1]} : vector<8x290xf32> to vector<8x256xf32>
    %670 = vector.broadcast %12 : vector<1x256xf32> to vector<8x256xf32>
    %671 = arith.mulf %669, %670 : vector<8x256xf32>
    %672 = vector.extract_strided_slice %661 {offsets = [0, 17], sizes = [8, 256], strides = [1, 1]} : vector<8x290xf32> to vector<8x256xf32>
    %673 = vector.extract_strided_slice %661 {offsets = [0, 18], sizes = [8, 256], strides = [1, 1]} : vector<8x290xf32> to vector<8x256xf32>
    %674 = vector.broadcast %23 : vector<1x256xf32> to vector<8x256xf32>
    %675 = arith.mulf %673, %674 : vector<8x256xf32>
    %676 = vector.extract_strided_slice %661 {offsets = [0, 32], sizes = [8, 256], strides = [1, 1]} : vector<8x290xf32> to vector<8x256xf32>
    %677 = vector.broadcast %12 : vector<1x256xf32> to vector<8x256xf32>
    %678 = arith.mulf %676, %677 : vector<8x256xf32>
    %679 = vector.extract_strided_slice %661 {offsets = [0, 33], sizes = [8, 256], strides = [1, 1]} : vector<8x290xf32> to vector<8x256xf32>
    %680 = vector.extract_strided_slice %661 {offsets = [0, 34], sizes = [8, 256], strides = [1, 1]} : vector<8x290xf32> to vector<8x256xf32>
    %681 = vector.broadcast %23 : vector<1x256xf32> to vector<8x256xf32>
    %682 = arith.mulf %680, %681 : vector<8x256xf32>
    %683 = tpu.concatenate %664, %665, %668, %671, %672, %675, %678, %679, %682 in 0 : vector<8x256xf32>, vector<8x256xf32>, vector<8x256xf32>, vector<8x256xf32>, vector<8x256xf32>, vector<8x256xf32>, vector<8x256xf32>, vector<8x256xf32>, vector<8x256xf32> -> vector<72x256xf32>
    %c0_251 = arith.constant 0 : index
    %c0_252 = arith.constant 0 : index
    %684 = vector.load %arg76[%c0_251, %c0_252] : memref<8x72xf32, #tpu.memory_space<vmem>>, vector<8x72xf32>
    %cst_253 = arith.constant dense<0.000000e+00> : vector<8x256xf32>
    %685 = tpu.matmul %684, %683, %cst_253 {dimension_numbers = #tpu.dot_dimension_numbers<[1], [0], [0], [1], [0, 0, 1, 1], [], []>} : vector<8x72xf32>, vector<72x256xf32>, vector<8x256xf32> -> vector<8x256xf32>
    %c0_254 = arith.constant 0 : index
    %c0_255 = arith.constant 0 : index
    %686 = vector.load %arg77[%c0_254, %c0_255] : memref<8x1xf32, #tpu.memory_space<vmem>>, vector<8x1xf32>
    %687 = vector.broadcast %686 : vector<8x1xf32> to vector<8x256xf32>
    %688 = arith.addf %685, %687 : vector<8x256xf32>
    %c0_256 = arith.constant 0 : index
    %689 = memref.load %arg78[%c0_256] : memref<1xf32, #tpu.memory_space<smem>>
    %690 = vector.broadcast %689 : f32 to vector<8x256xf32>
    %691 = arith.mulf %690, %688 : vector<8x256xf32>
    %cst_257 = arith.constant 1.000000e+00 : f32
    %692 = arith.subf %cst_257, %689 : f32
    %693 = vector.broadcast %692 : f32 to vector<8x256xf32>
    %694 = arith.mulf %693, %98 : vector<8x256xf32>
    %695 = arith.addf %691, %694 : vector<8x256xf32>
    %c0_258 = arith.constant 0 : index
    %c0_259 = arith.constant 0 : index
    %c0_260 = arith.constant 0 : index
    %696 = vector.load %arg79[%c0_258, %c0_259, %c0_260] : memref<1x8x256xf32, #tpu.memory_space<vmem>>, vector<1x8x256xf32>
    %697 = vector.shape_cast %696 : vector<1x8x256xf32> to vector<8x256xf32>
    %698 = vector.shape_cast %695 : vector<8x256xf32> to vector<1x8x256xf32>
    tpu.vector_store %arg79[%c0_258, %c0_259, %c0_260], %698 {strides = array<i32>} : memref<1x8x256xf32, #tpu.memory_space<vmem>>, vector<1x8x256xf32>,
    return
  }
  func.func @transform_0(%arg0: i32) -> (i32, i32, i32) {
    %c0_i32 = arith.constant 0 : i32
    %c0_i32_0 = arith.constant 0 : i32
    %c0_i32_1 = arith.constant 0 : i32
    return %arg0, %c0_i32, %c0_i32_0 : i32, i32, i32
  }
  func.func @transform_1(%arg0: i32) -> (i32, i32) {
    %c0_i32 = arith.constant 0 : i32
    %c0_i32_0 = arith.constant 0 : i32
    %c0_i32_1 = arith.constant 0 : i32
    return %c0_i32, %c0_i32_0 : i32, i32
  }
  func.func @transform_2(%arg0: i32) -> (i32, i32) {
    %c0_i32 = arith.constant 0 : i32
    %c0_i32_0 = arith.constant 0 : i32
    %c0_i32_1 = arith.constant 0 : i32
    return %c0_i32, %c0_i32_0 : i32, i32
  }
  func.func @transform_3(%arg0: i32) -> (i32, i32) {
    %c0_i32 = arith.constant 0 : i32
    %c0_i32_0 = arith.constant 0 : i32
    %c0_i32_1 = arith.constant 0 : i32
    return %c0_i32, %c0_i32_0 : i32, i32
  }
  func.func @transform_4(%arg0: i32) -> (i32, i32) {
    %c0_i32 = arith.constant 0 : i32
    %c0_i32_0 = arith.constant 0 : i32
    %c0_i32_1 = arith.constant 0 : i32
    return %c0_i32, %c0_i32_0 : i32, i32
  }
  func.func @transform_5(%arg0: i32) -> (i32, i32) {
    %c0_i32 = arith.constant 0 : i32
    %c0_i32_0 = arith.constant 0 : i32
    %c0_i32_1 = arith.constant 0 : i32
    return %c0_i32, %c0_i32_0 : i32, i32
  }
  func.func @transform_6(%arg0: i32) -> (i32, i32) {
    %c0_i32 = arith.constant 0 : i32
    %c0_i32_0 = arith.constant 0 : i32
    %c0_i32_1 = arith.constant 0 : i32
    return %c0_i32, %c0_i32_0 : i32, i32
  }
  func.func @transform_7(%arg0: i32) -> (i32, i32) {
    %c0_i32 = arith.constant 0 : i32
    %c0_i32_0 = arith.constant 0 : i32
    %c0_i32_1 = arith.constant 0 : i32
    return %c0_i32, %c0_i32_0 : i32, i32
  }
  func.func @transform_8(%arg0: i32) -> (i32, i32) {
    %c0_i32 = arith.constant 0 : i32
    %c0_i32_0 = arith.constant 0 : i32
    %c0_i32_1 = arith.constant 0 : i32
    return %c0_i32, %c0_i32_0 : i32, i32
  }
  func.func @transform_9(%arg0: i32) -> (i32, i32) {
    %c0_i32 = arith.constant 0 : i32
    %c0_i32_0 = arith.constant 0 : i32
    %c0_i32_1 = arith.constant 0 : i32
    return %c0_i32, %c0_i32_0 : i32, i32
  }
  func.func @transform_10(%arg0: i32) -> i32 {
    %c0_i32 = arith.constant 0 : i32
    %c0_i32_0 = arith.constant 0 : i32
    return %c0_i32 : i32
  }
  func.func @transform_11(%arg0: i32) -> (i32, i32) {
    %c0_i32 = arith.constant 0 : i32
    %c0_i32_0 = arith.constant 0 : i32
    %c0_i32_1 = arith.constant 0 : i32
    return %c0_i32, %c0_i32_0 : i32, i32
  }
  func.func @transform_12(%arg0: i32) -> (i32, i32) {
    %c0_i32 = arith.constant 0 : i32
    %c0_i32_0 = arith.constant 0 : i32
    %c0_i32_1 = arith.constant 0 : i32
    return %c0_i32, %c0_i32_0 : i32, i32
  }
  func.func @transform_13(%arg0: i32) -> (i32, i32) {
    %c0_i32 = arith.constant 0 : i32
    %c0_i32_0 = arith.constant 0 : i32
    %c0_i32_1 = arith.constant 0 : i32
    return %c0_i32, %c0_i32_0 : i32, i32
  }
  func.func @transform_14(%arg0: i32) -> (i32, i32) {
    %c0_i32 = arith.constant 0 : i32
    %c0_i32_0 = arith.constant 0 : i32
    %c0_i32_1 = arith.constant 0 : i32
    return %c0_i32, %c0_i32_0 : i32, i32
  }
  func.func @transform_15(%arg0: i32) -> (i32, i32) {
    %c0_i32 = arith.constant 0 : i32
    %c0_i32_0 = arith.constant 0 : i32
    %c0_i32_1 = arith.constant 0 : i32
    return %c0_i32, %c0_i32_0 : i32, i32
  }
  func.func @transform_16(%arg0: i32) -> (i32, i32) {
    %c0_i32 = arith.constant 0 : i32
    %c0_i32_0 = arith.constant 0 : i32
    %c0_i32_1 = arith.constant 0 : i32
    return %c0_i32, %c0_i32_0 : i32, i32
  }
  func.func @transform_17(%arg0: i32) -> (i32, i32) {
    %c0_i32 = arith.constant 0 : i32
    %c0_i32_0 = arith.constant 0 : i32
    %c0_i32_1 = arith.constant 0 : i32
    return %c0_i32, %c0_i32_0 : i32, i32
  }
  func.func @transform_18(%arg0: i32) -> (i32, i32) {
    %c0_i32 = arith.constant 0 : i32
    %c0_i32_0 = arith.constant 0 : i32
    %c0_i32_1 = arith.constant 0 : i32
    return %c0_i32, %c0_i32_0 : i32, i32
  }
  func.func @transform_19(%arg0: i32) -> (i32, i32) {
    %c0_i32 = arith.constant 0 : i32
    %c0_i32_0 = arith.constant 0 : i32
    %c0_i32_1 = arith.constant 0 : i32
    return %c0_i32, %c0_i32_0 : i32, i32
  }
  func.func @transform_20(%arg0: i32) -> (i32, i32) {
    %c0_i32 = arith.constant 0 : i32
    %c0_i32_0 = arith.constant 0 : i32
    %c0_i32_1 = arith.constant 0 : i32
    return %c0_i32, %c0_i32_0 : i32, i32
  }
  func.func @transform_21(%arg0: i32) -> (i32, i32) {
    %c0_i32 = arith.constant 0 : i32
    %c0_i32_0 = arith.constant 0 : i32
    %c0_i32_1 = arith.constant 0 : i32
    return %c0_i32, %c0_i32_0 : i32, i32
  }
  func.func @transform_22(%arg0: i32) -> (i32, i32) {
    %c0_i32 = arith.constant 0 : i32
    %c0_i32_0 = arith.constant 0 : i32
    %c0_i32_1 = arith.constant 0 : i32
    return %c0_i32, %c0_i32_0 : i32, i32
  }
  func.func @transform_23(%arg0: i32) -> (i32, i32) {
    %c0_i32 = arith.constant 0 : i32
    %c0_i32_0 = arith.constant 0 : i32
    %c0_i32_1 = arith.constant 0 : i32
    return %c0_i32, %c0_i32_0 : i32, i32
  }
  func.func @transform_24(%arg0: i32) -> (i32, i32) {
    %c0_i32 = arith.constant 0 : i32
    %c0_i32_0 = arith.constant 0 : i32
    %c0_i32_1 = arith.constant 0 : i32
    return %c0_i32, %c0_i32_0 : i32, i32
  }
  func.func @transform_25(%arg0: i32) -> (i32, i32) {
    %c0_i32 = arith.constant 0 : i32
    %c0_i32_0 = arith.constant 0 : i32
    %c0_i32_1 = arith.constant 0 : i32
    return %c0_i32, %c0_i32_0 : i32, i32
  }
  func.func @transform_26(%arg0: i32) -> (i32, i32) {
    %c0_i32 = arith.constant 0 : i32
    %c0_i32_0 = arith.constant 0 : i32
    %c0_i32_1 = arith.constant 0 : i32
    return %c0_i32, %c0_i32_0 : i32, i32
  }
  func.func @transform_27(%arg0: i32) -> (i32, i32) {
    %c0_i32 = arith.constant 0 : i32
    %c0_i32_0 = arith.constant 0 : i32
    %c0_i32_1 = arith.constant 0 : i32
    return %c0_i32, %c0_i32_0 : i32, i32
  }
  func.func @transform_28(%arg0: i32) -> (i32, i32) {
    %c0_i32 = arith.constant 0 : i32
    %c0_i32_0 = arith.constant 0 : i32
    %c0_i32_1 = arith.constant 0 : i32
    return %c0_i32, %c0_i32_0 : i32, i32
  }
  func.func @transform_29(%arg0: i32) -> (i32, i32) {
    %c0_i32 = arith.constant 0 : i32
    %c0_i32_0 = arith.constant 0 : i32
    %c0_i32_1 = arith.constant 0 : i32
    return %c0_i32, %c0_i32_0 : i32, i32
  }
  func.func @transform_30(%arg0: i32) -> (i32, i32) {
    %c0_i32 = arith.constant 0 : i32
    %c0_i32_0 = arith.constant 0 : i32
    %c0_i32_1 = arith.constant 0 : i32
    return %c0_i32, %c0_i32_0 : i32, i32
  }
  func.func @transform_31(%arg0: i32) -> (i32, i32) {
    %c0_i32 = arith.constant 0 : i32
    %c0_i32_0 = arith.constant 0 : i32
    %c0_i32_1 = arith.constant 0 : i32
    return %c0_i32, %c0_i32_0 : i32, i32
  }
  func.func @transform_32(%arg0: i32) -> (i32, i32) {
    %c0_i32 = arith.constant 0 : i32
    %c0_i32_0 = arith.constant 0 : i32
    %c0_i32_1 = arith.constant 0 : i32
    return %c0_i32, %c0_i32_0 : i32, i32
  }
  func.func @transform_33(%arg0: i32) -> (i32, i32) {
    %c0_i32 = arith.constant 0 : i32
    %c0_i32_0 = arith.constant 0 : i32
    %c0_i32_1 = arith.constant 0 : i32
    return %c0_i32, %c0_i32_0 : i32, i32
  }
  func.func @transform_34(%arg0: i32) -> (i32, i32) {
    %c0_i32 = arith.constant 0 : i32
    %c0_i32_0 = arith.constant 0 : i32
    %c0_i32_1 = arith.constant 0 : i32
    return %c0_i32, %c0_i32_0 : i32, i32
  }
  func.func @transform_35(%arg0: i32) -> (i32, i32) {
    %c0_i32 = arith.constant 0 : i32
    %c0_i32_0 = arith.constant 0 : i32
    %c0_i32_1 = arith.constant 0 : i32
    return %c0_i32, %c0_i32_0 : i32, i32
  }
  func.func @transform_36(%arg0: i32) -> (i32, i32) {
    %c0_i32 = arith.constant 0 : i32
    %c0_i32_0 = arith.constant 0 : i32
    %c0_i32_1 = arith.constant 0 : i32
    return %c0_i32, %c0_i32_0 : i32, i32
  }
  func.func @transform_37(%arg0: i32) -> (i32, i32) {
    %c0_i32 = arith.constant 0 : i32
    %c0_i32_0 = arith.constant 0 : i32
    %c0_i32_1 = arith.constant 0 : i32
    return %c0_i32, %c0_i32_0 : i32, i32
  }
  func.func @transform_38(%arg0: i32) -> (i32, i32) {
    %c0_i32 = arith.constant 0 : i32
    %c0_i32_0 = arith.constant 0 : i32
    %c0_i32_1 = arith.constant 0 : i32
    return %c0_i32, %c0_i32_0 : i32, i32
  }
  func.func @transform_39(%arg0: i32) -> (i32, i32) {
    %c0_i32 = arith.constant 0 : i32
    %c0_i32_0 = arith.constant 0 : i32
    %c0_i32_1 = arith.constant 0 : i32
    return %c0_i32, %c0_i32_0 : i32, i32
  }
  func.func @transform_40(%arg0: i32) -> (i32, i32) {
    %c0_i32 = arith.constant 0 : i32
    %c0_i32_0 = arith.constant 0 : i32
    %c0_i32_1 = arith.constant 0 : i32
    return %c0_i32, %c0_i32_0 : i32, i32
  }
  func.func @transform_41(%arg0: i32) -> i32 {
    %c0_i32 = arith.constant 0 : i32
    %c0_i32_0 = arith.constant 0 : i32
    return %c0_i32 : i32
  }
  func.func @transform_42(%arg0: i32) -> (i32, i32) {
    %c0_i32 = arith.constant 0 : i32
    %c0_i32_0 = arith.constant 0 : i32
    %c0_i32_1 = arith.constant 0 : i32
    return %c0_i32, %c0_i32_0 : i32, i32
  }
  func.func @transform_43(%arg0: i32) -> (i32, i32) {
    %c0_i32 = arith.constant 0 : i32
    %c0_i32_0 = arith.constant 0 : i32
    %c0_i32_1 = arith.constant 0 : i32
    return %c0_i32, %c0_i32_0 : i32, i32
  }
  func.func @transform_44(%arg0: i32) -> (i32, i32) {
    %c0_i32 = arith.constant 0 : i32
    %c0_i32_0 = arith.constant 0 : i32
    %c0_i32_1 = arith.constant 0 : i32
    return %c0_i32, %c0_i32_0 : i32, i32
  }
  func.func @transform_45(%arg0: i32) -> (i32, i32) {
    %c0_i32 = arith.constant 0 : i32
    %c0_i32_0 = arith.constant 0 : i32
    %c0_i32_1 = arith.constant 0 : i32
    return %c0_i32, %c0_i32_0 : i32, i32
  }
  func.func @transform_46(%arg0: i32) -> (i32, i32) {
    %c0_i32 = arith.constant 0 : i32
    %c0_i32_0 = arith.constant 0 : i32
    %c0_i32_1 = arith.constant 0 : i32
    return %c0_i32, %c0_i32_0 : i32, i32
  }
  func.func @transform_47(%arg0: i32) -> (i32, i32) {
    %c0_i32 = arith.constant 0 : i32
    %c0_i32_0 = arith.constant 0 : i32
    %c0_i32_1 = arith.constant 0 : i32
    return %c0_i32, %c0_i32_0 : i32, i32
  }
  func.func @transform_48(%arg0: i32) -> (i32, i32) {
    %c0_i32 = arith.constant 0 : i32
    %c0_i32_0 = arith.constant 0 : i32
    %c0_i32_1 = arith.constant 0 : i32
    return %c0_i32, %c0_i32_0 : i32, i32
  }
  func.func @transform_49(%arg0: i32) -> (i32, i32) {
    %c0_i32 = arith.constant 0 : i32
    %c0_i32_0 = arith.constant 0 : i32
    %c0_i32_1 = arith.constant 0 : i32
    return %c0_i32, %c0_i32_0 : i32, i32
  }
  func.func @transform_50(%arg0: i32) -> (i32, i32) {
    %c0_i32 = arith.constant 0 : i32
    %c0_i32_0 = arith.constant 0 : i32
    %c0_i32_1 = arith.constant 0 : i32
    return %c0_i32, %c0_i32_0 : i32, i32
  }
  func.func @transform_51(%arg0: i32) -> (i32, i32) {
    %c0_i32 = arith.constant 0 : i32
    %c0_i32_0 = arith.constant 0 : i32
    %c0_i32_1 = arith.constant 0 : i32
    return %c0_i32, %c0_i32_0 : i32, i32
  }
  func.func @transform_52(%arg0: i32) -> (i32, i32) {
    %c0_i32 = arith.constant 0 : i32
    %c0_i32_0 = arith.constant 0 : i32
    %c0_i32_1 = arith.constant 0 : i32
    return %c0_i32, %c0_i32_0 : i32, i32
  }
  func.func @transform_53(%arg0: i32) -> (i32, i32) {
    %c0_i32 = arith.constant 0 : i32
    %c0_i32_0 = arith.constant 0 : i32
    %c0_i32_1 = arith.constant 0 : i32
    return %c0_i32, %c0_i32_0 : i32, i32
  }
  func.func @transform_54(%arg0: i32) -> (i32, i32) {
    %c0_i32 = arith.constant 0 : i32
    %c0_i32_0 = arith.constant 0 : i32
    %c0_i32_1 = arith.constant 0 : i32
    return %c0_i32, %c0_i32_0 : i32, i32
  }
  func.func @transform_55(%arg0: i32) -> (i32, i32) {
    %c0_i32 = arith.constant 0 : i32
    %c0_i32_0 = arith.constant 0 : i32
    %c0_i32_1 = arith.constant 0 : i32
    return %c0_i32, %c0_i32_0 : i32, i32
  }
  func.func @transform_56(%arg0: i32) -> (i32, i32) {
    %c0_i32 = arith.constant 0 : i32
    %c0_i32_0 = arith.constant 0 : i32
    %c0_i32_1 = arith.constant 0 : i32
    return %c0_i32, %c0_i32_0 : i32, i32
  }
  func.func @transform_57(%arg0: i32) -> (i32, i32) {
    %c0_i32 = arith.constant 0 : i32
    %c0_i32_0 = arith.constant 0 : i32
    %c0_i32_1 = arith.constant 0 : i32
    return %c0_i32, %c0_i32_0 : i32, i32
  }
  func.func @transform_58(%arg0: i32) -> (i32, i32) {
    %c0_i32 = arith.constant 0 : i32
    %c0_i32_0 = arith.constant 0 : i32
    %c0_i32_1 = arith.constant 0 : i32
    return %c0_i32, %c0_i32_0 : i32, i32
  }
  func.func @transform_59(%arg0: i32) -> (i32, i32) {
    %c0_i32 = arith.constant 0 : i32
    %c0_i32_0 = arith.constant 0 : i32
    %c0_i32_1 = arith.constant 0 : i32
    return %c0_i32, %c0_i32_0 : i32, i32
  }
  func.func @transform_60(%arg0: i32) -> (i32, i32) {
    %c0_i32 = arith.constant 0 : i32
    %c0_i32_0 = arith.constant 0 : i32
    %c0_i32_1 = arith.constant 0 : i32
    return %c0_i32, %c0_i32_0 : i32, i32
  }
  func.func @transform_61(%arg0: i32) -> (i32, i32) {
    %c0_i32 = arith.constant 0 : i32
    %c0_i32_0 = arith.constant 0 : i32
    %c0_i32_1 = arith.constant 0 : i32
    return %c0_i32, %c0_i32_0 : i32, i32
  }
  func.func @transform_62(%arg0: i32) -> (i32, i32) {
    %c0_i32 = arith.constant 0 : i32
    %c0_i32_0 = arith.constant 0 : i32
    %c0_i32_1 = arith.constant 0 : i32
    return %c0_i32, %c0_i32_0 : i32, i32
  }
  func.func @transform_63(%arg0: i32) -> (i32, i32) {
    %c0_i32 = arith.constant 0 : i32
    %c0_i32_0 = arith.constant 0 : i32
    %c0_i32_1 = arith.constant 0 : i32
    return %c0_i32, %c0_i32_0 : i32, i32
  }
  func.func @transform_64(%arg0: i32) -> (i32, i32) {
    %c0_i32 = arith.constant 0 : i32
    %c0_i32_0 = arith.constant 0 : i32
    %c0_i32_1 = arith.constant 0 : i32
    return %c0_i32, %c0_i32_0 : i32, i32
  }
  func.func @transform_65(%arg0: i32) -> (i32, i32) {
    %c0_i32 = arith.constant 0 : i32
    %c0_i32_0 = arith.constant 0 : i32
    %c0_i32_1 = arith.constant 0 : i32
    return %c0_i32, %c0_i32_0 : i32, i32
  }
  func.func @transform_66(%arg0: i32) -> (i32, i32) {
    %c0_i32 = arith.constant 0 : i32
    %c0_i32_0 = arith.constant 0 : i32
    %c0_i32_1 = arith.constant 0 : i32
    return %c0_i32, %c0_i32_0 : i32, i32
  }
  func.func @transform_67(%arg0: i32) -> (i32, i32) {
    %c0_i32 = arith.constant 0 : i32
    %c0_i32_0 = arith.constant 0 : i32
    %c0_i32_1 = arith.constant 0 : i32
    return %c0_i32, %c0_i32_0 : i32, i32
  }
  func.func @transform_68(%arg0: i32) -> (i32, i32) {
    %c0_i32 = arith.constant 0 : i32
    %c0_i32_0 = arith.constant 0 : i32
    %c0_i32_1 = arith.constant 0 : i32
    return %c0_i32, %c0_i32_0 : i32, i32
  }
  func.func @transform_69(%arg0: i32) -> (i32, i32) {
    %c0_i32 = arith.constant 0 : i32
    %c0_i32_0 = arith.constant 0 : i32
    %c0_i32_1 = arith.constant 0 : i32
    return %c0_i32, %c0_i32_0 : i32, i32
  }
  func.func @transform_70(%arg0: i32) -> (i32, i32) {
    %c0_i32 = arith.constant 0 : i32
    %c0_i32_0 = arith.constant 0 : i32
    %c0_i32_1 = arith.constant 0 : i32
    return %c0_i32, %c0_i32_0 : i32, i32
  }
  func.func @transform_71(%arg0: i32) -> (i32, i32) {
    %c0_i32 = arith.constant 0 : i32
    %c0_i32_0 = arith.constant 0 : i32
    %c0_i32_1 = arith.constant 0 : i32
    return %c0_i32, %c0_i32_0 : i32, i32
  }
  func.func @transform_72(%arg0: i32) -> i32 {
    %c0_i32 = arith.constant 0 : i32
    %c0_i32_0 = arith.constant 0 : i32
    return %c0_i32 : i32
  }
  func.func @transform_73(%arg0: i32) -> (i32, i32) {
    %c0_i32 = arith.constant 0 : i32
    %c0_i32_0 = arith.constant 0 : i32
    %c0_i32_1 = arith.constant 0 : i32
    return %c0_i32, %c0_i32_0 : i32, i32
  }
  func.func @transform_74(%arg0: i32) -> (i32, i32) {
    %c0_i32 = arith.constant 0 : i32
    %c0_i32_0 = arith.constant 0 : i32
    %c0_i32_1 = arith.constant 0 : i32
    return %c0_i32, %c0_i32_0 : i32, i32
  }
  func.func @transform_75(%arg0: i32) -> (i32, i32) {
    %c0_i32 = arith.constant 0 : i32
    %c0_i32_0 = arith.constant 0 : i32
    %c0_i32_1 = arith.constant 0 : i32
    return %c0_i32, %c0_i32_0 : i32, i32
  }
  func.func @transform_76(%arg0: i32) -> (i32, i32) {
    %c0_i32 = arith.constant 0 : i32
    %c0_i32_0 = arith.constant 0 : i32
    %c0_i32_1 = arith.constant 0 : i32
    return %c0_i32, %c0_i32_0 : i32, i32
  }
  func.func @transform_77(%arg0: i32) -> i32 {
    %c0_i32 = arith.constant 0 : i32
    %c0_i32_0 = arith.constant 0 : i32
    return %c0_i32 : i32
  }
  func.func @transform_78(%arg0: i32) -> (i32, i32, i32) {
    %c0_i32 = arith.constant 0 : i32
    %c0_i32_0 = arith.constant 0 : i32
    %c0_i32_1 = arith.constant 0 : i32
    return %arg0, %c0_i32, %c0_i32_0 : i32, i32, i32
  }
}

</mosaic_0001>

<llo_original>
// kernel: tile.9
$region0: #{tile.9}
  %s0 = inlined_call_operand.vmem [shape: f32[16,16], index: 0, kind: input, shape index: {}]
  %s1 = inlined_call_operand.vmem [shape: f32[1,256], index: 1, kind: output, shape index: {}]
  $region1: #{tile.9} parent=0
    #allocation0 [shape = 'u8[8192]{0}', space=vmem, size = 0x2000, scoped, tag = 'scoped mem for output reshape']
    %s2 = smov 3
    %v3 = vld [vmem:[%s0] ss:$8 sm:%s2]
    %vm4 = vcmask 130048
    %5 = vst.msk [vmem:[#allocation0] ss:$8 sm:$0x3] %vm4, %v3
    %s6 = scalar_lea.vmem %s0, 7
    %s7 = smov 3
    %v8 = vld [vmem:[%s6] ss:$8 sm:%s7]
    %9 = vrot.lane.b32.xlu0 %v8, 112
    %v10 = vpop.permute.xlu0 %9
    %vm11 = vcmask 1048448
    %12 = vst.msk [vmem:[#allocation0] ss:$8 sm:$0x3] %vm11, %v10
    %s13 = scalar_lea.vmem %s0, 6
    %s14 = smov 3
    %v15 = vld [vmem:[%s13] ss:$8 sm:%s14]
    %16 = vrot.lane.b32.xlu0 %v15, 96
    %v17 = vpop.permute.xlu0 %16
    %vm18 = vcmask 917248
    %19 = vst.msk [vmem:[#allocation0] ss:$8 sm:$0x3] %vm18, %v17
    %s20 = scalar_lea.vmem %s0, 5
    %s21 = smov 3
    %v22 = vld [vmem:[%s20] ss:$8 sm:%s21]
    %23 = vrot.lane.b32.xlu0 %v22, 80
    %v24 = vpop.permute.xlu0 %23
    %vm25 = vcmask 786048
    %26 = vst.msk [vmem:[#allocation0] ss:$8 sm:$0x3] %vm25, %v24
    %s27 = scalar_lea.vmem %s0, 4
    %s28 = smov 3
    %v29 = vld [vmem:[%s27] ss:$8 sm:%s28]
    %30 = vrot.lane.b32.xlu0 %v29, 64
    %v31 = vpop.permute.xlu0 %30
    %vm32 = vcmask 654848
    %33 = vst.msk [vmem:[#allocation0] ss:$8 sm:$0x3] %vm32, %v31
    %s34 = scalar_lea.vmem %s0, 3
    %s35 = smov 3
    %v36 = vld [vmem:[%s34] ss:$8 sm:%s35]
    %37 = vrot.lane.b32.xlu0 %v36, 48
    %v38 = vpop.permute.xlu0 %37
    %vm39 = vcmask 523648
    %40 = vst.msk [vmem:[#allocation0] ss:$8 sm:$0x3] %vm39, %v38
    %s41 = scalar_lea.vmem %s0, 2
    %s42 = smov 3
    %v43 = vld [vmem:[%s41] ss:$8 sm:%s42]
    %44 = vrot.lane.b32.xlu0 %v43, 32
    %v45 = vpop.permute.xlu0 %44
    %vm46 = vcmask 392448
    %47 = vst.msk [vmem:[#allocation0] ss:$8 sm:$0x3] %vm46, %v45
    %s48 = scalar_lea.vmem %s0, 1
    %s49 = smov 3
    %v50 = vld [vmem:[%s48] ss:$8 sm:%s49]
    %51 = vrot.lane.b32.xlu0 %v50, 16
    %v52 = vpop.permute.xlu0 %51
    %vm53 = vcmask 261248
    %54 = vst.msk [vmem:[#allocation0] ss:$8 sm:$0x3] %vm53, %v52
    %s56 = ssub.s32 2, 1
    %v57 = vld [vmem:[#allocation0] sm:%s56]
    %s59 = ssub.s32 2, 1
    %60 = vst [vmem:[%s1] sm:%s59] %v57
    %s61 = scalar_lea.vmem [#allocation0], 8
    %v62 = vld [vmem:[%s61] sm:%s56]
    %s64 = ssub.s32 2, 1
    %s65 = scalar_lea.vmem %s1, 1
    %66 = vst [vmem:[%s65] sm:%s64] %v62

// kernel: mardan_forward.1
$region0: #{mardan_forward.1}
  #allocation0 [shape = 'u32[]', space=smem, size = 0x4, offset = 0x4, fixed_abs, tag = 'smem constant byte address 0x4 - core index']
  #allocation1 [shape = 'u32[72,128]{1,0:T(1,128)}', space=vmem, size = 0x9000, scoped, tag = 'internal scratch']
  #allocation2 [shape = 'f32[1]{0:T(128)S(6)}', space=smem, size = 0x200, scoped, tag = 'scoped memory for mardan_forward.1']
  #allocation3 [shape = 'f32[1]{0:T(128)S(6)}', space=smem, size = 0x200, scoped, tag = 'scoped memory for mardan_forward.1']
  #allocation4 [shape = 'f32[1]{0:T(128)S(6)}', space=smem, size = 0x200, scoped, tag = 'scoped memory for mardan_forward.1']
  #allocation5 [shape = 'f32[1]{0:T(128)S(6)}', space=smem, size = 0x200, scoped, tag = 'scoped memory for mardan_forward.1']
  %s0 = inlined_call_operand.smem [shape: u32[79], index: -1, kind: input, shape index: {}]
  %s1 = sld [smem:[%s0]]
  %s2 = scalar_lea.smem %s0, 1
  %s3 = sld [smem:[%s2]]
  %s4 = scalar_lea.smem %s0, 2
  %s5 = sld [smem:[%s4]]
  %s6 = scalar_lea.smem %s0, 3
  %s7 = sld [smem:[%s6]]
  %s8 = scalar_lea.smem %s0, 4
  %s9 = sld [smem:[%s8]]
  %s10 = scalar_lea.smem %s0, 5
  %s11 = sld [smem:[%s10]]
  %s12 = scalar_lea.smem %s0, 6
  %s13 = sld [smem:[%s12]]
  %s14 = scalar_lea.smem %s0, 7
  %s15 = sld [smem:[%s14]]
  %s16 = scalar_lea.smem %s0, 8
  %s17 = sld [smem:[%s16]]
  %s18 = scalar_lea.smem %s0, 9
  %s19 = sld [smem:[%s18]]
  %s20 = scalar_lea.smem %s0, 10
  %s21 = sld [smem:[%s20]]
  %s22 = scalar_lea.smem %s0, 11
  %s23 = sld [smem:[%s22]]
  %s24 = scalar_lea.smem %s0, 12
  %s25 = sld [smem:[%s24]]
  %s26 = scalar_lea.smem %s0, 13
  %s27 = sld [smem:[%s26]]
  %s28 = scalar_lea.smem %s0, 14
  %s29 = sld [smem:[%s28]]
  %s30 = scalar_lea.smem %s0, 15
  %s31 = sld [smem:[%s30]]
  %s32 = scalar_lea.smem %s0, 16
  %s33 = sld [smem:[%s32]]
  %s34 = scalar_lea.smem %s0, 17
  %s35 = sld [smem:[%s34]]
  %s36 = scalar_lea.smem %s0, 18
  %s37 = sld [smem:[%s36]]
  %s38 = scalar_lea.smem %s0, 19
  %s39 = sld [smem:[%s38]]
  %s40 = scalar_lea.smem %s0, 20
  %s41 = sld [smem:[%s40]]
  %s42 = scalar_lea.smem %s0, 21
  %s43 = sld [smem:[%s42]]
  %s44 = scalar_lea.smem %s0, 22
  %s45 = sld [smem:[%s44]]
  %s46 = scalar_lea.smem %s0, 23
  %s47 = sld [smem:[%s46]]
  %s48 = scalar_lea.smem %s0, 24
  %s49 = sld [smem:[%s48]]
  %s50 = scalar_lea.smem %s0, 25
  %s51 = sld [smem:[%s50]]
  %s52 = scalar_lea.smem %s0, 26
  %s53 = sld [smem:[%s52]]
  %s54 = scalar_lea.smem %s0, 27
  %s55 = sld [smem:[%s54]]
  %s56 = scalar_lea.smem %s0, 28
  %s57 = sld [smem:[%s56]]
  %s58 = scalar_lea.smem %s0, 29
  %s59 = sld [smem:[%s58]]
  %s60 = scalar_lea.smem %s0, 30
  %s61 = sld [smem:[%s60]]
  %s62 = scalar_lea.smem %s0, 31
  %s63 = sld [smem:[%s62]]
  %s64 = scalar_lea.smem %s0, 32
  %s65 = sld [smem:[%s64]]
  %s66 = scalar_lea.smem %s0, 33
  %s67 = sld [smem:[%s66]]
  %s68 = scalar_lea.smem %s0, 34
  %s69 = sld [smem:[%s68]]
  %s70 = scalar_lea.smem %s0, 35
  %s71 = sld [smem:[%s70]]
  %s72 = scalar_lea.smem %s0, 36
  %s73 = sld [smem:[%s72]]
  %s74 = scalar_lea.smem %s0, 37
  %s75 = sld [smem:[%s74]]
  %s76 = scalar_lea.smem %s0, 38
  %s77 = sld [smem:[%s76]]
  %s78 = scalar_lea.smem %s0, 39
  %s79 = sld [smem:[%s78]]
  %s80 = scalar_lea.smem %s0, 40
  %s81 = sld [smem:[%s80]]
  %s82 = scalar_lea.smem %s0, 41
  %s83 = sld [smem:[%s82]]
  %s84 = scalar_lea.smem %s0, 42
  %s85 = sld [smem:[%s84]]
  %s86 = scalar_lea.smem %s0, 43
  %s87 = sld [smem:[%s86]]
  %s88 = scalar_lea.smem %s0, 44
  %s89 = sld [smem:[%s88]]
  %s90 = scalar_lea.smem %s0, 45
  %s91 = sld [smem:[%s90]]
  %s92 = scalar_lea.smem %s0, 46
  %s93 = sld [smem:[%s92]]
  %s94 = scalar_lea.smem %s0, 47
  %s95 = sld [smem:[%s94]]
  %s96 = scalar_lea.smem %s0, 48
  %s97 = sld [smem:[%s96]]
  %s98 = scalar_lea.smem %s0, 49
  %s99 = sld [smem:[%s98]]
  %s100 = scalar_lea.smem %s0, 50
  %s101 = sld [smem:[%s100]]
  %s102 = scalar_lea.smem %s0, 51
  %s103 = sld [smem:[%s102]]
  %s104 = scalar_lea.smem %s0, 52
  %s105 = sld [smem:[%s104]]
  %s106 = scalar_lea.smem %s0, 53
  %s107 = sld [smem:[%s106]]
  %s108 = scalar_lea.smem %s0, 54
  %s109 = sld [smem:[%s108]]
  %s110 = scalar_lea.smem %s0, 55
  %s111 = sld [smem:[%s110]]
  %s112 = scalar_lea.smem %s0, 56
  %s113 = sld [smem:[%s112]]
  %s114 = scalar_lea.smem %s0, 57
  %s115 = sld [smem:[%s114]]
  %s116 = scalar_lea.smem %s0, 58
  %s117 = sld [smem:[%s116]]
  %s118 = scalar_lea.smem %s0, 59
  %s119 = sld [smem:[%s118]]
  %s120 = scalar_lea.smem %s0, 60
  %s121 = sld [smem:[%s120]]
  %s122 = scalar_lea.smem %s0, 61
  %s123 = sld [smem:[%s122]]
  %s124 = scalar_lea.smem %s0, 62
  %s125 = sld [smem:[%s124]]
  %s126 = scalar_lea.smem %s0, 63
  %s127 = sld [smem:[%s126]]
  %s128 = scalar_lea.smem %s0, 64
  %s129 = sld [smem:[%s128]]
  %s130 = scalar_lea.smem %s0, 65
  %s131 = sld [smem:[%s130]]
  %s132 = scalar_lea.smem %s0, 66
  %s133 = sld [smem:[%s132]]
  %s134 = scalar_lea.smem %s0, 67
  %s135 = sld [smem:[%s134]]
  %s136 = scalar_lea.smem %s0, 68
  %s137 = sld [smem:[%s136]]
  %s138 = scalar_lea.smem %s0, 69
  %s139 = sld [smem:[%s138]]
  %s140 = scalar_lea.smem %s0, 70
  %s141 = sld [smem:[%s140]]
  %s142 = scalar_lea.smem %s0, 71
  %s143 = sld [smem:[%s142]]
  %s144 = scalar_lea.smem %s0, 72
  %s145 = sld [smem:[%s144]]
  %s146 = scalar_lea.smem %s0, 73
  %s147 = sld [smem:[%s146]]
  %s148 = scalar_lea.smem %s0, 74
  %s149 = sld [smem:[%s148]]
  %s150 = scalar_lea.smem %s0, 75
  %s151 = sld [smem:[%s150]]
  %s152 = scalar_lea.smem %s0, 76
  %s153 = sld [smem:[%s152]]
  %s154 = scalar_lea.smem %s0, 77
  %s155 = sld [smem:[%s154]]
  %s156 = scalar_lea.smem %s0, 78
  %s157 = sld [smem:[%s156]]
  %s158 = sld [smem:[#allocation0]]
  $region345: #{mardan_forward.1} parent=0
    _
  %s160 = ssub.s32 1, %s158
  %s161 = scalar_select 0, %s160, %s158
  %162 = sst [smem:[#allocation2]] %s21
  %163 = sst [smem:[#allocation3]] %s83
  %164 = sst [smem:[#allocation4]] %s145
  %165 = sst [smem:[#allocation5]] %s155
  loop: start=0, step=1, limit=4
  $region2: #{mardan_forward.1} parent=0 // loop_pre_header
    _
  $region3: #{mardan_forward.1} parent=0 // loop_header
    %s167 = sphi 0, %s171
    %p168 = scmp.ge.s32.totalorder %s167, 4
    %s177 = sphi 0, %s179
    %s180 = sphi 0, %s177
    %s181 = sphi 0, %s180
    %s197 = sphi 0, %s181
    %s201 = sphi 0, %s201
    %s203 = sphi 0, %s201
    %s204 = sphi 0, %s203
    %s218 = sphi 0, %s204
    %s222 = sphi 0, %s222
    %s224 = sphi 0, %s222
    %s225 = sphi 0, %s224
    %s239 = sphi 0, %s225
    %s243 = sphi 0, %s243
    %s245 = sphi 0, %s243
    %s246 = sphi 0, %s245
    %s260 = sphi 0, %s246
    %s264 = sphi 0, %s264
    %s266 = sphi 0, %s264
    %s267 = sphi 0, %s266
    %s281 = sphi 0, %s267
    %s285 = sphi 0, %s285
    %s287 = sphi 0, %s285
    %s288 = sphi 0, %s287
    %s302 = sphi 0, %s288
    %s306 = sphi 0, %s306
    %s308 = sphi 0, %s306
    %s309 = sphi 0, %s308
    %s323 = sphi 0, %s309
    %s327 = sphi 0, %s327
    %s329 = sphi 0, %s327
    %s330 = sphi 0, %s329
    %s344 = sphi 0, %s330
    %s348 = sphi 0, %s348
    %s350 = sphi 0, %s348
    %s351 = sphi 0, %s350
    %s365 = sphi 0, %s351
    %s369 = sphi 0, %s369
    %s371 = sphi 0, %s369
    %s372 = sphi 0, %s371
    %s386 = sphi 0, %s372
    %s390 = sphi 0, %s390
    %s392 = sphi 0, %s390
    %s393 = sphi 0, %s392
    %s407 = sphi 0, %s393
    %s411 = sphi 0, %s411
    %s413 = sphi 0, %s411
    %s414 = sphi 0, %s413
    %s428 = sphi 0, %s414
    %s432 = sphi 0, %s432
    %s434 = sphi 0, %s432
    %s435 = sphi 0, %s434
    %s449 = sphi 0, %s435
    %s453 = sphi 0, %s453
    %s455 = sphi 0, %s453
    %s456 = sphi 0, %s455
    %s470 = sphi 0, %s456
    %s474 = sphi 0, %s474
    %s476 = sphi 0, %s474
    %s477 = sphi 0, %s476
    %s491 = sphi 0, %s477
    %s495 = sphi 0, %s495
    %s497 = sphi 0, %s495
    %s498 = sphi 0, %s497
    %s512 = sphi 0, %s498
    %s516 = sphi 0, %s516
    %s518 = sphi 0, %s516
    %s519 = sphi 0, %s518
    %s533 = sphi 0, %s519
    %s537 = sphi 0, %s537
    %s539 = sphi 0, %s537
    %s540 = sphi 0, %s539
    %s554 = sphi 0, %s540
    %s558 = sphi 0, %s558
    %s560 = sphi 0, %s558
    %s561 = sphi 0, %s560
    %s575 = sphi 0, %s561
    %s579 = sphi 0, %s579
    %s581 = sphi 0, %s579
    %s582 = sphi 0, %s581
    %s596 = sphi 0, %s582
    %s600 = sphi 0, %s600
    %s602 = sphi 0, %s600
    %s603 = sphi 0, %s602
    %s617 = sphi 0, %s603
    %s621 = sphi 0, %s621
    %s623 = sphi 0, %s621
    %s624 = sphi 0, %s623
    %s638 = sphi 0, %s624
    %s642 = sphi 0, %s642
    %s644 = sphi 0, %s642
    %s645 = sphi 0, %s644
    %s659 = sphi 0, %s645
    %s663 = sphi 0, %s663
    %s665 = sphi 0, %s663
    %s666 = sphi 0, %s665
    %s680 = sphi 0, %s666
    %s684 = sphi 0, %s684
    %s686 = sphi 0, %s684
    %s687 = sphi 0, %s686
    %s701 = sphi 0, %s687
    %s705 = sphi 0, %s705
    %s707 = sphi 0, %s705
    %s708 = sphi 0, %s707
    %s722 = sphi 0, %s708
    %s726 = sphi 0, %s726
    %s728 = sphi 0, %s726
    %s729 = sphi 0, %s728
    %s743 = sphi 0, %s729
    %s747 = sphi 0, %s747
    %s749 = sphi 0, %s747
    %s750 = sphi 0, %s749
    %s764 = sphi 0, %s750
    %s768 = sphi 0, %s768
    %s770 = sphi 0, %s768
    %s771 = sphi 0, %s770
    %s785 = sphi 0, %s771
    %s789 = sphi 0, %s789
    %s791 = sphi 0, %s789
    %s792 = sphi 0, %s791
    %s806 = sphi 0, %s792
    %s810 = sphi 0, %s810
    %s812 = sphi 0, %s810
    %s813 = sphi 0, %s812
    %s827 = sphi 0, %s813
    %s831 = sphi 0, %s831
    %s833 = sphi 0, %s831
    %s834 = sphi 0, %s833
    %s848 = sphi 0, %s834
    %s852 = sphi 0, %s852
    %s854 = sphi 0, %s852
    %s855 = sphi 0, %s854
    %s869 = sphi 0, %s855
    %s873 = sphi 0, %s873
    %s875 = sphi 0, %s873
    %s876 = sphi 0, %s875
    %s890 = sphi 0, %s876
    %s894 = sphi 0, %s894
    %s896 = sphi 0, %s894
    %s897 = sphi 0, %s896
    %s911 = sphi 0, %s897
    %s915 = sphi 0, %s915
    %s917 = sphi 0, %s915
    %s918 = sphi 0, %s917
    %s932 = sphi 0, %s918
    %s936 = sphi 0, %s936
    %s938 = sphi 0, %s936
    %s939 = sphi 0, %s938
    %s953 = sphi 0, %s939
    %s957 = sphi 0, %s957
    %s959 = sphi 0, %s957
    %s960 = sphi 0, %s959
    %s974 = sphi 0, %s960
    %s978 = sphi 0, %s978
    %s980 = sphi 0, %s978
    %s981 = sphi 0, %s980
    %s995 = sphi 0, %s981
    %s999 = sphi 0, %s999
    %s1001 = sphi 0, %s999
    %s1002 = sphi 0, %s1001
    %s1016 = sphi 0, %s1002
    %s1020 = sphi 0, %s1020
    %s1022 = sphi 0, %s1020
    %s1023 = sphi 0, %s1022
    %s1037 = sphi 0, %s1023
    %s1041 = sphi 0, %s1041
    %s1043 = sphi 0, %s1041
    %s1044 = sphi 0, %s1043
    %s1058 = sphi 0, %s1044
    %s1062 = sphi 0, %s1062
    %s1064 = sphi 0, %s1062
    %s1065 = sphi 0, %s1064
    %s1079 = sphi 0, %s1065
    %s1083 = sphi 0, %s1083
    %s1085 = sphi 0, %s1083
    %s1086 = sphi 0, %s1085
    %s1100 = sphi 0, %s1086
    %s1104 = sphi 0, %s1104
    %s1106 = sphi 0, %s1104
    %s1107 = sphi 0, %s1106
    %s1121 = sphi 0, %s1107
    %s1125 = sphi 0, %s1125
    %s1127 = sphi 0, %s1125
    %s1128 = sphi 0, %s1127
    %s1142 = sphi 0, %s1128
    %s1146 = sphi 0, %s1146
    %s1148 = sphi 0, %s1146
    %s1149 = sphi 0, %s1148
    %s1163 = sphi 0, %s1149
    %s1167 = sphi 0, %s1167
    %s1169 = sphi 0, %s1167
    %s1170 = sphi 0, %s1169
    %s1184 = sphi 0, %s1170
    %s1188 = sphi 0, %s1188
    %s1190 = sphi 0, %s1188
    %s1191 = sphi 0, %s1190
    %s1205 = sphi 0, %s1191
    %s1209 = sphi 0, %s1209
    %s1211 = sphi 0, %s1209
    %s1212 = sphi 0, %s1211
    %s1226 = sphi 0, %s1212
    %s1230 = sphi 0, %s1230
    %s1232 = sphi 0, %s1230
    %s1233 = sphi 0, %s1232
    %s1247 = sphi 0, %s1233
    %s1251 = sphi 0, %s1251
    %s1253 = sphi 0, %s1251
    %s1254 = sphi 0, %s1253
    %s1268 = sphi 0, %s1254
    %s1272 = sphi 0, %s1272
    %s1274 = sphi 0, %s1272
    %s1275 = sphi 0, %s1274
    %s1289 = sphi 0, %s1275
    %s1293 = sphi 0, %s1293
    %s1295 = sphi 0, %s1293
    %s1296 = sphi 0, %s1295
    %s1310 = sphi 0, %s1296
    %s1314 = sphi 0, %s1314
    %s1316 = sphi 0, %s1314
    %s1317 = sphi 0, %s1316
    %s1331 = sphi 0, %s1317
    %s1335 = sphi 0, %s1335
    %s1337 = sphi 0, %s1335
    %s1338 = sphi 0, %s1337
    %s1352 = sphi 0, %s1338
    %s1356 = sphi 0, %s1356
    %s1358 = sphi 0, %s1356
    %s1359 = sphi 0, %s1358
    %s1373 = sphi 0, %s1359
    %s1377 = sphi 0, %s1377
    %s1379 = sphi 0, %s1377
    %s1380 = sphi 0, %s1379
    %s1394 = sphi 0, %s1380
    %s1398 = sphi 0, %s1398
    %s1400 = sphi 0, %s1398
    %s1401 = sphi 0, %s1400
    %s1415 = sphi 0, %s1401
    %s1419 = sphi 0, %s1419
    %s1421 = sphi 0, %s1419
    %s1422 = sphi 0, %s1421
    %s1436 = sphi 0, %s1422
    %s1440 = sphi 0, %s1440
    %s1442 = sphi 0, %s1440
    %s1443 = sphi 0, %s1442
    %s1457 = sphi 0, %s1443
    %s1461 = sphi 0, %s1461
    %s1463 = sphi 0, %s1461
    %s1464 = sphi 0, %s1463
    %s1478 = sphi 0, %s1464
    %s1482 = sphi 0, %s1482
    %s1484 = sphi 0, %s1482
    %s1485 = sphi 0, %s1484
    %s1499 = sphi 0, %s1485
    %s1503 = sphi 0, %s1503
    %s1505 = sphi 0, %s1503
    %s1506 = sphi 0, %s1505
    %s1520 = sphi 0, %s1506
    %s1524 = sphi 0, %s1524
    %s1526 = sphi 0, %s1524
    %s1527 = sphi 0, %s1526
    %s1541 = sphi 0, %s1527
    %s1545 = sphi 0, %s1545
    %s1547 = sphi 0, %s1545
    %s1548 = sphi 0, %s1547
    %s1562 = sphi 0, %s1548
    %s1566 = sphi 0, %s1566
    %s1568 = sphi 0, %s1566
    %s1569 = sphi 0, %s1568
    %s1583 = sphi 0, %s1569
    %s1587 = sphi 0, %s1587
    %s1589 = sphi 0, %s1587
    %s1590 = sphi 0, %s1589
    %s1604 = sphi 0, %s1590
    %s1608 = sphi 0, %s1608
    %s1610 = sphi 0, %s1608
    %s1611 = sphi 0, %s1610
    %s1625 = sphi 0, %s1611
    %s1629 = sphi 0, %s1629
    %s1631 = sphi 0, %s1629
    %s1632 = sphi 0, %s1631
    %s1646 = sphi 0, %s1632
    %s1650 = sphi 0, %s1650
    %s1652 = sphi 0, %s1650
    %s1653 = sphi 0, %s1652
    %s1667 = sphi 0, %s1653
    %s1671 = sphi 0, %s1671
    %s1673 = sphi 0, %s1671
    %s1674 = sphi 0, %s1673
    %s1688 = sphi 0, %s1674
    %s1692 = sphi 0, %s1692
    %s1694 = sphi 0, %s1692
    %s1695 = sphi 0, %s1694
    %s1709 = sphi 0, %s1695
    %s1713 = sphi 0, %s1713
    %s1715 = sphi 0, %s1713
    %s1716 = sphi 0, %s1715
    %s1730 = sphi 0, %s1716
    %s1734 = sphi 0, %s1734
    %s1736 = sphi 0, %s1734
    %s1737 = sphi 0, %s1736
    %s1751 = sphi 0, %s1737
    %s1755 = sphi 0, %s1755
    %s1757 = sphi 0, %s1755
    %s1758 = sphi 0, %s1757
    %s1772 = sphi 0, %s1758
    %s1776 = sphi 0, %s1776
    %s1778 = sphi 0, %s1776
    %s1779 = sphi 0, %s1778
    %s1793 = sphi 0, %s1779
    %s1797 = sphi 0, %s1797
    %s1799 = sphi 0, %s1797
    %s1800 = sphi 0, %s1799
    %s1814 = sphi 0, %s1800
    %s1820 = sphi 0, %s1822
    %s1823 = sphi 0, %s1820
    %s1824 = sphi 0, %s1823
    %s1840 = sphi 0, %s1824
  $region4: #{mardan_forward.1} parent=0 // loop_header_branch
    %170 = sbr.rel (%p168) target = $region8
  $region5: #{mardan_forward.1} parent=0 // loop_body
    %s172 = ssub.s32 %s167, 1
    %s173 = ssub.s32 %s167, 2
    %s174 = sadd.s32 %s167, 1
    %s175 = ssub.s32 %s167, %s174
    %p176 = scmp.eq.s32.totalorder %s175, 0
    %s178 = sadd.s32 %s177, 1
    %s179 = scalar_select %p176, %s177, %s178
    %p182 = pneg %p176
    %p183 = scmp.eq.s32.totalorder %s167, 1
    %p184 = por %p182, %p183
    %p185 = scmp.ne.s32.totalorder %s177, %s180
    %p186 = scmp.eq.s32.totalorder %s167, 0
    %p187 = por %p185, %p186
    %p188 = scmp.ne.s32.totalorder %s177, %s180
    %p189 = scmp.eq.s32.totalorder %s172, 1
    %p190 = por %p188, %p189
    %p191 = scmp.ne.s32.totalorder %s180, %s181
    %p192 = scmp.eq.s32.totalorder %s172, 0
    %p193 = por %p191, %p192
    %p194 = scmp.ne.s32.totalorder %s180, %s181
    %p195 = scmp.eq.s32.totalorder %s173, 1
    %p196 = por %p194, %p195
    %p198 = scmp.ne.s32.totalorder %s181, %s197
    %p199 = scmp.eq.s32.totalorder %s173, 0
    %p200 = por %p198, %p199
    %s202 = sadd.s32 %s201, 1
    %p205 = scmp.eq.s32.totalorder %s167, 1
    %p206 = scmp.ne.s32.totalorder %s201, %s203
    %p207 = scmp.eq.s32.totalorder %s167, 0
    %p208 = por %p206, %p207
    %p209 = scmp.ne.s32.totalorder %s201, %s203
    %p210 = scmp.eq.s32.totalorder %s172, 1
    %p211 = por %p209, %p210
    %p212 = scmp.ne.s32.totalorder %s203, %s204
    %p213 = scmp.eq.s32.totalorder %s172, 0
    %p214 = por %p212, %p213
    %p215 = scmp.ne.s32.totalorder %s203, %s204
    %p216 = scmp.eq.s32.totalorder %s173, 1
    %p217 = por %p215, %p216
    %p219 = scmp.ne.s32.totalorder %s204, %s218
    %p220 = scmp.eq.s32.totalorder %s173, 0
    %p221 = por %p219, %p220
    %s223 = sadd.s32 %s222, 1
    %p226 = scmp.eq.s32.totalorder %s167, 1
    %p227 = scmp.ne.s32.totalorder %s222, %s224
    %p228 = scmp.eq.s32.totalorder %s167, 0
    %p229 = por %p227, %p228
    %p230 = scmp.ne.s32.totalorder %s222, %s224
    %p231 = scmp.eq.s32.totalorder %s172, 1
    %p232 = por %p230, %p231
    %p233 = scmp.ne.s32.totalorder %s224, %s225
    %p234 = scmp.eq.s32.totalorder %s172, 0
    %p235 = por %p233, %p234
    %p236 = scmp.ne.s32.totalorder %s224, %s225
    %p237 = scmp.eq.s32.totalorder %s173, 1
    %p238 = por %p236, %p237
    %p240 = scmp.ne.s32.totalorder %s225, %s239
    %p241 = scmp.eq.s32.totalorder %s173, 0
    %p242 = por %p240, %p241
    %s244 = sadd.s32 %s243, 1
    %p247 = scmp.eq.s32.totalorder %s167, 1
    %p248 = scmp.ne.s32.totalorder %s243, %s245
    %p249 = scmp.eq.s32.totalorder %s167, 0
    %p250 = por %p248, %p249
    %p251 = scmp.ne.s32.totalorder %s243, %s245
    %p252 = scmp.eq.s32.totalorder %s172, 1
    %p253 = por %p251, %p252
    %p254 = scmp.ne.s32.totalorder %s245, %s246
    %p255 = scmp.eq.s32.totalorder %s172, 0
    %p256 = por %p254, %p255
    %p257 = scmp.ne.s32.totalorder %s245, %s246
    %p258 = scmp.eq.s32.totalorder %s173, 1
    %p259 = por %p257, %p258
    %p261 = scmp.ne.s32.totalorder %s246, %s260
    %p262 = scmp.eq.s32.totalorder %s173, 0
    %p263 = por %p261, %p262
    %s265 = sadd.s32 %s264, 1
    %p268 = scmp.eq.s32.totalorder %s167, 1
    %p269 = scmp.ne.s32.totalorder %s264, %s266
    %p270 = scmp.eq.s32.totalorder %s167, 0
    %p271 = por %p269, %p270
    %p272 = scmp.ne.s32.totalorder %s264, %s266
    %p273 = scmp.eq.s32.totalorder %s172, 1
    %p274 = por %p272, %p273
    %p275 = scmp.ne.s32.totalorder %s266, %s267
    %p276 = scmp.eq.s32.totalorder %s172, 0
    %p277 = por %p275, %p276
    %p278 = scmp.ne.s32.totalorder %s266, %s267
    %p279 = scmp.eq.s32.totalorder %s173, 1
    %p280 = por %p278, %p279
    %p282 = scmp.ne.s32.totalorder %s267, %s281
    %p283 = scmp.eq.s32.totalorder %s173, 0
    %p284 = por %p282, %p283
    %s286 = sadd.s32 %s285, 1
    %p289 = scmp.eq.s32.totalorder %s167, 1
    %p290 = scmp.ne.s32.totalorder %s285, %s287
    %p291 = scmp.eq.s32.totalorder %s167, 0
    %p292 = por %p290, %p291
    %p293 = scmp.ne.s32.totalorder %s285, %s287
    %p294 = scmp.eq.s32.totalorder %s172, 1
    %p295 = por %p293, %p294
    %p296 = scmp.ne.s32.totalorder %s287, %s288
    %p297 = scmp.eq.s32.totalorder %s172, 0
    %p298 = por %p296, %p297
    %p299 = scmp.ne.s32.totalorder %s287, %s288
    %p300 = scmp.eq.s32.totalorder %s173, 1
    %p301 = por %p299, %p300
    %p303 = scmp.ne.s32.totalorder %s288, %s302
    %p304 = scmp.eq.s32.totalorder %s173, 0
    %p305 = por %p303, %p304
    %s307 = sadd.s32 %s306, 1
    %p310 = scmp.eq.s32.totalorder %s167, 1
    %p311 = scmp.ne.s32.totalorder %s306, %s308
    %p312 = scmp.eq.s32.totalorder %s167, 0
    %p313 = por %p311, %p312
    %p314 = scmp.ne.s32.totalorder %s306, %s308
    %p315 = scmp.eq.s32.totalorder %s172, 1
    %p316 = por %p314, %p315
    %p317 = scmp.ne.s32.totalorder %s308, %s309
    %p318 = scmp.eq.s32.totalorder %s172, 0
    %p319 = por %p317, %p318
    %p320 = scmp.ne.s32.totalorder %s308, %s309
    %p321 = scmp.eq.s32.totalorder %s173, 1
    %p322 = por %p320, %p321
    %p324 = scmp.ne.s32.totalorder %s309, %s323
    %p325 = scmp.eq.s32.totalorder %s173, 0
    %p326 = por %p324, %p325
    %s328 = sadd.s32 %s327, 1
    %p331 = scmp.eq.s32.totalorder %s167, 1
    %p332 = scmp.ne.s32.totalorder %s327, %s329
    %p333 = scmp.eq.s32.totalorder %s167, 0
    %p334 = por %p332, %p333
    %p335 = scmp.ne.s32.totalorder %s327, %s329
    %p336 = scmp.eq.s32.totalorder %s172, 1
    %p337 = por %p335, %p336
    %p338 = scmp.ne.s32.totalorder %s329, %s330
    %p339 = scmp.eq.s32.totalorder %s172, 0
    %p340 = por %p338, %p339
    %p341 = scmp.ne.s32.totalorder %s329, %s330
    %p342 = scmp.eq.s32.totalorder %s173, 1
    %p343 = por %p341, %p342
    %p345 = scmp.ne.s32.totalorder %s330, %s344
    %p346 = scmp.eq.s32.totalorder %s173, 0
    %p347 = por %p345, %p346
    %s349 = sadd.s32 %s348, 1
    %p352 = scmp.eq.s32.totalorder %s167, 1
    %p353 = scmp.ne.s32.totalorder %s348, %s350
    %p354 = scmp.eq.s32.totalorder %s167, 0
    %p355 = por %p353, %p354
    %p356 = scmp.ne.s32.totalorder %s348, %s350
    %p357 = scmp.eq.s32.totalorder %s172, 1
    %p358 = por %p356, %p357
    %p359 = scmp.ne.s32.totalorder %s350, %s351
    %p360 = scmp.eq.s32.totalorder %s172, 0
    %p361 = por %p359, %p360
    %p362 = scmp.ne.s32.totalorder %s350, %s351
    %p363 = scmp.eq.s32.totalorder %s173, 1
    %p364 = por %p362, %p363
    %p366 = scmp.ne.s32.totalorder %s351, %s365
    %p367 = scmp.eq.s32.totalorder %s173, 0
    %p368 = por %p366, %p367
    %s370 = sadd.s32 %s369, 1
    %p373 = scmp.eq.s32.totalorder %s167, 1
    %p374 = scmp.ne.s32.totalorder %s369, %s371
    %p375 = scmp.eq.s32.totalorder %s167, 0
    %p376 = por %p374, %p375
    %p377 = scmp.ne.s32.totalorder %s369, %s371
    %p378 = scmp.eq.s32.totalorder %s172, 1
    %p379 = por %p377, %p378
    %p380 = scmp.ne.s32.totalorder %s371, %s372
    %p381 = scmp.eq.s32.totalorder %s172, 0
    %p382 = por %p380, %p381
    %p383 = scmp.ne.s32.totalorder %s371, %s372
    %p384 = scmp.eq.s32.totalorder %s173, 1
    %p385 = por %p383, %p384
    %p387 = scmp.ne.s32.totalorder %s372, %s386
    %p388 = scmp.eq.s32.totalorder %s173, 0
    %p389 = por %p387, %p388
    %s391 = sadd.s32 %s390, 1
    %p394 = scmp.eq.s32.totalorder %s167, 1
    %p395 = scmp.ne.s32.totalorder %s390, %s392
    %p396 = scmp.eq.s32.totalorder %s167, 0
    %p397 = por %p395, %p396
    %p398 = scmp.ne.s32.totalorder %s390, %s392
    %p399 = scmp.eq.s32.totalorder %s172, 1
    %p400 = por %p398, %p399
    %p401 = scmp.ne.s32.totalorder %s392, %s393
    %p402 = scmp.eq.s32.totalorder %s172, 0
    %p403 = por %p401, %p402
    %p404 = scmp.ne.s32.totalorder %s392, %s393
    %p405 = scmp.eq.s32.totalorder %s173, 1
    %p406 = por %p404, %p405
    %p408 = scmp.ne.s32.totalorder %s393, %s407
    %p409 = scmp.eq.s32.totalorder %s173, 0
    %p410 = por %p408, %p409
    %s412 = sadd.s32 %s411, 1
    %p415 = scmp.eq.s32.totalorder %s167, 1
    %p416 = scmp.ne.s32.totalorder %s411, %s413
    %p417 = scmp.eq.s32.totalorder %s167, 0
    %p418 = por %p416, %p417
    %p419 = scmp.ne.s32.totalorder %s411, %s413
    %p420 = scmp.eq.s32.totalorder %s172, 1
    %p421 = por %p419, %p420
    %p422 = scmp.ne.s32.totalorder %s413, %s414
    %p423 = scmp.eq.s32.totalorder %s172, 0
    %p424 = por %p422, %p423
    %p425 = scmp.ne.s32.totalorder %s413, %s414
    %p426 = scmp.eq.s32.totalorder %s173, 1
    %p427 = por %p425, %p426
    %p429 = scmp.ne.s32.totalorder %s414, %s428
    %p430 = scmp.eq.s32.totalorder %s173, 0
    %p431 = por %p429, %p430
    %s433 = sadd.s32 %s432, 1
    %p436 = scmp.eq.s32.totalorder %s167, 1
    %p437 = scmp.ne.s32.totalorder %s432, %s434
    %p438 = scmp.eq.s32.totalorder %s167, 0
    %p439 = por %p437, %p438
    %p440 = scmp.ne.s32.totalorder %s432, %s434
    %p441 = scmp.eq.s32.totalorder %s172, 1
    %p442 = por %p440, %p441
    %p443 = scmp.ne.s32.totalorder %s434, %s435
    %p444 = scmp.eq.s32.totalorder %s172, 0
    %p445 = por %p443, %p444
    %p446 = scmp.ne.s32.totalorder %s434, %s435
    %p447 = scmp.eq.s32.totalorder %s173, 1
    %p448 = por %p446, %p447
    %p450 = scmp.ne.s32.totalorder %s435, %s449
    %p451 = scmp.eq.s32.totalorder %s173, 0
    %p452 = por %p450, %p451
    %s454 = sadd.s32 %s453, 1
    %p457 = scmp.eq.s32.totalorder %s167, 1
    %p458 = scmp.ne.s32.totalorder %s453, %s455
    %p459 = scmp.eq.s32.totalorder %s167, 0
    %p460 = por %p458, %p459
    %p461 = scmp.ne.s32.totalorder %s453, %s455
    %p462 = scmp.eq.s32.totalorder %s172, 1
    %p463 = por %p461, %p462
    %p464 = scmp.ne.s32.totalorder %s455, %s456
    %p465 = scmp.eq.s32.totalorder %s172, 0
    %p466 = por %p464, %p465
    %p467 = scmp.ne.s32.totalorder %s455, %s456
    %p468 = scmp.eq.s32.totalorder %s173, 1
    %p469 = por %p467, %p468
    %p471 = scmp.ne.s32.totalorder %s456, %s470
    %p472 = scmp.eq.s32.totalorder %s173, 0
    %p473 = por %p471, %p472
    %s475 = sadd.s32 %s474, 1
    %p478 = scmp.eq.s32.totalorder %s167, 1
    %p479 = scmp.ne.s32.totalorder %s474, %s476
    %p480 = scmp.eq.s32.totalorder %s167, 0
    %p481 = por %p479, %p480
    %p482 = scmp.ne.s32.totalorder %s474, %s476
    %p483 = scmp.eq.s32.totalorder %s172, 1
    %p484 = por %p482, %p483
    %p485 = scmp.ne.s32.totalorder %s476, %s477
    %p486 = scmp.eq.s32.totalorder %s172, 0
    %p487 = por %p485, %p486
    %p488 = scmp.ne.s32.totalorder %s476, %s477
    %p489 = scmp.eq.s32.totalorder %s173, 1
    %p490 = por %p488, %p489
    %p492 = scmp.ne.s32.totalorder %s477, %s491
    %p493 = scmp.eq.s32.totalorder %s173, 0
    %p494 = por %p492, %p493
    %s496 = sadd.s32 %s495, 1
    %p499 = scmp.eq.s32.totalorder %s167, 1
    %p500 = scmp.ne.s32.totalorder %s495, %s497
    %p501 = scmp.eq.s32.totalorder %s167, 0
    %p502 = por %p500, %p501
    %p503 = scmp.ne.s32.totalorder %s495, %s497
    %p504 = scmp.eq.s32.totalorder %s172, 1
    %p505 = por %p503, %p504
    %p506 = scmp.ne.s32.totalorder %s497, %s498
    %p507 = scmp.eq.s32.totalorder %s172, 0
    %p508 = por %p506, %p507
    %p509 = scmp.ne.s32.totalorder %s497, %s498
    %p510 = scmp.eq.s32.totalorder %s173, 1
    %p511 = por %p509, %p510
    %p513 = scmp.ne.s32.totalorder %s498, %s512
    %p514 = scmp.eq.s32.totalorder %s173, 0
    %p515 = por %p513, %p514
    %s517 = sadd.s32 %s516, 1
    %p520 = scmp.eq.s32.totalorder %s167, 1
    %p521 = scmp.ne.s32.totalorder %s516, %s518
    %p522 = scmp.eq.s32.totalorder %s167, 0
    %p523 = por %p521, %p522
    %p524 = scmp.ne.s32.totalorder %s516, %s518
    %p525 = scmp.eq.s32.totalorder %s172, 1
    %p526 = por %p524, %p525
    %p527 = scmp.ne.s32.totalorder %s518, %s519
    %p528 = scmp.eq.s32.totalorder %s172, 0
    %p529 = por %p527, %p528
    %p530 = scmp.ne.s32.totalorder %s518, %s519
    %p531 = scmp.eq.s32.totalorder %s173, 1
    %p532 = por %p530, %p531
    %p534 = scmp.ne.s32.totalorder %s519, %s533
    %p535 = scmp.eq.s32.totalorder %s173, 0
    %p536 = por %p534, %p535
    %s538 = sadd.s32 %s537, 1
    %p541 = scmp.eq.s32.totalorder %s167, 1
    %p542 = scmp.ne.s32.totalorder %s537, %s539
    %p543 = scmp.eq.s32.totalorder %s167, 0
    %p544 = por %p542, %p543
    %p545 = scmp.ne.s32.totalorder %s537, %s539
    %p546 = scmp.eq.s32.totalorder %s172, 1
    %p547 = por %p545, %p546
    %p548 = scmp.ne.s32.totalorder %s539, %s540
    %p549 = scmp.eq.s32.totalorder %s172, 0
    %p550 = por %p548, %p549
    %p551 = scmp.ne.s32.totalorder %s539, %s540
    %p552 = scmp.eq.s32.totalorder %s173, 1
    %p553 = por %p551, %p552
    %p555 = scmp.ne.s32.totalorder %s540, %s554
    %p556 = scmp.eq.s32.totalorder %s173, 0
    %p557 = por %p555, %p556
    %s559 = sadd.s32 %s558, 1
    %p562 = scmp.eq.s32.totalorder %s167, 1
    %p563 = scmp.ne.s32.totalorder %s558, %s560
    %p564 = scmp.eq.s32.totalorder %s167, 0
    %p565 = por %p563, %p564
    %p566 = scmp.ne.s32.totalorder %s558, %s560
    %p567 = scmp.eq.s32.totalorder %s172, 1
    %p568 = por %p566, %p567
    %p569 = scmp.ne.s32.totalorder %s560, %s561
    %p570 = scmp.eq.s32.totalorder %s172, 0
    %p571 = por %p569, %p570
    %p572 = scmp.ne.s32.totalorder %s560, %s561
    %p573 = scmp.eq.s32.totalorder %s173, 1
    %p574 = por %p572, %p573
    %p576 = scmp.ne.s32.totalorder %s561, %s575
    %p577 = scmp.eq.s32.totalorder %s173, 0
    %p578 = por %p576, %p577
    %s580 = sadd.s32 %s579, 1
    %p583 = scmp.eq.s32.totalorder %s167, 1
    %p584 = scmp.ne.s32.totalorder %s579, %s581
    %p585 = scmp.eq.s32.totalorder %s167, 0
    %p586 = por %p584, %p585
    %p587 = scmp.ne.s32.totalorder %s579, %s581
    %p588 = scmp.eq.s32.totalorder %s172, 1
    %p589 = por %p587, %p588
    %p590 = scmp.ne.s32.totalorder %s581, %s582
    %p591 = scmp.eq.s32.totalorder %s172, 0
    %p592 = por %p590, %p591
    %p593 = scmp.ne.s32.totalorder %s581, %s582
    %p594 = scmp.eq.s32.totalorder %s173, 1
    %p595 = por %p593, %p594
    %p597 = scmp.ne.s32.totalorder %s582, %s596
    %p598 = scmp.eq.s32.totalorder %s173, 0
    %p599 = por %p597, %p598
    %s601 = sadd.s32 %s600, 1
    %p604 = scmp.eq.s32.totalorder %s167, 1
    %p605 = scmp.ne.s32.totalorder %s600, %s602
    %p606 = scmp.eq.s32.totalorder %s167, 0
    %p607 = por %p605, %p606
    %p608 = scmp.ne.s32.totalorder %s600, %s602
    %p609 = scmp.eq.s32.totalorder %s172, 1
    %p610 = por %p608, %p609
    %p611 = scmp.ne.s32.totalorder %s602, %s603
    %p612 = scmp.eq.s32.totalorder %s172, 0
    %p613 = por %p611, %p612
    %p614 = scmp.ne.s32.totalorder %s602, %s603
    %p615 = scmp.eq.s32.totalorder %s173, 1
    %p616 = por %p614, %p615
    %p618 = scmp.ne.s32.totalorder %s603, %s617
    %p619 = scmp.eq.s32.totalorder %s173, 0
    %p620 = por %p618, %p619
    %s622 = sadd.s32 %s621, 1
    %p625 = scmp.eq.s32.totalorder %s167, 1
    %p626 = scmp.ne.s32.totalorder %s621, %s623
    %p627 = scmp.eq.s32.totalorder %s167, 0
    %p628 = por %p626, %p627
    %p629 = scmp.ne.s32.totalorder %s621, %s623
    %p630 = scmp.eq.s32.totalorder %s172, 1
    %p631 = por %p629, %p630
    %p632 = scmp.ne.s32.totalorder %s623, %s624
    %p633 = scmp.eq.s32.totalorder %s172, 0
    %p634 = por %p632, %p633
    %p635 = scmp.ne.s32.totalorder %s623, %s624
    %p636 = scmp.eq.s32.totalorder %s173, 1
    %p637 = por %p635, %p636
    %p639 = scmp.ne.s32.totalorder %s624, %s638
    %p640 = scmp.eq.s32.totalorder %s173, 0
    %p641 = por %p639, %p640
    %s643 = sadd.s32 %s642, 1
    %p646 = scmp.eq.s32.totalorder %s167, 1
    %p647 = scmp.ne.s32.totalorder %s642, %s644
    %p648 = scmp.eq.s32.totalorder %s167, 0
    %p649 = por %p647, %p648
    %p650 = scmp.ne.s32.totalorder %s642, %s644
    %p651 = scmp.eq.s32.totalorder %s172, 1
    %p652 = por %p650, %p651
    %p653 = scmp.ne.s32.totalorder %s644, %s645
    %p654 = scmp.eq.s32.totalorder %s172, 0
    %p655 = por %p653, %p654
    %p656 = scmp.ne.s32.totalorder %s644, %s645
    %p657 = scmp.eq.s32.totalorder %s173, 1
    %p658 = por %p656, %p657
    %p660 = scmp.ne.s32.totalorder %s645, %s659
    %p661 = scmp.eq.s32.totalorder %s173, 0
    %p662 = por %p660, %p661
    %s664 = sadd.s32 %s663, 1
    %p667 = scmp.eq.s32.totalorder %s167, 1
    %p668 = scmp.ne.s32.totalorder %s663, %s665
    %p669 = scmp.eq.s32.totalorder %s167, 0
    %p670 = por %p668, %p669
    %p671 = scmp.ne.s32.totalorder %s663, %s665
    %p672 = scmp.eq.s32.totalorder %s172, 1
    %p673 = por %p671, %p672
    %p674 = scmp.ne.s32.totalorder %s665, %s666
    %p675 = scmp.eq.s32.totalorder %s172, 0
    %p676 = por %p674, %p675
    %p677 = scmp.ne.s32.totalorder %s665, %s666
    %p678 = scmp.eq.s32.totalorder %s173, 1
    %p679 = por %p677, %p678
    %p681 = scmp.ne.s32.totalorder %s666, %s680
    %p682 = scmp.eq.s32.totalorder %s173, 0
    %p683 = por %p681, %p682
    %s685 = sadd.s32 %s684, 1
    %p688 = scmp.eq.s32.totalorder %s167, 1
    %p689 = scmp.ne.s32.totalorder %s684, %s686
    %p690 = scmp.eq.s32.totalorder %s167, 0
    %p691 = por %p689, %p690
    %p692 = scmp.ne.s32.totalorder %s684, %s686
    %p693 = scmp.eq.s32.totalorder %s172, 1
    %p694 = por %p692, %p693
    %p695 = scmp.ne.s32.totalorder %s686, %s687
    %p696 = scmp.eq.s32.totalorder %s172, 0
    %p697 = por %p695, %p696
    %p698 = scmp.ne.s32.totalorder %s686, %s687
    %p699 = scmp.eq.s32.totalorder %s173, 1
    %p700 = por %p698, %p699
    %p702 = scmp.ne.s32.totalorder %s687, %s701
    %p703 = scmp.eq.s32.totalorder %s173, 0
    %p704 = por %p702, %p703
    %s706 = sadd.s32 %s705, 1
    %p709 = scmp.eq.s32.totalorder %s167, 1
    %p710 = scmp.ne.s32.totalorder %s705, %s707
    %p711 = scmp.eq.s32.totalorder %s167, 0
    %p712 = por %p710, %p711
    %p713 = scmp.ne.s32.totalorder %s705, %s707
    %p714 = scmp.eq.s32.totalorder %s172, 1
    %p715 = por %p713, %p714
    %p716 = scmp.ne.s32.totalorder %s707, %s708
    %p717 = scmp.eq.s32.totalorder %s172, 0
    %p718 = por %p716, %p717
    %p719 = scmp.ne.s32.totalorder %s707, %s708
    %p720 = scmp.eq.s32.totalorder %s173, 1
    %p721 = por %p719, %p720
    %p723 = scmp.ne.s32.totalorder %s708, %s722
    %p724 = scmp.eq.s32.totalorder %s173, 0
    %p725 = por %p723, %p724
    %s727 = sadd.s32 %s726, 1
    %p730 = scmp.eq.s32.totalorder %s167, 1
    %p731 = scmp.ne.s32.totalorder %s726, %s728
    %p732 = scmp.eq.s32.totalorder %s167, 0
    %p733 = por %p731, %p732
    %p734 = scmp.ne.s32.totalorder %s726, %s728
    %p735 = scmp.eq.s32.totalorder %s172, 1
    %p736 = por %p734, %p735
    %p737 = scmp.ne.s32.totalorder %s728, %s729
    %p738 = scmp.eq.s32.totalorder %s172, 0
    %p739 = por %p737, %p738
    %p740 = scmp.ne.s32.totalorder %s728, %s729
    %p741 = scmp.eq.s32.totalorder %s173, 1
    %p742 = por %p740, %p741
    %p744 = scmp.ne.s32.totalorder %s729, %s743
    %p745 = scmp.eq.s32.totalorder %s173, 0
    %p746 = por %p744, %p745
    %s748 = sadd.s32 %s747, 1
    %p751 = scmp.eq.s32.totalorder %s167, 1
    %p752 = scmp.ne.s32.totalorder %s747, %s749
    %p753 = scmp.eq.s32.totalorder %s167, 0
    %p754 = por %p752, %p753
    %p755 = scmp.ne.s32.totalorder %s747, %s749
    %p756 = scmp.eq.s32.totalorder %s172, 1
    %p757 = por %p755, %p756
    %p758 = scmp.ne.s32.totalorder %s749, %s750
    %p759 = scmp.eq.s32.totalorder %s172, 0
    %p760 = por %p758, %p759
    %p761 = scmp.ne.s32.totalorder %s749, %s750
    %p762 = scmp.eq.s32.totalorder %s173, 1
    %p763 = por %p761, %p762
    %p765 = scmp.ne.s32.totalorder %s750, %s764
    %p766 = scmp.eq.s32.totalorder %s173, 0
    %p767 = por %p765, %p766
    %s769 = sadd.s32 %s768, 1
    %p772 = scmp.eq.s32.totalorder %s167, 1
    %p773 = scmp.ne.s32.totalorder %s768, %s770
    %p774 = scmp.eq.s32.totalorder %s167, 0
    %p775 = por %p773, %p774
    %p776 = scmp.ne.s32.totalorder %s768, %s770
    %p777 = scmp.eq.s32.totalorder %s172, 1
    %p778 = por %p776, %p777
    %p779 = scmp.ne.s32.totalorder %s770, %s771
    %p780 = scmp.eq.s32.totalorder %s172, 0
    %p781 = por %p779, %p780
    %p782 = scmp.ne.s32.totalorder %s770, %s771
    %p783 = scmp.eq.s32.totalorder %s173, 1
    %p784 = por %p782, %p783
    %p786 = scmp.ne.s32.totalorder %s771, %s785
    %p787 = scmp.eq.s32.totalorder %s173, 0
    %p788 = por %p786, %p787
    %s790 = sadd.s32 %s789, 1
    %p793 = scmp.eq.s32.totalorder %s167, 1
    %p794 = scmp.ne.s32.totalorder %s789, %s791
    %p795 = scmp.eq.s32.totalorder %s167, 0
    %p796 = por %p794, %p795
    %p797 = scmp.ne.s32.totalorder %s789, %s791
    %p798 = scmp.eq.s32.totalorder %s172, 1
    %p799 = por %p797, %p798
    %p800 = scmp.ne.s32.totalorder %s791, %s792
    %p801 = scmp.eq.s32.totalorder %s172, 0
    %p802 = por %p800, %p801
    %p803 = scmp.ne.s32.totalorder %s791, %s792
    %p804 = scmp.eq.s32.totalorder %s173, 1
    %p805 = por %p803, %p804
    %p807 = scmp.ne.s32.totalorder %s792, %s806
    %p808 = scmp.eq.s32.totalorder %s173, 0
    %p809 = por %p807, %p808
    %s811 = sadd.s32 %s810, 1
    %p814 = scmp.eq.s32.totalorder %s167, 1
    %p815 = scmp.ne.s32.totalorder %s810, %s812
    %p816 = scmp.eq.s32.totalorder %s167, 0
    %p817 = por %p815, %p816
    %p818 = scmp.ne.s32.totalorder %s810, %s812
    %p819 = scmp.eq.s32.totalorder %s172, 1
    %p820 = por %p818, %p819
    %p821 = scmp.ne.s32.totalorder %s812, %s813
    %p822 = scmp.eq.s32.totalorder %s172, 0
    %p823 = por %p821, %p822
    %p824 = scmp.ne.s32.totalorder %s812, %s813
    %p825 = scmp.eq.s32.totalorder %s173, 1
    %p826 = por %p824, %p825
    %p828 = scmp.ne.s32.totalorder %s813, %s827
    %p829 = scmp.eq.s32.totalorder %s173, 0
    %p830 = por %p828, %p829
    %s832 = sadd.s32 %s831, 1
    %p835 = scmp.eq.s32.totalorder %s167, 1
    %p836 = scmp.ne.s32.totalorder %s831, %s833
    %p837 = scmp.eq.s32.totalorder %s167, 0
    %p838 = por %p836, %p837
    %p839 = scmp.ne.s32.totalorder %s831, %s833
    %p840 = scmp.eq.s32.totalorder %s172, 1
    %p841 = por %p839, %p840
    %p842 = scmp.ne.s32.totalorder %s833, %s834
    %p843 = scmp.eq.s32.totalorder %s172, 0
    %p844 = por %p842, %p843
    %p845 = scmp.ne.s32.totalorder %s833, %s834
    %p846 = scmp.eq.s32.totalorder %s173, 1
    %p847 = por %p845, %p846
    %p849 = scmp.ne.s32.totalorder %s834, %s848
    %p850 = scmp.eq.s32.totalorder %s173, 0
    %p851 = por %p849, %p850
    %s853 = sadd.s32 %s852, 1
    %p856 = scmp.eq.s32.totalorder %s167, 1
    %p857 = scmp.ne.s32.totalorder %s852, %s854
    %p858 = scmp.eq.s32.totalorder %s167, 0
    %p859 = por %p857, %p858
    %p860 = scmp.ne.s32.totalorder %s852, %s854
    %p861 = scmp.eq.s32.totalorder %s172, 1
    %p862 = por %p860, %p861
    %p863 = scmp.ne.s32.totalorder %s854, %s855
    %p864 = scmp.eq.s32.totalorder %s172, 0
    %p865 = por %p863, %p864
    %p866 = scmp.ne.s32.totalorder %s854, %s855
    %p867 = scmp.eq.s32.totalorder %s173, 1
    %p868 = por %p866, %p867
    %p870 = scmp.ne.s32.totalorder %s855, %s869
    %p871 = scmp.eq.s32.totalorder %s173, 0
    %p872 = por %p870, %p871
    %s874 = sadd.s32 %s873, 1
    %p877 = scmp.eq.s32.totalorder %s167, 1
    %p878 = scmp.ne.s32.totalorder %s873, %s875
    %p879 = scmp.eq.s32.totalorder %s167, 0
    %p880 = por %p878, %p879
    %p881 = scmp.ne.s32.totalorder %s873, %s875
    %p882 = scmp.eq.s32.totalorder %s172, 1
    %p883 = por %p881, %p882
    %p884 = scmp.ne.s32.totalorder %s875, %s876
    %p885 = scmp.eq.s32.totalorder %s172, 0
    %p886 = por %p884, %p885
    %p887 = scmp.ne.s32.totalorder %s875, %s876
    %p888 = scmp.eq.s32.totalorder %s173, 1
    %p889 = por %p887, %p888
    %p891 = scmp.ne.s32.totalorder %s876, %s890
    %p892 = scmp.eq.s32.totalorder %s173, 0
    %p893 = por %p891, %p892
    %s895 = sadd.s32 %s894, 1
    %p898 = scmp.eq.s32.totalorder %s167, 1
    %p899 = scmp.ne.s32.totalorder %s894, %s896
    %p900 = scmp.eq.s32.totalorder %s167, 0
    %p901 = por %p899, %p900
    %p902 = scmp.ne.s32.totalorder %s894, %s896
    %p903 = scmp.eq.s32.totalorder %s172, 1
    %p904 = por %p902, %p903
    %p905 = scmp.ne.s32.totalorder %s896, %s897
    %p906 = scmp.eq.s32.totalorder %s172, 0
    %p907 = por %p905, %p906
    %p908 = scmp.ne.s32.totalorder %s896, %s897
    %p909 = scmp.eq.s32.totalorder %s173, 1
    %p910 = por %p908, %p909
    %p912 = scmp.ne.s32.totalorder %s897, %s911
    %p913 = scmp.eq.s32.totalorder %s173, 0
    %p914 = por %p912, %p913
    %s916 = sadd.s32 %s915, 1
    %p919 = scmp.eq.s32.totalorder %s167, 1
    %p920 = scmp.ne.s32.totalorder %s915, %s917
    %p921 = scmp.eq.s32.totalorder %s167, 0
    %p922 = por %p920, %p921
    %p923 = scmp.ne.s32.totalorder %s915, %s917
    %p924 = scmp.eq.s32.totalorder %s172, 1
    %p925 = por %p923, %p924
    %p926 = scmp.ne.s32.totalorder %s917, %s918
    %p927 = scmp.eq.s32.totalorder %s172, 0
    %p928 = por %p926, %p927
    %p929 = scmp.ne.s32.totalorder %s917, %s918
    %p930 = scmp.eq.s32.totalorder %s173, 1
    %p931 = por %p929, %p930
    %p933 = scmp.ne.s32.totalorder %s918, %s932
    %p934 = scmp.eq.s32.totalorder %s173, 0
    %p935 = por %p933, %p934
    %s937 = sadd.s32 %s936, 1
    %p940 = scmp.eq.s32.totalorder %s167, 1
    %p941 = scmp.ne.s32.totalorder %s936, %s938
    %p942 = scmp.eq.s32.totalorder %s167, 0
    %p943 = por %p941, %p942
    %p944 = scmp.ne.s32.totalorder %s936, %s938
    %p945 = scmp.eq.s32.totalorder %s172, 1
    %p946 = por %p944, %p945
    %p947 = scmp.ne.s32.totalorder %s938, %s939
    %p948 = scmp.eq.s32.totalorder %s172, 0
    %p949 = por %p947, %p948
    %p950 = scmp.ne.s32.totalorder %s938, %s939
    %p951 = scmp.eq.s32.totalorder %s173, 1
    %p952 = por %p950, %p951
    %p954 = scmp.ne.s32.totalorder %s939, %s953
    %p955 = scmp.eq.s32.totalorder %s173, 0
    %p956 = por %p954, %p955
    %s958 = sadd.s32 %s957, 1
    %p961 = scmp.eq.s32.totalorder %s167, 1
    %p962 = scmp.ne.s32.totalorder %s957, %s959
    %p963 = scmp.eq.s32.totalorder %s167, 0
    %p964 = por %p962, %p963
    %p965 = scmp.ne.s32.totalorder %s957, %s959
    %p966 = scmp.eq.s32.totalorder %s172, 1
    %p967 = por %p965, %p966
    %p968 = scmp.ne.s32.totalorder %s959, %s960
    %p969 = scmp.eq.s32.totalorder %s172, 0
    %p970 = por %p968, %p969
    %p971 = scmp.ne.s32.totalorder %s959, %s960
    %p972 = scmp.eq.s32.totalorder %s173, 1
    %p973 = por %p971, %p972
    %p975 = scmp.ne.s32.totalorder %s960, %s974
    %p976 = scmp.eq.s32.totalorder %s173, 0
    %p977 = por %p975, %p976
    %s979 = sadd.s32 %s978, 1
    %p982 = scmp.eq.s32.totalorder %s167, 1
    %p983 = scmp.ne.s32.totalorder %s978, %s980
    %p984 = scmp.eq.s32.totalorder %s167, 0
    %p985 = por %p983, %p984
    %p986 = scmp.ne.s32.totalorder %s978, %s980
    %p987 = scmp.eq.s32.totalorder %s172, 1
    %p988 = por %p986, %p987
    %p989 = scmp.ne.s32.totalorder %s980, %s981
    %p990 = scmp.eq.s32.totalorder %s172, 0
    %p991 = por %p989, %p990
    %p992 = scmp.ne.s32.totalorder %s980, %s981
    %p993 = scmp.eq.s32.totalorder %s173, 1
    %p994 = por %p992, %p993
    %p996 = scmp.ne.s32.totalorder %s981, %s995
    %p997 = scmp.eq.s32.totalorder %s173, 0
    %p998 = por %p996, %p997
    %s1000 = sadd.s32 %s999, 1
    %p1003 = scmp.eq.s32.totalorder %s167, 1
    %p1004 = scmp.ne.s32.totalorder %s999, %s1001
    %p1005 = scmp.eq.s32.totalorder %s167, 0
    %p1006 = por %p1004, %p1005
    %p1007 = scmp.ne.s32.totalorder %s999, %s1001
    %p1008 = scmp.eq.s32.totalorder %s172, 1
    %p1009 = por %p1007, %p1008
    %p1010 = scmp.ne.s32.totalorder %s1001, %s1002
    %p1011 = scmp.eq.s32.totalorder %s172, 0
    %p1012 = por %p1010, %p1011
    %p1013 = scmp.ne.s32.totalorder %s1001, %s1002
    %p1014 = scmp.eq.s32.totalorder %s173, 1
    %p1015 = por %p1013, %p1014
    %p1017 = scmp.ne.s32.totalorder %s1002, %s1016
    %p1018 = scmp.eq.s32.totalorder %s173, 0
    %p1019 = por %p1017, %p1018
    %s1021 = sadd.s32 %s1020, 1
    %p1024 = scmp.eq.s32.totalorder %s167, 1
    %p1025 = scmp.ne.s32.totalorder %s1020, %s1022
    %p1026 = scmp.eq.s32.totalorder %s167, 0
    %p1027 = por %p1025, %p1026
    %p1028 = scmp.ne.s32.totalorder %s1020, %s1022
    %p1029 = scmp.eq.s32.totalorder %s172, 1
    %p1030 = por %p1028, %p1029
    %p1031 = scmp.ne.s32.totalorder %s1022, %s1023
    %p1032 = scmp.eq.s32.totalorder %s172, 0
    %p1033 = por %p1031, %p1032
    %p1034 = scmp.ne.s32.totalorder %s1022, %s1023
    %p1035 = scmp.eq.s32.totalorder %s173, 1
    %p1036 = por %p1034, %p1035
    %p1038 = scmp.ne.s32.totalorder %s1023, %s1037
    %p1039 = scmp.eq.s32.totalorder %s173, 0
    %p1040 = por %p1038, %p1039
    %s1042 = sadd.s32 %s1041, 1
    %p1045 = scmp.eq.s32.totalorder %s167, 1
    %p1046 = scmp.ne.s32.totalorder %s1041, %s1043
    %p1047 = scmp.eq.s32.totalorder %s167, 0
    %p1048 = por %p1046, %p1047
    %p1049 = scmp.ne.s32.totalorder %s1041, %s1043
    %p1050 = scmp.eq.s32.totalorder %s172, 1
    %p1051 = por %p1049, %p1050
    %p1052 = scmp.ne.s32.totalorder %s1043, %s1044
    %p1053 = scmp.eq.s32.totalorder %s172, 0
    %p1054 = por %p1052, %p1053
    %p1055 = scmp.ne.s32.totalorder %s1043, %s1044
    %p1056 = scmp.eq.s32.totalorder %s173, 1
    %p1057 = por %p1055, %p1056
    %p1059 = scmp.ne.s32.totalorder %s1044, %s1058
    %p1060 = scmp.eq.s32.totalorder %s173, 0
    %p1061 = por %p1059, %p1060
    %s1063 = sadd.s32 %s1062, 1
    %p1066 = scmp.eq.s32.totalorder %s167, 1
    %p1067 = scmp.ne.s32.totalorder %s1062, %s1064
    %p1068 = scmp.eq.s32.totalorder %s167, 0
    %p1069 = por %p1067, %p1068
    %p1070 = scmp.ne.s32.totalorder %s1062, %s1064
    %p1071 = scmp.eq.s32.totalorder %s172, 1
    %p1072 = por %p1070, %p1071
    %p1073 = scmp.ne.s32.totalorder %s1064, %s1065
    %p1074 = scmp.eq.s32.totalorder %s172, 0
    %p1075 = por %p1073, %p1074
    %p1076 = scmp.ne.s32.totalorder %s1064, %s1065
    %p1077 = scmp.eq.s32.totalorder %s173, 1
    %p1078 = por %p1076, %p1077
    %p1080 = scmp.ne.s32.totalorder %s1065, %s1079
    %p1081 = scmp.eq.s32.totalorder %s173, 0
    %p1082 = por %p1080, %p1081
    %s1084 = sadd.s32 %s1083, 1
    %p1087 = scmp.eq.s32.totalorder %s167, 1
    %p1088 = scmp.ne.s32.totalorder %s1083, %s1085
    %p1089 = scmp.eq.s32.totalorder %s167, 0
    %p1090 = por %p1088, %p1089
    %p1091 = scmp.ne.s32.totalorder %s1083, %s1085
    %p1092 = scmp.eq.s32.totalorder %s172, 1
    %p1093 = por %p1091, %p1092
    %p1094 = scmp.ne.s32.totalorder %s1085, %s1086
    %p1095 = scmp.eq.s32.totalorder %s172, 0
    %p1096 = por %p1094, %p1095
    %p1097 = scmp.ne.s32.totalorder %s1085, %s1086
    %p1098 = scmp.eq.s32.totalorder %s173, 1
    %p1099 = por %p1097, %p1098
    %p1101 = scmp.ne.s32.totalorder %s1086, %s1100
    %p1102 = scmp.eq.s32.totalorder %s173, 0
    %p1103 = por %p1101, %p1102
    %s1105 = sadd.s32 %s1104, 1
    %p1108 = scmp.eq.s32.totalorder %s167, 1
    %p1109 = scmp.ne.s32.totalorder %s1104, %s1106
    %p1110 = scmp.eq.s32.totalorder %s167, 0
    %p1111 = por %p1109, %p1110
    %p1112 = scmp.ne.s32.totalorder %s1104, %s1106
    %p1113 = scmp.eq.s32.totalorder %s172, 1
    %p1114 = por %p1112, %p1113
    %p1115 = scmp.ne.s32.totalorder %s1106, %s1107
    %p1116 = scmp.eq.s32.totalorder %s172, 0
    %p1117 = por %p1115, %p1116
    %p1118 = scmp.ne.s32.totalorder %s1106, %s1107
    %p1119 = scmp.eq.s32.totalorder %s173, 1
    %p1120 = por %p1118, %p1119
    %p1122 = scmp.ne.s32.totalorder %s1107, %s1121
    %p1123 = scmp.eq.s32.totalorder %s173, 0
    %p1124 = por %p1122, %p1123
    %s1126 = sadd.s32 %s1125, 1
    %p1129 = scmp.eq.s32.totalorder %s167, 1
    %p1130 = scmp.ne.s32.totalorder %s1125, %s1127
    %p1131 = scmp.eq.s32.totalorder %s167, 0
    %p1132 = por %p1130, %p1131
    %p1133 = scmp.ne.s32.totalorder %s1125, %s1127
    %p1134 = scmp.eq.s32.totalorder %s172, 1
    %p1135 = por %p1133, %p1134
    %p1136 = scmp.ne.s32.totalorder %s1127, %s1128
    %p1137 = scmp.eq.s32.totalorder %s172, 0
    %p1138 = por %p1136, %p1137
    %p1139 = scmp.ne.s32.totalorder %s1127, %s1128
    %p1140 = scmp.eq.s32.totalorder %s173, 1
    %p1141 = por %p1139, %p1140
    %p1143 = scmp.ne.s32.totalorder %s1128, %s1142
    %p1144 = scmp.eq.s32.totalorder %s173, 0
    %p1145 = por %p1143, %p1144
    %s1147 = sadd.s32 %s1146, 1
    %p1150 = scmp.eq.s32.totalorder %s167, 1
    %p1151 = scmp.ne.s32.totalorder %s1146, %s1148
    %p1152 = scmp.eq.s32.totalorder %s167, 0
    %p1153 = por %p1151, %p1152
    %p1154 = scmp.ne.s32.totalorder %s1146, %s1148
    %p1155 = scmp.eq.s32.totalorder %s172, 1
    %p1156 = por %p1154, %p1155
    %p1157 = scmp.ne.s32.totalorder %s1148, %s1149
    %p1158 = scmp.eq.s32.totalorder %s172, 0
    %p1159 = por %p1157, %p1158
    %p1160 = scmp.ne.s32.totalorder %s1148, %s1149
    %p1161 = scmp.eq.s32.totalorder %s173, 1
    %p1162 = por %p1160, %p1161
    %p1164 = scmp.ne.s32.totalorder %s1149, %s1163
    %p1165 = scmp.eq.s32.totalorder %s173, 0
    %p1166 = por %p1164, %p1165
    %s1168 = sadd.s32 %s1167, 1
    %p1171 = scmp.eq.s32.totalorder %s167, 1
    %p1172 = scmp.ne.s32.totalorder %s1167, %s1169
    %p1173 = scmp.eq.s32.totalorder %s167, 0
    %p1174 = por %p1172, %p1173
    %p1175 = scmp.ne.s32.totalorder %s1167, %s1169
    %p1176 = scmp.eq.s32.totalorder %s172, 1
    %p1177 = por %p1175, %p1176
    %p1178 = scmp.ne.s32.totalorder %s1169, %s1170
    %p1179 = scmp.eq.s32.totalorder %s172, 0
    %p1180 = por %p1178, %p1179
    %p1181 = scmp.ne.s32.totalorder %s1169, %s1170
    %p1182 = scmp.eq.s32.totalorder %s173, 1
    %p1183 = por %p1181, %p1182
    %p1185 = scmp.ne.s32.totalorder %s1170, %s1184
    %p1186 = scmp.eq.s32.totalorder %s173, 0
    %p1187 = por %p1185, %p1186
    %s1189 = sadd.s32 %s1188, 1
    %p1192 = scmp.eq.s32.totalorder %s167, 1
    %p1193 = scmp.ne.s32.totalorder %s1188, %s1190
    %p1194 = scmp.eq.s32.totalorder %s167, 0
    %p1195 = por %p1193, %p1194
    %p1196 = scmp.ne.s32.totalorder %s1188, %s1190
    %p1197 = scmp.eq.s32.totalorder %s172, 1
    %p1198 = por %p1196, %p1197
    %p1199 = scmp.ne.s32.totalorder %s1190, %s1191
    %p1200 = scmp.eq.s32.totalorder %s172, 0
    %p1201 = por %p1199, %p1200
    %p1202 = scmp.ne.s32.totalorder %s1190, %s1191
    %p1203 = scmp.eq.s32.totalorder %s173, 1
    %p1204 = por %p1202, %p1203
    %p1206 = scmp.ne.s32.totalorder %s1191, %s1205
    %p1207 = scmp.eq.s32.totalorder %s173, 0
    %p1208 = por %p1206, %p1207
    %s1210 = sadd.s32 %s1209, 1
    %p1213 = scmp.eq.s32.totalorder %s167, 1
    %p1214 = scmp.ne.s32.totalorder %s1209, %s1211
    %p1215 = scmp.eq.s32.totalorder %s167, 0
    %p1216 = por %p1214, %p1215
    %p1217 = scmp.ne.s32.totalorder %s1209, %s1211
    %p1218 = scmp.eq.s32.totalorder %s172, 1
    %p1219 = por %p1217, %p1218
    %p1220 = scmp.ne.s32.totalorder %s1211, %s1212
    %p1221 = scmp.eq.s32.totalorder %s172, 0
    %p1222 = por %p1220, %p1221
    %p1223 = scmp.ne.s32.totalorder %s1211, %s1212
    %p1224 = scmp.eq.s32.totalorder %s173, 1
    %p1225 = por %p1223, %p1224
    %p1227 = scmp.ne.s32.totalorder %s1212, %s1226
    %p1228 = scmp.eq.s32.totalorder %s173, 0
    %p1229 = por %p1227, %p1228
    %s1231 = sadd.s32 %s1230, 1
    %p1234 = scmp.eq.s32.totalorder %s167, 1
    %p1235 = scmp.ne.s32.totalorder %s1230, %s1232
    %p1236 = scmp.eq.s32.totalorder %s167, 0
    %p1237 = por %p1235, %p1236
    %p1238 = scmp.ne.s32.totalorder %s1230, %s1232
    %p1239 = scmp.eq.s32.totalorder %s172, 1
    %p1240 = por %p1238, %p1239
    %p1241 = scmp.ne.s32.totalorder %s1232, %s1233
    %p1242 = scmp.eq.s32.totalorder %s172, 0
    %p1243 = por %p1241, %p1242
    %p1244 = scmp.ne.s32.totalorder %s1232, %s1233
    %p1245 = scmp.eq.s32.totalorder %s173, 1
    %p1246 = por %p1244, %p1245
    %p1248 = scmp.ne.s32.totalorder %s1233, %s1247
    %p1249 = scmp.eq.s32.totalorder %s173, 0
    %p1250 = por %p1248, %p1249
    %s1252 = sadd.s32 %s1251, 1
    %p1255 = scmp.eq.s32.totalorder %s167, 1
    %p1256 = scmp.ne.s32.totalorder %s1251, %s1253
    %p1257 = scmp.eq.s32.totalorder %s167, 0
    %p1258 = por %p1256, %p1257
    %p1259 = scmp.ne.s32.totalorder %s1251, %s1253
    %p1260 = scmp.eq.s32.totalorder %s172, 1
    %p1261 = por %p1259, %p1260
    %p1262 = scmp.ne.s32.totalorder %s1253, %s1254
    %p1263 = scmp.eq.s32.totalorder %s172, 0
    %p1264 = por %p1262, %p1263
    %p1265 = scmp.ne.s32.totalorder %s1253, %s1254
    %p1266 = scmp.eq.s32.totalorder %s173, 1
    %p1267 = por %p1265, %p1266
    %p1269 = scmp.ne.s32.totalorder %s1254, %s1268
    %p1270 = scmp.eq.s32.totalorder %s173, 0
    %p1271 = por %p1269, %p1270
    %s1273 = sadd.s32 %s1272, 1
    %p1276 = scmp.eq.s32.totalorder %s167, 1
    %p1277 = scmp.ne.s32.totalorder %s1272, %s1274
    %p1278 = scmp.eq.s32.totalorder %s167, 0
    %p1279 = por %p1277, %p1278
    %p1280 = scmp.ne.s32.totalorder %s1272, %s1274
    %p1281 = scmp.eq.s32.totalorder %s172, 1
    %p1282 = por %p1280, %p1281
    %p1283 = scmp.ne.s32.totalorder %s1274, %s1275
    %p1284 = scmp.eq.s32.totalorder %s172, 0
    %p1285 = por %p1283, %p1284
    %p1286 = scmp.ne.s32.totalorder %s1274, %s1275
    %p1287 = scmp.eq.s32.totalorder %s173, 1
    %p1288 = por %p1286, %p1287
    %p1290 = scmp.ne.s32.totalorder %s1275, %s1289
    %p1291 = scmp.eq.s32.totalorder %s173, 0
    %p1292 = por %p1290, %p1291
    %s1294 = sadd.s32 %s1293, 1
    %p1297 = scmp.eq.s32.totalorder %s167, 1
    %p1298 = scmp.ne.s32.totalorder %s1293, %s1295
    %p1299 = scmp.eq.s32.totalorder %s167, 0
    %p1300 = por %p1298, %p1299
    %p1301 = scmp.ne.s32.totalorder %s1293, %s1295
    %p1302 = scmp.eq.s32.totalorder %s172, 1
    %p1303 = por %p1301, %p1302
    %p1304 = scmp.ne.s32.totalorder %s1295, %s1296
    %p1305 = scmp.eq.s32.totalorder %s172, 0
    %p1306 = por %p1304, %p1305
    %p1307 = scmp.ne.s32.totalorder %s1295, %s1296
    %p1308 = scmp.eq.s32.totalorder %s173, 1
    %p1309 = por %p1307, %p1308
    %p1311 = scmp.ne.s32.totalorder %s1296, %s1310
    %p1312 = scmp.eq.s32.totalorder %s173, 0
    %p1313 = por %p1311, %p1312
    %s1315 = sadd.s32 %s1314, 1
    %p1318 = scmp.eq.s32.totalorder %s167, 1
    %p1319 = scmp.ne.s32.totalorder %s1314, %s1316
    %p1320 = scmp.eq.s32.totalorder %s167, 0
    %p1321 = por %p1319, %p1320
    %p1322 = scmp.ne.s32.totalorder %s1314, %s1316
    %p1323 = scmp.eq.s32.totalorder %s172, 1
    %p1324 = por %p1322, %p1323
    %p1325 = scmp.ne.s32.totalorder %s1316, %s1317
    %p1326 = scmp.eq.s32.totalorder %s172, 0
    %p1327 = por %p1325, %p1326
    %p1328 = scmp.ne.s32.totalorder %s1316, %s1317
    %p1329 = scmp.eq.s32.totalorder %s173, 1
    %p1330 = por %p1328, %p1329
    %p1332 = scmp.ne.s32.totalorder %s1317, %s1331
    %p1333 = scmp.eq.s32.totalorder %s173, 0
    %p1334 = por %p1332, %p1333
    %s1336 = sadd.s32 %s1335, 1
    %p1339 = scmp.eq.s32.totalorder %s167, 1
    %p1340 = scmp.ne.s32.totalorder %s1335, %s1337
    %p1341 = scmp.eq.s32.totalorder %s167, 0
    %p1342 = por %p1340, %p1341
    %p1343 = scmp.ne.s32.totalorder %s1335, %s1337
    %p1344 = scmp.eq.s32.totalorder %s172, 1
    %p1345 = por %p1343, %p1344
    %p1346 = scmp.ne.s32.totalorder %s1337, %s1338
    %p1347 = scmp.eq.s32.totalorder %s172, 0
    %p1348 = por %p1346, %p1347
    %p1349 = scmp.ne.s32.totalorder %s1337, %s1338
    %p1350 = scmp.eq.s32.totalorder %s173, 1
    %p1351 = por %p1349, %p1350
    %p1353 = scmp.ne.s32.totalorder %s1338, %s1352
    %p1354 = scmp.eq.s32.totalorder %s173, 0
    %p1355 = por %p1353, %p1354
    %s1357 = sadd.s32 %s1356, 1
    %p1360 = scmp.eq.s32.totalorder %s167, 1
    %p1361 = scmp.ne.s32.totalorder %s1356, %s1358
    %p1362 = scmp.eq.s32.totalorder %s167, 0
    %p1363 = por %p1361, %p1362
    %p1364 = scmp.ne.s32.totalorder %s1356, %s1358
    %p1365 = scmp.eq.s32.totalorder %s172, 1
    %p1366 = por %p1364, %p1365
    %p1367 = scmp.ne.s32.totalorder %s1358, %s1359
    %p1368 = scmp.eq.s32.totalorder %s172, 0
    %p1369 = por %p1367, %p1368
    %p1370 = scmp.ne.s32.totalorder %s1358, %s1359
    %p1371 = scmp.eq.s32.totalorder %s173, 1
    %p1372 = por %p1370, %p1371
    %p1374 = scmp.ne.s32.totalorder %s1359, %s1373
    %p1375 = scmp.eq.s32.totalorder %s173, 0
    %p1376 = por %p1374, %p1375
    %s1378 = sadd.s32 %s1377, 1
    %p1381 = scmp.eq.s32.totalorder %s167, 1
    %p1382 = scmp.ne.s32.totalorder %s1377, %s1379
    %p1383 = scmp.eq.s32.totalorder %s167, 0
    %p1384 = por %p1382, %p1383
    %p1385 = scmp.ne.s32.totalorder %s1377, %s1379
    %p1386 = scmp.eq.s32.totalorder %s172, 1
    %p1387 = por %p1385, %p1386
    %p1388 = scmp.ne.s32.totalorder %s1379, %s1380
    %p1389 = scmp.eq.s32.totalorder %s172, 0
    %p1390 = por %p1388, %p1389
    %p1391 = scmp.ne.s32.totalorder %s1379, %s1380
    %p1392 = scmp.eq.s32.totalorder %s173, 1
    %p1393 = por %p1391, %p1392
    %p1395 = scmp.ne.s32.totalorder %s1380, %s1394
    %p1396 = scmp.eq.s32.totalorder %s173, 0
    %p1397 = por %p1395, %p1396
    %s1399 = sadd.s32 %s1398, 1
    %p1402 = scmp.eq.s32.totalorder %s167, 1
    %p1403 = scmp.ne.s32.totalorder %s1398, %s1400
    %p1404 = scmp.eq.s32.totalorder %s167, 0
    %p1405 = por %p1403, %p1404
    %p1406 = scmp.ne.s32.totalorder %s1398, %s1400
    %p1407 = scmp.eq.s32.totalorder %s172, 1
    %p1408 = por %p1406, %p1407
    %p1409 = scmp.ne.s32.totalorder %s1400, %s1401
    %p1410 = scmp.eq.s32.totalorder %s172, 0
    %p1411 = por %p1409, %p1410
    %p1412 = scmp.ne.s32.totalorder %s1400, %s1401
    %p1413 = scmp.eq.s32.totalorder %s173, 1
    %p1414 = por %p1412, %p1413
    %p1416 = scmp.ne.s32.totalorder %s1401, %s1415
    %p1417 = scmp.eq.s32.totalorder %s173, 0
    %p1418 = por %p1416, %p1417
    %s1420 = sadd.s32 %s1419, 1
    %p1423 = scmp.eq.s32.totalorder %s167, 1
    %p1424 = scmp.ne.s32.totalorder %s1419, %s1421
    %p1425 = scmp.eq.s32.totalorder %s167, 0
    %p1426 = por %p1424, %p1425
    %p1427 = scmp.ne.s32.totalorder %s1419, %s1421
    %p1428 = scmp.eq.s32.totalorder %s172, 1
    %p1429 = por %p1427, %p1428
    %p1430 = scmp.ne.s32.totalorder %s1421, %s1422
    %p1431 = scmp.eq.s32.totalorder %s172, 0
    %p1432 = por %p1430, %p1431
    %p1433 = scmp.ne.s32.totalorder %s1421, %s1422
    %p1434 = scmp.eq.s32.totalorder %s173, 1
    %p1435 = por %p1433, %p1434
    %p1437 = scmp.ne.s32.totalorder %s1422, %s1436
    %p1438 = scmp.eq.s32.totalorder %s173, 0
    %p1439 = por %p1437, %p1438
    %s1441 = sadd.s32 %s1440, 1
    %p1444 = scmp.eq.s32.totalorder %s167, 1
    %p1445 = scmp.ne.s32.totalorder %s1440, %s1442
    %p1446 = scmp.eq.s32.totalorder %s167, 0
    %p1447 = por %p1445, %p1446
    %p1448 = scmp.ne.s32.totalorder %s1440, %s1442
    %p1449 = scmp.eq.s32.totalorder %s172, 1
    %p1450 = por %p1448, %p1449
    %p1451 = scmp.ne.s32.totalorder %s1442, %s1443
    %p1452 = scmp.eq.s32.totalorder %s172, 0
    %p1453 = por %p1451, %p1452
    %p1454 = scmp.ne.s32.totalorder %s1442, %s1443
    %p1455 = scmp.eq.s32.totalorder %s173, 1
    %p1456 = por %p1454, %p1455
    %p1458 = scmp.ne.s32.totalorder %s1443, %s1457
    %p1459 = scmp.eq.s32.totalorder %s173, 0
    %p1460 = por %p1458, %p1459
    %s1462 = sadd.s32 %s1461, 1
    %p1465 = scmp.eq.s32.totalorder %s167, 1
    %p1466 = scmp.ne.s32.totalorder %s1461, %s1463
    %p1467 = scmp.eq.s32.totalorder %s167, 0
    %p1468 = por %p1466, %p1467
    %p1469 = scmp.ne.s32.totalorder %s1461, %s1463
    %p1470 = scmp.eq.s32.totalorder %s172, 1
    %p1471 = por %p1469, %p1470
    %p1472 = scmp.ne.s32.totalorder %s1463, %s1464
    %p1473 = scmp.eq.s32.totalorder %s172, 0
    %p1474 = por %p1472, %p1473
    %p1475 = scmp.ne.s32.totalorder %s1463, %s1464
    %p1476 = scmp.eq.s32.totalorder %s173, 1
    %p1477 = por %p1475, %p1476
    %p1479 = scmp.ne.s32.totalorder %s1464, %s1478
    %p1480 = scmp.eq.s32.totalorder %s173, 0
    %p1481 = por %p1479, %p1480
    %s1483 = sadd.s32 %s1482, 1
    %p1486 = scmp.eq.s32.totalorder %s167, 1
    %p1487 = scmp.ne.s32.totalorder %s1482, %s1484
    %p1488 = scmp.eq.s32.totalorder %s167, 0
    %p1489 = por %p1487, %p1488
    %p1490 = scmp.ne.s32.totalorder %s1482, %s1484
    %p1491 = scmp.eq.s32.totalorder %s172, 1
    %p1492 = por %p1490, %p1491
    %p1493 = scmp.ne.s32.totalorder %s1484, %s1485
    %p1494 = scmp.eq.s32.totalorder %s172, 0
    %p1495 = por %p1493, %p1494
    %p1496 = scmp.ne.s32.totalorder %s1484, %s1485
    %p1497 = scmp.eq.s32.totalorder %s173, 1
    %p1498 = por %p1496, %p1497
    %p1500 = scmp.ne.s32.totalorder %s1485, %s1499
    %p1501 = scmp.eq.s32.totalorder %s173, 0
    %p1502 = por %p1500, %p1501
    %s1504 = sadd.s32 %s1503, 1
    %p1507 = scmp.eq.s32.totalorder %s167, 1
    %p1508 = scmp.ne.s32.totalorder %s1503, %s1505
    %p1509 = scmp.eq.s32.totalorder %s167, 0
    %p1510 = por %p1508, %p1509
    %p1511 = scmp.ne.s32.totalorder %s1503, %s1505
    %p1512 = scmp.eq.s32.totalorder %s172, 1
    %p1513 = por %p1511, %p1512
    %p1514 = scmp.ne.s32.totalorder %s1505, %s1506
    %p1515 = scmp.eq.s32.totalorder %s172, 0
    %p1516 = por %p1514, %p1515
    %p1517 = scmp.ne.s32.totalorder %s1505, %s1506
    %p1518 = scmp.eq.s32.totalorder %s173, 1
    %p1519 = por %p1517, %p1518
    %p1521 = scmp.ne.s32.totalorder %s1506, %s1520
    %p1522 = scmp.eq.s32.totalorder %s173, 0
    %p1523 = por %p1521, %p1522
    %s1525 = sadd.s32 %s1524, 1
    %p1528 = scmp.eq.s32.totalorder %s167, 1
    %p1529 = scmp.ne.s32.totalorder %s1524, %s1526
    %p1530 = scmp.eq.s32.totalorder %s167, 0
    %p1531 = por %p1529, %p1530
    %p1532 = scmp.ne.s32.totalorder %s1524, %s1526
    %p1533 = scmp.eq.s32.totalorder %s172, 1
    %p1534 = por %p1532, %p1533
    %p1535 = scmp.ne.s32.totalorder %s1526, %s1527
    %p1536 = scmp.eq.s32.totalorder %s172, 0
    %p1537 = por %p1535, %p1536
    %p1538 = scmp.ne.s32.totalorder %s1526, %s1527
    %p1539 = scmp.eq.s32.totalorder %s173, 1
    %p1540 = por %p1538, %p1539
    %p1542 = scmp.ne.s32.totalorder %s1527, %s1541
    %p1543 = scmp.eq.s32.totalorder %s173, 0
    %p1544 = por %p1542, %p1543
    %s1546 = sadd.s32 %s1545, 1
    %p1549 = scmp.eq.s32.totalorder %s167, 1
    %p1550 = scmp.ne.s32.totalorder %s1545, %s1547
    %p1551 = scmp.eq.s32.totalorder %s167, 0
    %p1552 = por %p1550, %p1551
    %p1553 = scmp.ne.s32.totalorder %s1545, %s1547
    %p1554 = scmp.eq.s32.totalorder %s172, 1
    %p1555 = por %p1553, %p1554
    %p1556 = scmp.ne.s32.totalorder %s1547, %s1548
    %p1557 = scmp.eq.s32.totalorder %s172, 0
    %p1558 = por %p1556, %p1557
    %p1559 = scmp.ne.s32.totalorder %s1547, %s1548
    %p1560 = scmp.eq.s32.totalorder %s173, 1
    %p1561 = por %p1559, %p1560
    %p1563 = scmp.ne.s32.totalorder %s1548, %s1562
    %p1564 = scmp.eq.s32.totalorder %s173, 0
    %p1565 = por %p1563, %p1564
    %s1567 = sadd.s32 %s1566, 1
    %p1570 = scmp.eq.s32.totalorder %s167, 1
    %p1571 = scmp.ne.s32.totalorder %s1566, %s1568
    %p1572 = scmp.eq.s32.totalorder %s167, 0
    %p1573 = por %p1571, %p1572
    %p1574 = scmp.ne.s32.totalorder %s1566, %s1568
    %p1575 = scmp.eq.s32.totalorder %s172, 1
    %p1576 = por %p1574, %p1575
    %p1577 = scmp.ne.s32.totalorder %s1568, %s1569
    %p1578 = scmp.eq.s32.totalorder %s172, 0
    %p1579 = por %p1577, %p1578
    %p1580 = scmp.ne.s32.totalorder %s1568, %s1569
    %p1581 = scmp.eq.s32.totalorder %s173, 1
    %p1582 = por %p1580, %p1581
    %p1584 = scmp.ne.s32.totalorder %s1569, %s1583
    %p1585 = scmp.eq.s32.totalorder %s173, 0
    %p1586 = por %p1584, %p1585
    %s1588 = sadd.s32 %s1587, 1
    %p1591 = scmp.eq.s32.totalorder %s167, 1
    %p1592 = scmp.ne.s32.totalorder %s1587, %s1589
    %p1593 = scmp.eq.s32.totalorder %s167, 0
    %p1594 = por %p1592, %p1593
    %p1595 = scmp.ne.s32.totalorder %s1587, %s1589
    %p1596 = scmp.eq.s32.totalorder %s172, 1
    %p1597 = por %p1595, %p1596
    %p1598 = scmp.ne.s32.totalorder %s1589, %s1590
    %p1599 = scmp.eq.s32.totalorder %s172, 0
    %p1600 = por %p1598, %p1599
    %p1601 = scmp.ne.s32.totalorder %s1589, %s1590
    %p1602 = scmp.eq.s32.totalorder %s173, 1
    %p1603 = por %p1601, %p1602
    %p1605 = scmp.ne.s32.totalorder %s1590, %s1604
    %p1606 = scmp.eq.s32.totalorder %s173, 0
    %p1607 = por %p1605, %p1606
    %s1609 = sadd.s32 %s1608, 1
    %p1612 = scmp.eq.s32.totalorder %s167, 1
    %p1613 = scmp.ne.s32.totalorder %s1608, %s1610
    %p1614 = scmp.eq.s32.totalorder %s167, 0
    %p1615 = por %p1613, %p1614
    %p1616 = scmp.ne.s32.totalorder %s1608, %s1610
    %p1617 = scmp.eq.s32.totalorder %s172, 1
    %p1618 = por %p1616, %p1617
    %p1619 = scmp.ne.s32.totalorder %s1610, %s1611
    %p1620 = scmp.eq.s32.totalorder %s172, 0
    %p1621 = por %p1619, %p1620
    %p1622 = scmp.ne.s32.totalorder %s1610, %s1611
    %p1623 = scmp.eq.s32.totalorder %s173, 1
    %p1624 = por %p1622, %p1623
    %p1626 = scmp.ne.s32.totalorder %s1611, %s1625
    %p1627 = scmp.eq.s32.totalorder %s173, 0
    %p1628 = por %p1626, %p1627
    %s1630 = sadd.s32 %s1629, 1
    %p1633 = scmp.eq.s32.totalorder %s167, 1
    %p1634 = scmp.ne.s32.totalorder %s1629, %s1631
    %p1635 = scmp.eq.s32.totalorder %s167, 0
    %p1636 = por %p1634, %p1635
    %p1637 = scmp.ne.s32.totalorder %s1629, %s1631
    %p1638 = scmp.eq.s32.totalorder %s172, 1
    %p1639 = por %p1637, %p1638
    %p1640 = scmp.ne.s32.totalorder %s1631, %s1632
    %p1641 = scmp.eq.s32.totalorder %s172, 0
    %p1642 = por %p1640, %p1641
    %p1643 = scmp.ne.s32.totalorder %s1631, %s1632
    %p1644 = scmp.eq.s32.totalorder %s173, 1
    %p1645 = por %p1643, %p1644
    %p1647 = scmp.ne.s32.totalorder %s1632, %s1646
    %p1648 = scmp.eq.s32.totalorder %s173, 0
    %p1649 = por %p1647, %p1648
    %s1651 = sadd.s32 %s1650, 1
    %p1654 = scmp.eq.s32.totalorder %s167, 1
    %p1655 = scmp.ne.s32.totalorder %s1650, %s1652
    %p1656 = scmp.eq.s32.totalorder %s167, 0
    %p1657 = por %p1655, %p1656
    %p1658 = scmp.ne.s32.totalorder %s1650, %s1652
    %p1659 = scmp.eq.s32.totalorder %s172, 1
    %p1660 = por %p1658, %p1659
    %p1661 = scmp.ne.s32.totalorder %s1652, %s1653
    %p1662 = scmp.eq.s32.totalorder %s172, 0
    %p1663 = por %p1661, %p1662
    %p1664 = scmp.ne.s32.totalorder %s1652, %s1653
    %p1665 = scmp.eq.s32.totalorder %s173, 1
    %p1666 = por %p1664, %p1665
    %p1668 = scmp.ne.s32.totalorder %s1653, %s1667
    %p1669 = scmp.eq.s32.totalorder %s173, 0
    %p1670 = por %p1668, %p1669
    %s1672 = sadd.s32 %s1671, 1
    %p1675 = scmp.eq.s32.totalorder %s167, 1
    %p1676 = scmp.ne.s32.totalorder %s1671, %s1673
    %p1677 = scmp.eq.s32.totalorder %s167, 0
    %p1678 = por %p1676, %p1677
    %p1679 = scmp.ne.s32.totalorder %s1671, %s1673
    %p1680 = scmp.eq.s32.totalorder %s172, 1
    %p1681 = por %p1679, %p1680
    %p1682 = scmp.ne.s32.totalorder %s1673, %s1674
    %p1683 = scmp.eq.s32.totalorder %s172, 0
    %p1684 = por %p1682, %p1683
    %p1685 = scmp.ne.s32.totalorder %s1673, %s1674
    %p1686 = scmp.eq.s32.totalorder %s173, 1
    %p1687 = por %p1685, %p1686
    %p1689 = scmp.ne.s32.totalorder %s1674, %s1688
    %p1690 = scmp.eq.s32.totalorder %s173, 0
    %p1691 = por %p1689, %p1690
    %s1693 = sadd.s32 %s1692, 1
    %p1696 = scmp.eq.s32.totalorder %s167, 1
    %p1697 = scmp.ne.s32.totalorder %s1692, %s1694
    %p1698 = scmp.eq.s32.totalorder %s167, 0
    %p1699 = por %p1697, %p1698
    %p1700 = scmp.ne.s32.totalorder %s1692, %s1694
    %p1701 = scmp.eq.s32.totalorder %s172, 1
    %p1702 = por %p1700, %p1701
    %p1703 = scmp.ne.s32.totalorder %s1694, %s1695
    %p1704 = scmp.eq.s32.totalorder %s172, 0
    %p1705 = por %p1703, %p1704
    %p1706 = scmp.ne.s32.totalorder %s1694, %s1695
    %p1707 = scmp.eq.s32.totalorder %s173, 1
    %p1708 = por %p1706, %p1707
    %p1710 = scmp.ne.s32.totalorder %s1695, %s1709
    %p1711 = scmp.eq.s32.totalorder %s173, 0
    %p1712 = por %p1710, %p1711
    %s1714 = sadd.s32 %s1713, 1
    %p1717 = scmp.eq.s32.totalorder %s167, 1
    %p1718 = scmp.ne.s32.totalorder %s1713, %s1715
    %p1719 = scmp.eq.s32.totalorder %s167, 0
    %p1720 = por %p1718, %p1719
    %p1721 = scmp.ne.s32.totalorder %s1713, %s1715
    %p1722 = scmp.eq.s32.totalorder %s172, 1
    %p1723 = por %p1721, %p1722
    %p1724 = scmp.ne.s32.totalorder %s1715, %s1716
    %p1725 = scmp.eq.s32.totalorder %s172, 0
    %p1726 = por %p1724, %p1725
    %p1727 = scmp.ne.s32.totalorder %s1715, %s1716
    %p1728 = scmp.eq.s32.totalorder %s173, 1
    %p1729 = por %p1727, %p1728
    %p1731 = scmp.ne.s32.totalorder %s1716, %s1730
    %p1732 = scmp.eq.s32.totalorder %s173, 0
    %p1733 = por %p1731, %p1732
    %s1735 = sadd.s32 %s1734, 1
    %p1738 = scmp.eq.s32.totalorder %s167, 1
    %p1739 = scmp.ne.s32.totalorder %s1734, %s1736
    %p1740 = scmp.eq.s32.totalorder %s167, 0
    %p1741 = por %p1739, %p1740
    %p1742 = scmp.ne.s32.totalorder %s1734, %s1736
    %p1743 = scmp.eq.s32.totalorder %s172, 1
    %p1744 = por %p1742, %p1743
    %p1745 = scmp.ne.s32.totalorder %s1736, %s1737
    %p1746 = scmp.eq.s32.totalorder %s172, 0
    %p1747 = por %p1745, %p1746
    %p1748 = scmp.ne.s32.totalorder %s1736, %s1737
    %p1749 = scmp.eq.s32.totalorder %s173, 1
    %p1750 = por %p1748, %p1749
    %p1752 = scmp.ne.s32.totalorder %s1737, %s1751
    %p1753 = scmp.eq.s32.totalorder %s173, 0
    %p1754 = por %p1752, %p1753
    %s1756 = sadd.s32 %s1755, 1
    %p1759 = scmp.eq.s32.totalorder %s167, 1
    %p1760 = scmp.ne.s32.totalorder %s1755, %s1757
    %p1761 = scmp.eq.s32.totalorder %s167, 0
    %p1762 = por %p1760, %p1761
    %p1763 = scmp.ne.s32.totalorder %s1755, %s1757
    %p1764 = scmp.eq.s32.totalorder %s172, 1
    %p1765 = por %p1763, %p1764
    %p1766 = scmp.ne.s32.totalorder %s1757, %s1758
    %p1767 = scmp.eq.s32.totalorder %s172, 0
    %p1768 = por %p1766, %p1767
    %p1769 = scmp.ne.s32.totalorder %s1757, %s1758
    %p1770 = scmp.eq.s32.totalorder %s173, 1
    %p1771 = por %p1769, %p1770
    %p1773 = scmp.ne.s32.totalorder %s1758, %s1772
    %p1774 = scmp.eq.s32.totalorder %s173, 0
    %p1775 = por %p1773, %p1774
    %s1777 = sadd.s32 %s1776, 1
    %p1780 = scmp.eq.s32.totalorder %s167, 1
    %p1781 = scmp.ne.s32.totalorder %s1776, %s1778
    %p1782 = scmp.eq.s32.totalorder %s167, 0
    %p1783 = por %p1781, %p1782
    %p1784 = scmp.ne.s32.totalorder %s1776, %s1778
    %p1785 = scmp.eq.s32.totalorder %s172, 1
    %p1786 = por %p1784, %p1785
    %p1787 = scmp.ne.s32.totalorder %s1778, %s1779
    %p1788 = scmp.eq.s32.totalorder %s172, 0
    %p1789 = por %p1787, %p1788
    %p1790 = scmp.ne.s32.totalorder %s1778, %s1779
    %p1791 = scmp.eq.s32.totalorder %s173, 1
    %p1792 = por %p1790, %p1791
    %p1794 = scmp.ne.s32.totalorder %s1779, %s1793
    %p1795 = scmp.eq.s32.totalorder %s173, 0
    %p1796 = por %p1794, %p1795
    %s1798 = sadd.s32 %s1797, 1
    %p1801 = scmp.eq.s32.totalorder %s167, 1
    %p1802 = scmp.ne.s32.totalorder %s1797, %s1799
    %p1803 = scmp.eq.s32.totalorder %s167, 0
    %p1804 = por %p1802, %p1803
    %p1805 = scmp.ne.s32.totalorder %s1797, %s1799
    %p1806 = scmp.eq.s32.totalorder %s172, 1
    %p1807 = por %p1805, %p1806
    %p1808 = scmp.ne.s32.totalorder %s1799, %s1800
    %p1809 = scmp.eq.s32.totalorder %s172, 0
    %p1810 = por %p1808, %p1809
    %p1811 = scmp.ne.s32.totalorder %s1799, %s1800
    %p1812 = scmp.eq.s32.totalorder %s173, 1
    %p1813 = por %p1811, %p1812
    %p1815 = scmp.ne.s32.totalorder %s1800, %s1814
    %p1816 = scmp.eq.s32.totalorder %s173, 0
    %p1817 = por %p1815, %p1816
    %s1818 = ssub.s32 %s167, %s174
    %p1819 = scmp.eq.s32.totalorder %s1818, 0
    %s1821 = sadd.s32 %s1820, 1
    %s1822 = scalar_select %p1819, %s1820, %s1821
    %p1825 = pneg %p1819
    %p1826 = scmp.eq.s32.totalorder %s167, 1
    %p1827 = por %p1825, %p1826
    %p1828 = scmp.ne.s32.totalorder %s1820, %s1823
    %p1829 = scmp.eq.s32.totalorder %s167, 0
    %p1830 = por %p1828, %p1829
    %p1831 = scmp.ne.s32.totalorder %s1820, %s1823
    %p1832 = scmp.eq.s32.totalorder %s172, 1
    %p1833 = por %p1831, %p1832
    %p1834 = scmp.ne.s32.totalorder %s1823, %s1824
    %p1835 = scmp.eq.s32.totalorder %s172, 0
    %p1836 = por %p1834, %p1835
    %p1837 = scmp.ne.s32.totalorder %s1823, %s1824
    %p1838 = scmp.eq.s32.totalorder %s173, 1
    %p1839 = por %p1837, %p1838
    %p1841 = scmp.ne.s32.totalorder %s1824, %s1840
    %p1842 = scmp.eq.s32.totalorder %s173, 0
    %p1843 = por %p1841, %p1842
    %p1844 = scmp.le.s32.totalorder 1, %s167
    %p1845 = scmp.lt.s32.totalorder %s167, 3
    %p1846 = pnand %p1844, %p1845
    %p1847 = pneg %p1846
    // Predicated region
    $region9: #{mardan_forward.1} parent=5 // pred_check
      _
    $region10: #{mardan_forward.1} parent=5 // pred_check_branch
      %1849 = sbr.rel (%p1846) target = $region12
    $region11: #{mardan_forward.1} parent=5 // pred_region
      %s1850 = ssub.s32 %s167, 1
      // Predicated region
      $region13: #{mardan_forward.1} parent=11 // pred_check
        %p1851 = pneg %p214
      $region14: #{mardan_forward.1} parent=11 // pred_check_branch
        %1853 = sbr.rel (%p1851) target = $region16
      $region15: #{mardan_forward.1} parent=11 // pred_region
        _
      $region16: #{mardan_forward.1} parent=11 // pred_fallthru
        _
      // Predicated region
      $region17: #{mardan_forward.1} parent=11 // pred_check
        %p1854 = pneg %p235
      $region18: #{mardan_forward.1} parent=11 // pred_check_branch
        %1856 = sbr.rel (%p1854) target = $region20
      $region19: #{mardan_forward.1} parent=11 // pred_region
        _
      $region20: #{mardan_forward.1} parent=11 // pred_fallthru
        _
      // Predicated region
      $region21: #{mardan_forward.1} parent=11 // pred_check
        %p1857 = pneg %p256
      $region22: #{mardan_forward.1} parent=11 // pred_check_branch
        %1859 = sbr.rel (%p1857) target = $region24
      $region23: #{mardan_forward.1} parent=11 // pred_region
        _
      $region24: #{mardan_forward.1} parent=11 // pred_fallthru
        _
      // Predicated region
      $region25: #{mardan_forward.1} parent=11 // pred_check
        %p1860 = pneg %p277
      $region26: #{mardan_forward.1} parent=11 // pred_check_branch
        %1862 = sbr.rel (%p1860) target = $region28
      $region27: #{mardan_forward.1} parent=11 // pred_region
        _
      $region28: #{mardan_forward.1} parent=11 // pred_fallthru
        _
      // Predicated region
      $region29: #{mardan_forward.1} parent=11 // pred_check
        %p1863 = pneg %p298
      $region30: #{mardan_forward.1} parent=11 // pred_check_branch
        %1865 = sbr.rel (%p1863) target = $region32
      $region31: #{mardan_forward.1} parent=11 // pred_region
        _
      $region32: #{mardan_forward.1} parent=11 // pred_fallthru
        _
      // Predicated region
      $region33: #{mardan_forward.1} parent=11 // pred_check
        %p1866 = pneg %p319
      $region34: #{mardan_forward.1} parent=11 // pred_check_branch
        %1868 = sbr.rel (%p1866) target = $region36
      $region35: #{mardan_forward.1} parent=11 // pred_region
        _
      $region36: #{mardan_forward.1} parent=11 // pred_fallthru
        _
      // Predicated region
      $region37: #{mardan_forward.1} parent=11 // pred_check
        %p1869 = pneg %p340
      $region38: #{mardan_forward.1} parent=11 // pred_check_branch
        %1871 = sbr.rel (%p1869) target = $region40
      $region39: #{mardan_forward.1} parent=11 // pred_region
        _
      $region40: #{mardan_forward.1} parent=11 // pred_fallthru
        _
      // Predicated region
      $region41: #{mardan_forward.1} parent=11 // pred_check
        %p1872 = pneg %p361
      $region42: #{mardan_forward.1} parent=11 // pred_check_branch
        %1874 = sbr.rel (%p1872) target = $region44
      $region43: #{mardan_forward.1} parent=11 // pred_region
        _
      $region44: #{mardan_forward.1} parent=11 // pred_fallthru
        _
      // Predicated region
      $region45: #{mardan_forward.1} parent=11 // pred_check
        %p1875 = pneg %p382
      $region46: #{mardan_forward.1} parent=11 // pred_check_branch
        %1877 = sbr.rel (%p1875) target = $region48
      $region47: #{mardan_forward.1} parent=11 // pred_region
        _
      $region48: #{mardan_forward.1} parent=11 // pred_fallthru
        _
      // Predicated region
      $region49: #{mardan_forward.1} parent=11 // pred_check
        %p1878 = pneg %p403
      $region50: #{mardan_forward.1} parent=11 // pred_check_branch
        %1880 = sbr.rel (%p1878) target = $region52
      $region51: #{mardan_forward.1} parent=11 // pred_region
        _
      $region52: #{mardan_forward.1} parent=11 // pred_fallthru
        _
      // Predicated region
      $region53: #{mardan_forward.1} parent=11 // pred_check
        %p1881 = pneg %p424
      $region54: #{mardan_forward.1} parent=11 // pred_check_branch
        %1883 = sbr.rel (%p1881) target = $region56
      $region55: #{mardan_forward.1} parent=11 // pred_region
        _
      $region56: #{mardan_forward.1} parent=11 // pred_fallthru
        _
      // Predicated region
      $region57: #{mardan_forward.1} parent=11 // pred_check
        %p1884 = pneg %p445
      $region58: #{mardan_forward.1} parent=11 // pred_check_branch
        %1886 = sbr.rel (%p1884) target = $region60
      $region59: #{mardan_forward.1} parent=11 // pred_region
        _
      $region60: #{mardan_forward.1} parent=11 // pred_fallthru
        _
      // Predicated region
      $region61: #{mardan_forward.1} parent=11 // pred_check
        %p1887 = pneg %p466
      $region62: #{mardan_forward.1} parent=11 // pred_check_branch
        %1889 = sbr.rel (%p1887) target = $region64
      $region63: #{mardan_forward.1} parent=11 // pred_region
        _
      $region64: #{mardan_forward.1} parent=11 // pred_fallthru
        _
      // Predicated region
      $region65: #{mardan_forward.1} parent=11 // pred_check
        %p1890 = pneg %p487
      $region66: #{mardan_forward.1} parent=11 // pred_check_branch
        %1892 = sbr.rel (%p1890) target = $region68
      $region67: #{mardan_forward.1} parent=11 // pred_region
        _
      $region68: #{mardan_forward.1} parent=11 // pred_fallthru
        _
      // Predicated region
      $region69: #{mardan_forward.1} parent=11 // pred_check
        %p1893 = pneg %p508
      $region70: #{mardan_forward.1} parent=11 // pred_check_branch
        %1895 = sbr.rel (%p1893) target = $region72
      $region71: #{mardan_forward.1} parent=11 // pred_region
        _
      $region72: #{mardan_forward.1} parent=11 // pred_fallthru
        _
      // Predicated region
      $region73: #{mardan_forward.1} parent=11 // pred_check
        %p1896 = pneg %p529
      $region74: #{mardan_forward.1} parent=11 // pred_check_branch
        %1898 = sbr.rel (%p1896) target = $region76
      $region75: #{mardan_forward.1} parent=11 // pred_region
        _
      $region76: #{mardan_forward.1} parent=11 // pred_fallthru
        _
      // Predicated region
      $region77: #{mardan_forward.1} parent=11 // pred_check
        %p1899 = pneg %p550
      $region78: #{mardan_forward.1} parent=11 // pred_check_branch
        %1901 = sbr.rel (%p1899) target = $region80
      $region79: #{mardan_forward.1} parent=11 // pred_region
        _
      $region80: #{mardan_forward.1} parent=11 // pred_fallthru
        _
      // Predicated region
      $region81: #{mardan_forward.1} parent=11 // pred_check
        %p1902 = pneg %p571
      $region82: #{mardan_forward.1} parent=11 // pred_check_branch
        %1904 = sbr.rel (%p1902) target = $region84
      $region83: #{mardan_forward.1} parent=11 // pred_region
        _
      $region84: #{mardan_forward.1} parent=11 // pred_fallthru
        _
      // Predicated region
      $region85: #{mardan_forward.1} parent=11 // pred_check
        %p1905 = pneg %p592
      $region86: #{mardan_forward.1} parent=11 // pred_check_branch
        %1907 = sbr.rel (%p1905) target = $region88
      $region87: #{mardan_forward.1} parent=11 // pred_region
        _
      $region88: #{mardan_forward.1} parent=11 // pred_fallthru
        _
      // Predicated region
      $region89: #{mardan_forward.1} parent=11 // pred_check
        %p1908 = pneg %p613
      $region90: #{mardan_forward.1} parent=11 // pred_check_branch
        %1910 = sbr.rel (%p1908) target = $region92
      $region91: #{mardan_forward.1} parent=11 // pred_region
        _
      $region92: #{mardan_forward.1} parent=11 // pred_fallthru
        _
      // Predicated region
      $region93: #{mardan_forward.1} parent=11 // pred_check
        %p1911 = pneg %p634
      $region94: #{mardan_forward.1} parent=11 // pred_check_branch
        %1913 = sbr.rel (%p1911) target = $region96
      $region95: #{mardan_forward.1} parent=11 // pred_region
        _
      $region96: #{mardan_forward.1} parent=11 // pred_fallthru
        _
      // Predicated region
      $region97: #{mardan_forward.1} parent=11 // pred_check
        %p1914 = pneg %p655
      $region98: #{mardan_forward.1} parent=11 // pred_check_branch
        %1916 = sbr.rel (%p1914) target = $region100
      $region99: #{mardan_forward.1} parent=11 // pred_region
        _
      $region100: #{mardan_forward.1} parent=11 // pred_fallthru
        _
      // Predicated region
      $region101: #{mardan_forward.1} parent=11 // pred_check
        %p1917 = pneg %p676
      $region102: #{mardan_forward.1} parent=11 // pred_check_branch
        %1919 = sbr.rel (%p1917) target = $region104
      $region103: #{mardan_forward.1} parent=11 // pred_region
        _
      $region104: #{mardan_forward.1} parent=11 // pred_fallthru
        _
      // Predicated region
      $region105: #{mardan_forward.1} parent=11 // pred_check
        %p1920 = pneg %p697
      $region106: #{mardan_forward.1} parent=11 // pred_check_branch
        %1922 = sbr.rel (%p1920) target = $region108
      $region107: #{mardan_forward.1} parent=11 // pred_region
        _
      $region108: #{mardan_forward.1} parent=11 // pred_fallthru
        _
      // Predicated region
      $region109: #{mardan_forward.1} parent=11 // pred_check
        %p1923 = pneg %p718
      $region110: #{mardan_forward.1} parent=11 // pred_check_branch
        %1925 = sbr.rel (%p1923) target = $region112
      $region111: #{mardan_forward.1} parent=11 // pred_region
        _
      $region112: #{mardan_forward.1} parent=11 // pred_fallthru
        _
      // Predicated region
      $region113: #{mardan_forward.1} parent=11 // pred_check
        %p1926 = pneg %p739
      $region114: #{mardan_forward.1} parent=11 // pred_check_branch
        %1928 = sbr.rel (%p1926) target = $region116
      $region115: #{mardan_forward.1} parent=11 // pred_region
        _
      $region116: #{mardan_forward.1} parent=11 // pred_fallthru
        _
      // Predicated region
      $region117: #{mardan_forward.1} parent=11 // pred_check
        %p1929 = pneg %p760
      $region118: #{mardan_forward.1} parent=11 // pred_check_branch
        %1931 = sbr.rel (%p1929) target = $region120
      $region119: #{mardan_forward.1} parent=11 // pred_region
        _
      $region120: #{mardan_forward.1} parent=11 // pred_fallthru
        _
      // Predicated region
      $region121: #{mardan_forward.1} parent=11 // pred_check
        %p1932 = pneg %p781
      $region122: #{mardan_forward.1} parent=11 // pred_check_branch
        %1934 = sbr.rel (%p1932) target = $region124
      $region123: #{mardan_forward.1} parent=11 // pred_region
        _
      $region124: #{mardan_forward.1} parent=11 // pred_fallthru
        _
      // Predicated region
      $region125: #{mardan_forward.1} parent=11 // pred_check
        %p1935 = pneg %p802
      $region126: #{mardan_forward.1} parent=11 // pred_check_branch
        %1937 = sbr.rel (%p1935) target = $region128
      $region127: #{mardan_forward.1} parent=11 // pred_region
        _
      $region128: #{mardan_forward.1} parent=11 // pred_fallthru
        _
      // Predicated region
      $region129: #{mardan_forward.1} parent=11 // pred_check
        %p1938 = pneg %p823
      $region130: #{mardan_forward.1} parent=11 // pred_check_branch
        %1940 = sbr.rel (%p1938) target = $region132
      $region131: #{mardan_forward.1} parent=11 // pred_region
        _
      $region132: #{mardan_forward.1} parent=11 // pred_fallthru
        _
      // Predicated region
      $region133: #{mardan_forward.1} parent=11 // pred_check
        %p1941 = pneg %p844
      $region134: #{mardan_forward.1} parent=11 // pred_check_branch
        %1943 = sbr.rel (%p1941) target = $region136
      $region135: #{mardan_forward.1} parent=11 // pred_region
        _
      $region136: #{mardan_forward.1} parent=11 // pred_fallthru
        _
      // Predicated region
      $region137: #{mardan_forward.1} parent=11 // pred_check
        %p1944 = pneg %p865
      $region138: #{mardan_forward.1} parent=11 // pred_check_branch
        %1946 = sbr.rel (%p1944) target = $region140
      $region139: #{mardan_forward.1} parent=11 // pred_region
        _
      $region140: #{mardan_forward.1} parent=11 // pred_fallthru
        _
      // Predicated region
      $region141: #{mardan_forward.1} parent=11 // pred_check
        %p1947 = pneg %p886
      $region142: #{mardan_forward.1} parent=11 // pred_check_branch
        %1949 = sbr.rel (%p1947) target = $region144
      $region143: #{mardan_forward.1} parent=11 // pred_region
        _
      $region144: #{mardan_forward.1} parent=11 // pred_fallthru
        _
      // Predicated region
      $region145: #{mardan_forward.1} parent=11 // pred_check
        %p1950 = pneg %p907
      $region146: #{mardan_forward.1} parent=11 // pred_check_branch
        %1952 = sbr.rel (%p1950) target = $region148
      $region147: #{mardan_forward.1} parent=11 // pred_region
        _
      $region148: #{mardan_forward.1} parent=11 // pred_fallthru
        _
      // Predicated region
      $region149: #{mardan_forward.1} parent=11 // pred_check
        %p1953 = pneg %p928
      $region150: #{mardan_forward.1} parent=11 // pred_check_branch
        %1955 = sbr.rel (%p1953) target = $region152
      $region151: #{mardan_forward.1} parent=11 // pred_region
        _
      $region152: #{mardan_forward.1} parent=11 // pred_fallthru
        _
      // Predicated region
      $region153: #{mardan_forward.1} parent=11 // pred_check
        %p1956 = pneg %p949
      $region154: #{mardan_forward.1} parent=11 // pred_check_branch
        %1958 = sbr.rel (%p1956) target = $region156
      $region155: #{mardan_forward.1} parent=11 // pred_region
        _
      $region156: #{mardan_forward.1} parent=11 // pred_fallthru
        _
      // Predicated region
      $region157: #{mardan_forward.1} parent=11 // pred_check
        %p1959 = pneg %p970
      $region158: #{mardan_forward.1} parent=11 // pred_check_branch
        %1961 = sbr.rel (%p1959) target = $region160
      $region159: #{mardan_forward.1} parent=11 // pred_region
        _
      $region160: #{mardan_forward.1} parent=11 // pred_fallthru
        _
      // Predicated region
      $region161: #{mardan_forward.1} parent=11 // pred_check
        %p1962 = pneg %p991
      $region162: #{mardan_forward.1} parent=11 // pred_check_branch
        %1964 = sbr.rel (%p1962) target = $region164
      $region163: #{mardan_forward.1} parent=11 // pred_region
        _
      $region164: #{mardan_forward.1} parent=11 // pred_fallthru
        _
      // Predicated region
      $region165: #{mardan_forward.1} parent=11 // pred_check
        %p1965 = pneg %p1012
      $region166: #{mardan_forward.1} parent=11 // pred_check_branch
        %1967 = sbr.rel (%p1965) target = $region168
      $region167: #{mardan_forward.1} parent=11 // pred_region
        _
      $region168: #{mardan_forward.1} parent=11 // pred_fallthru
        _
      // Predicated region
      $region169: #{mardan_forward.1} parent=11 // pred_check
        %p1968 = pneg %p1033
      $region170: #{mardan_forward.1} parent=11 // pred_check_branch
        %1970 = sbr.rel (%p1968) target = $region172
      $region171: #{mardan_forward.1} parent=11 // pred_region
        _
      $region172: #{mardan_forward.1} parent=11 // pred_fallthru
        _
      // Predicated region
      $region173: #{mardan_forward.1} parent=11 // pred_check
        %p1971 = pneg %p1054
      $region174: #{mardan_forward.1} parent=11 // pred_check_branch
        %1973 = sbr.rel (%p1971) target = $region176
      $region175: #{mardan_forward.1} parent=11 // pred_region
        _
      $region176: #{mardan_forward.1} parent=11 // pred_fallthru
        _
      // Predicated region
      $region177: #{mardan_forward.1} parent=11 // pred_check
        %p1974 = pneg %p1075
      $region178: #{mardan_forward.1} parent=11 // pred_check_branch
        %1976 = sbr.rel (%p1974) target = $region180
      $region179: #{mardan_forward.1} parent=11 // pred_region
        _
      $region180: #{mardan_forward.1} parent=11 // pred_fallthru
        _
      // Predicated region
      $region181: #{mardan_forward.1} parent=11 // pred_check
        %p1977 = pneg %p1096
      $region182: #{mardan_forward.1} parent=11 // pred_check_branch
        %1979 = sbr.rel (%p1977) target = $region184
      $region183: #{mardan_forward.1} parent=11 // pred_region
        _
      $region184: #{mardan_forward.1} parent=11 // pred_fallthru
        _
      // Predicated region
      $region185: #{mardan_forward.1} parent=11 // pred_check
        %p1980 = pneg %p1117
      $region186: #{mardan_forward.1} parent=11 // pred_check_branch
        %1982 = sbr.rel (%p1980) target = $region188
      $region187: #{mardan_forward.1} parent=11 // pred_region
        _
      $region188: #{mardan_forward.1} parent=11 // pred_fallthru
        _
      // Predicated region
      $region189: #{mardan_forward.1} parent=11 // pred_check
        %p1983 = pneg %p1138
      $region190: #{mardan_forward.1} parent=11 // pred_check_branch
        %1985 = sbr.rel (%p1983) target = $region192
      $region191: #{mardan_forward.1} parent=11 // pred_region
        _
      $region192: #{mardan_forward.1} parent=11 // pred_fallthru
        _
      // Predicated region
      $region193: #{mardan_forward.1} parent=11 // pred_check
        %p1986 = pneg %p1159
      $region194: #{mardan_forward.1} parent=11 // pred_check_branch
        %1988 = sbr.rel (%p1986) target = $region196
      $region195: #{mardan_forward.1} parent=11 // pred_region
        _
      $region196: #{mardan_forward.1} parent=11 // pred_fallthru
        _
      // Predicated region
      $region197: #{mardan_forward.1} parent=11 // pred_check
        %p1989 = pneg %p1180
      $region198: #{mardan_forward.1} parent=11 // pred_check_branch
        %1991 = sbr.rel (%p1989) target = $region200
      $region199: #{mardan_forward.1} parent=11 // pred_region
        _
      $region200: #{mardan_forward.1} parent=11 // pred_fallthru
        _
      // Predicated region
      $region201: #{mardan_forward.1} parent=11 // pred_check
        %p1992 = pneg %p1201
      $region202: #{mardan_forward.1} parent=11 // pred_check_branch
        %1994 = sbr.rel (%p1992) target = $region204
      $region203: #{mardan_forward.1} parent=11 // pred_region
        _
      $region204: #{mardan_forward.1} parent=11 // pred_fallthru
        _
      // Predicated region
      $region205: #{mardan_forward.1} parent=11 // pred_check
        %p1995 = pneg %p1222
      $region206: #{mardan_forward.1} parent=11 // pred_check_branch
        %1997 = sbr.rel (%p1995) target = $region208
      $region207: #{mardan_forward.1} parent=11 // pred_region
        _
      $region208: #{mardan_forward.1} parent=11 // pred_fallthru
        _
      // Predicated region
      $region209: #{mardan_forward.1} parent=11 // pred_check
        %p1998 = pneg %p1243
      $region210: #{mardan_forward.1} parent=11 // pred_check_branch
        %2000 = sbr.rel (%p1998) target = $region212
      $region211: #{mardan_forward.1} parent=11 // pred_region
        _
      $region212: #{mardan_forward.1} parent=11 // pred_fallthru
        _
      // Predicated region
      $region213: #{mardan_forward.1} parent=11 // pred_check
        %p2001 = pneg %p1264
      $region214: #{mardan_forward.1} parent=11 // pred_check_branch
        %2003 = sbr.rel (%p2001) target = $region216
      $region215: #{mardan_forward.1} parent=11 // pred_region
        _
      $region216: #{mardan_forward.1} parent=11 // pred_fallthru
        _
      // Predicated region
      $region217: #{mardan_forward.1} parent=11 // pred_check
        %p2004 = pneg %p1285
      $region218: #{mardan_forward.1} parent=11 // pred_check_branch
        %2006 = sbr.rel (%p2004) target = $region220
      $region219: #{mardan_forward.1} parent=11 // pred_region
        _
      $region220: #{mardan_forward.1} parent=11 // pred_fallthru
        _
      // Predicated region
      $region221: #{mardan_forward.1} parent=11 // pred_check
        %p2007 = pneg %p1306
      $region222: #{mardan_forward.1} parent=11 // pred_check_branch
        %2009 = sbr.rel (%p2007) target = $region224
      $region223: #{mardan_forward.1} parent=11 // pred_region
        _
      $region224: #{mardan_forward.1} parent=11 // pred_fallthru
        _
      // Predicated region
      $region225: #{mardan_forward.1} parent=11 // pred_check
        %p2010 = pneg %p1327
      $region226: #{mardan_forward.1} parent=11 // pred_check_branch
        %2012 = sbr.rel (%p2010) target = $region228
      $region227: #{mardan_forward.1} parent=11 // pred_region
        _
      $region228: #{mardan_forward.1} parent=11 // pred_fallthru
        _
      // Predicated region
      $region229: #{mardan_forward.1} parent=11 // pred_check
        %p2013 = pneg %p1348
      $region230: #{mardan_forward.1} parent=11 // pred_check_branch
        %2015 = sbr.rel (%p2013) target = $region232
      $region231: #{mardan_forward.1} parent=11 // pred_region
        _
      $region232: #{mardan_forward.1} parent=11 // pred_fallthru
        _
      // Predicated region
      $region233: #{mardan_forward.1} parent=11 // pred_check
        %p2016 = pneg %p1369
      $region234: #{mardan_forward.1} parent=11 // pred_check_branch
        %2018 = sbr.rel (%p2016) target = $region236
      $region235: #{mardan_forward.1} parent=11 // pred_region
        _
      $region236: #{mardan_forward.1} parent=11 // pred_fallthru
        _
      // Predicated region
      $region237: #{mardan_forward.1} parent=11 // pred_check
        %p2019 = pneg %p1390
      $region238: #{mardan_forward.1} parent=11 // pred_check_branch
        %2021 = sbr.rel (%p2019) target = $region240
      $region239: #{mardan_forward.1} parent=11 // pred_region
        _
      $region240: #{mardan_forward.1} parent=11 // pred_fallthru
        _
      // Predicated region
      $region241: #{mardan_forward.1} parent=11 // pred_check
        %p2022 = pneg %p1411
      $region242: #{mardan_forward.1} parent=11 // pred_check_branch
        %2024 = sbr.rel (%p2022) target = $region244
      $region243: #{mardan_forward.1} parent=11 // pred_region
        _
      $region244: #{mardan_forward.1} parent=11 // pred_fallthru
        _
      // Predicated region
      $region245: #{mardan_forward.1} parent=11 // pred_check
        %p2025 = pneg %p1432
      $region246: #{mardan_forward.1} parent=11 // pred_check_branch
        %2027 = sbr.rel (%p2025) target = $region248
      $region247: #{mardan_forward.1} parent=11 // pred_region
        _
      $region248: #{mardan_forward.1} parent=11 // pred_fallthru
        _
      // Predicated region
      $region249: #{mardan_forward.1} parent=11 // pred_check
        %p2028 = pneg %p1453
      $region250: #{mardan_forward.1} parent=11 // pred_check_branch
        %2030 = sbr.rel (%p2028) target = $region252
      $region251: #{mardan_forward.1} parent=11 // pred_region
        _
      $region252: #{mardan_forward.1} parent=11 // pred_fallthru
        _
      // Predicated region
      $region253: #{mardan_forward.1} parent=11 // pred_check
        %p2031 = pneg %p1474
      $region254: #{mardan_forward.1} parent=11 // pred_check_branch
        %2033 = sbr.rel (%p2031) target = $region256
      $region255: #{mardan_forward.1} parent=11 // pred_region
        _
      $region256: #{mardan_forward.1} parent=11 // pred_fallthru
        _
      // Predicated region
      $region257: #{mardan_forward.1} parent=11 // pred_check
        %p2034 = pneg %p1495
      $region258: #{mardan_forward.1} parent=11 // pred_check_branch
        %2036 = sbr.rel (%p2034) target = $region260
      $region259: #{mardan_forward.1} parent=11 // pred_region
        _
      $region260: #{mardan_forward.1} parent=11 // pred_fallthru
        _
      // Predicated region
      $region261: #{mardan_forward.1} parent=11 // pred_check
        %p2037 = pneg %p1516
      $region262: #{mardan_forward.1} parent=11 // pred_check_branch
        %2039 = sbr.rel (%p2037) target = $region264
      $region263: #{mardan_forward.1} parent=11 // pred_region
        _
      $region264: #{mardan_forward.1} parent=11 // pred_fallthru
        _
      // Predicated region
      $region265: #{mardan_forward.1} parent=11 // pred_check
        %p2040 = pneg %p1537
      $region266: #{mardan_forward.1} parent=11 // pred_check_branch
        %2042 = sbr.rel (%p2040) target = $region268
      $region267: #{mardan_forward.1} parent=11 // pred_region
        _
      $region268: #{mardan_forward.1} parent=11 // pred_fallthru
        _
      // Predicated region
      $region269: #{mardan_forward.1} parent=11 // pred_check
        %p2043 = pneg %p1558
      $region270: #{mardan_forward.1} parent=11 // pred_check_branch
        %2045 = sbr.rel (%p2043) target = $region272
      $region271: #{mardan_forward.1} parent=11 // pred_region
        _
      $region272: #{mardan_forward.1} parent=11 // pred_fallthru
        _
      // Predicated region
      $region273: #{mardan_forward.1} parent=11 // pred_check
        %p2046 = pneg %p1579
      $region274: #{mardan_forward.1} parent=11 // pred_check_branch
        %2048 = sbr.rel (%p2046) target = $region276
      $region275: #{mardan_forward.1} parent=11 // pred_region
        _
      $region276: #{mardan_forward.1} parent=11 // pred_fallthru
        _
      // Predicated region
      $region277: #{mardan_forward.1} parent=11 // pred_check
        %p2049 = pneg %p1600
      $region278: #{mardan_forward.1} parent=11 // pred_check_branch
        %2051 = sbr.rel (%p2049) target = $region280
      $region279: #{mardan_forward.1} parent=11 // pred_region
        _
      $region280: #{mardan_forward.1} parent=11 // pred_fallthru
        _
      // Predicated region
      $region281: #{mardan_forward.1} parent=11 // pred_check
        %p2052 = pneg %p1621
      $region282: #{mardan_forward.1} parent=11 // pred_check_branch
        %2054 = sbr.rel (%p2052) target = $region284
      $region283: #{mardan_forward.1} parent=11 // pred_region
        _
      $region284: #{mardan_forward.1} parent=11 // pred_fallthru
        _
      // Predicated region
      $region285: #{mardan_forward.1} parent=11 // pred_check
        %p2055 = pneg %p1642
      $region286: #{mardan_forward.1} parent=11 // pred_check_branch
        %2057 = sbr.rel (%p2055) target = $region288
      $region287: #{mardan_forward.1} parent=11 // pred_region
        _
      $region288: #{mardan_forward.1} parent=11 // pred_fallthru
        _
      // Predicated region
      $region289: #{mardan_forward.1} parent=11 // pred_check
        %p2058 = pneg %p1663
      $region290: #{mardan_forward.1} parent=11 // pred_check_branch
        %2060 = sbr.rel (%p2058) target = $region292
      $region291: #{mardan_forward.1} parent=11 // pred_region
        _
      $region292: #{mardan_forward.1} parent=11 // pred_fallthru
        _
      // Predicated region
      $region293: #{mardan_forward.1} parent=11 // pred_check
        %p2061 = pneg %p1684
      $region294: #{mardan_forward.1} parent=11 // pred_check_branch
        %2063 = sbr.rel (%p2061) target = $region296
      $region295: #{mardan_forward.1} parent=11 // pred_region
        _
      $region296: #{mardan_forward.1} parent=11 // pred_fallthru
        _
      // Predicated region
      $region297: #{mardan_forward.1} parent=11 // pred_check
        %p2064 = pneg %p1705
      $region298: #{mardan_forward.1} parent=11 // pred_check_branch
        %2066 = sbr.rel (%p2064) target = $region300
      $region299: #{mardan_forward.1} parent=11 // pred_region
        _
      $region300: #{mardan_forward.1} parent=11 // pred_fallthru
        _
      // Predicated region
      $region301: #{mardan_forward.1} parent=11 // pred_check
        %p2067 = pneg %p1726
      $region302: #{mardan_forward.1} parent=11 // pred_check_branch
        %2069 = sbr.rel (%p2067) target = $region304
      $region303: #{mardan_forward.1} parent=11 // pred_region
        _
      $region304: #{mardan_forward.1} parent=11 // pred_fallthru
        _
      // Predicated region
      $region305: #{mardan_forward.1} parent=11 // pred_check
        %p2070 = pneg %p1747
      $region306: #{mardan_forward.1} parent=11 // pred_check_branch
        %2072 = sbr.rel (%p2070) target = $region308
      $region307: #{mardan_forward.1} parent=11 // pred_region
        _
      $region308: #{mardan_forward.1} parent=11 // pred_fallthru
        _
      // Predicated region
      $region309: #{mardan_forward.1} parent=11 // pred_check
        %p2073 = pneg %p1768
      $region310: #{mardan_forward.1} parent=11 // pred_check_branch
        %2075 = sbr.rel (%p2073) target = $region312
      $region311: #{mardan_forward.1} parent=11 // pred_region
        _
      $region312: #{mardan_forward.1} parent=11 // pred_fallthru
        _
      // Predicated region
      $region313: #{mardan_forward.1} parent=11 // pred_check
        %p2076 = pneg %p1789
      $region314: #{mardan_forward.1} parent=11 // pred_check_branch
        %2078 = sbr.rel (%p2076) target = $region316
      $region315: #{mardan_forward.1} parent=11 // pred_region
        _
      $region316: #{mardan_forward.1} parent=11 // pred_fallthru
        _
      // Predicated region
      $region317: #{mardan_forward.1} parent=11 // pred_check
        %p2079 = pneg %p1810
      $region318: #{mardan_forward.1} parent=11 // pred_check_branch
        %2081 = sbr.rel (%p2079) target = $region320
      $region319: #{mardan_forward.1} parent=11 // pred_region
        _
      $region320: #{mardan_forward.1} parent=11 // pred_fallthru
        _
    $region12: #{mardan_forward.1} parent=5 // pred_fallthru
      _
    %p2082 = scmp.lt.s32.totalorder %s167, 2
    // Predicated region
    $region321: #{mardan_forward.1} parent=5 // pred_check
      %p2083 = pneg %p2082
    $region322: #{mardan_forward.1} parent=5 // pred_check_branch
      %2085 = sbr.rel (%p2083) target = $region324
    $region323: #{mardan_forward.1} parent=5 // pred_region
      // Predicated region
      $region325: #{mardan_forward.1} parent=323 // pred_check
        %p2086 = pneg %p187
      $region326: #{mardan_forward.1} parent=323 // pred_check_branch
        %2088 = sbr.rel (%p2086) target = $region328
      $region327: #{mardan_forward.1} parent=323 // pred_region
        %p2089 = scmp.lt.s32.totalorder %s167, 1
        %s2090 = scalar_select %p2089, %s167, 1
        %s2091 = smul.addr %s2090, 2
        %s2092 = smul.addr %s2091, 4
        %s2093 = scalar_lea.vmem %s1, %s2092
      $region328: #{mardan_forward.1} parent=323 // pred_fallthru
        _
    $region324: #{mardan_forward.1} parent=5 // pred_fallthru
      _
    %p2094 = scmp.le.s32.totalorder 1, %s167
    %p2095 = scmp.lt.s32.totalorder %s167, 3
    %p2096 = pnand %p2094, %p2095
    %p2097 = pneg %p2096
    // Predicated region
    $region329: #{mardan_forward.1} parent=5 // pred_check
      _
    $region330: #{mardan_forward.1} parent=5 // pred_check_branch
      %2099 = sbr.rel (%p2096) target = $region332
    $region331: #{mardan_forward.1} parent=5 // pred_region
      %s2100 = ssub.s32 %s167, 1
      %p2101 = scmp.lt.s32.totalorder %s172, 1
      %s2102 = scalar_select %p2101, %s172, 1
      %s2103 = smul.addr %s2102, 2
      %s2104 = smul.addr %s2103, 4
      %s2105 = scalar_lea.vmem %s1, %s2104
      %p2106 = pneg %p193
      %p2107 = pneg %p190
      %p2108 = pneg %p214
      %p2109 = pneg %p211
      %p2110 = pneg %p235
      %p2111 = pneg %p232
      %p2112 = pneg %p256
      %p2113 = pneg %p253
      %p2114 = pneg %p277
      %p2115 = pneg %p274
      %p2116 = pneg %p298
      %p2117 = pneg %p295
      %p2118 = pneg %p319
      %p2119 = pneg %p316
      %p2120 = pneg %p340
      %p2121 = pneg %p337
      %p2122 = pneg %p361
      %p2123 = pneg %p358
      %p2124 = pneg %p382
      %p2125 = pneg %p379
      %p2126 = pneg %p403
      %p2127 = pneg %p400
      %p2128 = pneg %p424
      %p2129 = pneg %p421
      %p2130 = pneg %p445
      %p2131 = pneg %p442
      %p2132 = pneg %p466
      %p2133 = pneg %p463
      %p2134 = pneg %p487
      %p2135 = pneg %p484
      %p2136 = pneg %p508
      %p2137 = pneg %p505
      %p2138 = pneg %p529
      %p2139 = pneg %p526
      %p2140 = pneg %p550
      %p2141 = pneg %p547
      %p2142 = pneg %p571
      %p2143 = pneg %p568
      %p2144 = pneg %p592
      %p2145 = pneg %p589
      %p2146 = pneg %p613
      %p2147 = pneg %p610
      %p2148 = pneg %p634
      %p2149 = pneg %p631
      %p2150 = pneg %p655
      %p2151 = pneg %p652
      %p2152 = pneg %p676
      %p2153 = pneg %p673
      %p2154 = pneg %p697
      %p2155 = pneg %p694
      %p2156 = pneg %p718
      %p2157 = pneg %p715
      %p2158 = pneg %p739
      %p2159 = pneg %p736
      %p2160 = pneg %p760
      %p2161 = pneg %p757
      %p2162 = pneg %p781
      %p2163 = pneg %p778
      %p2164 = pneg %p802
      %p2165 = pneg %p799
      %p2166 = pneg %p823
      %p2167 = pneg %p820
      %p2168 = pneg %p844
      %p2169 = pneg %p841
      %p2170 = pneg %p865
      %p2171 = pneg %p862
      %p2172 = pneg %p886
      %p2173 = pneg %p883
      %p2174 = pneg %p907
      %p2175 = pneg %p904
      %p2176 = pneg %p928
      %p2177 = pneg %p925
      %p2178 = pneg %p949
      %p2179 = pneg %p946
      %p2180 = pneg %p970
      %p2181 = pneg %p967
      %p2182 = pneg %p991
      %p2183 = pneg %p988
      %p2184 = pneg %p1012
      %p2185 = pneg %p1009
      %p2186 = pneg %p1033
      %p2187 = pneg %p1030
      %p2188 = pneg %p1054
      %p2189 = pneg %p1051
      %p2190 = pneg %p1075
      %p2191 = pneg %p1072
      %p2192 = pneg %p1096
      %p2193 = pneg %p1093
      %p2194 = pneg %p1117
      %p2195 = pneg %p1114
      %p2196 = pneg %p1138
      %p2197 = pneg %p1135
      %p2198 = pneg %p1159
      %p2199 = pneg %p1156
      %p2200 = pneg %p1180
      %p2201 = pneg %p1177
      %p2202 = pneg %p1201
      %p2203 = pneg %p1198
      %p2204 = pneg %p1222
      %p2205 = pneg %p1219
      %p2206 = pneg %p1243
      %p2207 = pneg %p1240
      %p2208 = pneg %p1264
      %p2209 = pneg %p1261
      %p2210 = pneg %p1285
      %p2211 = pneg %p1282
      %p2212 = pneg %p1306
      %p2213 = pneg %p1303
      %p2214 = pneg %p1327
      %p2215 = pneg %p1324
      %p2216 = pneg %p1348
      %p2217 = pneg %p1345
      %p2218 = pneg %p1369
      %p2219 = pneg %p1366
      %p2220 = pneg %p1390
      %p2221 = pneg %p1387
      %p2222 = pneg %p1411
      %p2223 = pneg %p1408
      %p2224 = pneg %p1432
      %p2225 = pneg %p1429
      %p2226 = pneg %p1453
      %p2227 = pneg %p1450
      %p2228 = pneg %p1474
      %p2229 = pneg %p1471
      %p2230 = pneg %p1495
      %p2231 = pneg %p1492
      %p2232 = pneg %p1516
      %p2233 = pneg %p1513
      %p2234 = pneg %p1537
      %p2235 = pneg %p1534
      %p2236 = pneg %p1558
      %p2237 = pneg %p1555
      %p2238 = pneg %p1579
      %p2239 = pneg %p1576
      %p2240 = pneg %p1600
      %p2241 = pneg %p1597
      %p2242 = pneg %p1621
      %p2243 = pneg %p1618
      %p2244 = pneg %p1642
      %p2245 = pneg %p1639
      %p2246 = pneg %p1663
      %p2247 = pneg %p1660
      %p2248 = pneg %p1684
      %p2249 = pneg %p1681
      %p2250 = pneg %p1705
      %p2251 = pneg %p1702
      %p2252 = pneg %p1726
      %p2253 = pneg %p1723
      %p2254 = pneg %p1747
      %p2255 = pneg %p1744
      %p2256 = pneg %p1768
      %p2257 = pneg %p1765
      %p2258 = pneg %p1789
      %p2259 = pneg %p1786
      %p2260 = pneg %p1810
      %p2261 = pneg %p1807
      %p2262 = pneg %p1836
      %p2263 = pneg %p1833
      %p2264 = scmp.lt.s32.totalorder %s172, 1
      %s2265 = scalar_select %p2264, %s172, 1
      %s2266 = smul.addr %s2265, 2
      %s2267 = smul.addr %s2266, 8
      %s2268 = scalar_lea.vmem %s157, %s2267
      %p2269 = scmp.lt.s32.totalorder %s172, 1
      %s2270 = scalar_select %p2269, %s172, 1
      %s2271 = smul.addr %s2270, 2
      %s2272 = smul.addr %s2271, 4
      %s2273 = scalar_lea.vmem %s1, %s2272
      %p2274 = scmp.lt.s32.totalorder %s172, 1
      %s2275 = scalar_select %p2274, %s172, 1
      %s2276 = smul.addr %s2275, 2
      %s2277 = smul.addr %s2276, 8
      %s2278 = scalar_lea.vmem %s157, %s2277
      %v2279 = vld [vmem:[%s3] sm:$0x3]
      %v2280 = vld [vmem:[%s2273] sm:$0x77]
      %2282 = vst [vmem:[#allocation1] ss:$2 sm:$0xff] %v2280
      %v2283 = vld.sshfl [vmem:[#allocation1] sm:$0xff pattern:$0x75316420]
      %v2284 = vld.sshfl [vmem:[#allocation1 + $0x8] sm:$0xff pattern:$0x75316420]
      %2285 = vrot.lane.b32.xlu0 %v2283, 17
      %v2286 = vpop.permute.xlu0 %2285
      %2287 = vrot.lane.b32.xlu0 %v2284, 17
      %v2288 = vpop.permute.xlu0 %2287
      %vm2289 = vcmask 138240
      %v2290 = vsel %vm2289, %v2286, %v2288
      %v2294 = vsel %vm2289, 0.0, %v2286
      %v2295 = vsel %vm2289, %v2288, 0.0
      %vm2296 = vcmp.ge.f32.partialorder %v2279, 1.0
      %vm2297 = vcmp.le.f32.partialorder %v2279, 16.0
      %vm2298 = vmand %vm2296, %vm2297
      %v2299 = vsel %vm2298, 1, 0
      %v2300 = vcvt.s32.f32 %v2299
      %v2302 = vperm.slane %v2300, 0
      %v2303 = vperm.slane %v2300, 1
      %v2306 = vmul.f32 %v2294, %v2302
      %v2307 = vmul.f32 %v2290, %v2303
      %vm2308 = vcmp.ge.f32.partialorder %v2279, -1.0
      %vm2309 = vcmp.le.f32.partialorder %v2279, 14.0
      %vm2310 = vmand %vm2308, %vm2309
      %v2311 = vsel %vm2310, 1, 0
      %v2312 = vcvt.s32.f32 %v2311
      %v2314 = vperm.slane %v2312, 0
      %v2315 = vperm.slane %v2312, 1
      %2316 = vrot.lane.b32.xlu0 %v2314, 2
      %v2317 = vpop.permute.xlu0 %2316
      %2318 = vrot.lane.b32.xlu0 %v2315, 2
      %v2319 = vpop.permute.xlu0 %2318
      %vm2320 = vcmask 15360
      %v2321 = vsel %vm2320, %v2317, %v2319
      %v2325 = vmul.f32 %v2294, %v2317
      %v2326 = vmul.f32 %v2290, %v2321
      %v2327 = vmul.f32 %v2295, %v2319
      %2328 = vrot.lane.b32.xlu0 %v2302, 16
      %v2329 = vpop.permute.xlu0 %2328
      %2330 = vrot.lane.b32.xlu0 %v2303, 16
      %v2331 = vpop.permute.xlu0 %2330
      %vm2332 = vcmask 130048
      %v2333 = vsel %vm2332, %v2329, %v2331
      %v2337 = vmul.f32 %v2294, %v2329
      %v2338 = vmul.f32 %v2290, %v2333
      %v2339 = vmul.f32 %v2295, %v2331
      %2340 = vrot.lane.b32.xlu0 %v2314, 18
      %v2341 = vpop.permute.xlu0 %2340
      %2342 = vrot.lane.b32.xlu0 %v2315, 18
      %v2343 = vpop.permute.xlu0 %2342
      %vm2344 = vcmask 146432
      %v2345 = vsel %vm2344, %v2341, %v2343
      %v2349 = vmul.f32 %v2294, %v2341
      %v2350 = vmul.f32 %v2290, %v2345
      %v2351 = vmul.f32 %v2295, %v2343
      %2352 = vrot.lane.b32.xlu0 %v2302, 32
      %v2353 = vpop.permute.xlu0 %2352
      %2354 = vrot.lane.b32.xlu0 %v2303, 32
      %v2355 = vpop.permute.xlu0 %2354
      %vm2356 = vcmask 261120
      %v2357 = vsel %vm2356, %v2353, %v2355
      %v2361 = vmul.f32 %v2294, %v2353
      %v2362 = vmul.f32 %v2290, %v2357
      %v2363 = vmul.f32 %v2295, %v2355
      %2364 = vrot.lane.b32.xlu0 %v2314, 34
      %v2365 = vpop.permute.xlu0 %2364
      %2366 = vrot.lane.b32.xlu0 %v2315, 34
      %v2367 = vpop.permute.xlu0 %2366
      %vm2368 = vcmask 277504
      %v2369 = vsel %vm2368, %v2365, %v2367
      %v2373 = vmul.f32 %v2294, %v2365
      %v2374 = vmul.f32 %v2290, %v2369
      %v2375 = vmul.f32 %v2295, %v2367
      %v2378 = vrot.slane %v2294, 5
      %v2379 = vrot.slane %v2290, 5
      %v2380 = vrot.slane %v2295, 5
      %2381 = vrot.lane.b32.xlu0 %v2378, 127
      %v2382 = vpop.permute.xlu0 %2381
      %2383 = vrot.lane.b32.xlu0 %v2379, 127
      %v2384 = vpop.permute.xlu0 %2383
      %2385 = vrot.lane.b32.xlu0 %v2380, 127
      %v2386 = vpop.permute.xlu0 %2385
      %vm2387 = vcmask 1039360
      %v2388 = vsel %vm2387, %v2382, %v2384
      %v2389 = vsel %vm2387, %v2384, %v2386
      %v2395 = vrot.slane %v2325, 2
      %v2396 = vrot.slane %v2326, 2
      %v2397 = vrot.slane %v2327, 2
      %2398 = vrot.lane.b32.xlu0 %v2395, 126
      %v2399 = vpop.permute.xlu0 %2398
      %2400 = vrot.lane.b32.xlu0 %v2396, 126
      %v2401 = vpop.permute.xlu0 %2400
      %2402 = vrot.lane.b32.xlu0 %v2397, 126
      %v2403 = vpop.permute.xlu0 %2402
      %vm2404 = vcmask 1031168
      %v2405 = vsel %vm2404, %v2399, %v2401
      %v2406 = vsel %vm2404, %v2401, %v2403
      %v2412 = vrot.slane %v2337, 7
      %v2413 = vrot.slane %v2338, 7
      %v2414 = vrot.slane %v2339, 7
      %2415 = vrot.lane.b32.xlu0 %v2412, 112
      %v2416 = vpop.permute.xlu0 %2415
      %2417 = vrot.lane.b32.xlu0 %v2413, 112
      %v2418 = vpop.permute.xlu0 %2417
      %2419 = vrot.lane.b32.xlu0 %v2414, 112
      %v2420 = vpop.permute.xlu0 %2419
      %vm2421 = vcmask 916480
      %v2422 = vsel %vm2421, %v2416, %v2418
      %v2423 = vsel %vm2421, %v2418, %v2420
      %v2426 = vrot.slane %v2294, 4
      %v2427 = vrot.slane %v2290, 4
      %v2428 = vrot.slane %v2295, 4
      %2429 = vrot.lane.b32.xlu0 %v2426, 111
      %v2430 = vpop.permute.xlu0 %2429
      %2431 = vrot.lane.b32.xlu0 %v2427, 111
      %v2432 = vpop.permute.xlu0 %2431
      %2433 = vrot.lane.b32.xlu0 %v2428, 111
      %v2434 = vpop.permute.xlu0 %2433
      %vm2435 = vcmask 908288
      %v2436 = vsel %vm2435, %v2430, %v2432
      %v2437 = vsel %vm2435, %v2432, %v2434
      %v2443 = vrot.slane %v2349, 1
      %v2444 = vrot.slane %v2350, 1
      %v2445 = vrot.slane %v2351, 1
      %2446 = vrot.lane.b32.xlu0 %v2443, 110
      %v2447 = vpop.permute.xlu0 %2446
      %2448 = vrot.lane.b32.xlu0 %v2444, 110
      %v2449 = vpop.permute.xlu0 %2448
      %2450 = vrot.lane.b32.xlu0 %v2445, 110
      %v2451 = vpop.permute.xlu0 %2450
      %vm2452 = vcmask 900096
      %v2453 = vsel %vm2452, %v2447, %v2449
      %v2454 = vsel %vm2452, %v2449, %v2451
      %v2460 = vrot.slane %v2361, 6
      %v2461 = vrot.slane %v2362, 6
      %v2462 = vrot.slane %v2363, 6
      %2463 = vrot.lane.b32.xlu0 %v2460, 96
      %v2464 = vpop.permute.xlu0 %2463
      %2465 = vrot.lane.b32.xlu0 %v2461, 96
      %v2466 = vpop.permute.xlu0 %2465
      %2467 = vrot.lane.b32.xlu0 %v2462, 96
      %v2468 = vpop.permute.xlu0 %2467
      %vm2469 = vcmask 785408
      %v2470 = vsel %vm2469, %v2464, %v2466
      %v2471 = vsel %vm2469, %v2466, %v2468
      %v2474 = vrot.slane %v2294, 3
      %v2475 = vrot.slane %v2290, 3
      %v2476 = vrot.slane %v2295, 3
      %2477 = vrot.lane.b32.xlu0 %v2474, 95
      %v2478 = vpop.permute.xlu0 %2477
      %2479 = vrot.lane.b32.xlu0 %v2475, 95
      %v2480 = vpop.permute.xlu0 %2479
      %2481 = vrot.lane.b32.xlu0 %v2476, 95
      %v2482 = vpop.permute.xlu0 %2481
      %vm2483 = vcmask 777216
      %v2484 = vsel %vm2483, %v2478, %v2480
      %v2485 = vsel %vm2483, %v2480, %v2482
      %2491 = vrot.lane.b32.xlu0 %v2373, 94
      %v2492 = vpop.permute.xlu0 %2491
      %2493 = vrot.lane.b32.xlu0 %v2374, 94
      %v2494 = vpop.permute.xlu0 %2493
      %2495 = vrot.lane.b32.xlu0 %v2375, 94
      %v2496 = vpop.permute.xlu0 %2495
      %vm2497 = vcmask 769024
      %v2498 = vsel %vm2497, %v2492, %v2494
      %v2499 = vsel %vm2497, %v2494, %v2496
      %vm2500 = vcmask 1042432
      %v2501 = vsel %vm2500, %v2306, %v2388
      %v2502 = vsel %vm2500, %v2307, %v2389
      %vm2503 = vcmask 1045504
      %v2504 = vsel %vm2503, %v2501, %v2405
      %v2505 = vsel %vm2503, %v2502, %v2406
      %vm2506 = vcmask 1040384
      %v2507 = vsel %vm2506, %v2405, %v2422
      %v2508 = vsel %vm2506, %v2406, %v2423
      %vm2509 = vcmask 1043456
      %v2510 = vsel %vm2509, %v2507, %v2436
      %v2511 = vsel %vm2509, %v2508, %v2437
      %vm2512 = vcmask 1046528
      %v2513 = vsel %vm2512, %v2510, %v2453
      %v2514 = vsel %vm2512, %v2511, %v2454
      %vm2515 = vcmask 1041408
      %v2516 = vsel %vm2515, %v2453, %v2470
      %v2517 = vsel %vm2515, %v2454, %v2471
      %vm2518 = vcmask 1044480
      %v2519 = vsel %vm2518, %v2516, %v2484
      %v2520 = vsel %vm2518, %v2517, %v2485
      %v2521 = vld [vmem:[%s5] sm:$0xff]
      %v2522 = vld [vmem:[%s7] sm:$0xff]
      %2524 = vset.pattern.permute.xlu0 0
      %2525 = vperm.xlu0 %2524, %v2522
      %v2526 = vpop.permute.xlu0 %2525
      %vm2528 = vcmask 220160
      %v2530 = vsel %vm2528, %v2521, 0
      %v2532 = vsel %vm2500, %v2498, 0
      %v2534 = vsel %vm2500, %v2499, 0
      %2536 = vmatpush.msra.mxu0 0.0
      %2537 = vmatpush.msra.mxu0 0.0
      %2538 = vmatpush.msra.mxu0 0.0
      %2539 = vmatpush.msra.mxu0 0.0
      %2540 = vmatpush.msra.mxu0 0.0
      %2541 = vmatpush.msra.mxu0 0.0
      %2542 = vmatpush.msra.mxu0 0.0
      %2543 = vmatpush.msra.mxu0 0.0
      %2544 = vmatpush.msra.mxu0 0.0
      %2545 = vmatpush.msra.mxu0 0.0
      %2546 = vmatpush.msra.mxu0 0.0
      %2547 = vmatpush.msra.mxu0 0.0
      %2548 = vmatpush.msra.mxu0 %v2532
      %2549 = vmatpush.msra.mxu0 %v2519
      %2550 = vmatpush.msra.mxu0 %v2513
      %2551 = vmatpush.msra.mxu0 %v2504
      %2552 = vmatmul.f32.gmra.mxu0 %v2530
      %v2553 = vpop.f32.mrf.mxu0
      %v2554 = vadd.f32 %v2526, %v2553
      %2555 = vdwg.mxu0
      %2556 = vmatpush.msra.mxu0 0.0
      %2557 = vmatpush.msra.mxu0 0.0
      %2558 = vmatpush.msra.mxu0 0.0
      %2559 = vmatpush.msra.mxu0 0.0
      %2560 = vmatpush.msra.mxu0 0.0
      %2561 = vmatpush.msra.mxu0 0.0
      %2562 = vmatpush.msra.mxu0 0.0
      %2563 = vmatpush.msra.mxu0 0.0
      %2564 = vmatpush.msra.mxu0 0.0
      %2565 = vmatpush.msra.mxu0 0.0
      %2566 = vmatpush.msra.mxu0 0.0
      %2567 = vmatpush.msra.mxu0 0.0
      %2568 = vmatpush.msra.mxu0 %v2534
      %2569 = vmatpush.msra.mxu0 %v2520
      %2570 = vmatpush.msra.mxu0 %v2514
      %2571 = vmatpush.msra.mxu0 %v2505
      %2572 = vmatmul.f32.gmra.mxu0 %v2530
      %v2573 = vpop.f32.mrf.mxu0
      %v2574 = vadd.f32 %v2526, %v2573
      %2575 = vdwg.mxu0
      %2578 = vrot.lane.b32.xlu0 %v2554, 17
      %v2579 = vpop.permute.xlu0 %2578
      %2580 = vrot.lane.b32.xlu0 %v2574, 17
      %v2581 = vpop.permute.xlu0 %2580
      %v2582 = vsel %vm2289, %v2579, %v2581
      %v2586 = vsel %vm2289, 0.0, %v2579
      %v2587 = vsel %vm2289, %v2581, 0.0
      %v2588 = vmul.f32 %v2586, %v2302
      %v2589 = vmul.f32 %v2582, %v2303
      %v2590 = vmul.f32 %v2586, %v2317
      %v2591 = vmul.f32 %v2582, %v2321
      %v2592 = vmul.f32 %v2587, %v2319
      %v2593 = vmul.f32 %v2586, %v2329
      %v2594 = vmul.f32 %v2582, %v2333
      %v2595 = vmul.f32 %v2587, %v2331
      %v2596 = vmul.f32 %v2586, %v2341
      %v2597 = vmul.f32 %v2582, %v2345
      %v2598 = vmul.f32 %v2587, %v2343
      %v2599 = vmul.f32 %v2586, %v2353
      %v2600 = vmul.f32 %v2582, %v2357
      %v2601 = vmul.f32 %v2587, %v2355
      %v2602 = vmul.f32 %v2586, %v2365
      %v2603 = vmul.f32 %v2582, %v2369
      %v2604 = vmul.f32 %v2587, %v2367
      %2607 = vrot.lane.b32.xlu0 %v2586, 127
      %v2608 = vpop.permute.xlu0 %2607
      %2609 = vrot.lane.b32.xlu0 %v2582, 127
      %v2610 = vpop.permute.xlu0 %2609
      %2611 = vrot.lane.b32.xlu0 %v2587, 127
      %v2612 = vpop.permute.xlu0 %2611
      %v2613 = vsel %vm2387, %v2608, %v2610
      %v2614 = vsel %vm2387, %v2610, %v2612
      %2620 = vrot.lane.b32.xlu0 %v2590, 126
      %v2621 = vpop.permute.xlu0 %2620
      %2622 = vrot.lane.b32.xlu0 %v2591, 126
      %v2623 = vpop.permute.xlu0 %2622
      %2624 = vrot.lane.b32.xlu0 %v2592, 126
      %v2625 = vpop.permute.xlu0 %2624
      %v2626 = vsel %vm2404, %v2621, %v2623
      %v2627 = vsel %vm2404, %v2623, %v2625
      %2633 = vrot.lane.b32.xlu0 %v2593, 112
      %v2634 = vpop.permute.xlu0 %2633
      %2635 = vrot.lane.b32.xlu0 %v2594, 112
      %v2636 = vpop.permute.xlu0 %2635
      %2637 = vrot.lane.b32.xlu0 %v2595, 112
      %v2638 = vpop.permute.xlu0 %2637
      %v2639 = vsel %vm2421, %v2634, %v2636
      %v2640 = vsel %vm2421, %v2636, %v2638
      %2643 = vrot.lane.b32.xlu0 %v2586, 111
      %v2644 = vpop.permute.xlu0 %2643
      %2645 = vrot.lane.b32.xlu0 %v2582, 111
      %v2646 = vpop.permute.xlu0 %2645
      %2647 = vrot.lane.b32.xlu0 %v2587, 111
      %v2648 = vpop.permute.xlu0 %2647
      %v2649 = vsel %vm2435, %v2644, %v2646
      %v2650 = vsel %vm2435, %v2646, %v2648
      %2656 = vrot.lane.b32.xlu0 %v2596, 110
      %v2657 = vpop.permute.xlu0 %2656
      %2658 = vrot.lane.b32.xlu0 %v2597, 110
      %v2659 = vpop.permute.xlu0 %2658
      %2660 = vrot.lane.b32.xlu0 %v2598, 110
      %v2661 = vpop.permute.xlu0 %2660
      %v2662 = vsel %vm2452, %v2657, %v2659
      %v2663 = vsel %vm2452, %v2659, %v2661
      %2669 = vrot.lane.b32.xlu0 %v2599, 96
      %v2670 = vpop.permute.xlu0 %2669
      %2671 = vrot.lane.b32.xlu0 %v2600, 96
      %v2672 = vpop.permute.xlu0 %2671
      %2673 = vrot.lane.b32.xlu0 %v2601, 96
      %v2674 = vpop.permute.xlu0 %2673
      %v2675 = vsel %vm2469, %v2670, %v2672
      %v2676 = vsel %vm2469, %v2672, %v2674
      %2679 = vrot.lane.b32.xlu0 %v2586, 95
      %v2680 = vpop.permute.xlu0 %2679
      %2681 = vrot.lane.b32.xlu0 %v2582, 95
      %v2682 = vpop.permute.xlu0 %2681
      %2683 = vrot.lane.b32.xlu0 %v2587, 95
      %v2684 = vpop.permute.xlu0 %2683
      %v2685 = vsel %vm2483, %v2680, %v2682
      %v2686 = vsel %vm2483, %v2682, %v2684
      %2692 = vrot.lane.b32.xlu0 %v2602, 94
      %v2693 = vpop.permute.xlu0 %2692
      %2694 = vrot.lane.b32.xlu0 %v2603, 94
      %v2695 = vpop.permute.xlu0 %2694
      %2696 = vrot.lane.b32.xlu0 %v2604, 94
      %v2697 = vpop.permute.xlu0 %2696
      %v2698 = vsel %vm2497, %v2693, %v2695
      %v2699 = vsel %vm2497, %v2695, %v2697
      %v2702 = vld [vmem:[%s9] sm:$0xff]
      %v2703 = vld [vmem:[%s11] sm:$0xff]
      %2705 = vset.pattern.permute.xlu0 0
      %2706 = vperm.xlu0 %2705, %v2703
      %v2707 = vpop.permute.xlu0 %2706
      %vm2709 = vcmask 588800
      %v2711 = vsel %vm2709, %v2702, 0
      %2713 = vmatpush.msra.mxu0 0.0
      %2714 = vmatpush.msra.mxu0 0.0
      %2715 = vmatpush.msra.mxu0 0.0
      %2716 = vmatpush.msra.mxu0 0.0
      %2717 = vmatpush.msra.mxu0 0.0
      %2718 = vmatpush.msra.mxu0 0.0
      %2719 = vmatpush.msra.mxu0 0.0
      %2720 = vmatpush.msra.mxu0 %v2698
      %2721 = vmatpush.msra.mxu0 %v2685
      %2722 = vmatpush.msra.mxu0 %v2675
      %2723 = vmatpush.msra.mxu0 %v2662
      %2724 = vmatpush.msra.mxu0 %v2649
      %2725 = vmatpush.msra.mxu0 %v2639
      %2726 = vmatpush.msra.mxu0 %v2626
      %2727 = vmatpush.msra.mxu0 %v2613
      %2728 = vmatpush.msra.mxu0 %v2588
      %2729 = vmatmul.f32.gmra.mxu0 %v2711
      %v2730 = vpop.f32.mrf.mxu0
      %v2731 = vadd.f32 %v2707, %v2730
      %2732 = vdwg.mxu0
      %2733 = vmatpush.msra.mxu0 0.0
      %2734 = vmatpush.msra.mxu0 0.0
      %2735 = vmatpush.msra.mxu0 0.0
      %2736 = vmatpush.msra.mxu0 0.0
      %2737 = vmatpush.msra.mxu0 0.0
      %2738 = vmatpush.msra.mxu0 0.0
      %2739 = vmatpush.msra.mxu0 0.0
      %2740 = vmatpush.msra.mxu0 %v2699
      %2741 = vmatpush.msra.mxu0 %v2686
      %2742 = vmatpush.msra.mxu0 %v2676
      %2743 = vmatpush.msra.mxu0 %v2663
      %2744 = vmatpush.msra.mxu0 %v2650
      %2745 = vmatpush.msra.mxu0 %v2640
      %2746 = vmatpush.msra.mxu0 %v2627
      %2747 = vmatpush.msra.mxu0 %v2614
      %2748 = vmatpush.msra.mxu0 %v2589
      %2749 = vmatmul.f32.gmra.mxu0 %v2711
      %v2750 = vpop.f32.mrf.mxu0
      %v2751 = vadd.f32 %v2707, %v2750
      %2752 = vdwg.mxu0
      %v2753 = vld [vmem:[%s13] sm:$0xff]
      %v2754 = vld [vmem:[%s15] sm:$0xff]
      %2756 = vset.pattern.permute.xlu0 0
      %2757 = vperm.xlu0 %2756, %v2754
      %v2758 = vpop.permute.xlu0 %2757
      %vm2760 = vcmask 64512
      %v2762 = vsel %vm2760, %v2753, 0
      %2764 = vmatpush.msra.mxu0 0.0
      %2765 = vmatpush.msra.mxu0 0.0
      %2766 = vmatpush.msra.mxu0 0.0
      %2767 = vmatpush.msra.mxu0 0.0
      %2768 = vmatpush.msra.mxu0 0.0
      %2769 = vmatpush.msra.mxu0 0.0
      %2770 = vmatpush.msra.mxu0 0.0
      %2771 = vmatpush.msra.mxu0 0.0
      %2772 = vmatpush.msra.mxu0 0.0
      %2773 = vmatpush.msra.mxu0 0.0
      %2774 = vmatpush.msra.mxu0 0.0
      %2775 = vmatpush.msra.mxu0 0.0
      %2776 = vmatpush.msra.mxu0 0.0
      %2777 = vmatpush.msra.mxu0 0.0
      %2778 = vmatpush.msra.mxu0 0.0
      %2779 = vmatpush.msra.mxu0 %v2554
      %2780 = vmatmul.f32.gmra.mxu0 %v2762
      %v2781 = vpop.f32.mrf.mxu0
      %v2782 = vadd.f32 %v2758, %v2781
      %2783 = vdwg.mxu0
      %2784 = vmatpush.msra.mxu0 0.0
      %2785 = vmatpush.msra.mxu0 0.0
      %2786 = vmatpush.msra.mxu0 0.0
      %2787 = vmatpush.msra.mxu0 0.0
      %2788 = vmatpush.msra.mxu0 0.0
      %2789 = vmatpush.msra.mxu0 0.0
      %2790 = vmatpush.msra.mxu0 0.0
      %2791 = vmatpush.msra.mxu0 0.0
      %2792 = vmatpush.msra.mxu0 0.0
      %2793 = vmatpush.msra.mxu0 0.0
      %2794 = vmatpush.msra.mxu0 0.0
      %2795 = vmatpush.msra.mxu0 0.0
      %2796 = vmatpush.msra.mxu0 0.0
      %2797 = vmatpush.msra.mxu0 0.0
      %2798 = vmatpush.msra.mxu0 0.0
      %2799 = vmatpush.msra.mxu0 %v2574
      %2800 = vmatmul.f32.gmra.mxu0 %v2762
      %v2801 = vpop.f32.mrf.mxu0
      %v2802 = vadd.f32 %v2758, %v2801
      %2803 = vdwg.mxu0
      %v2804 = vsub.f32 0.0, %v2782
      %v2805 = vsub.f32 0.0, %v2802
      %v2806 = vmul.f32 %v2804, 1.442695
      %v2807 = vpow.pop %v2806
      %v2808 = vmul.f32 %v2805, 1.442695
      %v2809 = vpow.pop %v2808
      %v2810 = vadd.f32 %v2807, 1.0
      %v2811 = vadd.f32 %v2809, 1.0
      %v2812 = vrcp.pop %v2810
      %v2813 = vrcp.pop %v2811
      %v2814 = vmul.f32 %v2554, %v2812
      %v2815 = vmul.f32 %v2574, %v2813
      %v2816 = vld [vmem:[%s17] sm:$0xff]
      %v2817 = vld [vmem:[%s19] sm:$0xff]
      %2819 = vset.pattern.permute.xlu0 0
      %2820 = vperm.xlu0 %2819, %v2817
      %v2821 = vpop.permute.xlu0 %2820
      %v2824 = vsel %vm2760, %v2816, 0
      %2826 = vmatpush.msra.mxu0 0.0
      %2827 = vmatpush.msra.mxu0 0.0
      %2828 = vmatpush.msra.mxu0 0.0
      %2829 = vmatpush.msra.mxu0 0.0
      %2830 = vmatpush.msra.mxu0 0.0
      %2831 = vmatpush.msra.mxu0 0.0
      %2832 = vmatpush.msra.mxu0 0.0
      %2833 = vmatpush.msra.mxu0 0.0
      %2834 = vmatpush.msra.mxu0 0.0
      %2835 = vmatpush.msra.mxu0 0.0
      %2836 = vmatpush.msra.mxu0 0.0
      %2837 = vmatpush.msra.mxu0 0.0
      %2838 = vmatpush.msra.mxu0 0.0
      %2839 = vmatpush.msra.mxu0 0.0
      %2840 = vmatpush.msra.mxu0 0.0
      %2841 = vmatpush.msra.mxu0 %v2554
      %2842 = vmatmul.f32.gmra.mxu0 %v2824
      %v2843 = vpop.f32.mrf.mxu0
      %v2844 = vadd.f32 %v2821, %v2843
      %2845 = vdwg.mxu0
      %2846 = vmatpush.msra.mxu0 0.0
      %2847 = vmatpush.msra.mxu0 0.0
      %2848 = vmatpush.msra.mxu0 0.0
      %2849 = vmatpush.msra.mxu0 0.0
      %2850 = vmatpush.msra.mxu0 0.0
      %2851 = vmatpush.msra.mxu0 0.0
      %2852 = vmatpush.msra.mxu0 0.0
      %2853 = vmatpush.msra.mxu0 0.0
      %2854 = vmatpush.msra.mxu0 0.0
      %2855 = vmatpush.msra.mxu0 0.0
      %2856 = vmatpush.msra.mxu0 0.0
      %2857 = vmatpush.msra.mxu0 0.0
      %2858 = vmatpush.msra.mxu0 0.0
      %2859 = vmatpush.msra.mxu0 0.0
      %2860 = vmatpush.msra.mxu0 0.0
      %2861 = vmatpush.msra.mxu0 %v2574
      %2862 = vmatmul.f32.gmra.mxu0 %v2824
      %v2863 = vpop.f32.mrf.mxu0
      %v2864 = vadd.f32 %v2821, %v2863
      %2865 = vdwg.mxu0
      %v2866 = vsub.f32 0.0, %v2844
      %v2867 = vsub.f32 0.0, %v2864
      %v2868 = vmul.f32 %v2866, 1.442695
      %v2869 = vpow.pop %v2868
      %v2870 = vmul.f32 %v2867, 1.442695
      %v2871 = vpow.pop %v2870
      %v2872 = vadd.f32 %v2869, 1.0
      %v2873 = vadd.f32 %v2871, 1.0
      %v2874 = vrcp.pop %v2872
      %v2875 = vrcp.pop %v2873
      %v2876 = vmul.f32 %v2554, %v2874
      %v2877 = vmul.f32 %v2574, %v2875
      %s2878 = sld [smem:[#allocation2]]
      %v2879 = vstv %s2878
      %v2880 = vmul.f32 %v2879, %v2731
      %v2881 = vmul.f32 %v2879, %v2751
      %s2882 = ssub.f32 1.0, %s2878
      %v2883 = vstv %s2882
      %v2884 = vmul.f32 %v2883, %v2814
      %v2885 = vmul.f32 %v2883, %v2815
      %v2886 = vadd.f32 %v2880, %v2884
      %v2887 = vadd.f32 %v2881, %v2885
      %v2888 = vld [vmem:[%s23] sm:$0x3]
      %v2889 = vld [vmem:[%s25] sm:$0x3]
      %2891 = vset.pattern.permute.xlu0 0
      %2892 = vperm.xlu0 %2891, %v2889
      %v2893 = vpop.permute.xlu0 %2892
      %v2897 = vrot.slane %v2886, 4
      %v2898 = vrot.slane %v2887, 4
      %vm2899 = vcmask 31744
      %v2901 = vsel %vm2899, %v2888, 0
      %v2903 = vsel %vm2509, %v2897, 0
      %v2905 = vsel %vm2509, %v2898, 0
      %2907 = vmatpush.msra.mxu0 0.0
      %2908 = vmatpush.msra.mxu0 0.0
      %2909 = vmatpush.msra.mxu0 0.0
      %2910 = vmatpush.msra.mxu0 0.0
      %2911 = vmatpush.msra.mxu0 0.0
      %2912 = vmatpush.msra.mxu0 0.0
      %2913 = vmatpush.msra.mxu0 0.0
      %2914 = vmatpush.msra.mxu0 0.0
      %2915 = vmatpush.msra.mxu0 0.0
      %2916 = vmatpush.msra.mxu0 0.0
      %2917 = vmatpush.msra.mxu0 0.0
      %2918 = vmatpush.msra.mxu0 0.0
      %2919 = vmatpush.msra.mxu0 0.0
      %2920 = vmatpush.msra.mxu0 0.0
      %2921 = vmatpush.msra.mxu0 0.0
      %2922 = vmatpush.msra.mxu0 %v2903
      %2923 = vmatmul.f32.gmra.mxu0 %v2901
      %v2924 = vpop.f32.mrf.mxu0
      %v2925 = vadd.f32 %v2893, %v2924
      %2926 = vdwg.mxu0
      %2927 = vmatpush.msra.mxu0 0.0
      %2928 = vmatpush.msra.mxu0 0.0
      %2929 = vmatpush.msra.mxu0 0.0
      %2930 = vmatpush.msra.mxu0 0.0
      %2931 = vmatpush.msra.mxu0 0.0
      %2932 = vmatpush.msra.mxu0 0.0
      %2933 = vmatpush.msra.mxu0 0.0
      %2934 = vmatpush.msra.mxu0 0.0
      %2935 = vmatpush.msra.mxu0 0.0
      %2936 = vmatpush.msra.mxu0 0.0
      %2937 = vmatpush.msra.mxu0 0.0
      %2938 = vmatpush.msra.mxu0 0.0
      %2939 = vmatpush.msra.mxu0 0.0
      %2940 = vmatpush.msra.mxu0 0.0
      %2941 = vmatpush.msra.mxu0 0.0
      %2942 = vmatpush.msra.mxu0 %v2905
      %2943 = vmatmul.f32.gmra.mxu0 %v2901
      %v2944 = vpop.f32.mrf.mxu0
      %v2945 = vadd.f32 %v2893, %v2944
      %2946 = vdwg.mxu0
      %v2947 = vmax.f32 %v2925, 0.0
      %v2948 = vmax.f32 %v2945, 0.0
      %v2949 = vld [vmem:[%s27] sm:$0xff]
      %v2950 = vld [vmem:[%s29] sm:$0xff]
      %2952 = vset.pattern.permute.xlu0 0
      %2953 = vperm.xlu0 %2952, %v2950
      %v2954 = vpop.permute.xlu0 %2953
      %v2957 = vsel %vm2320, %v2949, 0
      %v2960 = vsel %vm2515, %v2947, 0
      %v2963 = vsel %vm2515, %v2948, 0
      %2965 = vmatpush.msra.mxu0 0.0
      %2966 = vmatpush.msra.mxu0 0.0
      %2967 = vmatpush.msra.mxu0 0.0
      %2968 = vmatpush.msra.mxu0 0.0
      %2969 = vmatpush.msra.mxu0 0.0
      %2970 = vmatpush.msra.mxu0 0.0
      %2971 = vmatpush.msra.mxu0 0.0
      %2972 = vmatpush.msra.mxu0 0.0
      %2973 = vmatpush.msra.mxu0 0.0
      %2974 = vmatpush.msra.mxu0 0.0
      %2975 = vmatpush.msra.mxu0 0.0
      %2976 = vmatpush.msra.mxu0 0.0
      %2977 = vmatpush.msra.mxu0 0.0
      %2978 = vmatpush.msra.mxu0 0.0
      %2979 = vmatpush.msra.mxu0 0.0
      %2980 = vmatpush.msra.mxu0 %v2960
      %2981 = vmatmul.f32.gmra.mxu0 %v2957
      %v2982 = vpop.f32.mrf.mxu0
      %v2983 = vadd.f32 %v2954, %v2982
      %2984 = vdwg.mxu0
      %2985 = vmatpush.msra.mxu0 0.0
      %2986 = vmatpush.msra.mxu0 0.0
      %2987 = vmatpush.msra.mxu0 0.0
      %2988 = vmatpush.msra.mxu0 0.0
      %2989 = vmatpush.msra.mxu0 0.0
      %2990 = vmatpush.msra.mxu0 0.0
      %2991 = vmatpush.msra.mxu0 0.0
      %2992 = vmatpush.msra.mxu0 0.0
      %2993 = vmatpush.msra.mxu0 0.0
      %2994 = vmatpush.msra.mxu0 0.0
      %2995 = vmatpush.msra.mxu0 0.0
      %2996 = vmatpush.msra.mxu0 0.0
      %2997 = vmatpush.msra.mxu0 0.0
      %2998 = vmatpush.msra.mxu0 0.0
      %2999 = vmatpush.msra.mxu0 0.0
      %3000 = vmatpush.msra.mxu0 %v2963
      %3001 = vmatmul.f32.gmra.mxu0 %v2957
      %v3002 = vpop.f32.mrf.mxu0
      %v3003 = vadd.f32 %v2954, %v3002
      %3004 = vdwg.mxu0
      %v3005 = vsub.f32 0.0, %v2983
      %v3006 = vsub.f32 0.0, %v3003
      %v3007 = vmul.f32 %v3005, 1.442695
      %v3008 = vpow.pop %v3007
      %v3009 = vmul.f32 %v3006, 1.442695
      %v3010 = vpow.pop %v3009
      %v3011 = vadd.f32 %v3008, 1.0
      %v3012 = vadd.f32 %v3010, 1.0
      %v3013 = vrcp.pop %v3011
      %v3014 = vrcp.pop %v3012
      %v3015 = vmul.f32 %v2886, %v3013
      %v3016 = vmul.f32 %v2887, %v3014
      %v3019 = vrot.slane %v2983, 4
      %v3020 = vrot.slane %v3003, 4
      %v3023 = vadd.f32 %v3015, %v3019
      %v3024 = vadd.f32 %v3016, %v3020
      %v3025 = vld [vmem:[%s31] sm:$0x3]
      %v3026 = vld [vmem:[%s33] sm:$0x3]
      %3028 = vset.pattern.permute.xlu0 0
      %3029 = vperm.xlu0 %3028, %v3026
      %v3030 = vpop.permute.xlu0 %3029
      %v3033 = vsel %vm2899, %v3025, 0
      %v3035 = vsel %vm2509, %v2886, 0
      %v3037 = vsel %vm2509, %v2887, 0
      %3039 = vmatpush.msra.mxu0 0.0
      %3040 = vmatpush.msra.mxu0 0.0
      %3041 = vmatpush.msra.mxu0 0.0
      %3042 = vmatpush.msra.mxu0 0.0
      %3043 = vmatpush.msra.mxu0 0.0
      %3044 = vmatpush.msra.mxu0 0.0
      %3045 = vmatpush.msra.mxu0 0.0
      %3046 = vmatpush.msra.mxu0 0.0
      %3047 = vmatpush.msra.mxu0 0.0
      %3048 = vmatpush.msra.mxu0 0.0
      %3049 = vmatpush.msra.mxu0 0.0
      %3050 = vmatpush.msra.mxu0 0.0
      %3051 = vmatpush.msra.mxu0 0.0
      %3052 = vmatpush.msra.mxu0 0.0
      %3053 = vmatpush.msra.mxu0 0.0
      %3054 = vmatpush.msra.mxu0 %v3035
      %3055 = vmatmul.f32.gmra.mxu0 %v3033
      %v3056 = vpop.f32.mrf.mxu0
      %v3057 = vadd.f32 %v3030, %v3056
      %3058 = vdwg.mxu0
      %3059 = vmatpush.msra.mxu0 0.0
      %3060 = vmatpush.msra.mxu0 0.0
      %3061 = vmatpush.msra.mxu0 0.0
      %3062 = vmatpush.msra.mxu0 0.0
      %3063 = vmatpush.msra.mxu0 0.0
      %3064 = vmatpush.msra.mxu0 0.0
      %3065 = vmatpush.msra.mxu0 0.0
      %3066 = vmatpush.msra.mxu0 0.0
      %3067 = vmatpush.msra.mxu0 0.0
      %3068 = vmatpush.msra.mxu0 0.0
      %3069 = vmatpush.msra.mxu0 0.0
      %3070 = vmatpush.msra.mxu0 0.0
      %3071 = vmatpush.msra.mxu0 0.0
      %3072 = vmatpush.msra.mxu0 0.0
      %3073 = vmatpush.msra.mxu0 0.0
      %3074 = vmatpush.msra.mxu0 %v3037
      %3075 = vmatmul.f32.gmra.mxu0 %v3033
      %v3076 = vpop.f32.mrf.mxu0
      %v3077 = vadd.f32 %v3030, %v3076
      %3078 = vdwg.mxu0
      %v3079 = vmax.f32 %v3057, 0.0
      %v3080 = vmax.f32 %v3077, 0.0
      %v3081 = vld [vmem:[%s35] sm:$0xff]
      %v3082 = vld [vmem:[%s37] sm:$0xff]
      %3084 = vset.pattern.permute.xlu0 0
      %3085 = vperm.xlu0 %3084, %v3082
      %v3086 = vpop.permute.xlu0 %3085
      %v3089 = vsel %vm2320, %v3081, 0
      %v3092 = vsel %vm2515, %v3079, 0
      %v3095 = vsel %vm2515, %v3080, 0
      %3097 = vmatpush.msra.mxu0 0.0
      %3098 = vmatpush.msra.mxu0 0.0
      %3099 = vmatpush.msra.mxu0 0.0
      %3100 = vmatpush.msra.mxu0 0.0
      %3101 = vmatpush.msra.mxu0 0.0
      %3102 = vmatpush.msra.mxu0 0.0
      %3103 = vmatpush.msra.mxu0 0.0
      %3104 = vmatpush.msra.mxu0 0.0
      %3105 = vmatpush.msra.mxu0 0.0
      %3106 = vmatpush.msra.mxu0 0.0
      %3107 = vmatpush.msra.mxu0 0.0
      %3108 = vmatpush.msra.mxu0 0.0
      %3109 = vmatpush.msra.mxu0 0.0
      %3110 = vmatpush.msra.mxu0 0.0
      %3111 = vmatpush.msra.mxu0 0.0
      %3112 = vmatpush.msra.mxu0 %v3092
      %3113 = vmatmul.f32.gmra.mxu0 %v3089
      %v3114 = vpop.f32.mrf.mxu0
      %v3115 = vadd.f32 %v3086, %v3114
      %3116 = vdwg.mxu0
      %3117 = vmatpush.msra.mxu0 0.0
      %3118 = vmatpush.msra.mxu0 0.0
      %3119 = vmatpush.msra.mxu0 0.0
      %3120 = vmatpush.msra.mxu0 0.0
      %3121 = vmatpush.msra.mxu0 0.0
      %3122 = vmatpush.msra.mxu0 0.0
      %3123 = vmatpush.msra.mxu0 0.0
      %3124 = vmatpush.msra.mxu0 0.0
      %3125 = vmatpush.msra.mxu0 0.0
      %3126 = vmatpush.msra.mxu0 0.0
      %3127 = vmatpush.msra.mxu0 0.0
      %3128 = vmatpush.msra.mxu0 0.0
      %3129 = vmatpush.msra.mxu0 0.0
      %3130 = vmatpush.msra.mxu0 0.0
      %3131 = vmatpush.msra.mxu0 0.0
      %3132 = vmatpush.msra.mxu0 %v3095
      %3133 = vmatmul.f32.gmra.mxu0 %v3089
      %v3134 = vpop.f32.mrf.mxu0
      %v3135 = vadd.f32 %v3086, %v3134
      %3136 = vdwg.mxu0
      %v3137 = vsub.f32 0.0, %v3115
      %v3138 = vsub.f32 0.0, %v3135
      %v3139 = vmul.f32 %v3137, 1.442695
      %v3140 = vpow.pop %v3139
      %v3141 = vmul.f32 %v3138, 1.442695
      %v3142 = vpow.pop %v3141
      %v3143 = vadd.f32 %v3140, 1.0
      %v3144 = vadd.f32 %v3142, 1.0
      %v3145 = vrcp.pop %v3143
      %v3146 = vrcp.pop %v3144
      %v3149 = vrot.slane %v3145, 4
      %v3150 = vrot.slane %v3146, 4
      %v3153 = vmul.f32 %v2886, %v3149
      %v3154 = vmul.f32 %v2887, %v3150
      %v3155 = vadd.f32 %v3153, %v3115
      %v3156 = vadd.f32 %v3154, %v3135
      %3159 = vrot.lane.b32.xlu0 %v3023, 17
      %v3160 = vpop.permute.xlu0 %3159
      %3161 = vrot.lane.b32.xlu0 %v3024, 17
      %v3162 = vpop.permute.xlu0 %3161
      %v3163 = vsel %vm2289, %v3160, %v3162
      %v3167 = vsel %vm2289, 0.0, %v3160
      %v3168 = vsel %vm2289, %v3162, 0.0
      %v3169 = vmul.f32 %v3167, %v2302
      %v3170 = vmul.f32 %v3163, %v2303
      %v3171 = vmul.f32 %v3167, %v2317
      %v3172 = vmul.f32 %v3163, %v2321
      %v3173 = vmul.f32 %v3168, %v2319
      %v3174 = vmul.f32 %v3167, %v2329
      %v3175 = vmul.f32 %v3163, %v2333
      %v3176 = vmul.f32 %v3168, %v2331
      %v3177 = vmul.f32 %v3167, %v2341
      %v3178 = vmul.f32 %v3163, %v2345
      %v3179 = vmul.f32 %v3168, %v2343
      %v3180 = vmul.f32 %v3167, %v2353
      %v3181 = vmul.f32 %v3163, %v2357
      %v3182 = vmul.f32 %v3168, %v2355
      %v3183 = vmul.f32 %v3167, %v2365
      %v3184 = vmul.f32 %v3163, %v2369
      %v3185 = vmul.f32 %v3168, %v2367
      %v3188 = vrot.slane %v3167, 4
      %v3189 = vrot.slane %v3163, 4
      %v3190 = vrot.slane %v3168, 4
      %3191 = vrot.lane.b32.xlu0 %v3188, 127
      %v3192 = vpop.permute.xlu0 %3191
      %3193 = vrot.lane.b32.xlu0 %v3189, 127
      %v3194 = vpop.permute.xlu0 %3193
      %3195 = vrot.lane.b32.xlu0 %v3190, 127
      %v3196 = vpop.permute.xlu0 %3195
      %v3197 = vsel %vm2387, %v3192, %v3194
      %v3198 = vsel %vm2387, %v3194, %v3196
      %3204 = vrot.lane.b32.xlu0 %v3171, 126
      %v3205 = vpop.permute.xlu0 %3204
      %3206 = vrot.lane.b32.xlu0 %v3172, 126
      %v3207 = vpop.permute.xlu0 %3206
      %3208 = vrot.lane.b32.xlu0 %v3173, 126
      %v3209 = vpop.permute.xlu0 %3208
      %v3210 = vsel %vm2404, %v3205, %v3207
      %v3211 = vsel %vm2404, %v3207, %v3209
      %v3217 = vrot.slane %v3174, 4
      %v3218 = vrot.slane %v3175, 4
      %v3219 = vrot.slane %v3176, 4
      %3220 = vrot.lane.b32.xlu0 %v3217, 112
      %v3221 = vpop.permute.xlu0 %3220
      %3222 = vrot.lane.b32.xlu0 %v3218, 112
      %v3223 = vpop.permute.xlu0 %3222
      %3224 = vrot.lane.b32.xlu0 %v3219, 112
      %v3225 = vpop.permute.xlu0 %3224
      %v3226 = vsel %vm2421, %v3221, %v3223
      %v3227 = vsel %vm2421, %v3223, %v3225
      %3230 = vrot.lane.b32.xlu0 %v3167, 111
      %v3231 = vpop.permute.xlu0 %3230
      %3232 = vrot.lane.b32.xlu0 %v3163, 111
      %v3233 = vpop.permute.xlu0 %3232
      %3234 = vrot.lane.b32.xlu0 %v3168, 111
      %v3235 = vpop.permute.xlu0 %3234
      %v3236 = vsel %vm2435, %v3231, %v3233
      %v3237 = vsel %vm2435, %v3233, %v3235
      %v3243 = vrot.slane %v3177, 4
      %v3244 = vrot.slane %v3178, 4
      %v3245 = vrot.slane %v3179, 4
      %3246 = vrot.lane.b32.xlu0 %v3243, 110
      %v3247 = vpop.permute.xlu0 %3246
      %3248 = vrot.lane.b32.xlu0 %v3244, 110
      %v3249 = vpop.permute.xlu0 %3248
      %3250 = vrot.lane.b32.xlu0 %v3245, 110
      %v3251 = vpop.permute.xlu0 %3250
      %v3252 = vsel %vm2452, %v3247, %v3249
      %v3253 = vsel %vm2452, %v3249, %v3251
      %3259 = vrot.lane.b32.xlu0 %v3180, 96
      %v3260 = vpop.permute.xlu0 %3259
      %3261 = vrot.lane.b32.xlu0 %v3181, 96
      %v3262 = vpop.permute.xlu0 %3261
      %3263 = vrot.lane.b32.xlu0 %v3182, 96
      %v3264 = vpop.permute.xlu0 %3263
      %v3265 = vsel %vm2469, %v3260, %v3262
      %v3266 = vsel %vm2469, %v3262, %v3264
      %3269 = vrot.lane.b32.xlu0 %v3188, 95
      %v3270 = vpop.permute.xlu0 %3269
      %3271 = vrot.lane.b32.xlu0 %v3189, 95
      %v3272 = vpop.permute.xlu0 %3271
      %3273 = vrot.lane.b32.xlu0 %v3190, 95
      %v3274 = vpop.permute.xlu0 %3273
      %v3275 = vsel %vm2483, %v3270, %v3272
      %v3276 = vsel %vm2483, %v3272, %v3274
      %3282 = vrot.lane.b32.xlu0 %v3183, 94
      %v3283 = vpop.permute.xlu0 %3282
      %3284 = vrot.lane.b32.xlu0 %v3184, 94
      %v3285 = vpop.permute.xlu0 %3284
      %3286 = vrot.lane.b32.xlu0 %v3185, 94
      %v3287 = vpop.permute.xlu0 %3286
      %v3288 = vsel %vm2497, %v3283, %v3285
      %v3289 = vsel %vm2497, %v3285, %v3287
      %v3290 = vsel %vm2509, %v3169, %v3197
      %v3291 = vsel %vm2509, %v3170, %v3198
      %v3292 = vsel %vm2509, %v3210, %v3226
      %v3293 = vsel %vm2509, %v3211, %v3227
      %v3294 = vsel %vm2509, %v3236, %v3252
      %v3295 = vsel %vm2509, %v3237, %v3253
      %v3296 = vsel %vm2509, %v3265, %v3275
      %v3297 = vsel %vm2509, %v3266, %v3276
      %v3298 = vld [vmem:[%s39] sm:$0xf]
      %v3299 = vld [vmem:[%s41] sm:$0xf]
      %3301 = vset.pattern.permute.xlu0 0
      %3302 = vperm.xlu0 %3301, %v3299
      %v3303 = vpop.permute.xlu0 %3302
      %vm3305 = vcmask 293888
      %v3307 = vsel %vm3305, %v3298, 0
      %v3309 = vsel %vm2509, %v3288, 0
      %v3311 = vsel %vm2509, %v3289, 0
      %3313 = vmatpush.msra.mxu0 0.0
      %3314 = vmatpush.msra.mxu0 0.0
      %3315 = vmatpush.msra.mxu0 0.0
      %3316 = vmatpush.msra.mxu0 0.0
      %3317 = vmatpush.msra.mxu0 0.0
      %3318 = vmatpush.msra.mxu0 0.0
      %3319 = vmatpush.msra.mxu0 0.0
      %3320 = vmatpush.msra.mxu0 0.0
      %3321 = vmatpush.msra.mxu0 0.0
      %3322 = vmatpush.msra.mxu0 0.0
      %3323 = vmatpush.msra.mxu0 0.0
      %3324 = vmatpush.msra.mxu0 %v3309
      %3325 = vmatpush.msra.mxu0 %v3296
      %3326 = vmatpush.msra.mxu0 %v3294
      %3327 = vmatpush.msra.mxu0 %v3292
      %3328 = vmatpush.msra.mxu0 %v3290
      %3329 = vmatmul.f32.gmra.mxu0 %v3307
      %v3330 = vpop.f32.mrf.mxu0
      %v3331 = vadd.f32 %v3303, %v3330
      %3332 = vdwg.mxu0
      %3333 = vmatpush.msra.mxu0 0.0
      %3334 = vmatpush.msra.mxu0 0.0
      %3335 = vmatpush.msra.mxu0 0.0
      %3336 = vmatpush.msra.mxu0 0.0
      %3337 = vmatpush.msra.mxu0 0.0
      %3338 = vmatpush.msra.mxu0 0.0
      %3339 = vmatpush.msra.mxu0 0.0
      %3340 = vmatpush.msra.mxu0 0.0
      %3341 = vmatpush.msra.mxu0 0.0
      %3342 = vmatpush.msra.mxu0 0.0
      %3343 = vmatpush.msra.mxu0 0.0
      %3344 = vmatpush.msra.mxu0 %v3311
      %3345 = vmatpush.msra.mxu0 %v3297
      %3346 = vmatpush.msra.mxu0 %v3295
      %3347 = vmatpush.msra.mxu0 %v3293
      %3348 = vmatpush.msra.mxu0 %v3291
      %3349 = vmatmul.f32.gmra.mxu0 %v3307
      %v3350 = vpop.f32.mrf.mxu0
      %v3351 = vadd.f32 %v3303, %v3350
      %3352 = vdwg.mxu0
      %v3355 = vrot.slane %v3155, 4
      %v3356 = vrot.slane %v3156, 4
      %3357 = vrot.lane.b32.xlu0 %v3355, 17
      %v3358 = vpop.permute.xlu0 %3357
      %3359 = vrot.lane.b32.xlu0 %v3356, 17
      %v3360 = vpop.permute.xlu0 %3359
      %v3361 = vsel %vm2289, %v3358, %v3360
      %v3365 = vsel %vm2289, 0.0, %v3358
      %v3366 = vsel %vm2289, %v3360, 0.0
      %v3367 = vmul.f32 %v3365, %v2302
      %v3368 = vmul.f32 %v3361, %v2303
      %v3369 = vmul.f32 %v3365, %v2317
      %v3370 = vmul.f32 %v3361, %v2321
      %v3371 = vmul.f32 %v3366, %v2319
      %v3372 = vmul.f32 %v3365, %v2329
      %v3373 = vmul.f32 %v3361, %v2333
      %v3374 = vmul.f32 %v3366, %v2331
      %v3375 = vmul.f32 %v3365, %v2341
      %v3376 = vmul.f32 %v3361, %v2345
      %v3377 = vmul.f32 %v3366, %v2343
      %v3378 = vmul.f32 %v3365, %v2353
      %v3379 = vmul.f32 %v3361, %v2357
      %v3380 = vmul.f32 %v3366, %v2355
      %v3381 = vmul.f32 %v3365, %v2365
      %v3382 = vmul.f32 %v3361, %v2369
      %v3383 = vmul.f32 %v3366, %v2367
      %v3386 = vrot.slane %v3365, 4
      %v3387 = vrot.slane %v3361, 4
      %v3388 = vrot.slane %v3366, 4
      %3389 = vrot.lane.b32.xlu0 %v3386, 127
      %v3390 = vpop.permute.xlu0 %3389
      %3391 = vrot.lane.b32.xlu0 %v3387, 127
      %v3392 = vpop.permute.xlu0 %3391
      %3393 = vrot.lane.b32.xlu0 %v3388, 127
      %v3394 = vpop.permute.xlu0 %3393
      %v3395 = vsel %vm2387, %v3390, %v3392
      %v3396 = vsel %vm2387, %v3392, %v3394
      %3402 = vrot.lane.b32.xlu0 %v3369, 126
      %v3403 = vpop.permute.xlu0 %3402
      %3404 = vrot.lane.b32.xlu0 %v3370, 126
      %v3405 = vpop.permute.xlu0 %3404
      %3406 = vrot.lane.b32.xlu0 %v3371, 126
      %v3407 = vpop.permute.xlu0 %3406
      %v3408 = vsel %vm2404, %v3403, %v3405
      %v3409 = vsel %vm2404, %v3405, %v3407
      %v3415 = vrot.slane %v3372, 4
      %v3416 = vrot.slane %v3373, 4
      %v3417 = vrot.slane %v3374, 4
      %3418 = vrot.lane.b32.xlu0 %v3415, 112
      %v3419 = vpop.permute.xlu0 %3418
      %3420 = vrot.lane.b32.xlu0 %v3416, 112
      %v3421 = vpop.permute.xlu0 %3420
      %3422 = vrot.lane.b32.xlu0 %v3417, 112
      %v3423 = vpop.permute.xlu0 %3422
      %v3424 = vsel %vm2421, %v3419, %v3421
      %v3425 = vsel %vm2421, %v3421, %v3423
      %3428 = vrot.lane.b32.xlu0 %v3365, 111
      %v3429 = vpop.permute.xlu0 %3428
      %3430 = vrot.lane.b32.xlu0 %v3361, 111
      %v3431 = vpop.permute.xlu0 %3430
      %3432 = vrot.lane.b32.xlu0 %v3366, 111
      %v3433 = vpop.permute.xlu0 %3432
      %v3434 = vsel %vm2435, %v3429, %v3431
      %v3435 = vsel %vm2435, %v3431, %v3433
      %v3441 = vrot.slane %v3375, 4
      %v3442 = vrot.slane %v3376, 4
      %v3443 = vrot.slane %v3377, 4
      %3444 = vrot.lane.b32.xlu0 %v3441, 110
      %v3445 = vpop.permute.xlu0 %3444
      %3446 = vrot.lane.b32.xlu0 %v3442, 110
      %v3447 = vpop.permute.xlu0 %3446
      %3448 = vrot.lane.b32.xlu0 %v3443, 110
      %v3449 = vpop.permute.xlu0 %3448
      %v3450 = vsel %vm2452, %v3445, %v3447
      %v3451 = vsel %vm2452, %v3447, %v3449
      %3457 = vrot.lane.b32.xlu0 %v3378, 96
      %v3458 = vpop.permute.xlu0 %3457
      %3459 = vrot.lane.b32.xlu0 %v3379, 96
      %v3460 = vpop.permute.xlu0 %3459
      %3461 = vrot.lane.b32.xlu0 %v3380, 96
      %v3462 = vpop.permute.xlu0 %3461
      %v3463 = vsel %vm2469, %v3458, %v3460
      %v3464 = vsel %vm2469, %v3460, %v3462
      %3467 = vrot.lane.b32.xlu0 %v3386, 95
      %v3468 = vpop.permute.xlu0 %3467
      %3469 = vrot.lane.b32.xlu0 %v3387, 95
      %v3470 = vpop.permute.xlu0 %3469
      %3471 = vrot.lane.b32.xlu0 %v3388, 95
      %v3472 = vpop.permute.xlu0 %3471
      %v3473 = vsel %vm2483, %v3468, %v3470
      %v3474 = vsel %vm2483, %v3470, %v3472
      %3480 = vrot.lane.b32.xlu0 %v3381, 94
      %v3481 = vpop.permute.xlu0 %3480
      %3482 = vrot.lane.b32.xlu0 %v3382, 94
      %v3483 = vpop.permute.xlu0 %3482
      %3484 = vrot.lane.b32.xlu0 %v3383, 94
      %v3485 = vpop.permute.xlu0 %3484
      %v3486 = vsel %vm2497, %v3481, %v3483
      %v3487 = vsel %vm2497, %v3483, %v3485
      %v3488 = vsel %vm2509, %v3367, %v3395
      %v3489 = vsel %vm2509, %v3368, %v3396
      %v3490 = vsel %vm2509, %v3408, %v3424
      %v3491 = vsel %vm2509, %v3409, %v3425
      %v3492 = vsel %vm2509, %v3434, %v3450
      %v3493 = vsel %vm2509, %v3435, %v3451
      %v3494 = vsel %vm2509, %v3463, %v3473
      %v3495 = vsel %vm2509, %v3464, %v3474
      %v3496 = vld [vmem:[%s43] sm:$0xf]
      %v3497 = vld [vmem:[%s45] sm:$0xf]
      %3499 = vset.pattern.permute.xlu0 0
      %3500 = vperm.xlu0 %3499, %v3497
      %v3501 = vpop.permute.xlu0 %3500
      %v3504 = vsel %vm3305, %v3496, 0
      %v3506 = vsel %vm2509, %v3486, 0
      %v3508 = vsel %vm2509, %v3487, 0
      %3510 = vmatpush.msra.mxu0 0.0
      %3511 = vmatpush.msra.mxu0 0.0
      %3512 = vmatpush.msra.mxu0 0.0
      %3513 = vmatpush.msra.mxu0 0.0
      %3514 = vmatpush.msra.mxu0 0.0
      %3515 = vmatpush.msra.mxu0 0.0
      %3516 = vmatpush.msra.mxu0 0.0
      %3517 = vmatpush.msra.mxu0 0.0
      %3518 = vmatpush.msra.mxu0 0.0
      %3519 = vmatpush.msra.mxu0 0.0
      %3520 = vmatpush.msra.mxu0 0.0
      %3521 = vmatpush.msra.mxu0 %v3506
      %3522 = vmatpush.msra.mxu0 %v3494
      %3523 = vmatpush.msra.mxu0 %v3492
      %3524 = vmatpush.msra.mxu0 %v3490
      %3525 = vmatpush.msra.mxu0 %v3488
      %3526 = vmatmul.f32.gmra.mxu0 %v3504
      %v3527 = vpop.f32.mrf.mxu0
      %v3528 = vadd.f32 %v3501, %v3527
      %3529 = vdwg.mxu0
      %3530 = vmatpush.msra.mxu0 0.0
      %3531 = vmatpush.msra.mxu0 0.0
      %3532 = vmatpush.msra.mxu0 0.0
      %3533 = vmatpush.msra.mxu0 0.0
      %3534 = vmatpush.msra.mxu0 0.0
      %3535 = vmatpush.msra.mxu0 0.0
      %3536 = vmatpush.msra.mxu0 0.0
      %3537 = vmatpush.msra.mxu0 0.0
      %3538 = vmatpush.msra.mxu0 0.0
      %3539 = vmatpush.msra.mxu0 0.0
      %3540 = vmatpush.msra.mxu0 0.0
      %3541 = vmatpush.msra.mxu0 %v3508
      %3542 = vmatpush.msra.mxu0 %v3495
      %3543 = vmatpush.msra.mxu0 %v3493
      %3544 = vmatpush.msra.mxu0 %v3491
      %3545 = vmatpush.msra.mxu0 %v3489
      %3546 = vmatmul.f32.gmra.mxu0 %v3504
      %v3547 = vpop.f32.mrf.mxu0
      %v3548 = vadd.f32 %v3501, %v3547
      %3549 = vdwg.mxu0
      %v3552 = vrot.slane %v3528, 4
      %v3553 = vrot.slane %v3548, 4
      %v3556 = vsel %vm2509, %v3331, %v3552
      %v3557 = vsel %vm2509, %v3351, %v3553
      %v3558 = vmul.f32 %v3556, 0.5
      %v3559 = vmul.f32 %v3557, 0.5
      %v3560 = vmul.f32 %v3556, 0.044715
      %v3561 = vmul.f32 %v3557, 0.044715
      %v3562 = vmul.f32 %v3560, %v3556
      %v3563 = vmul.f32 %v3561, %v3557
      %v3564 = vmul.f32 %v3562, %v3556
      %v3565 = vmul.f32 %v3563, %v3557
      %v3566 = vadd.f32 %v3556, %v3564
      %v3567 = vadd.f32 %v3557, %v3565
      %v3568 = vmul.f32 %v3566, 0.7978846
      %v3569 = vmul.f32 %v3567, 0.7978846
      %v3570 = vtanh.pop %v3568
      %v3571 = vtanh.pop %v3569
      %v3572 = vadd.f32 %v3570, 1.0
      %v3573 = vadd.f32 %v3571, 1.0
      %v3574 = vmul.f32 %v3558, %v3572
      %v3575 = vmul.f32 %v3559, %v3573
      %v3576 = vld [vmem:[%s47] sm:$0xff]
      %v3577 = vld [vmem:[%s49] sm:$0xff]
      %3579 = vset.pattern.permute.xlu0 0
      %3580 = vperm.xlu0 %3579, %v3577
      %v3581 = vpop.permute.xlu0 %3580
      %v3584 = vsel %vm2760, %v3576, 0
      %3586 = vmatpush.msra.mxu0 0.0
      %3587 = vmatpush.msra.mxu0 0.0
      %3588 = vmatpush.msra.mxu0 0.0
      %3589 = vmatpush.msra.mxu0 0.0
      %3590 = vmatpush.msra.mxu0 0.0
      %3591 = vmatpush.msra.mxu0 0.0
      %3592 = vmatpush.msra.mxu0 0.0
      %3593 = vmatpush.msra.mxu0 0.0
      %3594 = vmatpush.msra.mxu0 0.0
      %3595 = vmatpush.msra.mxu0 0.0
      %3596 = vmatpush.msra.mxu0 0.0
      %3597 = vmatpush.msra.mxu0 0.0
      %3598 = vmatpush.msra.mxu0 0.0
      %3599 = vmatpush.msra.mxu0 0.0
      %3600 = vmatpush.msra.mxu0 0.0
      %3601 = vmatpush.msra.mxu0 %v3574
      %3602 = vmatmul.f32.gmra.mxu0 %v3584
      %v3603 = vpop.f32.mrf.mxu0
      %v3604 = vadd.f32 %v3581, %v3603
      %3605 = vdwg.mxu0
      %3606 = vmatpush.msra.mxu0 0.0
      %3607 = vmatpush.msra.mxu0 0.0
      %3608 = vmatpush.msra.mxu0 0.0
      %3609 = vmatpush.msra.mxu0 0.0
      %3610 = vmatpush.msra.mxu0 0.0
      %3611 = vmatpush.msra.mxu0 0.0
      %3612 = vmatpush.msra.mxu0 0.0
      %3613 = vmatpush.msra.mxu0 0.0
      %3614 = vmatpush.msra.mxu0 0.0
      %3615 = vmatpush.msra.mxu0 0.0
      %3616 = vmatpush.msra.mxu0 0.0
      %3617 = vmatpush.msra.mxu0 0.0
      %3618 = vmatpush.msra.mxu0 0.0
      %3619 = vmatpush.msra.mxu0 0.0
      %3620 = vmatpush.msra.mxu0 0.0
      %3621 = vmatpush.msra.mxu0 %v3575
      %3622 = vmatmul.f32.gmra.mxu0 %v3584
      %v3623 = vpop.f32.mrf.mxu0
      %v3624 = vadd.f32 %v3581, %v3623
      %3625 = vdwg.mxu0
      %v3626 = vsub.f32 0.0, %v3604
      %v3627 = vsub.f32 0.0, %v3624
      %v3628 = vmul.f32 %v3626, 1.442695
      %v3629 = vpow.pop %v3628
      %v3630 = vmul.f32 %v3627, 1.442695
      %v3631 = vpow.pop %v3630
      %v3632 = vadd.f32 %v3629, 1.0
      %v3633 = vadd.f32 %v3631, 1.0
      %v3634 = vrcp.pop %v3632
      %v3635 = vrcp.pop %v3633
      %v3636 = vmul.f32 %v3574, %v3634
      %v3637 = vmul.f32 %v3575, %v3635
      %v3638 = vld [vmem:[%s51] sm:$0xf]
      %v3639 = vld [vmem:[%s53] sm:$0xf]
      %3641 = vset.pattern.permute.xlu0 0
      %3642 = vperm.xlu0 %3641, %v3639
      %v3643 = vpop.permute.xlu0 %3642
      %v3646 = vsel %vm2760, %v3638, 0
      %3648 = vmatpush.msra.mxu0 0.0
      %3649 = vmatpush.msra.mxu0 0.0
      %3650 = vmatpush.msra.mxu0 0.0
      %3651 = vmatpush.msra.mxu0 0.0
      %3652 = vmatpush.msra.mxu0 0.0
      %3653 = vmatpush.msra.mxu0 0.0
      %3654 = vmatpush.msra.mxu0 0.0
      %3655 = vmatpush.msra.mxu0 0.0
      %3656 = vmatpush.msra.mxu0 0.0
      %3657 = vmatpush.msra.mxu0 0.0
      %3658 = vmatpush.msra.mxu0 0.0
      %3659 = vmatpush.msra.mxu0 0.0
      %3660 = vmatpush.msra.mxu0 0.0
      %3661 = vmatpush.msra.mxu0 0.0
      %3662 = vmatpush.msra.mxu0 0.0
      %3663 = vmatpush.msra.mxu0 %v3636
      %3664 = vmatmul.f32.gmra.mxu0 %v3646
      %v3665 = vpop.f32.mrf.mxu0
      %v3666 = vadd.f32 %v3643, %v3665
      %3667 = vdwg.mxu0
      %3668 = vmatpush.msra.mxu0 0.0
      %3669 = vmatpush.msra.mxu0 0.0
      %3670 = vmatpush.msra.mxu0 0.0
      %3671 = vmatpush.msra.mxu0 0.0
      %3672 = vmatpush.msra.mxu0 0.0
      %3673 = vmatpush.msra.mxu0 0.0
      %3674 = vmatpush.msra.mxu0 0.0
      %3675 = vmatpush.msra.mxu0 0.0
      %3676 = vmatpush.msra.mxu0 0.0
      %3677 = vmatpush.msra.mxu0 0.0
      %3678 = vmatpush.msra.mxu0 0.0
      %3679 = vmatpush.msra.mxu0 0.0
      %3680 = vmatpush.msra.mxu0 0.0
      %3681 = vmatpush.msra.mxu0 0.0
      %3682 = vmatpush.msra.mxu0 0.0
      %3683 = vmatpush.msra.mxu0 %v3637
      %3684 = vmatmul.f32.gmra.mxu0 %v3646
      %v3685 = vpop.f32.mrf.mxu0
      %v3686 = vadd.f32 %v3643, %v3685
      %3687 = vdwg.mxu0
      %v3688 = vmax.f32 %v3666, 0.0
      %v3689 = vmax.f32 %v3686, 0.0
      %v3690 = vld [vmem:[%s55] sm:$0xff]
      %v3691 = vld [vmem:[%s55 + $0x8] sm:$0xff]
      %v3692 = vld [vmem:[%s57] sm:$0xff]
      %v3693 = vld [vmem:[%s57 + $0x8] sm:$0xff]
      %3695 = vset.pattern.permute.xlu0 0
      %3696 = vperm.xlu0 %3695, %v3692
      %v3697 = vpop.permute.xlu0 %3696
      %3700 = vset.pattern.permute.xlu0 0
      %3701 = vperm.xlu0 %3700, %v3693
      %v3702 = vpop.permute.xlu0 %3701
      %v3705 = vsel %vm2899, %v3690, 0
      %v3708 = vsel %vm2899, %v3691, 0
      %v3711 = vsel %vm2509, %v3688, 0
      %v3714 = vsel %vm2509, %v3689, 0
      %3716 = vmatpush.msra.mxu0 0.0
      %3717 = vmatpush.msra.mxu0 0.0
      %3718 = vmatpush.msra.mxu0 0.0
      %3719 = vmatpush.msra.mxu0 0.0
      %3720 = vmatpush.msra.mxu0 0.0
      %3721 = vmatpush.msra.mxu0 0.0
      %3722 = vmatpush.msra.mxu0 0.0
      %3723 = vmatpush.msra.mxu0 0.0
      %3724 = vmatpush.msra.mxu0 0.0
      %3725 = vmatpush.msra.mxu0 0.0
      %3726 = vmatpush.msra.mxu0 0.0
      %3727 = vmatpush.msra.mxu0 0.0
      %3728 = vmatpush.msra.mxu0 0.0
      %3729 = vmatpush.msra.mxu0 0.0
      %3730 = vmatpush.msra.mxu0 0.0
      %3731 = vmatpush.msra.mxu0 %v3711
      %3732 = vmatmul.f32.gmra.mxu0 %v3705
      %v3733 = vpop.f32.mrf.mxu0
      %v3734 = vadd.f32 %v3697, %v3733
      %3735 = vmatmul.f32.gmra.mxu0 %v3708
      %v3736 = vpop.f32.mrf.mxu0
      %v3737 = vadd.f32 %v3702, %v3736
      %3738 = vdwg.mxu0
      %3739 = vmatpush.msra.mxu0 0.0
      %3740 = vmatpush.msra.mxu0 0.0
      %3741 = vmatpush.msra.mxu0 0.0
      %3742 = vmatpush.msra.mxu0 0.0
      %3743 = vmatpush.msra.mxu0 0.0
      %3744 = vmatpush.msra.mxu0 0.0
      %3745 = vmatpush.msra.mxu0 0.0
      %3746 = vmatpush.msra.mxu0 0.0
      %3747 = vmatpush.msra.mxu0 0.0
      %3748 = vmatpush.msra.mxu0 0.0
      %3749 = vmatpush.msra.mxu0 0.0
      %3750 = vmatpush.msra.mxu0 0.0
      %3751 = vmatpush.msra.mxu0 0.0
      %3752 = vmatpush.msra.mxu0 0.0
      %3753 = vmatpush.msra.mxu0 0.0
      %3754 = vmatpush.msra.mxu0 %v3714
      %3755 = vmatmul.f32.gmra.mxu0 %v3705
      %v3756 = vpop.f32.mrf.mxu0
      %v3757 = vadd.f32 %v3697, %v3756
      %3758 = vmatmul.f32.gmra.mxu0 %v3708
      %v3759 = vpop.f32.mrf.mxu0
      %v3760 = vadd.f32 %v3702, %v3759
      %3761 = vdwg.mxu0
      %v3762 = vsub.f32 0.0, %v3734
      %v3763 = vsub.f32 0.0, %v3757
      %v3764 = vmul.f32 %v3762, 1.442695
      %v3765 = vpow.pop %v3764
      %v3766 = vmul.f32 %v3763, 1.442695
      %v3767 = vpow.pop %v3766
      %v3768 = vadd.f32 %v3765, 1.0
      %v3769 = vadd.f32 %v3767, 1.0
      %v3770 = vrcp.pop %v3768
      %v3771 = vrcp.pop %v3769
      %v3772 = vmul.f32 %v2886, %v3770
      %v3773 = vmul.f32 %v2887, %v3771
      %v3774 = vadd.f32 %v3772, %v3737
      %v3775 = vadd.f32 %v3773, %v3760
      %v3776 = vld [vmem:[%s59] sm:$0xf]
      %v3777 = vld [vmem:[%s61] sm:$0xf]
      %3779 = vset.pattern.permute.xlu0 0
      %3780 = vperm.xlu0 %3779, %v3777
      %v3781 = vpop.permute.xlu0 %3780
      %v3784 = vsel %vm2760, %v3776, 0
      %3786 = vmatpush.msra.mxu0 0.0
      %3787 = vmatpush.msra.mxu0 0.0
      %3788 = vmatpush.msra.mxu0 0.0
      %3789 = vmatpush.msra.mxu0 0.0
      %3790 = vmatpush.msra.mxu0 0.0
      %3791 = vmatpush.msra.mxu0 0.0
      %3792 = vmatpush.msra.mxu0 0.0
      %3793 = vmatpush.msra.mxu0 0.0
      %3794 = vmatpush.msra.mxu0 0.0
      %3795 = vmatpush.msra.mxu0 0.0
      %3796 = vmatpush.msra.mxu0 0.0
      %3797 = vmatpush.msra.mxu0 0.0
      %3798 = vmatpush.msra.mxu0 0.0
      %3799 = vmatpush.msra.mxu0 0.0
      %3800 = vmatpush.msra.mxu0 0.0
      %3801 = vmatpush.msra.mxu0 %v2886
      %3802 = vmatmul.f32.gmra.mxu0 %v3784
      %v3803 = vpop.f32.mrf.mxu0
      %v3804 = vadd.f32 %v3781, %v3803
      %3805 = vdwg.mxu0
      %3806 = vmatpush.msra.mxu0 0.0
      %3807 = vmatpush.msra.mxu0 0.0
      %3808 = vmatpush.msra.mxu0 0.0
      %3809 = vmatpush.msra.mxu0 0.0
      %3810 = vmatpush.msra.mxu0 0.0
      %3811 = vmatpush.msra.mxu0 0.0
      %3812 = vmatpush.msra.mxu0 0.0
      %3813 = vmatpush.msra.mxu0 0.0
      %3814 = vmatpush.msra.mxu0 0.0
      %3815 = vmatpush.msra.mxu0 0.0
      %3816 = vmatpush.msra.mxu0 0.0
      %3817 = vmatpush.msra.mxu0 0.0
      %3818 = vmatpush.msra.mxu0 0.0
      %3819 = vmatpush.msra.mxu0 0.0
      %3820 = vmatpush.msra.mxu0 0.0
      %3821 = vmatpush.msra.mxu0 %v2887
      %3822 = vmatmul.f32.gmra.mxu0 %v3784
      %v3823 = vpop.f32.mrf.mxu0
      %v3824 = vadd.f32 %v3781, %v3823
      %3825 = vdwg.mxu0
      %v3826 = vmax.f32 %v3804, 0.0
      %v3827 = vmax.f32 %v3824, 0.0
      %v3828 = vld [vmem:[%s63] sm:$0xff]
      %v3829 = vld [vmem:[%s63 + $0x8] sm:$0xff]
      %v3830 = vld [vmem:[%s65] sm:$0xff]
      %v3831 = vld [vmem:[%s65 + $0x8] sm:$0xff]
      %3833 = vset.pattern.permute.xlu0 0
      %3834 = vperm.xlu0 %3833, %v3830
      %v3835 = vpop.permute.xlu0 %3834
      %3838 = vset.pattern.permute.xlu0 0
      %3839 = vperm.xlu0 %3838, %v3831
      %v3840 = vpop.permute.xlu0 %3839
      %v3843 = vsel %vm2899, %v3828, 0
      %v3846 = vsel %vm2899, %v3829, 0
      %v3849 = vsel %vm2509, %v3826, 0
      %v3852 = vsel %vm2509, %v3827, 0
      %3854 = vmatpush.msra.mxu0 0.0
      %3855 = vmatpush.msra.mxu0 0.0
      %3856 = vmatpush.msra.mxu0 0.0
      %3857 = vmatpush.msra.mxu0 0.0
      %3858 = vmatpush.msra.mxu0 0.0
      %3859 = vmatpush.msra.mxu0 0.0
      %3860 = vmatpush.msra.mxu0 0.0
      %3861 = vmatpush.msra.mxu0 0.0
      %3862 = vmatpush.msra.mxu0 0.0
      %3863 = vmatpush.msra.mxu0 0.0
      %3864 = vmatpush.msra.mxu0 0.0
      %3865 = vmatpush.msra.mxu0 0.0
      %3866 = vmatpush.msra.mxu0 0.0
      %3867 = vmatpush.msra.mxu0 0.0
      %3868 = vmatpush.msra.mxu0 0.0
      %3869 = vmatpush.msra.mxu0 %v3849
      %3870 = vmatmul.f32.gmra.mxu0 %v3843
      %v3871 = vpop.f32.mrf.mxu0
      %v3872 = vadd.f32 %v3835, %v3871
      %3873 = vmatmul.f32.gmra.mxu0 %v3846
      %v3874 = vpop.f32.mrf.mxu0
      %v3875 = vadd.f32 %v3840, %v3874
      %3876 = vdwg.mxu0
      %3877 = vmatpush.msra.mxu0 0.0
      %3878 = vmatpush.msra.mxu0 0.0
      %3879 = vmatpush.msra.mxu0 0.0
      %3880 = vmatpush.msra.mxu0 0.0
      %3881 = vmatpush.msra.mxu0 0.0
      %3882 = vmatpush.msra.mxu0 0.0
      %3883 = vmatpush.msra.mxu0 0.0
      %3884 = vmatpush.msra.mxu0 0.0
      %3885 = vmatpush.msra.mxu0 0.0
      %3886 = vmatpush.msra.mxu0 0.0
      %3887 = vmatpush.msra.mxu0 0.0
      %3888 = vmatpush.msra.mxu0 0.0
      %3889 = vmatpush.msra.mxu0 0.0
      %3890 = vmatpush.msra.mxu0 0.0
      %3891 = vmatpush.msra.mxu0 0.0
      %3892 = vmatpush.msra.mxu0 %v3852
      %3893 = vmatmul.f32.gmra.mxu0 %v3843
      %v3894 = vpop.f32.mrf.mxu0
      %v3895 = vadd.f32 %v3835, %v3894
      %3896 = vmatmul.f32.gmra.mxu0 %v3846
      %v3897 = vpop.f32.mrf.mxu0
      %v3898 = vadd.f32 %v3840, %v3897
      %3899 = vdwg.mxu0
      %v3900 = vsub.f32 0.0, %v3872
      %v3901 = vsub.f32 0.0, %v3895
      %v3902 = vmul.f32 %v3900, 1.442695
      %v3903 = vpow.pop %v3902
      %v3904 = vmul.f32 %v3901, 1.442695
      %v3905 = vpow.pop %v3904
      %v3906 = vadd.f32 %v3903, 1.0
      %v3907 = vadd.f32 %v3905, 1.0
      %v3908 = vrcp.pop %v3906
      %v3909 = vrcp.pop %v3907
      %v3910 = vmul.f32 %v3636, %v3908
      %v3911 = vmul.f32 %v3637, %v3909
      %v3912 = vadd.f32 %v3910, %v3875
      %v3913 = vadd.f32 %v3911, %v3898
      %3916 = vrot.lane.b32.xlu0 %v3774, 17
      %v3917 = vpop.permute.xlu0 %3916
      %3918 = vrot.lane.b32.xlu0 %v3775, 17
      %v3919 = vpop.permute.xlu0 %3918
      %v3920 = vsel %vm2289, %v3917, %v3919
      %v3924 = vsel %vm2289, 0.0, %v3917
      %v3925 = vsel %vm2289, %v3919, 0.0
      %v3926 = vmul.f32 %v3924, %v2302
      %v3927 = vmul.f32 %v3920, %v2303
      %v3928 = vmul.f32 %v3924, %v2317
      %v3929 = vmul.f32 %v3920, %v2321
      %v3930 = vmul.f32 %v3925, %v2319
      %v3931 = vmul.f32 %v3924, %v2329
      %v3932 = vmul.f32 %v3920, %v2333
      %v3933 = vmul.f32 %v3925, %v2331
      %v3934 = vmul.f32 %v3924, %v2341
      %v3935 = vmul.f32 %v3920, %v2345
      %v3936 = vmul.f32 %v3925, %v2343
      %v3937 = vmul.f32 %v3924, %v2353
      %v3938 = vmul.f32 %v3920, %v2357
      %v3939 = vmul.f32 %v3925, %v2355
      %v3940 = vmul.f32 %v3924, %v2365
      %v3941 = vmul.f32 %v3920, %v2369
      %v3942 = vmul.f32 %v3925, %v2367
      %3945 = vrot.lane.b32.xlu0 %v3924, 127
      %v3946 = vpop.permute.xlu0 %3945
      %3947 = vrot.lane.b32.xlu0 %v3920, 127
      %v3948 = vpop.permute.xlu0 %3947
      %3949 = vrot.lane.b32.xlu0 %v3925, 127
      %v3950 = vpop.permute.xlu0 %3949
      %v3951 = vsel %vm2387, %v3946, %v3948
      %v3952 = vsel %vm2387, %v3948, %v3950
      %3958 = vrot.lane.b32.xlu0 %v3928, 126
      %v3959 = vpop.permute.xlu0 %3958
      %3960 = vrot.lane.b32.xlu0 %v3929, 126
      %v3961 = vpop.permute.xlu0 %3960
      %3962 = vrot.lane.b32.xlu0 %v3930, 126
      %v3963 = vpop.permute.xlu0 %3962
      %v3964 = vsel %vm2404, %v3959, %v3961
      %v3965 = vsel %vm2404, %v3961, %v3963
      %3971 = vrot.lane.b32.xlu0 %v3931, 112
      %v3972 = vpop.permute.xlu0 %3971
      %3973 = vrot.lane.b32.xlu0 %v3932, 112
      %v3974 = vpop.permute.xlu0 %3973
      %3975 = vrot.lane.b32.xlu0 %v3933, 112
      %v3976 = vpop.permute.xlu0 %3975
      %v3977 = vsel %vm2421, %v3972, %v3974
      %v3978 = vsel %vm2421, %v3974, %v3976
      %3981 = vrot.lane.b32.xlu0 %v3924, 111
      %v3982 = vpop.permute.xlu0 %3981
      %3983 = vrot.lane.b32.xlu0 %v3920, 111
      %v3984 = vpop.permute.xlu0 %3983
      %3985 = vrot.lane.b32.xlu0 %v3925, 111
      %v3986 = vpop.permute.xlu0 %3985
      %v3987 = vsel %vm2435, %v3982, %v3984
      %v3988 = vsel %vm2435, %v3984, %v3986
      %3994 = vrot.lane.b32.xlu0 %v3934, 110
      %v3995 = vpop.permute.xlu0 %3994
      %3996 = vrot.lane.b32.xlu0 %v3935, 110
      %v3997 = vpop.permute.xlu0 %3996
      %3998 = vrot.lane.b32.xlu0 %v3936, 110
      %v3999 = vpop.permute.xlu0 %3998
      %v4000 = vsel %vm2452, %v3995, %v3997
      %v4001 = vsel %vm2452, %v3997, %v3999
      %4007 = vrot.lane.b32.xlu0 %v3937, 96
      %v4008 = vpop.permute.xlu0 %4007
      %4009 = vrot.lane.b32.xlu0 %v3938, 96
      %v4010 = vpop.permute.xlu0 %4009
      %4011 = vrot.lane.b32.xlu0 %v3939, 96
      %v4012 = vpop.permute.xlu0 %4011
      %v4013 = vsel %vm2469, %v4008, %v4010
      %v4014 = vsel %vm2469, %v4010, %v4012
      %4017 = vrot.lane.b32.xlu0 %v3924, 95
      %v4018 = vpop.permute.xlu0 %4017
      %4019 = vrot.lane.b32.xlu0 %v3920, 95
      %v4020 = vpop.permute.xlu0 %4019
      %4021 = vrot.lane.b32.xlu0 %v3925, 95
      %v4022 = vpop.permute.xlu0 %4021
      %v4023 = vsel %vm2483, %v4018, %v4020
      %v4024 = vsel %vm2483, %v4020, %v4022
      %4030 = vrot.lane.b32.xlu0 %v3940, 94
      %v4031 = vpop.permute.xlu0 %4030
      %4032 = vrot.lane.b32.xlu0 %v3941, 94
      %v4033 = vpop.permute.xlu0 %4032
      %4034 = vrot.lane.b32.xlu0 %v3942, 94
      %v4035 = vpop.permute.xlu0 %4034
      %v4036 = vsel %vm2497, %v4031, %v4033
      %v4037 = vsel %vm2497, %v4033, %v4035
      %v4040 = vld [vmem:[%s67] sm:$0xf]
      %v4041 = vld [vmem:[%s69] sm:$0xf]
      %4043 = vset.pattern.permute.xlu0 0
      %4044 = vperm.xlu0 %4043, %v4041
      %v4045 = vpop.permute.xlu0 %4044
      %v4048 = vsel %vm2709, %v4040, 0
      %4050 = vmatpush.msra.mxu0 0.0
      %4051 = vmatpush.msra.mxu0 0.0
      %4052 = vmatpush.msra.mxu0 0.0
      %4053 = vmatpush.msra.mxu0 0.0
      %4054 = vmatpush.msra.mxu0 0.0
      %4055 = vmatpush.msra.mxu0 0.0
      %4056 = vmatpush.msra.mxu0 0.0
      %4057 = vmatpush.msra.mxu0 %v4036
      %4058 = vmatpush.msra.mxu0 %v4023
      %4059 = vmatpush.msra.mxu0 %v4013
      %4060 = vmatpush.msra.mxu0 %v4000
      %4061 = vmatpush.msra.mxu0 %v3987
      %4062 = vmatpush.msra.mxu0 %v3977
      %4063 = vmatpush.msra.mxu0 %v3964
      %4064 = vmatpush.msra.mxu0 %v3951
      %4065 = vmatpush.msra.mxu0 %v3926
      %4066 = vmatmul.f32.gmra.mxu0 %v4048
      %v4067 = vpop.f32.mrf.mxu0
      %v4068 = vadd.f32 %v4045, %v4067
      %4069 = vdwg.mxu0
      %4070 = vmatpush.msra.mxu0 0.0
      %4071 = vmatpush.msra.mxu0 0.0
      %4072 = vmatpush.msra.mxu0 0.0
      %4073 = vmatpush.msra.mxu0 0.0
      %4074 = vmatpush.msra.mxu0 0.0
      %4075 = vmatpush.msra.mxu0 0.0
      %4076 = vmatpush.msra.mxu0 0.0
      %4077 = vmatpush.msra.mxu0 %v4037
      %4078 = vmatpush.msra.mxu0 %v4024
      %4079 = vmatpush.msra.mxu0 %v4014
      %4080 = vmatpush.msra.mxu0 %v4001
      %4081 = vmatpush.msra.mxu0 %v3988
      %4082 = vmatpush.msra.mxu0 %v3978
      %4083 = vmatpush.msra.mxu0 %v3965
      %4084 = vmatpush.msra.mxu0 %v3952
      %4085 = vmatpush.msra.mxu0 %v3927
      %4086 = vmatmul.f32.gmra.mxu0 %v4048
      %v4087 = vpop.f32.mrf.mxu0
      %v4088 = vadd.f32 %v4045, %v4087
      %4089 = vdwg.mxu0
      %4092 = vrot.lane.b32.xlu0 %v3912, 17
      %v4093 = vpop.permute.xlu0 %4092
      %4094 = vrot.lane.b32.xlu0 %v3913, 17
      %v4095 = vpop.permute.xlu0 %4094
      %v4096 = vsel %vm2289, %v4093, %v4095
      %v4100 = vsel %vm2289, 0.0, %v4093
      %v4101 = vsel %vm2289, %v4095, 0.0
      %v4102 = vmul.f32 %v4100, %v2302
      %v4103 = vmul.f32 %v4096, %v2303
      %v4104 = vmul.f32 %v4100, %v2317
      %v4105 = vmul.f32 %v4096, %v2321
      %v4106 = vmul.f32 %v4101, %v2319
      %v4107 = vmul.f32 %v4100, %v2329
      %v4108 = vmul.f32 %v4096, %v2333
      %v4109 = vmul.f32 %v4101, %v2331
      %v4110 = vmul.f32 %v4100, %v2341
      %v4111 = vmul.f32 %v4096, %v2345
      %v4112 = vmul.f32 %v4101, %v2343
      %v4113 = vmul.f32 %v4100, %v2353
      %v4114 = vmul.f32 %v4096, %v2357
      %v4115 = vmul.f32 %v4101, %v2355
      %v4116 = vmul.f32 %v4100, %v2365
      %v4117 = vmul.f32 %v4096, %v2369
      %v4118 = vmul.f32 %v4101, %v2367
      %4121 = vrot.lane.b32.xlu0 %v4100, 127
      %v4122 = vpop.permute.xlu0 %4121
      %4123 = vrot.lane.b32.xlu0 %v4096, 127
      %v4124 = vpop.permute.xlu0 %4123
      %4125 = vrot.lane.b32.xlu0 %v4101, 127
      %v4126 = vpop.permute.xlu0 %4125
      %v4127 = vsel %vm2387, %v4122, %v4124
      %v4128 = vsel %vm2387, %v4124, %v4126
      %4134 = vrot.lane.b32.xlu0 %v4104, 126
      %v4135 = vpop.permute.xlu0 %4134
      %4136 = vrot.lane.b32.xlu0 %v4105, 126
      %v4137 = vpop.permute.xlu0 %4136
      %4138 = vrot.lane.b32.xlu0 %v4106, 126
      %v4139 = vpop.permute.xlu0 %4138
      %v4140 = vsel %vm2404, %v4135, %v4137
      %v4141 = vsel %vm2404, %v4137, %v4139
      %4147 = vrot.lane.b32.xlu0 %v4107, 112
      %v4148 = vpop.permute.xlu0 %4147
      %4149 = vrot.lane.b32.xlu0 %v4108, 112
      %v4150 = vpop.permute.xlu0 %4149
      %4151 = vrot.lane.b32.xlu0 %v4109, 112
      %v4152 = vpop.permute.xlu0 %4151
      %v4153 = vsel %vm2421, %v4148, %v4150
      %v4154 = vsel %vm2421, %v4150, %v4152
      %4157 = vrot.lane.b32.xlu0 %v4100, 111
      %v4158 = vpop.permute.xlu0 %4157
      %4159 = vrot.lane.b32.xlu0 %v4096, 111
      %v4160 = vpop.permute.xlu0 %4159
      %4161 = vrot.lane.b32.xlu0 %v4101, 111
      %v4162 = vpop.permute.xlu0 %4161
      %v4163 = vsel %vm2435, %v4158, %v4160
      %v4164 = vsel %vm2435, %v4160, %v4162
      %4170 = vrot.lane.b32.xlu0 %v4110, 110
      %v4171 = vpop.permute.xlu0 %4170
      %4172 = vrot.lane.b32.xlu0 %v4111, 110
      %v4173 = vpop.permute.xlu0 %4172
      %4174 = vrot.lane.b32.xlu0 %v4112, 110
      %v4175 = vpop.permute.xlu0 %4174
      %v4176 = vsel %vm2452, %v4171, %v4173
      %v4177 = vsel %vm2452, %v4173, %v4175
      %4183 = vrot.lane.b32.xlu0 %v4113, 96
      %v4184 = vpop.permute.xlu0 %4183
      %4185 = vrot.lane.b32.xlu0 %v4114, 96
      %v4186 = vpop.permute.xlu0 %4185
      %4187 = vrot.lane.b32.xlu0 %v4115, 96
      %v4188 = vpop.permute.xlu0 %4187
      %v4189 = vsel %vm2469, %v4184, %v4186
      %v4190 = vsel %vm2469, %v4186, %v4188
      %4193 = vrot.lane.b32.xlu0 %v4100, 95
      %v4194 = vpop.permute.xlu0 %4193
      %4195 = vrot.lane.b32.xlu0 %v4096, 95
      %v4196 = vpop.permute.xlu0 %4195
      %4197 = vrot.lane.b32.xlu0 %v4101, 95
      %v4198 = vpop.permute.xlu0 %4197
      %v4199 = vsel %vm2483, %v4194, %v4196
      %v4200 = vsel %vm2483, %v4196, %v4198
      %4206 = vrot.lane.b32.xlu0 %v4116, 94
      %v4207 = vpop.permute.xlu0 %4206
      %4208 = vrot.lane.b32.xlu0 %v4117, 94
      %v4209 = vpop.permute.xlu0 %4208
      %4210 = vrot.lane.b32.xlu0 %v4118, 94
      %v4211 = vpop.permute.xlu0 %4210
      %v4212 = vsel %vm2497, %v4207, %v4209
      %v4213 = vsel %vm2497, %v4209, %v4211
      %v4216 = vld [vmem:[%s71] sm:$0xf]
      %v4217 = vld [vmem:[%s73] sm:$0xf]
      %4219 = vset.pattern.permute.xlu0 0
      %4220 = vperm.xlu0 %4219, %v4217
      %v4221 = vpop.permute.xlu0 %4220
      %v4224 = vsel %vm2709, %v4216, 0
      %4226 = vmatpush.msra.mxu0 0.0
      %4227 = vmatpush.msra.mxu0 0.0
      %4228 = vmatpush.msra.mxu0 0.0
      %4229 = vmatpush.msra.mxu0 0.0
      %4230 = vmatpush.msra.mxu0 0.0
      %4231 = vmatpush.msra.mxu0 0.0
      %4232 = vmatpush.msra.mxu0 0.0
      %4233 = vmatpush.msra.mxu0 %v4212
      %4234 = vmatpush.msra.mxu0 %v4199
      %4235 = vmatpush.msra.mxu0 %v4189
      %4236 = vmatpush.msra.mxu0 %v4176
      %4237 = vmatpush.msra.mxu0 %v4163
      %4238 = vmatpush.msra.mxu0 %v4153
      %4239 = vmatpush.msra.mxu0 %v4140
      %4240 = vmatpush.msra.mxu0 %v4127
      %4241 = vmatpush.msra.mxu0 %v4102
      %4242 = vmatmul.f32.gmra.mxu0 %v4224
      %v4243 = vpop.f32.mrf.mxu0
      %v4244 = vadd.f32 %v4221, %v4243
      %4245 = vdwg.mxu0
      %4246 = vmatpush.msra.mxu0 0.0
      %4247 = vmatpush.msra.mxu0 0.0
      %4248 = vmatpush.msra.mxu0 0.0
      %4249 = vmatpush.msra.mxu0 0.0
      %4250 = vmatpush.msra.mxu0 0.0
      %4251 = vmatpush.msra.mxu0 0.0
      %4252 = vmatpush.msra.mxu0 0.0
      %4253 = vmatpush.msra.mxu0 %v4213
      %4254 = vmatpush.msra.mxu0 %v4200
      %4255 = vmatpush.msra.mxu0 %v4190
      %4256 = vmatpush.msra.mxu0 %v4177
      %4257 = vmatpush.msra.mxu0 %v4164
      %4258 = vmatpush.msra.mxu0 %v4154
      %4259 = vmatpush.msra.mxu0 %v4141
      %4260 = vmatpush.msra.mxu0 %v4128
      %4261 = vmatpush.msra.mxu0 %v4103
      %4262 = vmatmul.f32.gmra.mxu0 %v4224
      %v4263 = vpop.f32.mrf.mxu0
      %v4264 = vadd.f32 %v4221, %v4263
      %4265 = vdwg.mxu0
      %v4268 = vrot.slane %v4244, 4
      %v4269 = vrot.slane %v4264, 4
      %v4272 = vsel %vm2509, %v4068, %v4268
      %v4273 = vsel %vm2509, %v4088, %v4269
      %v4274 = vmul.f32 %v4272, 0.5
      %v4275 = vmul.f32 %v4273, 0.5
      %v4276 = vmul.f32 %v4272, 0.044715
      %v4277 = vmul.f32 %v4273, 0.044715
      %v4278 = vmul.f32 %v4276, %v4272
      %v4279 = vmul.f32 %v4277, %v4273
      %v4280 = vmul.f32 %v4278, %v4272
      %v4281 = vmul.f32 %v4279, %v4273
      %v4282 = vadd.f32 %v4272, %v4280
      %v4283 = vadd.f32 %v4273, %v4281
      %v4284 = vmul.f32 %v4282, 0.7978846
      %v4285 = vmul.f32 %v4283, 0.7978846
      %v4286 = vtanh.pop %v4284
      %v4287 = vtanh.pop %v4285
      %v4288 = vadd.f32 %v4286, 1.0
      %v4289 = vadd.f32 %v4287, 1.0
      %v4290 = vmul.f32 %v4274, %v4288
      %v4291 = vmul.f32 %v4275, %v4289
      %v4292 = vld [vmem:[%s75] sm:$0xff]
      %v4293 = vld [vmem:[%s77] sm:$0xff]
      %4295 = vset.pattern.permute.xlu0 0
      %4296 = vperm.xlu0 %4295, %v4293
      %v4297 = vpop.permute.xlu0 %4296
      %v4300 = vsel %vm2760, %v4292, 0
      %4302 = vmatpush.msra.mxu0 0.0
      %4303 = vmatpush.msra.mxu0 0.0
      %4304 = vmatpush.msra.mxu0 0.0
      %4305 = vmatpush.msra.mxu0 0.0
      %4306 = vmatpush.msra.mxu0 0.0
      %4307 = vmatpush.msra.mxu0 0.0
      %4308 = vmatpush.msra.mxu0 0.0
      %4309 = vmatpush.msra.mxu0 0.0
      %4310 = vmatpush.msra.mxu0 0.0
      %4311 = vmatpush.msra.mxu0 0.0
      %4312 = vmatpush.msra.mxu0 0.0
      %4313 = vmatpush.msra.mxu0 0.0
      %4314 = vmatpush.msra.mxu0 0.0
      %4315 = vmatpush.msra.mxu0 0.0
      %4316 = vmatpush.msra.mxu0 0.0
      %4317 = vmatpush.msra.mxu0 %v4290
      %4318 = vmatmul.f32.gmra.mxu0 %v4300
      %v4319 = vpop.f32.mrf.mxu0
      %v4320 = vadd.f32 %v4297, %v4319
      %4321 = vdwg.mxu0
      %4322 = vmatpush.msra.mxu0 0.0
      %4323 = vmatpush.msra.mxu0 0.0
      %4324 = vmatpush.msra.mxu0 0.0
      %4325 = vmatpush.msra.mxu0 0.0
      %4326 = vmatpush.msra.mxu0 0.0
      %4327 = vmatpush.msra.mxu0 0.0
      %4328 = vmatpush.msra.mxu0 0.0
      %4329 = vmatpush.msra.mxu0 0.0
      %4330 = vmatpush.msra.mxu0 0.0
      %4331 = vmatpush.msra.mxu0 0.0
      %4332 = vmatpush.msra.mxu0 0.0
      %4333 = vmatpush.msra.mxu0 0.0
      %4334 = vmatpush.msra.mxu0 0.0
      %4335 = vmatpush.msra.mxu0 0.0
      %4336 = vmatpush.msra.mxu0 0.0
      %4337 = vmatpush.msra.mxu0 %v4291
      %4338 = vmatmul.f32.gmra.mxu0 %v4300
      %v4339 = vpop.f32.mrf.mxu0
      %v4340 = vadd.f32 %v4297, %v4339
      %4341 = vdwg.mxu0
      %v4342 = vsub.f32 0.0, %v4320
      %v4343 = vsub.f32 0.0, %v4340
      %v4344 = vmul.f32 %v4342, 1.442695
      %v4345 = vpow.pop %v4344
      %v4346 = vmul.f32 %v4343, 1.442695
      %v4347 = vpow.pop %v4346
      %v4348 = vadd.f32 %v4345, 1.0
      %v4349 = vadd.f32 %v4347, 1.0
      %v4350 = vrcp.pop %v4348
      %v4351 = vrcp.pop %v4349
      %v4352 = vmul.f32 %v4290, %v4350
      %v4353 = vmul.f32 %v4291, %v4351
      %v4354 = vld [vmem:[%s79] sm:$0xff]
      %v4355 = vld [vmem:[%s81] sm:$0xff]
      %4357 = vset.pattern.permute.xlu0 0
      %4358 = vperm.xlu0 %4357, %v4355
      %v4359 = vpop.permute.xlu0 %4358
      %vm4361 = vcmask 195584
      %v4363 = vsel %vm4361, %v4354, 0
      %4365 = vmatpush.msra.mxu0 0.0
      %4366 = vmatpush.msra.mxu0 0.0
      %4367 = vmatpush.msra.mxu0 0.0
      %4368 = vmatpush.msra.mxu0 0.0
      %4369 = vmatpush.msra.mxu0 0.0
      %4370 = vmatpush.msra.mxu0 0.0
      %4371 = vmatpush.msra.mxu0 0.0
      %4372 = vmatpush.msra.mxu0 0.0
      %4373 = vmatpush.msra.mxu0 0.0
      %4374 = vmatpush.msra.mxu0 0.0
      %4375 = vmatpush.msra.mxu0 0.0
      %4376 = vmatpush.msra.mxu0 0.0
      %4377 = vmatpush.msra.mxu0 0.0
      %4378 = vmatpush.msra.mxu0 %v4352
      %4379 = vmatpush.msra.mxu0 %v3636
      %4380 = vmatpush.msra.mxu0 %v2886
      %4381 = vmatmul.f32.gmra.mxu0 %v4363
      %v4382 = vpop.f32.mrf.mxu0
      %v4383 = vadd.f32 %v4359, %v4382
      %4384 = vdwg.mxu0
      %4385 = vmatpush.msra.mxu0 0.0
      %4386 = vmatpush.msra.mxu0 0.0
      %4387 = vmatpush.msra.mxu0 0.0
      %4388 = vmatpush.msra.mxu0 0.0
      %4389 = vmatpush.msra.mxu0 0.0
      %4390 = vmatpush.msra.mxu0 0.0
      %4391 = vmatpush.msra.mxu0 0.0
      %4392 = vmatpush.msra.mxu0 0.0
      %4393 = vmatpush.msra.mxu0 0.0
      %4394 = vmatpush.msra.mxu0 0.0
      %4395 = vmatpush.msra.mxu0 0.0
      %4396 = vmatpush.msra.mxu0 0.0
      %4397 = vmatpush.msra.mxu0 0.0
      %4398 = vmatpush.msra.mxu0 %v4353
      %4399 = vmatpush.msra.mxu0 %v3637
      %4400 = vmatpush.msra.mxu0 %v2887
      %4401 = vmatmul.f32.gmra.mxu0 %v4363
      %v4402 = vpop.f32.mrf.mxu0
      %v4403 = vadd.f32 %v4359, %v4402
      %4404 = vdwg.mxu0
      %s4405 = sld [smem:[#allocation3]]
      %v4406 = vstv %s4405
      %v4407 = vmul.f32 %v4406, %v4383
      %v4408 = vmul.f32 %v4406, %v4403
      %s4409 = ssub.f32 1.0, %s4405
      %v4410 = vstv %s4409
      %v4411 = vmul.f32 %v4410, %v2886
      %v4412 = vmul.f32 %v4410, %v2887
      %v4413 = vadd.f32 %v4407, %v4411
      %v4414 = vadd.f32 %v4408, %v4412
      %v4415 = vld [vmem:[%s85] sm:$0x3]
      %v4416 = vld [vmem:[%s87] sm:$0x3]
      %4418 = vset.pattern.permute.xlu0 0
      %4419 = vperm.xlu0 %4418, %v4416
      %v4420 = vpop.permute.xlu0 %4419
      %v4424 = vrot.slane %v4413, 4
      %v4425 = vrot.slane %v4414, 4
      %v4427 = vsel %vm2899, %v4415, 0
      %v4429 = vsel %vm2509, %v4424, 0
      %v4431 = vsel %vm2509, %v4425, 0
      %4433 = vmatpush.msra.mxu0 0.0
      %4434 = vmatpush.msra.mxu0 0.0
      %4435 = vmatpush.msra.mxu0 0.0
      %4436 = vmatpush.msra.mxu0 0.0
      %4437 = vmatpush.msra.mxu0 0.0
      %4438 = vmatpush.msra.mxu0 0.0
      %4439 = vmatpush.msra.mxu0 0.0
      %4440 = vmatpush.msra.mxu0 0.0
      %4441 = vmatpush.msra.mxu0 0.0
      %4442 = vmatpush.msra.mxu0 0.0
      %4443 = vmatpush.msra.mxu0 0.0
      %4444 = vmatpush.msra.mxu0 0.0
      %4445 = vmatpush.msra.mxu0 0.0
      %4446 = vmatpush.msra.mxu0 0.0
      %4447 = vmatpush.msra.mxu0 0.0
      %4448 = vmatpush.msra.mxu0 %v4429
      %4449 = vmatmul.f32.gmra.mxu0 %v4427
      %v4450 = vpop.f32.mrf.mxu0
      %v4451 = vadd.f32 %v4420, %v4450
      %4452 = vdwg.mxu0
      %4453 = vmatpush.msra.mxu0 0.0
      %4454 = vmatpush.msra.mxu0 0.0
      %4455 = vmatpush.msra.mxu0 0.0
      %4456 = vmatpush.msra.mxu0 0.0
      %4457 = vmatpush.msra.mxu0 0.0
      %4458 = vmatpush.msra.mxu0 0.0
      %4459 = vmatpush.msra.mxu0 0.0
      %4460 = vmatpush.msra.mxu0 0.0
      %4461 = vmatpush.msra.mxu0 0.0
      %4462 = vmatpush.msra.mxu0 0.0
      %4463 = vmatpush.msra.mxu0 0.0
      %4464 = vmatpush.msra.mxu0 0.0
      %4465 = vmatpush.msra.mxu0 0.0
      %4466 = vmatpush.msra.mxu0 0.0
      %4467 = vmatpush.msra.mxu0 0.0
      %4468 = vmatpush.msra.mxu0 %v4431
      %4469 = vmatmul.f32.gmra.mxu0 %v4427
      %v4470 = vpop.f32.mrf.mxu0
      %v4471 = vadd.f32 %v4420, %v4470
      %4472 = vdwg.mxu0
      %v4473 = vmax.f32 %v4451, 0.0
      %v4474 = vmax.f32 %v4471, 0.0
      %v4475 = vld [vmem:[%s89] sm:$0xff]
      %v4476 = vld [vmem:[%s91] sm:$0xff]
      %4478 = vset.pattern.permute.xlu0 0
      %4479 = vperm.xlu0 %4478, %v4476
      %v4480 = vpop.permute.xlu0 %4479
      %v4483 = vsel %vm2320, %v4475, 0
      %v4486 = vsel %vm2515, %v4473, 0
      %v4489 = vsel %vm2515, %v4474, 0
      %4491 = vmatpush.msra.mxu0 0.0
      %4492 = vmatpush.msra.mxu0 0.0
      %4493 = vmatpush.msra.mxu0 0.0
      %4494 = vmatpush.msra.mxu0 0.0
      %4495 = vmatpush.msra.mxu0 0.0
      %4496 = vmatpush.msra.mxu0 0.0
      %4497 = vmatpush.msra.mxu0 0.0
      %4498 = vmatpush.msra.mxu0 0.0
      %4499 = vmatpush.msra.mxu0 0.0
      %4500 = vmatpush.msra.mxu0 0.0
      %4501 = vmatpush.msra.mxu0 0.0
      %4502 = vmatpush.msra.mxu0 0.0
      %4503 = vmatpush.msra.mxu0 0.0
      %4504 = vmatpush.msra.mxu0 0.0
      %4505 = vmatpush.msra.mxu0 0.0
      %4506 = vmatpush.msra.mxu0 %v4486
      %4507 = vmatmul.f32.gmra.mxu0 %v4483
      %v4508 = vpop.f32.mrf.mxu0
      %v4509 = vadd.f32 %v4480, %v4508
      %4510 = vdwg.mxu0
      %4511 = vmatpush.msra.mxu0 0.0
      %4512 = vmatpush.msra.mxu0 0.0
      %4513 = vmatpush.msra.mxu0 0.0
      %4514 = vmatpush.msra.mxu0 0.0
      %4515 = vmatpush.msra.mxu0 0.0
      %4516 = vmatpush.msra.mxu0 0.0
      %4517 = vmatpush.msra.mxu0 0.0
      %4518 = vmatpush.msra.mxu0 0.0
      %4519 = vmatpush.msra.mxu0 0.0
      %4520 = vmatpush.msra.mxu0 0.0
      %4521 = vmatpush.msra.mxu0 0.0
      %4522 = vmatpush.msra.mxu0 0.0
      %4523 = vmatpush.msra.mxu0 0.0
      %4524 = vmatpush.msra.mxu0 0.0
      %4525 = vmatpush.msra.mxu0 0.0
      %4526 = vmatpush.msra.mxu0 %v4489
      %4527 = vmatmul.f32.gmra.mxu0 %v4483
      %v4528 = vpop.f32.mrf.mxu0
      %v4529 = vadd.f32 %v4480, %v4528
      %4530 = vdwg.mxu0
      %v4531 = vsub.f32 0.0, %v4509
      %v4532 = vsub.f32 0.0, %v4529
      %v4533 = vmul.f32 %v4531, 1.442695
      %v4534 = vpow.pop %v4533
      %v4535 = vmul.f32 %v4532, 1.442695
      %v4536 = vpow.pop %v4535
      %v4537 = vadd.f32 %v4534, 1.0
      %v4538 = vadd.f32 %v4536, 1.0
      %v4539 = vrcp.pop %v4537
      %v4540 = vrcp.pop %v4538
      %v4541 = vmul.f32 %v4413, %v4539
      %v4542 = vmul.f32 %v4414, %v4540
      %v4545 = vrot.slane %v4509, 4
      %v4546 = vrot.slane %v4529, 4
      %v4549 = vadd.f32 %v4541, %v4545
      %v4550 = vadd.f32 %v4542, %v4546
      %v4551 = vld [vmem:[%s93] sm:$0x3]
      %v4552 = vld [vmem:[%s95] sm:$0x3]
      %4554 = vset.pattern.permute.xlu0 0
      %4555 = vperm.xlu0 %4554, %v4552
      %v4556 = vpop.permute.xlu0 %4555
      %v4559 = vsel %vm2899, %v4551, 0
      %v4561 = vsel %vm2509, %v4413, 0
      %v4563 = vsel %vm2509, %v4414, 0
      %4565 = vmatpush.msra.mxu0 0.0
      %4566 = vmatpush.msra.mxu0 0.0
      %4567 = vmatpush.msra.mxu0 0.0
      %4568 = vmatpush.msra.mxu0 0.0
      %4569 = vmatpush.msra.mxu0 0.0
      %4570 = vmatpush.msra.mxu0 0.0
      %4571 = vmatpush.msra.mxu0 0.0
      %4572 = vmatpush.msra.mxu0 0.0
      %4573 = vmatpush.msra.mxu0 0.0
      %4574 = vmatpush.msra.mxu0 0.0
      %4575 = vmatpush.msra.mxu0 0.0
      %4576 = vmatpush.msra.mxu0 0.0
      %4577 = vmatpush.msra.mxu0 0.0
      %4578 = vmatpush.msra.mxu0 0.0
      %4579 = vmatpush.msra.mxu0 0.0
      %4580 = vmatpush.msra.mxu0 %v4561
      %4581 = vmatmul.f32.gmra.mxu0 %v4559
      %v4582 = vpop.f32.mrf.mxu0
      %v4583 = vadd.f32 %v4556, %v4582
      %4584 = vdwg.mxu0
      %4585 = vmatpush.msra.mxu0 0.0
      %4586 = vmatpush.msra.mxu0 0.0
      %4587 = vmatpush.msra.mxu0 0.0
      %4588 = vmatpush.msra.mxu0 0.0
      %4589 = vmatpush.msra.mxu0 0.0
      %4590 = vmatpush.msra.mxu0 0.0
      %4591 = vmatpush.msra.mxu0 0.0
      %4592 = vmatpush.msra.mxu0 0.0
      %4593 = vmatpush.msra.mxu0 0.0
      %4594 = vmatpush.msra.mxu0 0.0
      %4595 = vmatpush.msra.mxu0 0.0
      %4596 = vmatpush.msra.mxu0 0.0
      %4597 = vmatpush.msra.mxu0 0.0
      %4598 = vmatpush.msra.mxu0 0.0
      %4599 = vmatpush.msra.mxu0 0.0
      %4600 = vmatpush.msra.mxu0 %v4563
      %4601 = vmatmul.f32.gmra.mxu0 %v4559
      %v4602 = vpop.f32.mrf.mxu0
      %v4603 = vadd.f32 %v4556, %v4602
      %4604 = vdwg.mxu0
      %v4605 = vmax.f32 %v4583, 0.0
      %v4606 = vmax.f32 %v4603, 0.0
      %v4607 = vld [vmem:[%s97] sm:$0xff]
      %v4608 = vld [vmem:[%s99] sm:$0xff]
      %4610 = vset.pattern.permute.xlu0 0
      %4611 = vperm.xlu0 %4610, %v4608
      %v4612 = vpop.permute.xlu0 %4611
      %v4615 = vsel %vm2320, %v4607, 0
      %v4618 = vsel %vm2515, %v4605, 0
      %v4621 = vsel %vm2515, %v4606, 0
      %4623 = vmatpush.msra.mxu0 0.0
      %4624 = vmatpush.msra.mxu0 0.0
      %4625 = vmatpush.msra.mxu0 0.0
      %4626 = vmatpush.msra.mxu0 0.0
      %4627 = vmatpush.msra.mxu0 0.0
      %4628 = vmatpush.msra.mxu0 0.0
      %4629 = vmatpush.msra.mxu0 0.0
      %4630 = vmatpush.msra.mxu0 0.0
      %4631 = vmatpush.msra.mxu0 0.0
      %4632 = vmatpush.msra.mxu0 0.0
      %4633 = vmatpush.msra.mxu0 0.0
      %4634 = vmatpush.msra.mxu0 0.0
      %4635 = vmatpush.msra.mxu0 0.0
      %4636 = vmatpush.msra.mxu0 0.0
      %4637 = vmatpush.msra.mxu0 0.0
      %4638 = vmatpush.msra.mxu0 %v4618
      %4639 = vmatmul.f32.gmra.mxu0 %v4615
      %v4640 = vpop.f32.mrf.mxu0
      %v4641 = vadd.f32 %v4612, %v4640
      %4642 = vdwg.mxu0
      %4643 = vmatpush.msra.mxu0 0.0
      %4644 = vmatpush.msra.mxu0 0.0
      %4645 = vmatpush.msra.mxu0 0.0
      %4646 = vmatpush.msra.mxu0 0.0
      %4647 = vmatpush.msra.mxu0 0.0
      %4648 = vmatpush.msra.mxu0 0.0
      %4649 = vmatpush.msra.mxu0 0.0
      %4650 = vmatpush.msra.mxu0 0.0
      %4651 = vmatpush.msra.mxu0 0.0
      %4652 = vmatpush.msra.mxu0 0.0
      %4653 = vmatpush.msra.mxu0 0.0
      %4654 = vmatpush.msra.mxu0 0.0
      %4655 = vmatpush.msra.mxu0 0.0
      %4656 = vmatpush.msra.mxu0 0.0
      %4657 = vmatpush.msra.mxu0 0.0
      %4658 = vmatpush.msra.mxu0 %v4621
      %4659 = vmatmul.f32.gmra.mxu0 %v4615
      %v4660 = vpop.f32.mrf.mxu0
      %v4661 = vadd.f32 %v4612, %v4660
      %4662 = vdwg.mxu0
      %v4663 = vsub.f32 0.0, %v4641
      %v4664 = vsub.f32 0.0, %v4661
      %v4665 = vmul.f32 %v4663, 1.442695
      %v4666 = vpow.pop %v4665
      %v4667 = vmul.f32 %v4664, 1.442695
      %v4668 = vpow.pop %v4667
      %v4669 = vadd.f32 %v4666, 1.0
      %v4670 = vadd.f32 %v4668, 1.0
      %v4671 = vrcp.pop %v4669
      %v4672 = vrcp.pop %v4670
      %v4675 = vrot.slane %v4671, 4
      %v4676 = vrot.slane %v4672, 4
      %v4679 = vmul.f32 %v4413, %v4675
      %v4680 = vmul.f32 %v4414, %v4676
      %v4681 = vadd.f32 %v4679, %v4641
      %v4682 = vadd.f32 %v4680, %v4661
      %4685 = vrot.lane.b32.xlu0 %v4549, 17
      %v4686 = vpop.permute.xlu0 %4685
      %4687 = vrot.lane.b32.xlu0 %v4550, 17
      %v4688 = vpop.permute.xlu0 %4687
      %v4689 = vsel %vm2289, %v4686, %v4688
      %v4693 = vsel %vm2289, 0.0, %v4686
      %v4694 = vsel %vm2289, %v4688, 0.0
      %v4695 = vmul.f32 %v4693, %v2302
      %v4696 = vmul.f32 %v4689, %v2303
      %v4697 = vmul.f32 %v4693, %v2317
      %v4698 = vmul.f32 %v4689, %v2321
      %v4699 = vmul.f32 %v4694, %v2319
      %v4700 = vmul.f32 %v4693, %v2329
      %v4701 = vmul.f32 %v4689, %v2333
      %v4702 = vmul.f32 %v4694, %v2331
      %v4703 = vmul.f32 %v4693, %v2341
      %v4704 = vmul.f32 %v4689, %v2345
      %v4705 = vmul.f32 %v4694, %v2343
      %v4706 = vmul.f32 %v4693, %v2353
      %v4707 = vmul.f32 %v4689, %v2357
      %v4708 = vmul.f32 %v4694, %v2355
      %v4709 = vmul.f32 %v4693, %v2365
      %v4710 = vmul.f32 %v4689, %v2369
      %v4711 = vmul.f32 %v4694, %v2367
      %v4714 = vrot.slane %v4693, 4
      %v4715 = vrot.slane %v4689, 4
      %v4716 = vrot.slane %v4694, 4
      %4717 = vrot.lane.b32.xlu0 %v4714, 127
      %v4718 = vpop.permute.xlu0 %4717
      %4719 = vrot.lane.b32.xlu0 %v4715, 127
      %v4720 = vpop.permute.xlu0 %4719
      %4721 = vrot.lane.b32.xlu0 %v4716, 127
      %v4722 = vpop.permute.xlu0 %4721
      %v4723 = vsel %vm2387, %v4718, %v4720
      %v4724 = vsel %vm2387, %v4720, %v4722
      %4730 = vrot.lane.b32.xlu0 %v4697, 126
      %v4731 = vpop.permute.xlu0 %4730
      %4732 = vrot.lane.b32.xlu0 %v4698, 126
      %v4733 = vpop.permute.xlu0 %4732
      %4734 = vrot.lane.b32.xlu0 %v4699, 126
      %v4735 = vpop.permute.xlu0 %4734
      %v4736 = vsel %vm2404, %v4731, %v4733
      %v4737 = vsel %vm2404, %v4733, %v4735
      %v4743 = vrot.slane %v4700, 4
      %v4744 = vrot.slane %v4701, 4
      %v4745 = vrot.slane %v4702, 4
      %4746 = vrot.lane.b32.xlu0 %v4743, 112
      %v4747 = vpop.permute.xlu0 %4746
      %4748 = vrot.lane.b32.xlu0 %v4744, 112
      %v4749 = vpop.permute.xlu0 %4748
      %4750 = vrot.lane.b32.xlu0 %v4745, 112
      %v4751 = vpop.permute.xlu0 %4750
      %v4752 = vsel %vm2421, %v4747, %v4749
      %v4753 = vsel %vm2421, %v4749, %v4751
      %4756 = vrot.lane.b32.xlu0 %v4693, 111
      %v4757 = vpop.permute.xlu0 %4756
      %4758 = vrot.lane.b32.xlu0 %v4689, 111
      %v4759 = vpop.permute.xlu0 %4758
      %4760 = vrot.lane.b32.xlu0 %v4694, 111
      %v4761 = vpop.permute.xlu0 %4760
      %v4762 = vsel %vm2435, %v4757, %v4759
      %v4763 = vsel %vm2435, %v4759, %v4761
      %v4769 = vrot.slane %v4703, 4
      %v4770 = vrot.slane %v4704, 4
      %v4771 = vrot.slane %v4705, 4
      %4772 = vrot.lane.b32.xlu0 %v4769, 110
      %v4773 = vpop.permute.xlu0 %4772
      %4774 = vrot.lane.b32.xlu0 %v4770, 110
      %v4775 = vpop.permute.xlu0 %4774
      %4776 = vrot.lane.b32.xlu0 %v4771, 110
      %v4777 = vpop.permute.xlu0 %4776
      %v4778 = vsel %vm2452, %v4773, %v4775
      %v4779 = vsel %vm2452, %v4775, %v4777
      %4785 = vrot.lane.b32.xlu0 %v4706, 96
      %v4786 = vpop.permute.xlu0 %4785
      %4787 = vrot.lane.b32.xlu0 %v4707, 96
      %v4788 = vpop.permute.xlu0 %4787
      %4789 = vrot.lane.b32.xlu0 %v4708, 96
      %v4790 = vpop.permute.xlu0 %4789
      %v4791 = vsel %vm2469, %v4786, %v4788
      %v4792 = vsel %vm2469, %v4788, %v4790
      %4795 = vrot.lane.b32.xlu0 %v4714, 95
      %v4796 = vpop.permute.xlu0 %4795
      %4797 = vrot.lane.b32.xlu0 %v4715, 95
      %v4798 = vpop.permute.xlu0 %4797
      %4799 = vrot.lane.b32.xlu0 %v4716, 95
      %v4800 = vpop.permute.xlu0 %4799
      %v4801 = vsel %vm2483, %v4796, %v4798
      %v4802 = vsel %vm2483, %v4798, %v4800
      %4808 = vrot.lane.b32.xlu0 %v4709, 94
      %v4809 = vpop.permute.xlu0 %4808
      %4810 = vrot.lane.b32.xlu0 %v4710, 94
      %v4811 = vpop.permute.xlu0 %4810
      %4812 = vrot.lane.b32.xlu0 %v4711, 94
      %v4813 = vpop.permute.xlu0 %4812
      %v4814 = vsel %vm2497, %v4809, %v4811
      %v4815 = vsel %vm2497, %v4811, %v4813
      %v4816 = vsel %vm2509, %v4695, %v4723
      %v4817 = vsel %vm2509, %v4696, %v4724
      %v4818 = vsel %vm2509, %v4736, %v4752
      %v4819 = vsel %vm2509, %v4737, %v4753
      %v4820 = vsel %vm2509, %v4762, %v4778
      %v4821 = vsel %vm2509, %v4763, %v4779
      %v4822 = vsel %vm2509, %v4791, %v4801
      %v4823 = vsel %vm2509, %v4792, %v4802
      %v4824 = vld [vmem:[%s101] sm:$0xf]
      %v4825 = vld [vmem:[%s103] sm:$0xf]
      %4827 = vset.pattern.permute.xlu0 0
      %4828 = vperm.xlu0 %4827, %v4825
      %v4829 = vpop.permute.xlu0 %4828
      %v4832 = vsel %vm3305, %v4824, 0
      %v4834 = vsel %vm2509, %v4814, 0
      %v4836 = vsel %vm2509, %v4815, 0
      %4838 = vmatpush.msra.mxu0 0.0
      %4839 = vmatpush.msra.mxu0 0.0
      %4840 = vmatpush.msra.mxu0 0.0
      %4841 = vmatpush.msra.mxu0 0.0
      %4842 = vmatpush.msra.mxu0 0.0
      %4843 = vmatpush.msra.mxu0 0.0
      %4844 = vmatpush.msra.mxu0 0.0
      %4845 = vmatpush.msra.mxu0 0.0
      %4846 = vmatpush.msra.mxu0 0.0
      %4847 = vmatpush.msra.mxu0 0.0
      %4848 = vmatpush.msra.mxu0 0.0
      %4849 = vmatpush.msra.mxu0 %v4834
      %4850 = vmatpush.msra.mxu0 %v4822
      %4851 = vmatpush.msra.mxu0 %v4820
      %4852 = vmatpush.msra.mxu0 %v4818
      %4853 = vmatpush.msra.mxu0 %v4816
      %4854 = vmatmul.f32.gmra.mxu0 %v4832
      %v4855 = vpop.f32.mrf.mxu0
      %v4856 = vadd.f32 %v4829, %v4855
      %4857 = vdwg.mxu0
      %4858 = vmatpush.msra.mxu0 0.0
      %4859 = vmatpush.msra.mxu0 0.0
      %4860 = vmatpush.msra.mxu0 0.0
      %4861 = vmatpush.msra.mxu0 0.0
      %4862 = vmatpush.msra.mxu0 0.0
      %4863 = vmatpush.msra.mxu0 0.0
      %4864 = vmatpush.msra.mxu0 0.0
      %4865 = vmatpush.msra.mxu0 0.0
      %4866 = vmatpush.msra.mxu0 0.0
      %4867 = vmatpush.msra.mxu0 0.0
      %4868 = vmatpush.msra.mxu0 0.0
      %4869 = vmatpush.msra.mxu0 %v4836
      %4870 = vmatpush.msra.mxu0 %v4823
      %4871 = vmatpush.msra.mxu0 %v4821
      %4872 = vmatpush.msra.mxu0 %v4819
      %4873 = vmatpush.msra.mxu0 %v4817
      %4874 = vmatmul.f32.gmra.mxu0 %v4832
      %v4875 = vpop.f32.mrf.mxu0
      %v4876 = vadd.f32 %v4829, %v4875
      %4877 = vdwg.mxu0
      %v4880 = vrot.slane %v4681, 4
      %v4881 = vrot.slane %v4682, 4
      %4882 = vrot.lane.b32.xlu0 %v4880, 17
      %v4883 = vpop.permute.xlu0 %4882
      %4884 = vrot.lane.b32.xlu0 %v4881, 17
      %v4885 = vpop.permute.xlu0 %4884
      %v4886 = vsel %vm2289, %v4883, %v4885
      %v4890 = vsel %vm2289, 0.0, %v4883
      %v4891 = vsel %vm2289, %v4885, 0.0
      %v4892 = vmul.f32 %v4890, %v2302
      %v4893 = vmul.f32 %v4886, %v2303
      %v4894 = vmul.f32 %v4890, %v2317
      %v4895 = vmul.f32 %v4886, %v2321
      %v4896 = vmul.f32 %v4891, %v2319
      %v4897 = vmul.f32 %v4890, %v2329
      %v4898 = vmul.f32 %v4886, %v2333
      %v4899 = vmul.f32 %v4891, %v2331
      %v4900 = vmul.f32 %v4890, %v2341
      %v4901 = vmul.f32 %v4886, %v2345
      %v4902 = vmul.f32 %v4891, %v2343
      %v4903 = vmul.f32 %v4890, %v2353
      %v4904 = vmul.f32 %v4886, %v2357
      %v4905 = vmul.f32 %v4891, %v2355
      %v4906 = vmul.f32 %v4890, %v2365
      %v4907 = vmul.f32 %v4886, %v2369
      %v4908 = vmul.f32 %v4891, %v2367
      %v4911 = vrot.slane %v4890, 4
      %v4912 = vrot.slane %v4886, 4
      %v4913 = vrot.slane %v4891, 4
      %4914 = vrot.lane.b32.xlu0 %v4911, 127
      %v4915 = vpop.permute.xlu0 %4914
      %4916 = vrot.lane.b32.xlu0 %v4912, 127
      %v4917 = vpop.permute.xlu0 %4916
      %4918 = vrot.lane.b32.xlu0 %v4913, 127
      %v4919 = vpop.permute.xlu0 %4918
      %v4920 = vsel %vm2387, %v4915, %v4917
      %v4921 = vsel %vm2387, %v4917, %v4919
      %4927 = vrot.lane.b32.xlu0 %v4894, 126
      %v4928 = vpop.permute.xlu0 %4927
      %4929 = vrot.lane.b32.xlu0 %v4895, 126
      %v4930 = vpop.permute.xlu0 %4929
      %4931 = vrot.lane.b32.xlu0 %v4896, 126
      %v4932 = vpop.permute.xlu0 %4931
      %v4933 = vsel %vm2404, %v4928, %v4930
      %v4934 = vsel %vm2404, %v4930, %v4932
      %v4940 = vrot.slane %v4897, 4
      %v4941 = vrot.slane %v4898, 4
      %v4942 = vrot.slane %v4899, 4
      %4943 = vrot.lane.b32.xlu0 %v4940, 112
      %v4944 = vpop.permute.xlu0 %4943
      %4945 = vrot.lane.b32.xlu0 %v4941, 112
      %v4946 = vpop.permute.xlu0 %4945
      %4947 = vrot.lane.b32.xlu0 %v4942, 112
      %v4948 = vpop.permute.xlu0 %4947
      %v4949 = vsel %vm2421, %v4944, %v4946
      %v4950 = vsel %vm2421, %v4946, %v4948
      %4953 = vrot.lane.b32.xlu0 %v4890, 111
      %v4954 = vpop.permute.xlu0 %4953
      %4955 = vrot.lane.b32.xlu0 %v4886, 111
      %v4956 = vpop.permute.xlu0 %4955
      %4957 = vrot.lane.b32.xlu0 %v4891, 111
      %v4958 = vpop.permute.xlu0 %4957
      %v4959 = vsel %vm2435, %v4954, %v4956
      %v4960 = vsel %vm2435, %v4956, %v4958
      %v4966 = vrot.slane %v4900, 4
      %v4967 = vrot.slane %v4901, 4
      %v4968 = vrot.slane %v4902, 4
      %4969 = vrot.lane.b32.xlu0 %v4966, 110
      %v4970 = vpop.permute.xlu0 %4969
      %4971 = vrot.lane.b32.xlu0 %v4967, 110
      %v4972 = vpop.permute.xlu0 %4971
      %4973 = vrot.lane.b32.xlu0 %v4968, 110
      %v4974 = vpop.permute.xlu0 %4973
      %v4975 = vsel %vm2452, %v4970, %v4972
      %v4976 = vsel %vm2452, %v4972, %v4974
      %4982 = vrot.lane.b32.xlu0 %v4903, 96
      %v4983 = vpop.permute.xlu0 %4982
      %4984 = vrot.lane.b32.xlu0 %v4904, 96
      %v4985 = vpop.permute.xlu0 %4984
      %4986 = vrot.lane.b32.xlu0 %v4905, 96
      %v4987 = vpop.permute.xlu0 %4986
      %v4988 = vsel %vm2469, %v4983, %v4985
      %v4989 = vsel %vm2469, %v4985, %v4987
      %4992 = vrot.lane.b32.xlu0 %v4911, 95
      %v4993 = vpop.permute.xlu0 %4992
      %4994 = vrot.lane.b32.xlu0 %v4912, 95
      %v4995 = vpop.permute.xlu0 %4994
      %4996 = vrot.lane.b32.xlu0 %v4913, 95
      %v4997 = vpop.permute.xlu0 %4996
      %v4998 = vsel %vm2483, %v4993, %v4995
      %v4999 = vsel %vm2483, %v4995, %v4997
      %5005 = vrot.lane.b32.xlu0 %v4906, 94
      %v5006 = vpop.permute.xlu0 %5005
      %5007 = vrot.lane.b32.xlu0 %v4907, 94
      %v5008 = vpop.permute.xlu0 %5007
      %5009 = vrot.lane.b32.xlu0 %v4908, 94
      %v5010 = vpop.permute.xlu0 %5009
      %v5011 = vsel %vm2497, %v5006, %v5008
      %v5012 = vsel %vm2497, %v5008, %v5010
      %v5013 = vsel %vm2509, %v4892, %v4920
      %v5014 = vsel %vm2509, %v4893, %v4921
      %v5015 = vsel %vm2509, %v4933, %v4949
      %v5016 = vsel %vm2509, %v4934, %v4950
      %v5017 = vsel %vm2509, %v4959, %v4975
      %v5018 = vsel %vm2509, %v4960, %v4976
      %v5019 = vsel %vm2509, %v4988, %v4998
      %v5020 = vsel %vm2509, %v4989, %v4999
      %v5021 = vld [vmem:[%s105] sm:$0xf]
      %v5022 = vld [vmem:[%s107] sm:$0xf]
      %5024 = vset.pattern.permute.xlu0 0
      %5025 = vperm.xlu0 %5024, %v5022
      %v5026 = vpop.permute.xlu0 %5025
      %v5029 = vsel %vm3305, %v5021, 0
      %v5031 = vsel %vm2509, %v5011, 0
      %v5033 = vsel %vm2509, %v5012, 0
      %5035 = vmatpush.msra.mxu0 0.0
      %5036 = vmatpush.msra.mxu0 0.0
      %5037 = vmatpush.msra.mxu0 0.0
      %5038 = vmatpush.msra.mxu0 0.0
      %5039 = vmatpush.msra.mxu0 0.0
      %5040 = vmatpush.msra.mxu0 0.0
      %5041 = vmatpush.msra.mxu0 0.0
      %5042 = vmatpush.msra.mxu0 0.0
      %5043 = vmatpush.msra.mxu0 0.0
      %5044 = vmatpush.msra.mxu0 0.0
      %5045 = vmatpush.msra.mxu0 0.0
      %5046 = vmatpush.msra.mxu0 %v5031
      %5047 = vmatpush.msra.mxu0 %v5019
      %5048 = vmatpush.msra.mxu0 %v5017
      %5049 = vmatpush.msra.mxu0 %v5015
      %5050 = vmatpush.msra.mxu0 %v5013
      %5051 = vmatmul.f32.gmra.mxu0 %v5029
      %v5052 = vpop.f32.mrf.mxu0
      %v5053 = vadd.f32 %v5026, %v5052
      %5054 = vdwg.mxu0
      %5055 = vmatpush.msra.mxu0 0.0
      %5056 = vmatpush.msra.mxu0 0.0
      %5057 = vmatpush.msra.mxu0 0.0
      %5058 = vmatpush.msra.mxu0 0.0
      %5059 = vmatpush.msra.mxu0 0.0
      %5060 = vmatpush.msra.mxu0 0.0
      %5061 = vmatpush.msra.mxu0 0.0
      %5062 = vmatpush.msra.mxu0 0.0
      %5063 = vmatpush.msra.mxu0 0.0
      %5064 = vmatpush.msra.mxu0 0.0
      %5065 = vmatpush.msra.mxu0 0.0
      %5066 = vmatpush.msra.mxu0 %v5033
      %5067 = vmatpush.msra.mxu0 %v5020
      %5068 = vmatpush.msra.mxu0 %v5018
      %5069 = vmatpush.msra.mxu0 %v5016
      %5070 = vmatpush.msra.mxu0 %v5014
      %5071 = vmatmul.f32.gmra.mxu0 %v5029
      %v5072 = vpop.f32.mrf.mxu0
      %v5073 = vadd.f32 %v5026, %v5072
      %5074 = vdwg.mxu0
      %v5077 = vrot.slane %v5053, 4
      %v5078 = vrot.slane %v5073, 4
      %v5081 = vsel %vm2509, %v4856, %v5077
      %v5082 = vsel %vm2509, %v4876, %v5078
      %v5083 = vmul.f32 %v5081, 0.5
      %v5084 = vmul.f32 %v5082, 0.5
      %v5085 = vmul.f32 %v5081, 0.044715
      %v5086 = vmul.f32 %v5082, 0.044715
      %v5087 = vmul.f32 %v5085, %v5081
      %v5088 = vmul.f32 %v5086, %v5082
      %v5089 = vmul.f32 %v5087, %v5081
      %v5090 = vmul.f32 %v5088, %v5082
      %v5091 = vadd.f32 %v5081, %v5089
      %v5092 = vadd.f32 %v5082, %v5090
      %v5093 = vmul.f32 %v5091, 0.7978846
      %v5094 = vmul.f32 %v5092, 0.7978846
      %v5095 = vtanh.pop %v5093
      %v5096 = vtanh.pop %v5094
      %v5097 = vadd.f32 %v5095, 1.0
      %v5098 = vadd.f32 %v5096, 1.0
      %v5099 = vmul.f32 %v5083, %v5097
      %v5100 = vmul.f32 %v5084, %v5098
      %v5101 = vld [vmem:[%s109] sm:$0xff]
      %v5102 = vld [vmem:[%s111] sm:$0xff]
      %5104 = vset.pattern.permute.xlu0 0
      %5105 = vperm.xlu0 %5104, %v5102
      %v5106 = vpop.permute.xlu0 %5105
      %v5109 = vsel %vm2760, %v5101, 0
      %5111 = vmatpush.msra.mxu0 0.0
      %5112 = vmatpush.msra.mxu0 0.0
      %5113 = vmatpush.msra.mxu0 0.0
      %5114 = vmatpush.msra.mxu0 0.0
      %5115 = vmatpush.msra.mxu0 0.0
      %5116 = vmatpush.msra.mxu0 0.0
      %5117 = vmatpush.msra.mxu0 0.0
      %5118 = vmatpush.msra.mxu0 0.0
      %5119 = vmatpush.msra.mxu0 0.0
      %5120 = vmatpush.msra.mxu0 0.0
      %5121 = vmatpush.msra.mxu0 0.0
      %5122 = vmatpush.msra.mxu0 0.0
      %5123 = vmatpush.msra.mxu0 0.0
      %5124 = vmatpush.msra.mxu0 0.0
      %5125 = vmatpush.msra.mxu0 0.0
      %5126 = vmatpush.msra.mxu0 %v5099
      %5127 = vmatmul.f32.gmra.mxu0 %v5109
      %v5128 = vpop.f32.mrf.mxu0
      %v5129 = vadd.f32 %v5106, %v5128
      %5130 = vdwg.mxu0
      %5131 = vmatpush.msra.mxu0 0.0
      %5132 = vmatpush.msra.mxu0 0.0
      %5133 = vmatpush.msra.mxu0 0.0
      %5134 = vmatpush.msra.mxu0 0.0
      %5135 = vmatpush.msra.mxu0 0.0
      %5136 = vmatpush.msra.mxu0 0.0
      %5137 = vmatpush.msra.mxu0 0.0
      %5138 = vmatpush.msra.mxu0 0.0
      %5139 = vmatpush.msra.mxu0 0.0
      %5140 = vmatpush.msra.mxu0 0.0
      %5141 = vmatpush.msra.mxu0 0.0
      %5142 = vmatpush.msra.mxu0 0.0
      %5143 = vmatpush.msra.mxu0 0.0
      %5144 = vmatpush.msra.mxu0 0.0
      %5145 = vmatpush.msra.mxu0 0.0
      %5146 = vmatpush.msra.mxu0 %v5100
      %5147 = vmatmul.f32.gmra.mxu0 %v5109
      %v5148 = vpop.f32.mrf.mxu0
      %v5149 = vadd.f32 %v5106, %v5148
      %5150 = vdwg.mxu0
      %v5151 = vsub.f32 0.0, %v5129
      %v5152 = vsub.f32 0.0, %v5149
      %v5153 = vmul.f32 %v5151, 1.442695
      %v5154 = vpow.pop %v5153
      %v5155 = vmul.f32 %v5152, 1.442695
      %v5156 = vpow.pop %v5155
      %v5157 = vadd.f32 %v5154, 1.0
      %v5158 = vadd.f32 %v5156, 1.0
      %v5159 = vrcp.pop %v5157
      %v5160 = vrcp.pop %v5158
      %v5161 = vmul.f32 %v5099, %v5159
      %v5162 = vmul.f32 %v5100, %v5160
      %v5163 = vld [vmem:[%s113] sm:$0xf]
      %v5164 = vld [vmem:[%s115] sm:$0xf]
      %5166 = vset.pattern.permute.xlu0 0
      %5167 = vperm.xlu0 %5166, %v5164
      %v5168 = vpop.permute.xlu0 %5167
      %v5171 = vsel %vm2760, %v5163, 0
      %5173 = vmatpush.msra.mxu0 0.0
      %5174 = vmatpush.msra.mxu0 0.0
      %5175 = vmatpush.msra.mxu0 0.0
      %5176 = vmatpush.msra.mxu0 0.0
      %5177 = vmatpush.msra.mxu0 0.0
      %5178 = vmatpush.msra.mxu0 0.0
      %5179 = vmatpush.msra.mxu0 0.0
      %5180 = vmatpush.msra.mxu0 0.0
      %5181 = vmatpush.msra.mxu0 0.0
      %5182 = vmatpush.msra.mxu0 0.0
      %5183 = vmatpush.msra.mxu0 0.0
      %5184 = vmatpush.msra.mxu0 0.0
      %5185 = vmatpush.msra.mxu0 0.0
      %5186 = vmatpush.msra.mxu0 0.0
      %5187 = vmatpush.msra.mxu0 0.0
      %5188 = vmatpush.msra.mxu0 %v5161
      %5189 = vmatmul.f32.gmra.mxu0 %v5171
      %v5190 = vpop.f32.mrf.mxu0
      %v5191 = vadd.f32 %v5168, %v5190
      %5192 = vdwg.mxu0
      %5193 = vmatpush.msra.mxu0 0.0
      %5194 = vmatpush.msra.mxu0 0.0
      %5195 = vmatpush.msra.mxu0 0.0
      %5196 = vmatpush.msra.mxu0 0.0
      %5197 = vmatpush.msra.mxu0 0.0
      %5198 = vmatpush.msra.mxu0 0.0
      %5199 = vmatpush.msra.mxu0 0.0
      %5200 = vmatpush.msra.mxu0 0.0
      %5201 = vmatpush.msra.mxu0 0.0
      %5202 = vmatpush.msra.mxu0 0.0
      %5203 = vmatpush.msra.mxu0 0.0
      %5204 = vmatpush.msra.mxu0 0.0
      %5205 = vmatpush.msra.mxu0 0.0
      %5206 = vmatpush.msra.mxu0 0.0
      %5207 = vmatpush.msra.mxu0 0.0
      %5208 = vmatpush.msra.mxu0 %v5162
      %5209 = vmatmul.f32.gmra.mxu0 %v5171
      %v5210 = vpop.f32.mrf.mxu0
      %v5211 = vadd.f32 %v5168, %v5210
      %5212 = vdwg.mxu0
      %v5213 = vmax.f32 %v5191, 0.0
      %v5214 = vmax.f32 %v5211, 0.0
      %v5215 = vld [vmem:[%s117] sm:$0xff]
      %v5216 = vld [vmem:[%s117 + $0x8] sm:$0xff]
      %v5217 = vld [vmem:[%s119] sm:$0xff]
      %v5218 = vld [vmem:[%s119 + $0x8] sm:$0xff]
      %5220 = vset.pattern.permute.xlu0 0
      %5221 = vperm.xlu0 %5220, %v5217
      %v5222 = vpop.permute.xlu0 %5221
      %5225 = vset.pattern.permute.xlu0 0
      %5226 = vperm.xlu0 %5225, %v5218
      %v5227 = vpop.permute.xlu0 %5226
      %v5230 = vsel %vm2899, %v5215, 0
      %v5233 = vsel %vm2899, %v5216, 0
      %v5236 = vsel %vm2509, %v5213, 0
      %v5239 = vsel %vm2509, %v5214, 0
      %5241 = vmatpush.msra.mxu0 0.0
      %5242 = vmatpush.msra.mxu0 0.0
      %5243 = vmatpush.msra.mxu0 0.0
      %5244 = vmatpush.msra.mxu0 0.0
      %5245 = vmatpush.msra.mxu0 0.0
      %5246 = vmatpush.msra.mxu0 0.0
      %5247 = vmatpush.msra.mxu0 0.0
      %5248 = vmatpush.msra.mxu0 0.0
      %5249 = vmatpush.msra.mxu0 0.0
      %5250 = vmatpush.msra.mxu0 0.0
      %5251 = vmatpush.msra.mxu0 0.0
      %5252 = vmatpush.msra.mxu0 0.0
      %5253 = vmatpush.msra.mxu0 0.0
      %5254 = vmatpush.msra.mxu0 0.0
      %5255 = vmatpush.msra.mxu0 0.0
      %5256 = vmatpush.msra.mxu0 %v5236
      %5257 = vmatmul.f32.gmra.mxu0 %v5230
      %v5258 = vpop.f32.mrf.mxu0
      %v5259 = vadd.f32 %v5222, %v5258
      %5260 = vmatmul.f32.gmra.mxu0 %v5233
      %v5261 = vpop.f32.mrf.mxu0
      %v5262 = vadd.f32 %v5227, %v5261
      %5263 = vdwg.mxu0
      %5264 = vmatpush.msra.mxu0 0.0
      %5265 = vmatpush.msra.mxu0 0.0
      %5266 = vmatpush.msra.mxu0 0.0
      %5267 = vmatpush.msra.mxu0 0.0
      %5268 = vmatpush.msra.mxu0 0.0
      %5269 = vmatpush.msra.mxu0 0.0
      %5270 = vmatpush.msra.mxu0 0.0
      %5271 = vmatpush.msra.mxu0 0.0
      %5272 = vmatpush.msra.mxu0 0.0
      %5273 = vmatpush.msra.mxu0 0.0
      %5274 = vmatpush.msra.mxu0 0.0
      %5275 = vmatpush.msra.mxu0 0.0
      %5276 = vmatpush.msra.mxu0 0.0
      %5277 = vmatpush.msra.mxu0 0.0
      %5278 = vmatpush.msra.mxu0 0.0
      %5279 = vmatpush.msra.mxu0 %v5239
      %5280 = vmatmul.f32.gmra.mxu0 %v5230
      %v5281 = vpop.f32.mrf.mxu0
      %v5282 = vadd.f32 %v5222, %v5281
      %5283 = vmatmul.f32.gmra.mxu0 %v5233
      %v5284 = vpop.f32.mrf.mxu0
      %v5285 = vadd.f32 %v5227, %v5284
      %5286 = vdwg.mxu0
      %v5287 = vsub.f32 0.0, %v5259
      %v5288 = vsub.f32 0.0, %v5282
      %v5289 = vmul.f32 %v5287, 1.442695
      %v5290 = vpow.pop %v5289
      %v5291 = vmul.f32 %v5288, 1.442695
      %v5292 = vpow.pop %v5291
      %v5293 = vadd.f32 %v5290, 1.0
      %v5294 = vadd.f32 %v5292, 1.0
      %v5295 = vrcp.pop %v5293
      %v5296 = vrcp.pop %v5294
      %v5297 = vmul.f32 %v4413, %v5295
      %v5298 = vmul.f32 %v4414, %v5296
      %v5299 = vadd.f32 %v5297, %v5262
      %v5300 = vadd.f32 %v5298, %v5285
      %v5301 = vld [vmem:[%s121] sm:$0xf]
      %v5302 = vld [vmem:[%s123] sm:$0xf]
      %5304 = vset.pattern.permute.xlu0 0
      %5305 = vperm.xlu0 %5304, %v5302
      %v5306 = vpop.permute.xlu0 %5305
      %v5309 = vsel %vm2760, %v5301, 0
      %5311 = vmatpush.msra.mxu0 0.0
      %5312 = vmatpush.msra.mxu0 0.0
      %5313 = vmatpush.msra.mxu0 0.0
      %5314 = vmatpush.msra.mxu0 0.0
      %5315 = vmatpush.msra.mxu0 0.0
      %5316 = vmatpush.msra.mxu0 0.0
      %5317 = vmatpush.msra.mxu0 0.0
      %5318 = vmatpush.msra.mxu0 0.0
      %5319 = vmatpush.msra.mxu0 0.0
      %5320 = vmatpush.msra.mxu0 0.0
      %5321 = vmatpush.msra.mxu0 0.0
      %5322 = vmatpush.msra.mxu0 0.0
      %5323 = vmatpush.msra.mxu0 0.0
      %5324 = vmatpush.msra.mxu0 0.0
      %5325 = vmatpush.msra.mxu0 0.0
      %5326 = vmatpush.msra.mxu0 %v4413
      %5327 = vmatmul.f32.gmra.mxu0 %v5309
      %v5328 = vpop.f32.mrf.mxu0
      %v5329 = vadd.f32 %v5306, %v5328
      %5330 = vdwg.mxu0
      %5331 = vmatpush.msra.mxu0 0.0
      %5332 = vmatpush.msra.mxu0 0.0
      %5333 = vmatpush.msra.mxu0 0.0
      %5334 = vmatpush.msra.mxu0 0.0
      %5335 = vmatpush.msra.mxu0 0.0
      %5336 = vmatpush.msra.mxu0 0.0
      %5337 = vmatpush.msra.mxu0 0.0
      %5338 = vmatpush.msra.mxu0 0.0
      %5339 = vmatpush.msra.mxu0 0.0
      %5340 = vmatpush.msra.mxu0 0.0
      %5341 = vmatpush.msra.mxu0 0.0
      %5342 = vmatpush.msra.mxu0 0.0
      %5343 = vmatpush.msra.mxu0 0.0
      %5344 = vmatpush.msra.mxu0 0.0
      %5345 = vmatpush.msra.mxu0 0.0
      %5346 = vmatpush.msra.mxu0 %v4414
      %5347 = vmatmul.f32.gmra.mxu0 %v5309
      %v5348 = vpop.f32.mrf.mxu0
      %v5349 = vadd.f32 %v5306, %v5348
      %5350 = vdwg.mxu0
      %v5351 = vmax.f32 %v5329, 0.0
      %v5352 = vmax.f32 %v5349, 0.0
      %v5353 = vld [vmem:[%s125] sm:$0xff]
      %v5354 = vld [vmem:[%s125 + $0x8] sm:$0xff]
      %v5355 = vld [vmem:[%s127] sm:$0xff]
      %v5356 = vld [vmem:[%s127 + $0x8] sm:$0xff]
      %5358 = vset.pattern.permute.xlu0 0
      %5359 = vperm.xlu0 %5358, %v5355
      %v5360 = vpop.permute.xlu0 %5359
      %5363 = vset.pattern.permute.xlu0 0
      %5364 = vperm.xlu0 %5363, %v5356
      %v5365 = vpop.permute.xlu0 %5364
      %v5368 = vsel %vm2899, %v5353, 0
      %v5371 = vsel %vm2899, %v5354, 0
      %v5374 = vsel %vm2509, %v5351, 0
      %v5377 = vsel %vm2509, %v5352, 0
      %5379 = vmatpush.msra.mxu0 0.0
      %5380 = vmatpush.msra.mxu0 0.0
      %5381 = vmatpush.msra.mxu0 0.0
      %5382 = vmatpush.msra.mxu0 0.0
      %5383 = vmatpush.msra.mxu0 0.0
      %5384 = vmatpush.msra.mxu0 0.0
      %5385 = vmatpush.msra.mxu0 0.0
      %5386 = vmatpush.msra.mxu0 0.0
      %5387 = vmatpush.msra.mxu0 0.0
      %5388 = vmatpush.msra.mxu0 0.0
      %5389 = vmatpush.msra.mxu0 0.0
      %5390 = vmatpush.msra.mxu0 0.0
      %5391 = vmatpush.msra.mxu0 0.0
      %5392 = vmatpush.msra.mxu0 0.0
      %5393 = vmatpush.msra.mxu0 0.0
      %5394 = vmatpush.msra.mxu0 %v5374
      %5395 = vmatmul.f32.gmra.mxu0 %v5368
      %v5396 = vpop.f32.mrf.mxu0
      %v5397 = vadd.f32 %v5360, %v5396
      %5398 = vmatmul.f32.gmra.mxu0 %v5371
      %v5399 = vpop.f32.mrf.mxu0
      %v5400 = vadd.f32 %v5365, %v5399
      %5401 = vdwg.mxu0
      %5402 = vmatpush.msra.mxu0 0.0
      %5403 = vmatpush.msra.mxu0 0.0
      %5404 = vmatpush.msra.mxu0 0.0
      %5405 = vmatpush.msra.mxu0 0.0
      %5406 = vmatpush.msra.mxu0 0.0
      %5407 = vmatpush.msra.mxu0 0.0
      %5408 = vmatpush.msra.mxu0 0.0
      %5409 = vmatpush.msra.mxu0 0.0
      %5410 = vmatpush.msra.mxu0 0.0
      %5411 = vmatpush.msra.mxu0 0.0
      %5412 = vmatpush.msra.mxu0 0.0
      %5413 = vmatpush.msra.mxu0 0.0
      %5414 = vmatpush.msra.mxu0 0.0
      %5415 = vmatpush.msra.mxu0 0.0
      %5416 = vmatpush.msra.mxu0 0.0
      %5417 = vmatpush.msra.mxu0 %v5377
      %5418 = vmatmul.f32.gmra.mxu0 %v5368
      %v5419 = vpop.f32.mrf.mxu0
      %v5420 = vadd.f32 %v5360, %v5419
      %5421 = vmatmul.f32.gmra.mxu0 %v5371
      %v5422 = vpop.f32.mrf.mxu0
      %v5423 = vadd.f32 %v5365, %v5422
      %5424 = vdwg.mxu0
      %v5425 = vsub.f32 0.0, %v5397
      %v5426 = vsub.f32 0.0, %v5420
      %v5427 = vmul.f32 %v5425, 1.442695
      %v5428 = vpow.pop %v5427
      %v5429 = vmul.f32 %v5426, 1.442695
      %v5430 = vpow.pop %v5429
      %v5431 = vadd.f32 %v5428, 1.0
      %v5432 = vadd.f32 %v5430, 1.0
      %v5433 = vrcp.pop %v5431
      %v5434 = vrcp.pop %v5432
      %v5435 = vmul.f32 %v5161, %v5433
      %v5436 = vmul.f32 %v5162, %v5434
      %v5437 = vadd.f32 %v5435, %v5400
      %v5438 = vadd.f32 %v5436, %v5423
      %5441 = vrot.lane.b32.xlu0 %v5299, 17
      %v5442 = vpop.permute.xlu0 %5441
      %5443 = vrot.lane.b32.xlu0 %v5300, 17
      %v5444 = vpop.permute.xlu0 %5443
      %v5445 = vsel %vm2289, %v5442, %v5444
      %v5449 = vsel %vm2289, 0.0, %v5442
      %v5450 = vsel %vm2289, %v5444, 0.0
      %v5451 = vmul.f32 %v5449, %v2302
      %v5452 = vmul.f32 %v5445, %v2303
      %v5453 = vmul.f32 %v5449, %v2317
      %v5454 = vmul.f32 %v5445, %v2321
      %v5455 = vmul.f32 %v5450, %v2319
      %v5456 = vmul.f32 %v5449, %v2329
      %v5457 = vmul.f32 %v5445, %v2333
      %v5458 = vmul.f32 %v5450, %v2331
      %v5459 = vmul.f32 %v5449, %v2341
      %v5460 = vmul.f32 %v5445, %v2345
      %v5461 = vmul.f32 %v5450, %v2343
      %v5462 = vmul.f32 %v5449, %v2353
      %v5463 = vmul.f32 %v5445, %v2357
      %v5464 = vmul.f32 %v5450, %v2355
      %v5465 = vmul.f32 %v5449, %v2365
      %v5466 = vmul.f32 %v5445, %v2369
      %v5467 = vmul.f32 %v5450, %v2367
      %5470 = vrot.lane.b32.xlu0 %v5449, 127
      %v5471 = vpop.permute.xlu0 %5470
      %5472 = vrot.lane.b32.xlu0 %v5445, 127
      %v5473 = vpop.permute.xlu0 %5472
      %5474 = vrot.lane.b32.xlu0 %v5450, 127
      %v5475 = vpop.permute.xlu0 %5474
      %v5476 = vsel %vm2387, %v5471, %v5473
      %v5477 = vsel %vm2387, %v5473, %v5475
      %5483 = vrot.lane.b32.xlu0 %v5453, 126
      %v5484 = vpop.permute.xlu0 %5483
      %5485 = vrot.lane.b32.xlu0 %v5454, 126
      %v5486 = vpop.permute.xlu0 %5485
      %5487 = vrot.lane.b32.xlu0 %v5455, 126
      %v5488 = vpop.permute.xlu0 %5487
      %v5489 = vsel %vm2404, %v5484, %v5486
      %v5490 = vsel %vm2404, %v5486, %v5488
      %5496 = vrot.lane.b32.xlu0 %v5456, 112
      %v5497 = vpop.permute.xlu0 %5496
      %5498 = vrot.lane.b32.xlu0 %v5457, 112
      %v5499 = vpop.permute.xlu0 %5498
      %5500 = vrot.lane.b32.xlu0 %v5458, 112
      %v5501 = vpop.permute.xlu0 %5500
      %v5502 = vsel %vm2421, %v5497, %v5499
      %v5503 = vsel %vm2421, %v5499, %v5501
      %5506 = vrot.lane.b32.xlu0 %v5449, 111
      %v5507 = vpop.permute.xlu0 %5506
      %5508 = vrot.lane.b32.xlu0 %v5445, 111
      %v5509 = vpop.permute.xlu0 %5508
      %5510 = vrot.lane.b32.xlu0 %v5450, 111
      %v5511 = vpop.permute.xlu0 %5510
      %v5512 = vsel %vm2435, %v5507, %v5509
      %v5513 = vsel %vm2435, %v5509, %v5511
      %5519 = vrot.lane.b32.xlu0 %v5459, 110
      %v5520 = vpop.permute.xlu0 %5519
      %5521 = vrot.lane.b32.xlu0 %v5460, 110
      %v5522 = vpop.permute.xlu0 %5521
      %5523 = vrot.lane.b32.xlu0 %v5461, 110
      %v5524 = vpop.permute.xlu0 %5523
      %v5525 = vsel %vm2452, %v5520, %v5522
      %v5526 = vsel %vm2452, %v5522, %v5524
      %5532 = vrot.lane.b32.xlu0 %v5462, 96
      %v5533 = vpop.permute.xlu0 %5532
      %5534 = vrot.lane.b32.xlu0 %v5463, 96
      %v5535 = vpop.permute.xlu0 %5534
      %5536 = vrot.lane.b32.xlu0 %v5464, 96
      %v5537 = vpop.permute.xlu0 %5536
      %v5538 = vsel %vm2469, %v5533, %v5535
      %v5539 = vsel %vm2469, %v5535, %v5537
      %5542 = vrot.lane.b32.xlu0 %v5449, 95
      %v5543 = vpop.permute.xlu0 %5542
      %5544 = vrot.lane.b32.xlu0 %v5445, 95
      %v5545 = vpop.permute.xlu0 %5544
      %5546 = vrot.lane.b32.xlu0 %v5450, 95
      %v5547 = vpop.permute.xlu0 %5546
      %v5548 = vsel %vm2483, %v5543, %v5545
      %v5549 = vsel %vm2483, %v5545, %v5547
      %5555 = vrot.lane.b32.xlu0 %v5465, 94
      %v5556 = vpop.permute.xlu0 %5555
      %5557 = vrot.lane.b32.xlu0 %v5466, 94
      %v5558 = vpop.permute.xlu0 %5557
      %5559 = vrot.lane.b32.xlu0 %v5467, 94
      %v5560 = vpop.permute.xlu0 %5559
      %v5561 = vsel %vm2497, %v5556, %v5558
      %v5562 = vsel %vm2497, %v5558, %v5560
      %v5565 = vld [vmem:[%s129] sm:$0xf]
      %v5566 = vld [vmem:[%s131] sm:$0xf]
      %5568 = vset.pattern.permute.xlu0 0
      %5569 = vperm.xlu0 %5568, %v5566
      %v5570 = vpop.permute.xlu0 %5569
      %v5573 = vsel %vm2709, %v5565, 0
      %5575 = vmatpush.msra.mxu0 0.0
      %5576 = vmatpush.msra.mxu0 0.0
      %5577 = vmatpush.msra.mxu0 0.0
      %5578 = vmatpush.msra.mxu0 0.0
      %5579 = vmatpush.msra.mxu0 0.0
      %5580 = vmatpush.msra.mxu0 0.0
      %5581 = vmatpush.msra.mxu0 0.0
      %5582 = vmatpush.msra.mxu0 %v5561
      %5583 = vmatpush.msra.mxu0 %v5548
      %5584 = vmatpush.msra.mxu0 %v5538
      %5585 = vmatpush.msra.mxu0 %v5525
      %5586 = vmatpush.msra.mxu0 %v5512
      %5587 = vmatpush.msra.mxu0 %v5502
      %5588 = vmatpush.msra.mxu0 %v5489
      %5589 = vmatpush.msra.mxu0 %v5476
      %5590 = vmatpush.msra.mxu0 %v5451
      %5591 = vmatmul.f32.gmra.mxu0 %v5573
      %v5592 = vpop.f32.mrf.mxu0
      %v5593 = vadd.f32 %v5570, %v5592
      %5594 = vdwg.mxu0
      %5595 = vmatpush.msra.mxu0 0.0
      %5596 = vmatpush.msra.mxu0 0.0
      %5597 = vmatpush.msra.mxu0 0.0
      %5598 = vmatpush.msra.mxu0 0.0
      %5599 = vmatpush.msra.mxu0 0.0
      %5600 = vmatpush.msra.mxu0 0.0
      %5601 = vmatpush.msra.mxu0 0.0
      %5602 = vmatpush.msra.mxu0 %v5562
      %5603 = vmatpush.msra.mxu0 %v5549
      %5604 = vmatpush.msra.mxu0 %v5539
      %5605 = vmatpush.msra.mxu0 %v5526
      %5606 = vmatpush.msra.mxu0 %v5513
      %5607 = vmatpush.msra.mxu0 %v5503
      %5608 = vmatpush.msra.mxu0 %v5490
      %5609 = vmatpush.msra.mxu0 %v5477
      %5610 = vmatpush.msra.mxu0 %v5452
      %5611 = vmatmul.f32.gmra.mxu0 %v5573
      %v5612 = vpop.f32.mrf.mxu0
      %v5613 = vadd.f32 %v5570, %v5612
      %5614 = vdwg.mxu0
      %5617 = vrot.lane.b32.xlu0 %v5437, 17
      %v5618 = vpop.permute.xlu0 %5617
      %5619 = vrot.lane.b32.xlu0 %v5438, 17
      %v5620 = vpop.permute.xlu0 %5619
      %v5621 = vsel %vm2289, %v5618, %v5620
      %v5625 = vsel %vm2289, 0.0, %v5618
      %v5626 = vsel %vm2289, %v5620, 0.0
      %v5627 = vmul.f32 %v5625, %v2302
      %v5628 = vmul.f32 %v5621, %v2303
      %v5629 = vmul.f32 %v5625, %v2317
      %v5630 = vmul.f32 %v5621, %v2321
      %v5631 = vmul.f32 %v5626, %v2319
      %v5632 = vmul.f32 %v5625, %v2329
      %v5633 = vmul.f32 %v5621, %v2333
      %v5634 = vmul.f32 %v5626, %v2331
      %v5635 = vmul.f32 %v5625, %v2341
      %v5636 = vmul.f32 %v5621, %v2345
      %v5637 = vmul.f32 %v5626, %v2343
      %v5638 = vmul.f32 %v5625, %v2353
      %v5639 = vmul.f32 %v5621, %v2357
      %v5640 = vmul.f32 %v5626, %v2355
      %v5641 = vmul.f32 %v5625, %v2365
      %v5642 = vmul.f32 %v5621, %v2369
      %v5643 = vmul.f32 %v5626, %v2367
      %5646 = vrot.lane.b32.xlu0 %v5625, 127
      %v5647 = vpop.permute.xlu0 %5646
      %5648 = vrot.lane.b32.xlu0 %v5621, 127
      %v5649 = vpop.permute.xlu0 %5648
      %5650 = vrot.lane.b32.xlu0 %v5626, 127
      %v5651 = vpop.permute.xlu0 %5650
      %v5652 = vsel %vm2387, %v5647, %v5649
      %v5653 = vsel %vm2387, %v5649, %v5651
      %5659 = vrot.lane.b32.xlu0 %v5629, 126
      %v5660 = vpop.permute.xlu0 %5659
      %5661 = vrot.lane.b32.xlu0 %v5630, 126
      %v5662 = vpop.permute.xlu0 %5661
      %5663 = vrot.lane.b32.xlu0 %v5631, 126
      %v5664 = vpop.permute.xlu0 %5663
      %v5665 = vsel %vm2404, %v5660, %v5662
      %v5666 = vsel %vm2404, %v5662, %v5664
      %5672 = vrot.lane.b32.xlu0 %v5632, 112
      %v5673 = vpop.permute.xlu0 %5672
      %5674 = vrot.lane.b32.xlu0 %v5633, 112
      %v5675 = vpop.permute.xlu0 %5674
      %5676 = vrot.lane.b32.xlu0 %v5634, 112
      %v5677 = vpop.permute.xlu0 %5676
      %v5678 = vsel %vm2421, %v5673, %v5675
      %v5679 = vsel %vm2421, %v5675, %v5677
      %5682 = vrot.lane.b32.xlu0 %v5625, 111
      %v5683 = vpop.permute.xlu0 %5682
      %5684 = vrot.lane.b32.xlu0 %v5621, 111
      %v5685 = vpop.permute.xlu0 %5684
      %5686 = vrot.lane.b32.xlu0 %v5626, 111
      %v5687 = vpop.permute.xlu0 %5686
      %v5688 = vsel %vm2435, %v5683, %v5685
      %v5689 = vsel %vm2435, %v5685, %v5687
      %5695 = vrot.lane.b32.xlu0 %v5635, 110
      %v5696 = vpop.permute.xlu0 %5695
      %5697 = vrot.lane.b32.xlu0 %v5636, 110
      %v5698 = vpop.permute.xlu0 %5697
      %5699 = vrot.lane.b32.xlu0 %v5637, 110
      %v5700 = vpop.permute.xlu0 %5699
      %v5701 = vsel %vm2452, %v5696, %v5698
      %v5702 = vsel %vm2452, %v5698, %v5700
      %5708 = vrot.lane.b32.xlu0 %v5638, 96
      %v5709 = vpop.permute.xlu0 %5708
      %5710 = vrot.lane.b32.xlu0 %v5639, 96
      %v5711 = vpop.permute.xlu0 %5710
      %5712 = vrot.lane.b32.xlu0 %v5640, 96
      %v5713 = vpop.permute.xlu0 %5712
      %v5714 = vsel %vm2469, %v5709, %v5711
      %v5715 = vsel %vm2469, %v5711, %v5713
      %5718 = vrot.lane.b32.xlu0 %v5625, 95
      %v5719 = vpop.permute.xlu0 %5718
      %5720 = vrot.lane.b32.xlu0 %v5621, 95
      %v5721 = vpop.permute.xlu0 %5720
      %5722 = vrot.lane.b32.xlu0 %v5626, 95
      %v5723 = vpop.permute.xlu0 %5722
      %v5724 = vsel %vm2483, %v5719, %v5721
      %v5725 = vsel %vm2483, %v5721, %v5723
      %5731 = vrot.lane.b32.xlu0 %v5641, 94
      %v5732 = vpop.permute.xlu0 %5731
      %5733 = vrot.lane.b32.xlu0 %v5642, 94
      %v5734 = vpop.permute.xlu0 %5733
      %5735 = vrot.lane.b32.xlu0 %v5643, 94
      %v5736 = vpop.permute.xlu0 %5735
      %v5737 = vsel %vm2497, %v5732, %v5734
      %v5738 = vsel %vm2497, %v5734, %v5736
      %v5741 = vld [vmem:[%s133] sm:$0xf]
      %v5742 = vld [vmem:[%s135] sm:$0xf]
      %5744 = vset.pattern.permute.xlu0 0
      %5745 = vperm.xlu0 %5744, %v5742
      %v5746 = vpop.permute.xlu0 %5745
      %v5749 = vsel %vm2709, %v5741, 0
      %5751 = vmatpush.msra.mxu0 0.0
      %5752 = vmatpush.msra.mxu0 0.0
      %5753 = vmatpush.msra.mxu0 0.0
      %5754 = vmatpush.msra.mxu0 0.0
      %5755 = vmatpush.msra.mxu0 0.0
      %5756 = vmatpush.msra.mxu0 0.0
      %5757 = vmatpush.msra.mxu0 0.0
      %5758 = vmatpush.msra.mxu0 %v5737
      %5759 = vmatpush.msra.mxu0 %v5724
      %5760 = vmatpush.msra.mxu0 %v5714
      %5761 = vmatpush.msra.mxu0 %v5701
      %5762 = vmatpush.msra.mxu0 %v5688
      %5763 = vmatpush.msra.mxu0 %v5678
      %5764 = vmatpush.msra.mxu0 %v5665
      %5765 = vmatpush.msra.mxu0 %v5652
      %5766 = vmatpush.msra.mxu0 %v5627
      %5767 = vmatmul.f32.gmra.mxu0 %v5749
      %v5768 = vpop.f32.mrf.mxu0
      %v5769 = vadd.f32 %v5746, %v5768
      %5770 = vdwg.mxu0
      %5771 = vmatpush.msra.mxu0 0.0
      %5772 = vmatpush.msra.mxu0 0.0
      %5773 = vmatpush.msra.mxu0 0.0
      %5774 = vmatpush.msra.mxu0 0.0
      %5775 = vmatpush.msra.mxu0 0.0
      %5776 = vmatpush.msra.mxu0 0.0
      %5777 = vmatpush.msra.mxu0 0.0
      %5778 = vmatpush.msra.mxu0 %v5738
      %5779 = vmatpush.msra.mxu0 %v5725
      %5780 = vmatpush.msra.mxu0 %v5715
      %5781 = vmatpush.msra.mxu0 %v5702
      %5782 = vmatpush.msra.mxu0 %v5689
      %5783 = vmatpush.msra.mxu0 %v5679
      %5784 = vmatpush.msra.mxu0 %v5666
      %5785 = vmatpush.msra.mxu0 %v5653
      %5786 = vmatpush.msra.mxu0 %v5628
      %5787 = vmatmul.f32.gmra.mxu0 %v5749
      %v5788 = vpop.f32.mrf.mxu0
      %v5789 = vadd.f32 %v5746, %v5788
      %5790 = vdwg.mxu0
      %v5793 = vrot.slane %v5769, 4
      %v5794 = vrot.slane %v5789, 4
      %v5797 = vsel %vm2509, %v5593, %v5793
      %v5798 = vsel %vm2509, %v5613, %v5794
      %v5799 = vmul.f32 %v5797, 0.5
      %v5800 = vmul.f32 %v5798, 0.5
      %v5801 = vmul.f32 %v5797, 0.044715
      %v5802 = vmul.f32 %v5798, 0.044715
      %v5803 = vmul.f32 %v5801, %v5797
      %v5804 = vmul.f32 %v5802, %v5798
      %v5805 = vmul.f32 %v5803, %v5797
      %v5806 = vmul.f32 %v5804, %v5798
      %v5807 = vadd.f32 %v5797, %v5805
      %v5808 = vadd.f32 %v5798, %v5806
      %v5809 = vmul.f32 %v5807, 0.7978846
      %v5810 = vmul.f32 %v5808, 0.7978846
      %v5811 = vtanh.pop %v5809
      %v5812 = vtanh.pop %v5810
      %v5813 = vadd.f32 %v5811, 1.0
      %v5814 = vadd.f32 %v5812, 1.0
      %v5815 = vmul.f32 %v5799, %v5813
      %v5816 = vmul.f32 %v5800, %v5814
      %v5817 = vld [vmem:[%s137] sm:$0xff]
      %v5818 = vld [vmem:[%s139] sm:$0xff]
      %5820 = vset.pattern.permute.xlu0 0
      %5821 = vperm.xlu0 %5820, %v5818
      %v5822 = vpop.permute.xlu0 %5821
      %v5825 = vsel %vm2760, %v5817, 0
      %5827 = vmatpush.msra.mxu0 0.0
      %5828 = vmatpush.msra.mxu0 0.0
      %5829 = vmatpush.msra.mxu0 0.0
      %5830 = vmatpush.msra.mxu0 0.0
      %5831 = vmatpush.msra.mxu0 0.0
      %5832 = vmatpush.msra.mxu0 0.0
      %5833 = vmatpush.msra.mxu0 0.0
      %5834 = vmatpush.msra.mxu0 0.0
      %5835 = vmatpush.msra.mxu0 0.0
      %5836 = vmatpush.msra.mxu0 0.0
      %5837 = vmatpush.msra.mxu0 0.0
      %5838 = vmatpush.msra.mxu0 0.0
      %5839 = vmatpush.msra.mxu0 0.0
      %5840 = vmatpush.msra.mxu0 0.0
      %5841 = vmatpush.msra.mxu0 0.0
      %5842 = vmatpush.msra.mxu0 %v5815
      %5843 = vmatmul.f32.gmra.mxu0 %v5825
      %v5844 = vpop.f32.mrf.mxu0
      %v5845 = vadd.f32 %v5822, %v5844
      %5846 = vdwg.mxu0
      %5847 = vmatpush.msra.mxu0 0.0
      %5848 = vmatpush.msra.mxu0 0.0
      %5849 = vmatpush.msra.mxu0 0.0
      %5850 = vmatpush.msra.mxu0 0.0
      %5851 = vmatpush.msra.mxu0 0.0
      %5852 = vmatpush.msra.mxu0 0.0
      %5853 = vmatpush.msra.mxu0 0.0
      %5854 = vmatpush.msra.mxu0 0.0
      %5855 = vmatpush.msra.mxu0 0.0
      %5856 = vmatpush.msra.mxu0 0.0
      %5857 = vmatpush.msra.mxu0 0.0
      %5858 = vmatpush.msra.mxu0 0.0
      %5859 = vmatpush.msra.mxu0 0.0
      %5860 = vmatpush.msra.mxu0 0.0
      %5861 = vmatpush.msra.mxu0 0.0
      %5862 = vmatpush.msra.mxu0 %v5816
      %5863 = vmatmul.f32.gmra.mxu0 %v5825
      %v5864 = vpop.f32.mrf.mxu0
      %v5865 = vadd.f32 %v5822, %v5864
      %5866 = vdwg.mxu0
      %v5867 = vsub.f32 0.0, %v5845
      %v5868 = vsub.f32 0.0, %v5865
      %v5869 = vmul.f32 %v5867, 1.442695
      %v5870 = vpow.pop %v5869
      %v5871 = vmul.f32 %v5868, 1.442695
      %v5872 = vpow.pop %v5871
      %v5873 = vadd.f32 %v5870, 1.0
      %v5874 = vadd.f32 %v5872, 1.0
      %v5875 = vrcp.pop %v5873
      %v5876 = vrcp.pop %v5874
      %v5877 = vmul.f32 %v5815, %v5875
      %v5878 = vmul.f32 %v5816, %v5876
      %v5879 = vld [vmem:[%s141] sm:$0xff]
      %v5880 = vld [vmem:[%s143] sm:$0xff]
      %5882 = vset.pattern.permute.xlu0 0
      %5883 = vperm.xlu0 %5882, %v5880
      %v5884 = vpop.permute.xlu0 %5883
      %v5887 = vsel %vm4361, %v5879, 0
      %5889 = vmatpush.msra.mxu0 0.0
      %5890 = vmatpush.msra.mxu0 0.0
      %5891 = vmatpush.msra.mxu0 0.0
      %5892 = vmatpush.msra.mxu0 0.0
      %5893 = vmatpush.msra.mxu0 0.0
      %5894 = vmatpush.msra.mxu0 0.0
      %5895 = vmatpush.msra.mxu0 0.0
      %5896 = vmatpush.msra.mxu0 0.0
      %5897 = vmatpush.msra.mxu0 0.0
      %5898 = vmatpush.msra.mxu0 0.0
      %5899 = vmatpush.msra.mxu0 0.0
      %5900 = vmatpush.msra.mxu0 0.0
      %5901 = vmatpush.msra.mxu0 0.0
      %5902 = vmatpush.msra.mxu0 %v5877
      %5903 = vmatpush.msra.mxu0 %v5161
      %5904 = vmatpush.msra.mxu0 %v4413
      %5905 = vmatmul.f32.gmra.mxu0 %v5887
      %v5906 = vpop.f32.mrf.mxu0
      %v5907 = vadd.f32 %v5884, %v5906
      %5908 = vdwg.mxu0
      %5909 = vmatpush.msra.mxu0 0.0
      %5910 = vmatpush.msra.mxu0 0.0
      %5911 = vmatpush.msra.mxu0 0.0
      %5912 = vmatpush.msra.mxu0 0.0
      %5913 = vmatpush.msra.mxu0 0.0
      %5914 = vmatpush.msra.mxu0 0.0
      %5915 = vmatpush.msra.mxu0 0.0
      %5916 = vmatpush.msra.mxu0 0.0
      %5917 = vmatpush.msra.mxu0 0.0
      %5918 = vmatpush.msra.mxu0 0.0
      %5919 = vmatpush.msra.mxu0 0.0
      %5920 = vmatpush.msra.mxu0 0.0
      %5921 = vmatpush.msra.mxu0 0.0
      %5922 = vmatpush.msra.mxu0 %v5878
      %5923 = vmatpush.msra.mxu0 %v5162
      %5924 = vmatpush.msra.mxu0 %v4414
      %5925 = vmatmul.f32.gmra.mxu0 %v5887
      %v5926 = vpop.f32.mrf.mxu0
      %v5927 = vadd.f32 %v5884, %v5926
      %5928 = vdwg.mxu0
      %s5929 = sld [smem:[#allocation4]]
      %v5930 = vstv %s5929
      %v5931 = vmul.f32 %v5930, %v5907
      %v5932 = vmul.f32 %v5930, %v5927
      %s5933 = ssub.f32 1.0, %s5929
      %v5934 = vstv %s5933
      %v5935 = vmul.f32 %v5934, %v4413
      %v5936 = vmul.f32 %v5934, %v4414
      %v5937 = vadd.f32 %v5931, %v5935
      %v5938 = vadd.f32 %v5932, %v5936
      %v5939 = vld [vmem:[%s147] sm:$0xff]
      %v5940 = vld [vmem:[%s149] sm:$0xff]
      %5942 = vset.pattern.permute.xlu0 0
      %5943 = vperm.xlu0 %5942, %v5940
      %v5944 = vpop.permute.xlu0 %5943
      %v5947 = vsel %vm2332, %v5939, 0
      %5949 = vmatpush.msra.mxu0 0.0
      %5950 = vmatpush.msra.mxu0 0.0
      %5951 = vmatpush.msra.mxu0 0.0
      %5952 = vmatpush.msra.mxu0 0.0
      %5953 = vmatpush.msra.mxu0 0.0
      %5954 = vmatpush.msra.mxu0 0.0
      %5955 = vmatpush.msra.mxu0 0.0
      %5956 = vmatpush.msra.mxu0 0.0
      %5957 = vmatpush.msra.mxu0 0.0
      %5958 = vmatpush.msra.mxu0 0.0
      %5959 = vmatpush.msra.mxu0 0.0
      %5960 = vmatpush.msra.mxu0 0.0
      %5961 = vmatpush.msra.mxu0 0.0
      %5962 = vmatpush.msra.mxu0 0.0
      %5963 = vmatpush.msra.mxu0 %v5937
      %5964 = vmatpush.msra.mxu0 %v4413
      %5965 = vmatmul.f32.gmra.mxu0 %v5947
      %v5966 = vpop.f32.mrf.mxu0
      %v5967 = vadd.f32 %v5944, %v5966
      %5968 = vdwg.mxu0
      %5969 = vmatpush.msra.mxu0 0.0
      %5970 = vmatpush.msra.mxu0 0.0
      %5971 = vmatpush.msra.mxu0 0.0
      %5972 = vmatpush.msra.mxu0 0.0
      %5973 = vmatpush.msra.mxu0 0.0
      %5974 = vmatpush.msra.mxu0 0.0
      %5975 = vmatpush.msra.mxu0 0.0
      %5976 = vmatpush.msra.mxu0 0.0
      %5977 = vmatpush.msra.mxu0 0.0
      %5978 = vmatpush.msra.mxu0 0.0
      %5979 = vmatpush.msra.mxu0 0.0
      %5980 = vmatpush.msra.mxu0 0.0
      %5981 = vmatpush.msra.mxu0 0.0
      %5982 = vmatpush.msra.mxu0 0.0
      %5983 = vmatpush.msra.mxu0 %v5938
      %5984 = vmatpush.msra.mxu0 %v4414
      %5985 = vmatmul.f32.gmra.mxu0 %v5947
      %v5986 = vpop.f32.mrf.mxu0
      %v5987 = vadd.f32 %v5944, %v5986
      %5988 = vdwg.mxu0
      %5991 = vrot.lane.b32.xlu0 %v5967, 17
      %v5992 = vpop.permute.xlu0 %5991
      %5993 = vrot.lane.b32.xlu0 %v5987, 17
      %v5994 = vpop.permute.xlu0 %5993
      %v5995 = vsel %vm2289, %v5992, %v5994
      %v5999 = vsel %vm2289, 0.0, %v5992
      %v6000 = vsel %vm2289, %v5994, 0.0
      %v6001 = vmul.f32 %v5999, %v2302
      %v6002 = vmul.f32 %v5995, %v2303
      %v6003 = vmul.f32 %v5999, %v2317
      %v6004 = vmul.f32 %v5995, %v2321
      %v6005 = vmul.f32 %v6000, %v2319
      %v6006 = vmul.f32 %v5999, %v2329
      %v6007 = vmul.f32 %v5995, %v2333
      %v6008 = vmul.f32 %v6000, %v2331
      %v6009 = vmul.f32 %v5999, %v2341
      %v6010 = vmul.f32 %v5995, %v2345
      %v6011 = vmul.f32 %v6000, %v2343
      %v6012 = vmul.f32 %v5999, %v2353
      %v6013 = vmul.f32 %v5995, %v2357
      %v6014 = vmul.f32 %v6000, %v2355
      %v6015 = vmul.f32 %v5999, %v2365
      %v6016 = vmul.f32 %v5995, %v2369
      %v6017 = vmul.f32 %v6000, %v2367
      %6020 = vrot.lane.b32.xlu0 %v5999, 127
      %v6021 = vpop.permute.xlu0 %6020
      %6022 = vrot.lane.b32.xlu0 %v5995, 127
      %v6023 = vpop.permute.xlu0 %6022
      %6024 = vrot.lane.b32.xlu0 %v6000, 127
      %v6025 = vpop.permute.xlu0 %6024
      %v6026 = vsel %vm2387, %v6021, %v6023
      %v6027 = vsel %vm2387, %v6023, %v6025
      %6033 = vrot.lane.b32.xlu0 %v6003, 126
      %v6034 = vpop.permute.xlu0 %6033
      %6035 = vrot.lane.b32.xlu0 %v6004, 126
      %v6036 = vpop.permute.xlu0 %6035
      %6037 = vrot.lane.b32.xlu0 %v6005, 126
      %v6038 = vpop.permute.xlu0 %6037
      %v6039 = vsel %vm2404, %v6034, %v6036
      %v6040 = vsel %vm2404, %v6036, %v6038
      %6046 = vrot.lane.b32.xlu0 %v6006, 112
      %v6047 = vpop.permute.xlu0 %6046
      %6048 = vrot.lane.b32.xlu0 %v6007, 112
      %v6049 = vpop.permute.xlu0 %6048
      %6050 = vrot.lane.b32.xlu0 %v6008, 112
      %v6051 = vpop.permute.xlu0 %6050
      %v6052 = vsel %vm2421, %v6047, %v6049
      %v6053 = vsel %vm2421, %v6049, %v6051
      %6056 = vrot.lane.b32.xlu0 %v5999, 111
      %v6057 = vpop.permute.xlu0 %6056
      %6058 = vrot.lane.b32.xlu0 %v5995, 111
      %v6059 = vpop.permute.xlu0 %6058
      %6060 = vrot.lane.b32.xlu0 %v6000, 111
      %v6061 = vpop.permute.xlu0 %6060
      %v6062 = vsel %vm2435, %v6057, %v6059
      %v6063 = vsel %vm2435, %v6059, %v6061
      %6069 = vrot.lane.b32.xlu0 %v6009, 110
      %v6070 = vpop.permute.xlu0 %6069
      %6071 = vrot.lane.b32.xlu0 %v6010, 110
      %v6072 = vpop.permute.xlu0 %6071
      %6073 = vrot.lane.b32.xlu0 %v6011, 110
      %v6074 = vpop.permute.xlu0 %6073
      %v6075 = vsel %vm2452, %v6070, %v6072
      %v6076 = vsel %vm2452, %v6072, %v6074
      %6082 = vrot.lane.b32.xlu0 %v6012, 96
      %v6083 = vpop.permute.xlu0 %6082
      %6084 = vrot.lane.b32.xlu0 %v6013, 96
      %v6085 = vpop.permute.xlu0 %6084
      %6086 = vrot.lane.b32.xlu0 %v6014, 96
      %v6087 = vpop.permute.xlu0 %6086
      %v6088 = vsel %vm2469, %v6083, %v6085
      %v6089 = vsel %vm2469, %v6085, %v6087
      %6092 = vrot.lane.b32.xlu0 %v5999, 95
      %v6093 = vpop.permute.xlu0 %6092
      %6094 = vrot.lane.b32.xlu0 %v5995, 95
      %v6095 = vpop.permute.xlu0 %6094
      %6096 = vrot.lane.b32.xlu0 %v6000, 95
      %v6097 = vpop.permute.xlu0 %6096
      %v6098 = vsel %vm2483, %v6093, %v6095
      %v6099 = vsel %vm2483, %v6095, %v6097
      %6105 = vrot.lane.b32.xlu0 %v6015, 94
      %v6106 = vpop.permute.xlu0 %6105
      %6107 = vrot.lane.b32.xlu0 %v6016, 94
      %v6108 = vpop.permute.xlu0 %6107
      %6109 = vrot.lane.b32.xlu0 %v6017, 94
      %v6110 = vpop.permute.xlu0 %6109
      %v6111 = vsel %vm2497, %v6106, %v6108
      %v6112 = vsel %vm2497, %v6108, %v6110
      %v6115 = vld [vmem:[%s151] sm:$0xff]
      %v6116 = vld [vmem:[%s153] sm:$0xff]
      %6118 = vset.pattern.permute.xlu0 0
      %6119 = vperm.xlu0 %6118, %v6116
      %v6120 = vpop.permute.xlu0 %6119
      %v6123 = vsel %vm2709, %v6115, 0
      %6125 = vmatpush.msra.mxu0 0.0
      %6126 = vmatpush.msra.mxu0 0.0
      %6127 = vmatpush.msra.mxu0 0.0
      %6128 = vmatpush.msra.mxu0 0.0
      %6129 = vmatpush.msra.mxu0 0.0
      %6130 = vmatpush.msra.mxu0 0.0
      %6131 = vmatpush.msra.mxu0 0.0
      %6132 = vmatpush.msra.mxu0 %v6111
      %6133 = vmatpush.msra.mxu0 %v6098
      %6134 = vmatpush.msra.mxu0 %v6088
      %6135 = vmatpush.msra.mxu0 %v6075
      %6136 = vmatpush.msra.mxu0 %v6062
      %6137 = vmatpush.msra.mxu0 %v6052
      %6138 = vmatpush.msra.mxu0 %v6039
      %6139 = vmatpush.msra.mxu0 %v6026
      %6140 = vmatpush.msra.mxu0 %v6001
      %6141 = vmatmul.f32.gmra.mxu0 %v6123
      %v6142 = vpop.f32.mrf.mxu0
      %v6143 = vadd.f32 %v6120, %v6142
      %6144 = vdwg.mxu0
      %6145 = vmatpush.msra.mxu0 0.0
      %6146 = vmatpush.msra.mxu0 0.0
      %6147 = vmatpush.msra.mxu0 0.0
      %6148 = vmatpush.msra.mxu0 0.0
      %6149 = vmatpush.msra.mxu0 0.0
      %6150 = vmatpush.msra.mxu0 0.0
      %6151 = vmatpush.msra.mxu0 0.0
      %6152 = vmatpush.msra.mxu0 %v6112
      %6153 = vmatpush.msra.mxu0 %v6099
      %6154 = vmatpush.msra.mxu0 %v6089
      %6155 = vmatpush.msra.mxu0 %v6076
      %6156 = vmatpush.msra.mxu0 %v6063
      %6157 = vmatpush.msra.mxu0 %v6053
      %6158 = vmatpush.msra.mxu0 %v6040
      %6159 = vmatpush.msra.mxu0 %v6027
      %6160 = vmatpush.msra.mxu0 %v6002
      %6161 = vmatmul.f32.gmra.mxu0 %v6123
      %v6162 = vpop.f32.mrf.mxu0
      %v6163 = vadd.f32 %v6120, %v6162
      %6164 = vdwg.mxu0
      %s6165 = sld [smem:[#allocation5]]
      %v6166 = vstv %s6165
      %v6167 = vmul.f32 %v6166, %v6143
      %v6168 = vmul.f32 %v6166, %v6163
      %s6169 = ssub.f32 1.0, %s6165
      %v6170 = vstv %s6169
      %v6171 = vmul.f32 %v6170, %v2876
      %v6172 = vmul.f32 %v6170, %v2877
      %v6173 = vadd.f32 %v6167, %v6171
      %v6174 = vadd.f32 %v6168, %v6172
      %6175 = vst [vmem:[%s2278] sm:$0xff] %v6173
      %6176 = vst [vmem:[%s2278 + $0x8] sm:$0xff] %v6174
      %p6177 = scmp.lt.s32.totalorder %s172, 1
      %s6178 = scalar_select %p6177, %s172, 1
      %s6179 = smul.addr %s6178, 2
      %s6180 = smul.addr %s6179, 8
      %s6181 = scalar_lea.vmem %s157, %s6180
      // Predicated region
      $region333: #{mardan_forward.1} parent=331 // pred_check
        %p6182 = pneg %p1833
      $region334: #{mardan_forward.1} parent=331 // pred_check_branch
        %6184 = sbr.rel (%p6182) target = $region336
      $region335: #{mardan_forward.1} parent=331 // pred_region
        _
      $region336: #{mardan_forward.1} parent=331 // pred_fallthru
        _
    $region332: #{mardan_forward.1} parent=5 // pred_fallthru
      _
    %p6185 = scmp.le.s32.totalorder 2, %s167
    // Predicated region
    $region337: #{mardan_forward.1} parent=5 // pred_check
      %p6186 = pneg %p6185
    $region338: #{mardan_forward.1} parent=5 // pred_check_branch
      %6188 = sbr.rel (%p6186) target = $region340
    $region339: #{mardan_forward.1} parent=5 // pred_region
      %s6189 = ssub.s32 %s167, 2
      // Predicated region
      $region341: #{mardan_forward.1} parent=339 // pred_check
        %p6190 = pneg %p1839
      $region342: #{mardan_forward.1} parent=339 // pred_check_branch
        %6192 = sbr.rel (%p6190) target = $region344
      $region343: #{mardan_forward.1} parent=339 // pred_region
        %p6193 = scmp.lt.s32.totalorder %s173, 1
        %s6194 = scalar_select %p6193, %s173, 1
        %s6195 = smul.addr %s6194, 2
        %s6196 = smul.addr %s6195, 8
        %s6197 = scalar_lea.vmem %s157, %s6196
      $region344: #{mardan_forward.1} parent=339 // pred_fallthru
        _
    $region340: #{mardan_forward.1} parent=5 // pred_fallthru
      _
  $region6: #{mardan_forward.1} parent=0 // loop_footer
    %s171 = sadd.s32 1, %s167
  $region7: #{mardan_forward.1} parent=0 // loop_footer_branch
    %166 = sbr.rel target = $region3
  $region8: #{mardan_forward.1} parent=0 // loop_exit
    _

</llo_original>
